<compile_context>
chip_gen: v6e
topology: v6e:2x2x1
jax: 0.10.0
libtpu: 0.0.40
codegen_flags: <defaults>
</compile_context>

<pallas_src>
import jax
import jax.numpy as jnp
from jax.experimental import pallas as pl
from jax.experimental.pallas import tpu as pltpu

# ------------------- synthetic hparams (consistent with NaoEpd.__init__) -------------------
BATCH = 2
ENC_VOCAB = 16
DEC_VOCAB = 16
ENC_EMB = 32
ENC_HID = 32
MLP_HID = 32
DEC_HID = 32                 # must equal ENC_HID: decoder h0/c0 = arch_emb
NUM_MLP_LAYERS = 1
NUM_ENC_LAYERS = 1           # TODO(synk): multi-layer LSTM stacks not modeled (single layer)
NUM_DEC_LAYERS = 1
BLOCK_LENGTH = 8
GLOBAL_LENGTH = 0
SRC_LENGTH = BLOCK_LENGTH + GLOBAL_LENGTH      # 8
ENC_LENGTH = SRC_LENGTH
DEC_LENGTH = SRC_LENGTH
NUM_INPUT_NODES = 2
INDEX_RANGE = (1, 5)         # lb_nodes = 1
ENC_OP_RANGE = (5, 10)
DEC_OP_RANGE = (10, 15)
GLOBAL_RANGE = [15, 16]      # unused (GLOBAL_LENGTH == 0)
INIT_RANGE = 0.04

_VMEM = pl.BlockSpec(memory_space=pltpu.MemorySpace.VMEM)
_NEG = -1e30                 # plain Python float -> jaxpr literal, NOT a captured array const


# =========================== symbol-selection ranges (static per step) ===========================
def _step_range(step):
    length = DEC_LENGTH
    lb_nodes = INDEX_RANGE[0]
    if step >= BLOCK_LENGTH:
        i = step - BLOCK_LENGTH
        lo, hi = GLOBAL_RANGE[i], GLOBAL_RANGE[i + 1]
    else:
        ed, ed_idx = divmod(step, length // 2)
        in_encoder = ed == 0
        node_idx, i = divmod(ed_idx, 4)
        op_range = ENC_OP_RANGE if in_encoder else DEC_OP_RANGE
        if i in (0, 2):
            lo, hi = lb_nodes, node_idx + NUM_INPUT_NODES + lb_nodes   # NoEOS path
        else:
            lo, hi = op_range[0], op_range[1]
    assert 0 <= lo < hi <= DEC_VOCAB, f"empty/invalid symbol range at step {step}: [{lo},{hi})"
    return lo, hi


# =========================== fused NaoEpd forward kernel ===========================
def _nao_epd_kernel(src_ids_ref, tgt_ids_ref,
                    enc_emb_ref, enc_w_ih_ref, enc_w_hh_ref, enc_b_ref,
                    p0_ref, pfin_ref,
                    dec_emb_ref, dec_w_ih_ref, dec_w_hh_ref, dec_b_ref,
                    attn_w_ref, attn_b_ref, out_w_ref, out_b_ref,
                    pred_ref, logp_ref, sym_ref):
    B, S = src_ids_ref.shape
    L = tgt_ids_ref.shape[1]
    EV = enc_emb_ref.shape[0]
    DV, H = dec_emb_ref.shape
    G4 = 4 * H
    assert (B & (B - 1)) == 0, "block-diagonal attention mask below assumes power-of-two batch"

    f32 = jnp.float32
    bf16 = jnp.bfloat16

    # ---------------- one-time prologue (off every critical path) ----------------
    # Fold the embedding tables into the LSTM input projections:
    #   emb[x] @ W_ih == onehot(x) @ (emb @ W_ih)
    enc_in_proj = jnp.dot(enc_emb_ref[...], enc_w_ih_ref[...],
                          preferred_element_type=f32).astype(bf16)          # (EV, 4H)
    dec_in_proj = jnp.dot(dec_emb_ref[...], dec_w_ih_ref[...],
                          preferred_element_type=f32).astype(bf16)          # (DV, 4H)
    enc_w_hh = enc_w_hh_ref[...]                                            # bf16 (H, 4H)
    dec_w_hh = dec_w_hh_ref[...]                                            # bf16 (H, 4H)
    enc_b = enc_b_ref[...]                                                  # f32  (1, 4H)
    dec_b = dec_b_ref[...]                                                  # f32  (1, 4H)
    # Split attention linear once -> no per-step lane concat of [mix, h].
    attn_w = attn_w_ref[...]                                                # bf16 (2H, H)
    w_mix = attn_w[:H, :]
    w_hid = attn_w[H:, :]
    attn_b = attn_b_ref[...]                                                # f32  (1, H)
    out_w = out_w_ref[...]                                                  # bf16 (H, DV)
    out_b = out_b_ref[...]                                                  # f32  (1, DV)

    # sigmoid(x) = 0.5 * tanh(0.5 * x) + 0.5  ->  one tanh pass over the lane-dense gate
    # vector per LSTM step.  Scale is 0.5 for the [i, f, o] chunks, 1.0 for the g chunk.
    lane4 = jax.lax.broadcasted_iota(jnp.int32, (1, G4), 1)
    gate_scale = jnp.where((lane4 >= 2 * H) & (lane4 < 3 * H), 1.0, 0.5)

    iota_ev = jax.lax.broadcasted_iota(jnp.int32, (B, EV), 1)
    iota_dv = jax.lax.broadcasted_iota(jnp.int32, (B, DV), 1)

    def gate_update(gates, c_prev):
        """PyTorch gate order [i, f, g, o]; single tanh EUP pass. c_prev=None means c==0."""
        tg = jnp.tanh(gates * gate_scale)                     # (B, 4H) single EUP pass
        i_g = 0.5 * tg[:, 0:H] + 0.5
        g_g = tg[:, 2 * H:3 * H]
        o_g = 0.5 * tg[:, 3 * H:4 * H] + 0.5
        if c_prev is None:
            c_new = i_g * g_g
        else:
            f_g = 0.5 * tg[:, H:2 * H] + 0.5
            c_new = f_g * c_prev + i_g * g_g
        h_new = o_g * jnp.tanh(c_new)
        return h_new, c_new

    def l2_normalize(x):                                      # F.normalize(x, 2, dim=-1)
        return x * jax.lax.rsqrt(jnp.sum(x * x, axis=-1, keepdims=True) + 1e-24)

    # ---------------- encoder: single-layer LSTM + per-step L2 normalize ----------------
    src_ids = src_ids_ref[...]                                # (B, S) int32

    # Input path depends only on src_ids -> hoisted entirely out of the recurrence.
    xg = []
    for step in range(S):
        onehot = (iota_ev == src_ids[:, step:step + 1]).astype(bf16)        # (B, EV)
        xg.append(jnp.dot(onehot, enc_in_proj, preferred_element_type=f32) + enc_b)

    h = None
    c = None
    acc = None
    enc_rows = []
    for step in range(S):                                     # S static & tiny -> unrolled
        if h is None:                                         # h0 == 0 => h@W_hh == 0
            gates = xg[step]
        else:
            gates = xg[step] + jnp.dot(h.astype(bf16), enc_w_hh,
                                       preferred_element_type=f32)
        h, c = gate_update(gates, c)
        h_n = l2_normalize(h)
        enc_rows.append(h_n)
        acc = h_n if acc is None else acc + h_n

    arch = l2_normalize(acc * (1.0 / S))                      # arch_emb (B, H), f32

    # predictor MLP (NUM_MLP_LAYERS == 1) + final projection + sigmoid
    mlp = jnp.maximum(
        jnp.dot(arch.astype(bf16), p0_ref[...], preferred_element_type=f32), 0.0)
    pred_ref[...] = jax.nn.sigmoid(
        jnp.dot(mlp.astype(bf16), pfin_ref[...], preferred_element_type=f32))

    # Attention context as a 2-D lane/sublane-friendly slab: (S*B, H), row = t*B + b.
    ctx = jnp.concatenate(enc_rows, axis=0).astype(bf16)
    # Block-diagonal additive mask: score column c belongs to batch (c mod B).
    col = jax.lax.broadcasted_iota(jnp.int32, (B, S * B), 1)
    row = jax.lax.broadcasted_iota(jnp.int32, (B, S * B), 0)
    score_bias = jnp.where((col & (B - 1)) == row, 0.0, _NEG)               # (B, S*B)

    # ---------------- greedy attention decoder (fully in-kernel) ----------------
    h_d = arch                                                # decoder h0 = c0 = arch_emb
    c_d = arch
    cur = tgt_ids_ref[...][:, 0:1]                            # (B, 1) int32 (target[:, 0])

    logp_list = []
    sym_list = []
    for di in range(L):                                       # static unrolled decode loop
        onehot = (iota_dv == cur).astype(bf16)                # (B, DV)
        gates = (jnp.dot(onehot, dec_in_proj, preferred_element_type=f32)
                 + jnp.dot(h_d.astype(bf16), dec_w_hh, preferred_element_type=f32)
                 + dec_b)
        h_d, c_d = gate_update(gates, c_d)
        h_b = h_d.astype(bf16)

        # attention on the MXU: scores = h_d . ctx (contract H); mix = attn @ ctx
        scores = jax.lax.dot_general(h_b, ctx, (((1,), (1,)), ((), ())),
                                     preferred_element_type=f32) + score_bias   # (B, S*B)
        # |score| <= ||h_d|| * ||ctx_row|| <= sqrt(H) (ctx rows are L2-normalized), so exp is
        # safe without a max-shift; masked columns underflow to exactly 0.
        e = jnp.exp(scores)
        attn = e / jnp.sum(e, axis=-1, keepdims=True)
        mix = jnp.dot(attn.astype(bf16), ctx, preferred_element_type=f32)        # (B, H)

        a_out = jnp.tanh(jnp.dot(mix.astype(bf16), w_mix, preferred_element_type=f32)
                         + jnp.dot(h_b, w_hid, preferred_element_type=f32)
                         + attn_b)
        logits = jnp.dot(a_out.astype(bf16), out_w, preferred_element_type=f32) + out_b  # (B, DV)

        # ---- greedy feedback path: range-masked argmax directly on raw logits ----
        # (log_softmax is monotone, so this matches slice-argmax on log-probs.)
        lo, hi = _step_range(di)
        in_range = (iota_dv >= lo) & (iota_dv < hi)
        masked = jnp.where(in_range, logits, _NEG)
        mval = jnp.max(masked, axis=-1, keepdims=True)
        idx = jnp.min(jnp.where(masked == mval, iota_dv, DV),
                      axis=-1, keepdims=True)                 # first index achieving max
        sym_list.append(idx)
        cur = idx                                             # greedy feedback

        # ---- output path (off the feedback chain): log_softmax over vocab ----
        m = jnp.max(logits, axis=-1, keepdims=True)
        z = logits - m
        logp_list.append(z - jnp.log(jnp.sum(jnp.exp(z), axis=-1, keepdims=True)))

    # single lane-dense stores
    logp_ref[...] = jnp.concatenate(logp_list, axis=1)        # (B, L*DV) = (2, 128)
    sym_ref[...] = jnp.concatenate(sym_list, axis=1).astype(jnp.int32)       # (B, L)


# =========================== full NaoEpd.forward (one pallas_call) ===========================
def nao_epd_forward(params, input_variable, target_variable):
    B = input_variable.shape[0]
    L = target_variable.shape[1]
    V = params['out_w'].shape[1]

    pred, logp_flat, syms = pl.pallas_call(
        _nao_epd_kernel,
        in_specs=[_VMEM] * 16,
        out_specs=(_VMEM, _VMEM, _VMEM),
        out_shape=(jax.ShapeDtypeStruct((B, 1), jnp.float32),       # predict_value
                   jax.ShapeDtypeStruct((B, L * V), jnp.float32),   # log-probs slab
                   jax.ShapeDtypeStruct((B, L), jnp.int32)),        # greedy symbols
        cost_estimate=pl.CostEstimate(flops=800_000, transcendentals=8_000,
                                      bytes_accessed=60_000),
    )(input_variable, target_variable,
      params['enc_emb'], params['enc_w_ih'], params['enc_w_hh'], params['enc_b'],
      params['p0'], params['pfin'],
      params['dec_emb'], params['dec_w_ih'], params['dec_w_hh'], params['dec_b'],
      params['attn_w'], params['attn_b'], params['out_w'], params['out_b'])

    decoder_outputs = logp_flat.reshape(B, L, V)                    # (B, L, V)
    arch = syms[:, :, None]                                         # (B, L, 1) int32
    return pred, decoder_outputs, arch


# =========================== deterministic parameter init ===========================
def init_params(key):
    ks = jax.random.split(key, 12)

    def u(k, shape, dtype=jnp.bfloat16):
        # matmul-operand weights stored bf16 (MXU-native); biases stay f32
        return jax.random.uniform(k, shape, jnp.float32, -INIT_RANGE, INIT_RANGE).astype(dtype)

    return {
        'enc_emb':  u(ks[0], (ENC_VOCAB, ENC_EMB)),
        'enc_w_ih': u(ks[1], (ENC_EMB, 4 * ENC_HID)),
        'enc_w_hh': u(ks[2], (ENC_HID, 4 * ENC_HID)),
        'enc_b':    u(ks[3], (1, 4 * ENC_HID), jnp.float32),   # b_ih + b_hh pre-summed
        'p0':       u(ks[4], (ENC_HID, MLP_HID)),
        'pfin':     u(ks[5], (MLP_HID, 1)),
        'dec_emb':  u(ks[6], (DEC_VOCAB, DEC_HID)),
        'dec_w_ih': u(ks[7], (DEC_HID, 4 * DEC_HID)),
        'dec_w_hh': u(ks[8], (DEC_HID, 4 * DEC_HID)),
        'dec_b':    u(ks[9], (1, 4 * DEC_HID), jnp.float32),
        'attn_w':   u(ks[10], (2 * DEC_HID, DEC_HID)),
        'attn_b':   jnp.zeros((1, DEC_HID), jnp.float32),
        'out_w':    u(ks[11], (DEC_HID, DEC_VOCAB)),
        'out_b':    jnp.zeros((1, DEC_VOCAB), jnp.float32),
    }


if __name__ == "__main__":
    key = jax.random.PRNGKey(0)
    pkey, ikey, tkey = jax.random.split(key, 3)
    params = init_params(pkey)

    input_variable = jax.random.randint(ikey, (BATCH, SRC_LENGTH), 0, ENC_VOCAB, jnp.int32)
    target_variable = jax.random.randint(tkey, (BATCH, DEC_LENGTH), 0, DEC_VOCAB, jnp.int32)

    fwd = jax.jit(nao_epd_forward)
    predict_value, decoder_outputs, arch = fwd(params, input_variable, target_variable)
    jax.block_until_ready((predict_value, decoder_outputs, arch))

    assert predict_value.shape == (BATCH, 1)
    assert decoder_outputs.shape == (BATCH, DEC_LENGTH, DEC_VOCAB)
    assert arch.shape == (BATCH, DEC_LENGTH, 1)
    print("KERNEL_OK")
</pallas_src>

<mosaic_0001>
module attributes {stable_mosaic.version = 11 : i64} {
  func.func @_nao_epd_kernel(%arg0: memref<2x8xi32, #tpu.memory_space<vmem>>, %arg1: memref<2x8xi32, #tpu.memory_space<vmem>>, %arg2: memref<16x32xbf16, #tpu.memory_space<vmem>>, %arg3: memref<32x128xbf16, #tpu.memory_space<vmem>>, %arg4: memref<32x128xbf16, #tpu.memory_space<vmem>>, %arg5: memref<1x128xf32, #tpu.memory_space<vmem>>, %arg6: memref<32x32xbf16, #tpu.memory_space<vmem>>, %arg7: memref<32x1xbf16, #tpu.memory_space<vmem>>, %arg8: memref<16x32xbf16, #tpu.memory_space<vmem>>, %arg9: memref<32x128xbf16, #tpu.memory_space<vmem>>, %arg10: memref<32x128xbf16, #tpu.memory_space<vmem>>, %arg11: memref<1x128xf32, #tpu.memory_space<vmem>>, %arg12: memref<64x32xbf16, #tpu.memory_space<vmem>>, %arg13: memref<1x32xf32, #tpu.memory_space<vmem>>, %arg14: memref<32x16xbf16, #tpu.memory_space<vmem>>, %arg15: memref<1x16xf32, #tpu.memory_space<vmem>>, %arg16: memref<2x1xf32, #tpu.memory_space<vmem>>, %arg17: memref<2x128xf32, #tpu.memory_space<vmem>>, %arg18: memref<2x8xi32, #tpu.memory_space<vmem>>) attributes {dimension_semantics = [], scalar_prefetch = 0 : i64, scratch_operands = 0 : i64, tpu.core_type = #tpu.core_type<tc>} {
    %c0 = arith.constant 0 : index
    %c0_0 = arith.constant 0 : index
    %0 = vector.load %arg2[%c0, %c0_0] : memref<16x32xbf16, #tpu.memory_space<vmem>>, vector<16x32xbf16>
    %c0_1 = arith.constant 0 : index
    %c0_2 = arith.constant 0 : index
    %1 = vector.load %arg3[%c0_1, %c0_2] : memref<32x128xbf16, #tpu.memory_space<vmem>>, vector<32x128xbf16>
    %cst = arith.constant dense<0.000000e+00> : vector<16x128xf32>
    %2 = tpu.matmul %0, %1, %cst {dimension_numbers = #tpu.dot_dimension_numbers<[1], [0], [0], [1], [0, 0, 1, 1], [], []>} : vector<16x32xbf16>, vector<32x128xbf16>, vector<16x128xf32> -> vector<16x128xf32>
    %3 = arith.truncf %2 : vector<16x128xf32> to vector<16x128xbf16>
    %c0_3 = arith.constant 0 : index
    %c0_4 = arith.constant 0 : index
    %4 = vector.load %arg8[%c0_3, %c0_4] : memref<16x32xbf16, #tpu.memory_space<vmem>>, vector<16x32xbf16>
    %c0_5 = arith.constant 0 : index
    %c0_6 = arith.constant 0 : index
    %5 = vector.load %arg9[%c0_5, %c0_6] : memref<32x128xbf16, #tpu.memory_space<vmem>>, vector<32x128xbf16>
    %cst_7 = arith.constant dense<0.000000e+00> : vector<16x128xf32>
    %6 = tpu.matmul %4, %5, %cst_7 {dimension_numbers = #tpu.dot_dimension_numbers<[1], [0], [0], [1], [0, 0, 1, 1], [], []>} : vector<16x32xbf16>, vector<32x128xbf16>, vector<16x128xf32> -> vector<16x128xf32>
    %7 = arith.truncf %6 : vector<16x128xf32> to vector<16x128xbf16>
    %c0_8 = arith.constant 0 : index
    %c0_9 = arith.constant 0 : index
    %8 = vector.load %arg4[%c0_8, %c0_9] : memref<32x128xbf16, #tpu.memory_space<vmem>>, vector<32x128xbf16>
    %c0_10 = arith.constant 0 : index
    %c0_11 = arith.constant 0 : index
    %9 = vector.load %arg10[%c0_10, %c0_11] : memref<32x128xbf16, #tpu.memory_space<vmem>>, vector<32x128xbf16>
    %c0_12 = arith.constant 0 : index
    %c0_13 = arith.constant 0 : index
    %10 = vector.load %arg5[%c0_12, %c0_13] : memref<1x128xf32, #tpu.memory_space<vmem>>, vector<1x128xf32>
    %c0_14 = arith.constant 0 : index
    %c0_15 = arith.constant 0 : index
    %11 = vector.load %arg11[%c0_14, %c0_15] : memref<1x128xf32, #tpu.memory_space<vmem>>, vector<1x128xf32>
    %c0_16 = arith.constant 0 : index
    %c0_17 = arith.constant 0 : index
    %12 = vector.load %arg12[%c0_16, %c0_17] : memref<64x32xbf16, #tpu.memory_space<vmem>>, vector<64x32xbf16>
    %13 = vector.extract_strided_slice %12 {offsets = [0, 0], sizes = [32, 32], strides = [1, 1]} : vector<64x32xbf16> to vector<32x32xbf16>
    %14 = vector.extract_strided_slice %12 {offsets = [32, 0], sizes = [32, 32], strides = [1, 1]} : vector<64x32xbf16> to vector<32x32xbf16>
    %c0_18 = arith.constant 0 : index
    %c0_19 = arith.constant 0 : index
    %15 = vector.load %arg13[%c0_18, %c0_19] : memref<1x32xf32, #tpu.memory_space<vmem>>, vector<1x32xf32>
    %c0_20 = arith.constant 0 : index
    %c0_21 = arith.constant 0 : index
    %16 = vector.load %arg14[%c0_20, %c0_21] : memref<32x16xbf16, #tpu.memory_space<vmem>>, vector<32x16xbf16>
    %c0_22 = arith.constant 0 : index
    %c0_23 = arith.constant 0 : index
    %17 = vector.load %arg15[%c0_22, %c0_23] : memref<1x16xf32, #tpu.memory_space<vmem>>, vector<1x16xf32>
    %18 = tpu.iota {dimensions = array<i32: 1>} : vector<1x128xi32>
    %c64_i32 = arith.constant 64 : i32
    %19 = vector.broadcast %c64_i32 : i32 to vector<1x128xi32>
    %20 = arith.cmpi sge, %18, %19 : vector<1x128xi32>
    %c96_i32 = arith.constant 96 : i32
    %21 = vector.broadcast %c96_i32 : i32 to vector<1x128xi32>
    %22 = arith.cmpi slt, %18, %21 : vector<1x128xi32>
    %23 = arith.andi %20, %22 : vector<1x128xi1>
    %cst_24 = arith.constant 1.000000e+00 : f32
    %cst_25 = arith.constant 5.000000e-01 : f32
    %24 = vector.broadcast %cst_24 : f32 to vector<1x128xf32>
    %25 = vector.broadcast %cst_25 : f32 to vector<1x128xf32>
    %26 = arith.select %23, %24, %25 : vector<1x128xi1>, vector<1x128xf32>
    %27 = tpu.iota {dimensions = array<i32: 1>} : vector<2x16xi32>
    %28 = tpu.iota {dimensions = array<i32: 1>} : vector<2x16xi32>
    %c0_26 = arith.constant 0 : index
    %c0_27 = arith.constant 0 : index
    %29 = vector.load %arg0[%c0_26, %c0_27] : memref<2x8xi32, #tpu.memory_space<vmem>>, vector<2x8xi32>
    %30 = vector.extract_strided_slice %29 {offsets = [0, 0], sizes = [2, 1], strides = [1, 1]} : vector<2x8xi32> to vector<2x1xi32>
    %31 = vector.broadcast %30 : vector<2x1xi32> to vector<2x16xi32>
    %32 = arith.cmpi eq, %27, %31 : vector<2x16xi32>
    %33 = arith.extui %32 : vector<2x16xi1> to vector<2x16xi32>
    %34 = arith.sitofp %33 : vector<2x16xi32> to vector<2x16xf32>
    %35 = arith.truncf %34 : vector<2x16xf32> to vector<2x16xbf16>
    %cst_28 = arith.constant dense<0.000000e+00> : vector<2x128xf32>
    %36 = tpu.matmul %35, %3, %cst_28 {dimension_numbers = #tpu.dot_dimension_numbers<[1], [0], [0], [1], [0, 0, 1, 1], [], []>} : vector<2x16xbf16>, vector<16x128xbf16>, vector<2x128xf32> -> vector<2x128xf32>
    %37 = vector.broadcast %10 : vector<1x128xf32> to vector<2x128xf32>
    %38 = arith.addf %36, %37 : vector<2x128xf32>
    %39 = vector.extract_strided_slice %29 {offsets = [0, 1], sizes = [2, 1], strides = [1, 1]} : vector<2x8xi32> to vector<2x1xi32>
    %40 = vector.broadcast %39 : vector<2x1xi32> to vector<2x16xi32>
    %41 = arith.cmpi eq, %27, %40 : vector<2x16xi32>
    %42 = arith.extui %41 : vector<2x16xi1> to vector<2x16xi32>
    %43 = arith.sitofp %42 : vector<2x16xi32> to vector<2x16xf32>
    %44 = arith.truncf %43 : vector<2x16xf32> to vector<2x16xbf16>
    %cst_29 = arith.constant dense<0.000000e+00> : vector<2x128xf32>
    %45 = tpu.matmul %44, %3, %cst_29 {dimension_numbers = #tpu.dot_dimension_numbers<[1], [0], [0], [1], [0, 0, 1, 1], [], []>} : vector<2x16xbf16>, vector<16x128xbf16>, vector<2x128xf32> -> vector<2x128xf32>
    %46 = vector.broadcast %10 : vector<1x128xf32> to vector<2x128xf32>
    %47 = arith.addf %45, %46 : vector<2x128xf32>
    %48 = vector.extract_strided_slice %29 {offsets = [0, 2], sizes = [2, 1], strides = [1, 1]} : vector<2x8xi32> to vector<2x1xi32>
    %49 = vector.broadcast %48 : vector<2x1xi32> to vector<2x16xi32>
    %50 = arith.cmpi eq, %27, %49 : vector<2x16xi32>
    %51 = arith.extui %50 : vector<2x16xi1> to vector<2x16xi32>
    %52 = arith.sitofp %51 : vector<2x16xi32> to vector<2x16xf32>
    %53 = arith.truncf %52 : vector<2x16xf32> to vector<2x16xbf16>
    %cst_30 = arith.constant dense<0.000000e+00> : vector<2x128xf32>
    %54 = tpu.matmul %53, %3, %cst_30 {dimension_numbers = #tpu.dot_dimension_numbers<[1], [0], [0], [1], [0, 0, 1, 1], [], []>} : vector<2x16xbf16>, vector<16x128xbf16>, vector<2x128xf32> -> vector<2x128xf32>
    %55 = vector.broadcast %10 : vector<1x128xf32> to vector<2x128xf32>
    %56 = arith.addf %54, %55 : vector<2x128xf32>
    %57 = vector.extract_strided_slice %29 {offsets = [0, 3], sizes = [2, 1], strides = [1, 1]} : vector<2x8xi32> to vector<2x1xi32>
    %58 = vector.broadcast %57 : vector<2x1xi32> to vector<2x16xi32>
    %59 = arith.cmpi eq, %27, %58 : vector<2x16xi32>
    %60 = arith.extui %59 : vector<2x16xi1> to vector<2x16xi32>
    %61 = arith.sitofp %60 : vector<2x16xi32> to vector<2x16xf32>
    %62 = arith.truncf %61 : vector<2x16xf32> to vector<2x16xbf16>
    %cst_31 = arith.constant dense<0.000000e+00> : vector<2x128xf32>
    %63 = tpu.matmul %62, %3, %cst_31 {dimension_numbers = #tpu.dot_dimension_numbers<[1], [0], [0], [1], [0, 0, 1, 1], [], []>} : vector<2x16xbf16>, vector<16x128xbf16>, vector<2x128xf32> -> vector<2x128xf32>
    %64 = vector.broadcast %10 : vector<1x128xf32> to vector<2x128xf32>
    %65 = arith.addf %63, %64 : vector<2x128xf32>
    %66 = vector.extract_strided_slice %29 {offsets = [0, 4], sizes = [2, 1], strides = [1, 1]} : vector<2x8xi32> to vector<2x1xi32>
    %67 = vector.broadcast %66 : vector<2x1xi32> to vector<2x16xi32>
    %68 = arith.cmpi eq, %27, %67 : vector<2x16xi32>
    %69 = arith.extui %68 : vector<2x16xi1> to vector<2x16xi32>
    %70 = arith.sitofp %69 : vector<2x16xi32> to vector<2x16xf32>
    %71 = arith.truncf %70 : vector<2x16xf32> to vector<2x16xbf16>
    %cst_32 = arith.constant dense<0.000000e+00> : vector<2x128xf32>
    %72 = tpu.matmul %71, %3, %cst_32 {dimension_numbers = #tpu.dot_dimension_numbers<[1], [0], [0], [1], [0, 0, 1, 1], [], []>} : vector<2x16xbf16>, vector<16x128xbf16>, vector<2x128xf32> -> vector<2x128xf32>
    %73 = vector.broadcast %10 : vector<1x128xf32> to vector<2x128xf32>
    %74 = arith.addf %72, %73 : vector<2x128xf32>
    %75 = vector.extract_strided_slice %29 {offsets = [0, 5], sizes = [2, 1], strides = [1, 1]} : vector<2x8xi32> to vector<2x1xi32>
    %76 = vector.broadcast %75 : vector<2x1xi32> to vector<2x16xi32>
    %77 = arith.cmpi eq, %27, %76 : vector<2x16xi32>
    %78 = arith.extui %77 : vector<2x16xi1> to vector<2x16xi32>
    %79 = arith.sitofp %78 : vector<2x16xi32> to vector<2x16xf32>
    %80 = arith.truncf %79 : vector<2x16xf32> to vector<2x16xbf16>
    %cst_33 = arith.constant dense<0.000000e+00> : vector<2x128xf32>
    %81 = tpu.matmul %80, %3, %cst_33 {dimension_numbers = #tpu.dot_dimension_numbers<[1], [0], [0], [1], [0, 0, 1, 1], [], []>} : vector<2x16xbf16>, vector<16x128xbf16>, vector<2x128xf32> -> vector<2x128xf32>
    %82 = vector.broadcast %10 : vector<1x128xf32> to vector<2x128xf32>
    %83 = arith.addf %81, %82 : vector<2x128xf32>
    %84 = vector.extract_strided_slice %29 {offsets = [0, 6], sizes = [2, 1], strides = [1, 1]} : vector<2x8xi32> to vector<2x1xi32>
    %85 = vector.broadcast %84 : vector<2x1xi32> to vector<2x16xi32>
    %86 = arith.cmpi eq, %27, %85 : vector<2x16xi32>
    %87 = arith.extui %86 : vector<2x16xi1> to vector<2x16xi32>
    %88 = arith.sitofp %87 : vector<2x16xi32> to vector<2x16xf32>
    %89 = arith.truncf %88 : vector<2x16xf32> to vector<2x16xbf16>
    %cst_34 = arith.constant dense<0.000000e+00> : vector<2x128xf32>
    %90 = tpu.matmul %89, %3, %cst_34 {dimension_numbers = #tpu.dot_dimension_numbers<[1], [0], [0], [1], [0, 0, 1, 1], [], []>} : vector<2x16xbf16>, vector<16x128xbf16>, vector<2x128xf32> -> vector<2x128xf32>
    %91 = vector.broadcast %10 : vector<1x128xf32> to vector<2x128xf32>
    %92 = arith.addf %90, %91 : vector<2x128xf32>
    %93 = vector.extract_strided_slice %29 {offsets = [0, 7], sizes = [2, 1], strides = [1, 1]} : vector<2x8xi32> to vector<2x1xi32>
    %94 = vector.broadcast %93 : vector<2x1xi32> to vector<2x16xi32>
    %95 = arith.cmpi eq, %27, %94 : vector<2x16xi32>
    %96 = arith.extui %95 : vector<2x16xi1> to vector<2x16xi32>
    %97 = arith.sitofp %96 : vector<2x16xi32> to vector<2x16xf32>
    %98 = arith.truncf %97 : vector<2x16xf32> to vector<2x16xbf16>
    %cst_35 = arith.constant dense<0.000000e+00> : vector<2x128xf32>
    %99 = tpu.matmul %98, %3, %cst_35 {dimension_numbers = #tpu.dot_dimension_numbers<[1], [0], [0], [1], [0, 0, 1, 1], [], []>} : vector<2x16xbf16>, vector<16x128xbf16>, vector<2x128xf32> -> vector<2x128xf32>
    %100 = vector.broadcast %10 : vector<1x128xf32> to vector<2x128xf32>
    %101 = arith.addf %99, %100 : vector<2x128xf32>
    %102 = vector.broadcast %26 : vector<1x128xf32> to vector<2x128xf32>
    %103 = arith.mulf %38, %102 : vector<2x128xf32>
    %104 = math.tanh %103 : vector<2x128xf32>
    %105 = vector.extract_strided_slice %104 {offsets = [0, 0], sizes = [2, 32], strides = [1, 1]} : vector<2x128xf32> to vector<2x32xf32>
    %cst_36 = arith.constant 5.000000e-01 : f32
    %106 = vector.broadcast %cst_36 : f32 to vector<2x32xf32>
    %107 = arith.mulf %106, %105 : vector<2x32xf32>
    %cst_37 = arith.constant 5.000000e-01 : f32
    %108 = vector.broadcast %cst_37 : f32 to vector<2x32xf32>
    %109 = arith.addf %107, %108 : vector<2x32xf32>
    %110 = vector.extract_strided_slice %104 {offsets = [0, 64], sizes = [2, 32], strides = [1, 1]} : vector<2x128xf32> to vector<2x32xf32>
    %111 = vector.extract_strided_slice %104 {offsets = [0, 96], sizes = [2, 32], strides = [1, 1]} : vector<2x128xf32> to vector<2x32xf32>
    %cst_38 = arith.constant 5.000000e-01 : f32
    %112 = vector.broadcast %cst_38 : f32 to vector<2x32xf32>
    %113 = arith.mulf %112, %111 : vector<2x32xf32>
    %cst_39 = arith.constant 5.000000e-01 : f32
    %114 = vector.broadcast %cst_39 : f32 to vector<2x32xf32>
    %115 = arith.addf %113, %114 : vector<2x32xf32>
    %116 = arith.mulf %109, %110 : vector<2x32xf32>
    %117 = math.tanh %116 : vector<2x32xf32>
    %118 = arith.mulf %115, %117 : vector<2x32xf32>
    %119 = arith.mulf %118, %118 : vector<2x32xf32>
    %cst_40 = arith.constant dense<0.000000e+00> : vector<2xf32>
    %120 = vector.multi_reduction <add>, %119, %cst_40 [1] : vector<2x32xf32> to vector<2xf32>
    %121 = vector.shape_cast %120 : vector<2xf32> to vector<2x1xf32>
    %cst_41 = arith.constant 1.000000e-24 : f32
    %122 = vector.broadcast %cst_41 : f32 to vector<2x1xf32>
    %123 = arith.addf %121, %122 : vector<2x1xf32>
    %124 = math.rsqrt %123 : vector<2x1xf32>
    %125 = vector.broadcast %124 : vector<2x1xf32> to vector<2x32xf32>
    %126 = arith.mulf %118, %125 : vector<2x32xf32>
    %127 = arith.truncf %118 : vector<2x32xf32> to vector<2x32xbf16>
    %cst_42 = arith.constant dense<0.000000e+00> : vector<2x128xf32>
    %128 = tpu.matmul %127, %8, %cst_42 {dimension_numbers = #tpu.dot_dimension_numbers<[1], [0], [0], [1], [0, 0, 1, 1], [], []>} : vector<2x32xbf16>, vector<32x128xbf16>, vector<2x128xf32> -> vector<2x128xf32>
    %129 = arith.addf %47, %128 : vector<2x128xf32>
    %130 = vector.broadcast %26 : vector<1x128xf32> to vector<2x128xf32>
    %131 = arith.mulf %129, %130 : vector<2x128xf32>
    %132 = math.tanh %131 : vector<2x128xf32>
    %133 = vector.extract_strided_slice %132 {offsets = [0, 0], sizes = [2, 32], strides = [1, 1]} : vector<2x128xf32> to vector<2x32xf32>
    %cst_43 = arith.constant 5.000000e-01 : f32
    %134 = vector.broadcast %cst_43 : f32 to vector<2x32xf32>
    %135 = arith.mulf %134, %133 : vector<2x32xf32>
    %cst_44 = arith.constant 5.000000e-01 : f32
    %136 = vector.broadcast %cst_44 : f32 to vector<2x32xf32>
    %137 = arith.addf %135, %136 : vector<2x32xf32>
    %138 = vector.extract_strided_slice %132 {offsets = [0, 64], sizes = [2, 32], strides = [1, 1]} : vector<2x128xf32> to vector<2x32xf32>
    %139 = vector.extract_strided_slice %132 {offsets = [0, 96], sizes = [2, 32], strides = [1, 1]} : vector<2x128xf32> to vector<2x32xf32>
    %cst_45 = arith.constant 5.000000e-01 : f32
    %140 = vector.broadcast %cst_45 : f32 to vector<2x32xf32>
    %141 = arith.mulf %140, %139 : vector<2x32xf32>
    %cst_46 = arith.constant 5.000000e-01 : f32
    %142 = vector.broadcast %cst_46 : f32 to vector<2x32xf32>
    %143 = arith.addf %141, %142 : vector<2x32xf32>
    %144 = vector.extract_strided_slice %132 {offsets = [0, 32], sizes = [2, 32], strides = [1, 1]} : vector<2x128xf32> to vector<2x32xf32>
    %cst_47 = arith.constant 5.000000e-01 : f32
    %145 = vector.broadcast %cst_47 : f32 to vector<2x32xf32>
    %146 = arith.mulf %145, %144 : vector<2x32xf32>
    %cst_48 = arith.constant 5.000000e-01 : f32
    %147 = vector.broadcast %cst_48 : f32 to vector<2x32xf32>
    %148 = arith.addf %146, %147 : vector<2x32xf32>
    %149 = arith.mulf %148, %116 : vector<2x32xf32>
    %150 = arith.mulf %137, %138 : vector<2x32xf32>
    %151 = arith.addf %149, %150 : vector<2x32xf32>
    %152 = math.tanh %151 : vector<2x32xf32>
    %153 = arith.mulf %143, %152 : vector<2x32xf32>
    %154 = arith.mulf %153, %153 : vector<2x32xf32>
    %cst_49 = arith.constant dense<0.000000e+00> : vector<2xf32>
    %155 = vector.multi_reduction <add>, %154, %cst_49 [1] : vector<2x32xf32> to vector<2xf32>
    %156 = vector.shape_cast %155 : vector<2xf32> to vector<2x1xf32>
    %cst_50 = arith.constant 1.000000e-24 : f32
    %157 = vector.broadcast %cst_50 : f32 to vector<2x1xf32>
    %158 = arith.addf %156, %157 : vector<2x1xf32>
    %159 = math.rsqrt %158 : vector<2x1xf32>
    %160 = vector.broadcast %159 : vector<2x1xf32> to vector<2x32xf32>
    %161 = arith.mulf %153, %160 : vector<2x32xf32>
    %162 = arith.addf %126, %161 : vector<2x32xf32>
    %163 = arith.truncf %153 : vector<2x32xf32> to vector<2x32xbf16>
    %cst_51 = arith.constant dense<0.000000e+00> : vector<2x128xf32>
    %164 = tpu.matmul %163, %8, %cst_51 {dimension_numbers = #tpu.dot_dimension_numbers<[1], [0], [0], [1], [0, 0, 1, 1], [], []>} : vector<2x32xbf16>, vector<32x128xbf16>, vector<2x128xf32> -> vector<2x128xf32>
    %165 = arith.addf %56, %164 : vector<2x128xf32>
    %166 = vector.broadcast %26 : vector<1x128xf32> to vector<2x128xf32>
    %167 = arith.mulf %165, %166 : vector<2x128xf32>
    %168 = math.tanh %167 : vector<2x128xf32>
    %169 = vector.extract_strided_slice %168 {offsets = [0, 0], sizes = [2, 32], strides = [1, 1]} : vector<2x128xf32> to vector<2x32xf32>
    %cst_52 = arith.constant 5.000000e-01 : f32
    %170 = vector.broadcast %cst_52 : f32 to vector<2x32xf32>
    %171 = arith.mulf %170, %169 : vector<2x32xf32>
    %cst_53 = arith.constant 5.000000e-01 : f32
    %172 = vector.broadcast %cst_53 : f32 to vector<2x32xf32>
    %173 = arith.addf %171, %172 : vector<2x32xf32>
    %174 = vector.extract_strided_slice %168 {offsets = [0, 64], sizes = [2, 32], strides = [1, 1]} : vector<2x128xf32> to vector<2x32xf32>
    %175 = vector.extract_strided_slice %168 {offsets = [0, 96], sizes = [2, 32], strides = [1, 1]} : vector<2x128xf32> to vector<2x32xf32>
    %cst_54 = arith.constant 5.000000e-01 : f32
    %176 = vector.broadcast %cst_54 : f32 to vector<2x32xf32>
    %177 = arith.mulf %176, %175 : vector<2x32xf32>
    %cst_55 = arith.constant 5.000000e-01 : f32
    %178 = vector.broadcast %cst_55 : f32 to vector<2x32xf32>
    %179 = arith.addf %177, %178 : vector<2x32xf32>
    %180 = vector.extract_strided_slice %168 {offsets = [0, 32], sizes = [2, 32], strides = [1, 1]} : vector<2x128xf32> to vector<2x32xf32>
    %cst_56 = arith.constant 5.000000e-01 : f32
    %181 = vector.broadcast %cst_56 : f32 to vector<2x32xf32>
    %182 = arith.mulf %181, %180 : vector<2x32xf32>
    %cst_57 = arith.constant 5.000000e-01 : f32
    %183 = vector.broadcast %cst_57 : f32 to vector<2x32xf32>
    %184 = arith.addf %182, %183 : vector<2x32xf32>
    %185 = arith.mulf %184, %151 : vector<2x32xf32>
    %186 = arith.mulf %173, %174 : vector<2x32xf32>
    %187 = arith.addf %185, %186 : vector<2x32xf32>
    %188 = math.tanh %187 : vector<2x32xf32>
    %189 = arith.mulf %179, %188 : vector<2x32xf32>
    %190 = arith.mulf %189, %189 : vector<2x32xf32>
    %cst_58 = arith.constant dense<0.000000e+00> : vector<2xf32>
    %191 = vector.multi_reduction <add>, %190, %cst_58 [1] : vector<2x32xf32> to vector<2xf32>
    %192 = vector.shape_cast %191 : vector<2xf32> to vector<2x1xf32>
    %cst_59 = arith.constant 1.000000e-24 : f32
    %193 = vector.broadcast %cst_59 : f32 to vector<2x1xf32>
    %194 = arith.addf %192, %193 : vector<2x1xf32>
    %195 = math.rsqrt %194 : vector<2x1xf32>
    %196 = vector.broadcast %195 : vector<2x1xf32> to vector<2x32xf32>
    %197 = arith.mulf %189, %196 : vector<2x32xf32>
    %198 = arith.addf %162, %197 : vector<2x32xf32>
    %199 = arith.truncf %189 : vector<2x32xf32> to vector<2x32xbf16>
    %cst_60 = arith.constant dense<0.000000e+00> : vector<2x128xf32>
    %200 = tpu.matmul %199, %8, %cst_60 {dimension_numbers = #tpu.dot_dimension_numbers<[1], [0], [0], [1], [0, 0, 1, 1], [], []>} : vector<2x32xbf16>, vector<32x128xbf16>, vector<2x128xf32> -> vector<2x128xf32>
    %201 = arith.addf %65, %200 : vector<2x128xf32>
    %202 = vector.broadcast %26 : vector<1x128xf32> to vector<2x128xf32>
    %203 = arith.mulf %201, %202 : vector<2x128xf32>
    %204 = math.tanh %203 : vector<2x128xf32>
    %205 = vector.extract_strided_slice %204 {offsets = [0, 0], sizes = [2, 32], strides = [1, 1]} : vector<2x128xf32> to vector<2x32xf32>
    %cst_61 = arith.constant 5.000000e-01 : f32
    %206 = vector.broadcast %cst_61 : f32 to vector<2x32xf32>
    %207 = arith.mulf %206, %205 : vector<2x32xf32>
    %cst_62 = arith.constant 5.000000e-01 : f32
    %208 = vector.broadcast %cst_62 : f32 to vector<2x32xf32>
    %209 = arith.addf %207, %208 : vector<2x32xf32>
    %210 = vector.extract_strided_slice %204 {offsets = [0, 64], sizes = [2, 32], strides = [1, 1]} : vector<2x128xf32> to vector<2x32xf32>
    %211 = vector.extract_strided_slice %204 {offsets = [0, 96], sizes = [2, 32], strides = [1, 1]} : vector<2x128xf32> to vector<2x32xf32>
    %cst_63 = arith.constant 5.000000e-01 : f32
    %212 = vector.broadcast %cst_63 : f32 to vector<2x32xf32>
    %213 = arith.mulf %212, %211 : vector<2x32xf32>
    %cst_64 = arith.constant 5.000000e-01 : f32
    %214 = vector.broadcast %cst_64 : f32 to vector<2x32xf32>
    %215 = arith.addf %213, %214 : vector<2x32xf32>
    %216 = vector.extract_strided_slice %204 {offsets = [0, 32], sizes = [2, 32], strides = [1, 1]} : vector<2x128xf32> to vector<2x32xf32>
    %cst_65 = arith.constant 5.000000e-01 : f32
    %217 = vector.broadcast %cst_65 : f32 to vector<2x32xf32>
    %218 = arith.mulf %217, %216 : vector<2x32xf32>
    %cst_66 = arith.constant 5.000000e-01 : f32
    %219 = vector.broadcast %cst_66 : f32 to vector<2x32xf32>
    %220 = arith.addf %218, %219 : vector<2x32xf32>
    %221 = arith.mulf %220, %187 : vector<2x32xf32>
    %222 = arith.mulf %209, %210 : vector<2x32xf32>
    %223 = arith.addf %221, %222 : vector<2x32xf32>
    %224 = math.tanh %223 : vector<2x32xf32>
    %225 = arith.mulf %215, %224 : vector<2x32xf32>
    %226 = arith.mulf %225, %225 : vector<2x32xf32>
    %cst_67 = arith.constant dense<0.000000e+00> : vector<2xf32>
    %227 = vector.multi_reduction <add>, %226, %cst_67 [1] : vector<2x32xf32> to vector<2xf32>
    %228 = vector.shape_cast %227 : vector<2xf32> to vector<2x1xf32>
    %cst_68 = arith.constant 1.000000e-24 : f32
    %229 = vector.broadcast %cst_68 : f32 to vector<2x1xf32>
    %230 = arith.addf %228, %229 : vector<2x1xf32>
    %231 = math.rsqrt %230 : vector<2x1xf32>
    %232 = vector.broadcast %231 : vector<2x1xf32> to vector<2x32xf32>
    %233 = arith.mulf %225, %232 : vector<2x32xf32>
    %234 = arith.addf %198, %233 : vector<2x32xf32>
    %235 = arith.truncf %225 : vector<2x32xf32> to vector<2x32xbf16>
    %cst_69 = arith.constant dense<0.000000e+00> : vector<2x128xf32>
    %236 = tpu.matmul %235, %8, %cst_69 {dimension_numbers = #tpu.dot_dimension_numbers<[1], [0], [0], [1], [0, 0, 1, 1], [], []>} : vector<2x32xbf16>, vector<32x128xbf16>, vector<2x128xf32> -> vector<2x128xf32>
    %237 = arith.addf %74, %236 : vector<2x128xf32>
    %238 = vector.broadcast %26 : vector<1x128xf32> to vector<2x128xf32>
    %239 = arith.mulf %237, %238 : vector<2x128xf32>
    %240 = math.tanh %239 : vector<2x128xf32>
    %241 = vector.extract_strided_slice %240 {offsets = [0, 0], sizes = [2, 32], strides = [1, 1]} : vector<2x128xf32> to vector<2x32xf32>
    %cst_70 = arith.constant 5.000000e-01 : f32
    %242 = vector.broadcast %cst_70 : f32 to vector<2x32xf32>
    %243 = arith.mulf %242, %241 : vector<2x32xf32>
    %cst_71 = arith.constant 5.000000e-01 : f32
    %244 = vector.broadcast %cst_71 : f32 to vector<2x32xf32>
    %245 = arith.addf %243, %244 : vector<2x32xf32>
    %246 = vector.extract_strided_slice %240 {offsets = [0, 64], sizes = [2, 32], strides = [1, 1]} : vector<2x128xf32> to vector<2x32xf32>
    %247 = vector.extract_strided_slice %240 {offsets = [0, 96], sizes = [2, 32], strides = [1, 1]} : vector<2x128xf32> to vector<2x32xf32>
    %cst_72 = arith.constant 5.000000e-01 : f32
    %248 = vector.broadcast %cst_72 : f32 to vector<2x32xf32>
    %249 = arith.mulf %248, %247 : vector<2x32xf32>
    %cst_73 = arith.constant 5.000000e-01 : f32
    %250 = vector.broadcast %cst_73 : f32 to vector<2x32xf32>
    %251 = arith.addf %249, %250 : vector<2x32xf32>
    %252 = vector.extract_strided_slice %240 {offsets = [0, 32], sizes = [2, 32], strides = [1, 1]} : vector<2x128xf32> to vector<2x32xf32>
    %cst_74 = arith.constant 5.000000e-01 : f32
    %253 = vector.broadcast %cst_74 : f32 to vector<2x32xf32>
    %254 = arith.mulf %253, %252 : vector<2x32xf32>
    %cst_75 = arith.constant 5.000000e-01 : f32
    %255 = vector.broadcast %cst_75 : f32 to vector<2x32xf32>
    %256 = arith.addf %254, %255 : vector<2x32xf32>
    %257 = arith.mulf %256, %223 : vector<2x32xf32>
    %258 = arith.mulf %245, %246 : vector<2x32xf32>
    %259 = arith.addf %257, %258 : vector<2x32xf32>
    %260 = math.tanh %259 : vector<2x32xf32>
    %261 = arith.mulf %251, %260 : vector<2x32xf32>
    %262 = arith.mulf %261, %261 : vector<2x32xf32>
    %cst_76 = arith.constant dense<0.000000e+00> : vector<2xf32>
    %263 = vector.multi_reduction <add>, %262, %cst_76 [1] : vector<2x32xf32> to vector<2xf32>
    %264 = vector.shape_cast %263 : vector<2xf32> to vector<2x1xf32>
    %cst_77 = arith.constant 1.000000e-24 : f32
    %265 = vector.broadcast %cst_77 : f32 to vector<2x1xf32>
    %266 = arith.addf %264, %265 : vector<2x1xf32>
    %267 = math.rsqrt %266 : vector<2x1xf32>
    %268 = vector.broadcast %267 : vector<2x1xf32> to vector<2x32xf32>
    %269 = arith.mulf %261, %268 : vector<2x32xf32>
    %270 = arith.addf %234, %269 : vector<2x32xf32>
    %271 = arith.truncf %261 : vector<2x32xf32> to vector<2x32xbf16>
    %cst_78 = arith.constant dense<0.000000e+00> : vector<2x128xf32>
    %272 = tpu.matmul %271, %8, %cst_78 {dimension_numbers = #tpu.dot_dimension_numbers<[1], [0], [0], [1], [0, 0, 1, 1], [], []>} : vector<2x32xbf16>, vector<32x128xbf16>, vector<2x128xf32> -> vector<2x128xf32>
    %273 = arith.addf %83, %272 : vector<2x128xf32>
    %274 = vector.broadcast %26 : vector<1x128xf32> to vector<2x128xf32>
    %275 = arith.mulf %273, %274 : vector<2x128xf32>
    %276 = math.tanh %275 : vector<2x128xf32>
    %277 = vector.extract_strided_slice %276 {offsets = [0, 0], sizes = [2, 32], strides = [1, 1]} : vector<2x128xf32> to vector<2x32xf32>
    %cst_79 = arith.constant 5.000000e-01 : f32
    %278 = vector.broadcast %cst_79 : f32 to vector<2x32xf32>
    %279 = arith.mulf %278, %277 : vector<2x32xf32>
    %cst_80 = arith.constant 5.000000e-01 : f32
    %280 = vector.broadcast %cst_80 : f32 to vector<2x32xf32>
    %281 = arith.addf %279, %280 : vector<2x32xf32>
    %282 = vector.extract_strided_slice %276 {offsets = [0, 64], sizes = [2, 32], strides = [1, 1]} : vector<2x128xf32> to vector<2x32xf32>
    %283 = vector.extract_strided_slice %276 {offsets = [0, 96], sizes = [2, 32], strides = [1, 1]} : vector<2x128xf32> to vector<2x32xf32>
    %cst_81 = arith.constant 5.000000e-01 : f32
    %284 = vector.broadcast %cst_81 : f32 to vector<2x32xf32>
    %285 = arith.mulf %284, %283 : vector<2x32xf32>
    %cst_82 = arith.constant 5.000000e-01 : f32
    %286 = vector.broadcast %cst_82 : f32 to vector<2x32xf32>
    %287 = arith.addf %285, %286 : vector<2x32xf32>
    %288 = vector.extract_strided_slice %276 {offsets = [0, 32], sizes = [2, 32], strides = [1, 1]} : vector<2x128xf32> to vector<2x32xf32>
    %cst_83 = arith.constant 5.000000e-01 : f32
    %289 = vector.broadcast %cst_83 : f32 to vector<2x32xf32>
    %290 = arith.mulf %289, %288 : vector<2x32xf32>
    %cst_84 = arith.constant 5.000000e-01 : f32
    %291 = vector.broadcast %cst_84 : f32 to vector<2x32xf32>
    %292 = arith.addf %290, %291 : vector<2x32xf32>
    %293 = arith.mulf %292, %259 : vector<2x32xf32>
    %294 = arith.mulf %281, %282 : vector<2x32xf32>
    %295 = arith.addf %293, %294 : vector<2x32xf32>
    %296 = math.tanh %295 : vector<2x32xf32>
    %297 = arith.mulf %287, %296 : vector<2x32xf32>
    %298 = arith.mulf %297, %297 : vector<2x32xf32>
    %cst_85 = arith.constant dense<0.000000e+00> : vector<2xf32>
    %299 = vector.multi_reduction <add>, %298, %cst_85 [1] : vector<2x32xf32> to vector<2xf32>
    %300 = vector.shape_cast %299 : vector<2xf32> to vector<2x1xf32>
    %cst_86 = arith.constant 1.000000e-24 : f32
    %301 = vector.broadcast %cst_86 : f32 to vector<2x1xf32>
    %302 = arith.addf %300, %301 : vector<2x1xf32>
    %303 = math.rsqrt %302 : vector<2x1xf32>
    %304 = vector.broadcast %303 : vector<2x1xf32> to vector<2x32xf32>
    %305 = arith.mulf %297, %304 : vector<2x32xf32>
    %306 = arith.addf %270, %305 : vector<2x32xf32>
    %307 = arith.truncf %297 : vector<2x32xf32> to vector<2x32xbf16>
    %cst_87 = arith.constant dense<0.000000e+00> : vector<2x128xf32>
    %308 = tpu.matmul %307, %8, %cst_87 {dimension_numbers = #tpu.dot_dimension_numbers<[1], [0], [0], [1], [0, 0, 1, 1], [], []>} : vector<2x32xbf16>, vector<32x128xbf16>, vector<2x128xf32> -> vector<2x128xf32>
    %309 = arith.addf %92, %308 : vector<2x128xf32>
    %310 = vector.broadcast %26 : vector<1x128xf32> to vector<2x128xf32>
    %311 = arith.mulf %309, %310 : vector<2x128xf32>
    %312 = math.tanh %311 : vector<2x128xf32>
    %313 = vector.extract_strided_slice %312 {offsets = [0, 0], sizes = [2, 32], strides = [1, 1]} : vector<2x128xf32> to vector<2x32xf32>
    %cst_88 = arith.constant 5.000000e-01 : f32
    %314 = vector.broadcast %cst_88 : f32 to vector<2x32xf32>
    %315 = arith.mulf %314, %313 : vector<2x32xf32>
    %cst_89 = arith.constant 5.000000e-01 : f32
    %316 = vector.broadcast %cst_89 : f32 to vector<2x32xf32>
    %317 = arith.addf %315, %316 : vector<2x32xf32>
    %318 = vector.extract_strided_slice %312 {offsets = [0, 64], sizes = [2, 32], strides = [1, 1]} : vector<2x128xf32> to vector<2x32xf32>
    %319 = vector.extract_strided_slice %312 {offsets = [0, 96], sizes = [2, 32], strides = [1, 1]} : vector<2x128xf32> to vector<2x32xf32>
    %cst_90 = arith.constant 5.000000e-01 : f32
    %320 = vector.broadcast %cst_90 : f32 to vector<2x32xf32>
    %321 = arith.mulf %320, %319 : vector<2x32xf32>
    %cst_91 = arith.constant 5.000000e-01 : f32
    %322 = vector.broadcast %cst_91 : f32 to vector<2x32xf32>
    %323 = arith.addf %321, %322 : vector<2x32xf32>
    %324 = vector.extract_strided_slice %312 {offsets = [0, 32], sizes = [2, 32], strides = [1, 1]} : vector<2x128xf32> to vector<2x32xf32>
    %cst_92 = arith.constant 5.000000e-01 : f32
    %325 = vector.broadcast %cst_92 : f32 to vector<2x32xf32>
    %326 = arith.mulf %325, %324 : vector<2x32xf32>
    %cst_93 = arith.constant 5.000000e-01 : f32
    %327 = vector.broadcast %cst_93 : f32 to vector<2x32xf32>
    %328 = arith.addf %326, %327 : vector<2x32xf32>
    %329 = arith.mulf %328, %295 : vector<2x32xf32>
    %330 = arith.mulf %317, %318 : vector<2x32xf32>
    %331 = arith.addf %329, %330 : vector<2x32xf32>
    %332 = math.tanh %331 : vector<2x32xf32>
    %333 = arith.mulf %323, %332 : vector<2x32xf32>
    %334 = arith.mulf %333, %333 : vector<2x32xf32>
    %cst_94 = arith.constant dense<0.000000e+00> : vector<2xf32>
    %335 = vector.multi_reduction <add>, %334, %cst_94 [1] : vector<2x32xf32> to vector<2xf32>
    %336 = vector.shape_cast %335 : vector<2xf32> to vector<2x1xf32>
    %cst_95 = arith.constant 1.000000e-24 : f32
    %337 = vector.broadcast %cst_95 : f32 to vector<2x1xf32>
    %338 = arith.addf %336, %337 : vector<2x1xf32>
    %339 = math.rsqrt %338 : vector<2x1xf32>
    %340 = vector.broadcast %339 : vector<2x1xf32> to vector<2x32xf32>
    %341 = arith.mulf %333, %340 : vector<2x32xf32>
    %342 = arith.addf %306, %341 : vector<2x32xf32>
    %343 = arith.truncf %333 : vector<2x32xf32> to vector<2x32xbf16>
    %cst_96 = arith.constant dense<0.000000e+00> : vector<2x128xf32>
    %344 = tpu.matmul %343, %8, %cst_96 {dimension_numbers = #tpu.dot_dimension_numbers<[1], [0], [0], [1], [0, 0, 1, 1], [], []>} : vector<2x32xbf16>, vector<32x128xbf16>, vector<2x128xf32> -> vector<2x128xf32>
    %345 = arith.addf %101, %344 : vector<2x128xf32>
    %346 = vector.broadcast %26 : vector<1x128xf32> to vector<2x128xf32>
    %347 = arith.mulf %345, %346 : vector<2x128xf32>
    %348 = math.tanh %347 : vector<2x128xf32>
    %349 = vector.extract_strided_slice %348 {offsets = [0, 0], sizes = [2, 32], strides = [1, 1]} : vector<2x128xf32> to vector<2x32xf32>
    %cst_97 = arith.constant 5.000000e-01 : f32
    %350 = vector.broadcast %cst_97 : f32 to vector<2x32xf32>
    %351 = arith.mulf %350, %349 : vector<2x32xf32>
    %cst_98 = arith.constant 5.000000e-01 : f32
    %352 = vector.broadcast %cst_98 : f32 to vector<2x32xf32>
    %353 = arith.addf %351, %352 : vector<2x32xf32>
    %354 = vector.extract_strided_slice %348 {offsets = [0, 64], sizes = [2, 32], strides = [1, 1]} : vector<2x128xf32> to vector<2x32xf32>
    %355 = vector.extract_strided_slice %348 {offsets = [0, 96], sizes = [2, 32], strides = [1, 1]} : vector<2x128xf32> to vector<2x32xf32>
    %cst_99 = arith.constant 5.000000e-01 : f32
    %356 = vector.broadcast %cst_99 : f32 to vector<2x32xf32>
    %357 = arith.mulf %356, %355 : vector<2x32xf32>
    %cst_100 = arith.constant 5.000000e-01 : f32
    %358 = vector.broadcast %cst_100 : f32 to vector<2x32xf32>
    %359 = arith.addf %357, %358 : vector<2x32xf32>
    %360 = vector.extract_strided_slice %348 {offsets = [0, 32], sizes = [2, 32], strides = [1, 1]} : vector<2x128xf32> to vector<2x32xf32>
    %cst_101 = arith.constant 5.000000e-01 : f32
    %361 = vector.broadcast %cst_101 : f32 to vector<2x32xf32>
    %362 = arith.mulf %361, %360 : vector<2x32xf32>
    %cst_102 = arith.constant 5.000000e-01 : f32
    %363 = vector.broadcast %cst_102 : f32 to vector<2x32xf32>
    %364 = arith.addf %362, %363 : vector<2x32xf32>
    %365 = arith.mulf %364, %331 : vector<2x32xf32>
    %366 = arith.mulf %353, %354 : vector<2x32xf32>
    %367 = arith.addf %365, %366 : vector<2x32xf32>
    %368 = math.tanh %367 : vector<2x32xf32>
    %369 = arith.mulf %359, %368 : vector<2x32xf32>
    %370 = arith.mulf %369, %369 : vector<2x32xf32>
    %cst_103 = arith.constant dense<0.000000e+00> : vector<2xf32>
    %371 = vector.multi_reduction <add>, %370, %cst_103 [1] : vector<2x32xf32> to vector<2xf32>
    %372 = vector.shape_cast %371 : vector<2xf32> to vector<2x1xf32>
    %cst_104 = arith.constant 1.000000e-24 : f32
    %373 = vector.broadcast %cst_104 : f32 to vector<2x1xf32>
    %374 = arith.addf %372, %373 : vector<2x1xf32>
    %375 = math.rsqrt %374 : vector<2x1xf32>
    %376 = vector.broadcast %375 : vector<2x1xf32> to vector<2x32xf32>
    %377 = arith.mulf %369, %376 : vector<2x32xf32>
    %378 = arith.addf %342, %377 : vector<2x32xf32>
    %cst_105 = arith.constant 1.250000e-01 : f32
    %379 = vector.broadcast %cst_105 : f32 to vector<2x32xf32>
    %380 = arith.mulf %378, %379 : vector<2x32xf32>
    %381 = arith.mulf %380, %380 : vector<2x32xf32>
    %cst_106 = arith.constant dense<0.000000e+00> : vector<2xf32>
    %382 = vector.multi_reduction <add>, %381, %cst_106 [1] : vector<2x32xf32> to vector<2xf32>
    %383 = vector.shape_cast %382 : vector<2xf32> to vector<2x1xf32>
    %cst_107 = arith.constant 1.000000e-24 : f32
    %384 = vector.broadcast %cst_107 : f32 to vector<2x1xf32>
    %385 = arith.addf %383, %384 : vector<2x1xf32>
    %386 = math.rsqrt %385 : vector<2x1xf32>
    %387 = vector.broadcast %386 : vector<2x1xf32> to vector<2x32xf32>
    %388 = arith.mulf %380, %387 : vector<2x32xf32>
    %389 = arith.truncf %388 : vector<2x32xf32> to vector<2x32xbf16>
    %c0_108 = arith.constant 0 : index
    %c0_109 = arith.constant 0 : index
    %390 = vector.load %arg6[%c0_108, %c0_109] : memref<32x32xbf16, #tpu.memory_space<vmem>>, vector<32x32xbf16>
    %cst_110 = arith.constant dense<0.000000e+00> : vector<2x32xf32>
    %391 = tpu.matmul %389, %390, %cst_110 {dimension_numbers = #tpu.dot_dimension_numbers<[1], [0], [0], [1], [0, 0, 1, 1], [], []>} : vector<2x32xbf16>, vector<32x32xbf16>, vector<2x32xf32> -> vector<2x32xf32>
    %cst_111 = arith.constant 0.000000e+00 : f32
    %392 = vector.broadcast %cst_111 : f32 to vector<2x32xf32>
    %393 = arith.maximumf %391, %392 : vector<2x32xf32>
    %394 = arith.truncf %393 : vector<2x32xf32> to vector<2x32xbf16>
    %c0_112 = arith.constant 0 : index
    %c0_113 = arith.constant 0 : index
    %395 = vector.load %arg7[%c0_112, %c0_113] : memref<32x1xbf16, #tpu.memory_space<vmem>>, vector<32x1xbf16>
    %cst_114 = arith.constant dense<0.000000e+00> : vector<2x1xf32>
    %396 = tpu.matmul %394, %395, %cst_114 {dimension_numbers = #tpu.dot_dimension_numbers<[1], [0], [0], [1], [0, 0, 1, 1], [], []>} : vector<2x32xbf16>, vector<32x1xbf16>, vector<2x1xf32> -> vector<2x1xf32>
    %397 = arith.negf %396 : vector<2x1xf32>
    %398 = math.exp %397 : vector<2x1xf32>
    %cst_115 = arith.constant 1.000000e+00 : f32
    %399 = vector.broadcast %cst_115 : f32 to vector<2x1xf32>
    %400 = arith.addf %399, %398 : vector<2x1xf32>
    %401 = arith.divf %399, %400 : vector<2x1xf32>
    %c0_116 = arith.constant 0 : index
    %c0_117 = arith.constant 0 : index
    %402 = vector.load %arg16[%c0_116, %c0_117] : memref<2x1xf32, #tpu.memory_space<vmem>>, vector<2x1xf32>
    tpu.vector_store %arg16[%c0_116, %c0_117], %401 {strides = array<i32>} : memref<2x1xf32, #tpu.memory_space<vmem>>, vector<2x1xf32>,
    %403 = tpu.concatenate %126, %161, %197, %233, %269, %305, %341, %377 in 0 : vector<2x32xf32>, vector<2x32xf32>, vector<2x32xf32>, vector<2x32xf32>, vector<2x32xf32>, vector<2x32xf32>, vector<2x32xf32>, vector<2x32xf32> -> vector<16x32xf32>
    %404 = arith.truncf %403 : vector<16x32xf32> to vector<16x32xbf16>
    %405 = tpu.iota {dimensions = array<i32: 1>} : vector<2x16xi32>
    %406 = tpu.iota {dimensions = array<i32: 0>} : vector<2x16xi32>
    %c1_i32 = arith.constant 1 : i32
    %407 = vector.broadcast %c1_i32 : i32 to vector<2x16xi32>
    %408 = arith.andi %405, %407 : vector<2x16xi32>
    %409 = arith.cmpi eq, %408, %406 : vector<2x16xi32>
    %cst_118 = arith.constant 0.000000e+00 : f32
    %cst_119 = arith.constant -1.000000e+30 : f32
    %410 = vector.broadcast %cst_118 : f32 to vector<2x16xf32>
    %411 = vector.broadcast %cst_119 : f32 to vector<2x16xf32>
    %412 = arith.select %409, %410, %411 : vector<2x16xi1>, vector<2x16xf32>
    %c0_120 = arith.constant 0 : index
    %c0_121 = arith.constant 0 : index
    %413 = vector.load %arg1[%c0_120, %c0_121] : memref<2x8xi32, #tpu.memory_space<vmem>>, vector<2x8xi32>
    %414 = vector.extract_strided_slice %413 {offsets = [0, 0], sizes = [2, 1], strides = [1, 1]} : vector<2x8xi32> to vector<2x1xi32>
    %415 = vector.broadcast %414 : vector<2x1xi32> to vector<2x16xi32>
    %416 = arith.cmpi eq, %28, %415 : vector<2x16xi32>
    %417 = arith.extui %416 : vector<2x16xi1> to vector<2x16xi32>
    %418 = arith.sitofp %417 : vector<2x16xi32> to vector<2x16xf32>
    %419 = arith.truncf %418 : vector<2x16xf32> to vector<2x16xbf16>
    %cst_122 = arith.constant dense<0.000000e+00> : vector<2x128xf32>
    %420 = tpu.matmul %419, %7, %cst_122 {dimension_numbers = #tpu.dot_dimension_numbers<[1], [0], [0], [1], [0, 0, 1, 1], [], []>} : vector<2x16xbf16>, vector<16x128xbf16>, vector<2x128xf32> -> vector<2x128xf32>
    %421 = arith.truncf %388 : vector<2x32xf32> to vector<2x32xbf16>
    %cst_123 = arith.constant dense<0.000000e+00> : vector<2x128xf32>
    %422 = tpu.matmul %421, %9, %cst_123 {dimension_numbers = #tpu.dot_dimension_numbers<[1], [0], [0], [1], [0, 0, 1, 1], [], []>} : vector<2x32xbf16>, vector<32x128xbf16>, vector<2x128xf32> -> vector<2x128xf32>
    %423 = arith.addf %420, %422 : vector<2x128xf32>
    %424 = vector.broadcast %11 : vector<1x128xf32> to vector<2x128xf32>
    %425 = arith.addf %423, %424 : vector<2x128xf32>
    %426 = vector.broadcast %26 : vector<1x128xf32> to vector<2x128xf32>
    %427 = arith.mulf %425, %426 : vector<2x128xf32>
    %428 = math.tanh %427 : vector<2x128xf32>
    %429 = vector.extract_strided_slice %428 {offsets = [0, 0], sizes = [2, 32], strides = [1, 1]} : vector<2x128xf32> to vector<2x32xf32>
    %cst_124 = arith.constant 5.000000e-01 : f32
    %430 = vector.broadcast %cst_124 : f32 to vector<2x32xf32>
    %431 = arith.mulf %430, %429 : vector<2x32xf32>
    %cst_125 = arith.constant 5.000000e-01 : f32
    %432 = vector.broadcast %cst_125 : f32 to vector<2x32xf32>
    %433 = arith.addf %431, %432 : vector<2x32xf32>
    %434 = vector.extract_strided_slice %428 {offsets = [0, 64], sizes = [2, 32], strides = [1, 1]} : vector<2x128xf32> to vector<2x32xf32>
    %435 = vector.extract_strided_slice %428 {offsets = [0, 96], sizes = [2, 32], strides = [1, 1]} : vector<2x128xf32> to vector<2x32xf32>
    %cst_126 = arith.constant 5.000000e-01 : f32
    %436 = vector.broadcast %cst_126 : f32 to vector<2x32xf32>
    %437 = arith.mulf %436, %435 : vector<2x32xf32>
    %cst_127 = arith.constant 5.000000e-01 : f32
    %438 = vector.broadcast %cst_127 : f32 to vector<2x32xf32>
    %439 = arith.addf %437, %438 : vector<2x32xf32>
    %440 = vector.extract_strided_slice %428 {offsets = [0, 32], sizes = [2, 32], strides = [1, 1]} : vector<2x128xf32> to vector<2x32xf32>
    %cst_128 = arith.constant 5.000000e-01 : f32
    %441 = vector.broadcast %cst_128 : f32 to vector<2x32xf32>
    %442 = arith.mulf %441, %440 : vector<2x32xf32>
    %cst_129 = arith.constant 5.000000e-01 : f32
    %443 = vector.broadcast %cst_129 : f32 to vector<2x32xf32>
    %444 = arith.addf %442, %443 : vector<2x32xf32>
    %445 = arith.mulf %444, %388 : vector<2x32xf32>
    %446 = arith.mulf %433, %434 : vector<2x32xf32>
    %447 = arith.addf %445, %446 : vector<2x32xf32>
    %448 = math.tanh %447 : vector<2x32xf32>
    %449 = arith.mulf %439, %448 : vector<2x32xf32>
    %450 = arith.truncf %449 : vector<2x32xf32> to vector<2x32xbf16>
    %cst_130 = arith.constant dense<0.000000e+00> : vector<2x16xf32>
    %451 = tpu.matmul %450, %404, %cst_130 {dimension_numbers = #tpu.dot_dimension_numbers<[1], [1], [0], [0], [0, 0, 1, 0], [], []>} : vector<2x32xbf16>, vector<16x32xbf16>, vector<2x16xf32> -> vector<2x16xf32>
    %452 = arith.addf %451, %412 : vector<2x16xf32>
    %453 = math.exp %452 : vector<2x16xf32>
    %cst_131 = arith.constant dense<0.000000e+00> : vector<2xf32>
    %454 = vector.multi_reduction <add>, %453, %cst_131 [1] : vector<2x16xf32> to vector<2xf32>
    %455 = vector.shape_cast %454 : vector<2xf32> to vector<2x1xf32>
    %456 = vector.broadcast %455 : vector<2x1xf32> to vector<2x16xf32>
    %457 = arith.divf %453, %456 : vector<2x16xf32>
    %458 = arith.truncf %457 : vector<2x16xf32> to vector<2x16xbf16>
    %cst_132 = arith.constant dense<0.000000e+00> : vector<2x32xf32>
    %459 = tpu.matmul %458, %404, %cst_132 {dimension_numbers = #tpu.dot_dimension_numbers<[1], [0], [0], [1], [0, 0, 1, 1], [], []>} : vector<2x16xbf16>, vector<16x32xbf16>, vector<2x32xf32> -> vector<2x32xf32>
    %460 = arith.truncf %459 : vector<2x32xf32> to vector<2x32xbf16>
    %cst_133 = arith.constant dense<0.000000e+00> : vector<2x32xf32>
    %461 = tpu.matmul %460, %13, %cst_133 {dimension_numbers = #tpu.dot_dimension_numbers<[1], [0], [0], [1], [0, 0, 1, 1], [], []>} : vector<2x32xbf16>, vector<32x32xbf16>, vector<2x32xf32> -> vector<2x32xf32>
    %cst_134 = arith.constant dense<0.000000e+00> : vector<2x32xf32>
    %462 = tpu.matmul %450, %14, %cst_134 {dimension_numbers = #tpu.dot_dimension_numbers<[1], [0], [0], [1], [0, 0, 1, 1], [], []>} : vector<2x32xbf16>, vector<32x32xbf16>, vector<2x32xf32> -> vector<2x32xf32>
    %463 = arith.addf %461, %462 : vector<2x32xf32>
    %464 = vector.broadcast %15 : vector<1x32xf32> to vector<2x32xf32>
    %465 = arith.addf %463, %464 : vector<2x32xf32>
    %466 = math.tanh %465 : vector<2x32xf32>
    %467 = arith.truncf %466 : vector<2x32xf32> to vector<2x32xbf16>
    %cst_135 = arith.constant dense<0.000000e+00> : vector<2x16xf32>
    %468 = tpu.matmul %467, %16, %cst_135 {dimension_numbers = #tpu.dot_dimension_numbers<[1], [0], [0], [1], [0, 0, 1, 1], [], []>} : vector<2x32xbf16>, vector<32x16xbf16>, vector<2x16xf32> -> vector<2x16xf32>
    %469 = vector.broadcast %17 : vector<1x16xf32> to vector<2x16xf32>
    %470 = arith.addf %468, %469 : vector<2x16xf32>
    %c1_i32_136 = arith.constant 1 : i32
    %471 = vector.broadcast %c1_i32_136 : i32 to vector<2x16xi32>
    %472 = arith.cmpi sge, %28, %471 : vector<2x16xi32>
    %c3_i32 = arith.constant 3 : i32
    %473 = vector.broadcast %c3_i32 : i32 to vector<2x16xi32>
    %474 = arith.cmpi slt, %28, %473 : vector<2x16xi32>
    %475 = arith.andi %472, %474 : vector<2x16xi1>
    %cst_137 = arith.constant -1.000000e+30 : f32
    %476 = vector.broadcast %cst_137 : f32 to vector<2x16xf32>
    %477 = arith.select %475, %470, %476 : vector<2x16xi1>, vector<2x16xf32>
    %cst_138 = arith.constant dense<0xFF800000> : vector<2xf32>
    %478 = vector.multi_reduction <maximumf>, %477, %cst_138 [1] : vector<2x16xf32> to vector<2xf32>
    %479 = vector.shape_cast %478 : vector<2xf32> to vector<2x1xf32>
    %480 = vector.broadcast %479 : vector<2x1xf32> to vector<2x16xf32>
    %481 = arith.cmpf oeq, %477, %480 : vector<2x16xf32>
    %c16_i32 = arith.constant 16 : i32
    %482 = vector.broadcast %c16_i32 : i32 to vector<2x16xi32>
    %483 = arith.select %481, %28, %482 : vector<2x16xi1>, vector<2x16xi32>
    %cst_139 = arith.constant dense<2147483647> : vector<2xi32>
    %484 = vector.multi_reduction <minsi>, %483, %cst_139 [1] : vector<2x16xi32> to vector<2xi32>
    %485 = vector.shape_cast %484 : vector<2xi32> to vector<2x1xi32>
    %cst_140 = arith.constant dense<0xFF800000> : vector<2xf32>
    %486 = vector.multi_reduction <maximumf>, %470, %cst_140 [1] : vector<2x16xf32> to vector<2xf32>
    %487 = vector.shape_cast %486 : vector<2xf32> to vector<2x1xf32>
    %488 = vector.broadcast %487 : vector<2x1xf32> to vector<2x16xf32>
    %489 = arith.subf %470, %488 : vector<2x16xf32>
    %490 = math.exp %489 : vector<2x16xf32>
    %cst_141 = arith.constant dense<0.000000e+00> : vector<2xf32>
    %491 = vector.multi_reduction <add>, %490, %cst_141 [1] : vector<2x16xf32> to vector<2xf32>
    %492 = vector.shape_cast %491 : vector<2xf32> to vector<2x1xf32>
    %493 = math.log %492 : vector<2x1xf32>
    %494 = vector.broadcast %493 : vector<2x1xf32> to vector<2x16xf32>
    %495 = arith.subf %489, %494 : vector<2x16xf32>
    %496 = vector.broadcast %485 : vector<2x1xi32> to vector<2x16xi32>
    %497 = arith.cmpi eq, %28, %496 : vector<2x16xi32>
    %498 = arith.extui %497 : vector<2x16xi1> to vector<2x16xi32>
    %499 = arith.sitofp %498 : vector<2x16xi32> to vector<2x16xf32>
    %500 = arith.truncf %499 : vector<2x16xf32> to vector<2x16xbf16>
    %cst_142 = arith.constant dense<0.000000e+00> : vector<2x128xf32>
    %501 = tpu.matmul %500, %7, %cst_142 {dimension_numbers = #tpu.dot_dimension_numbers<[1], [0], [0], [1], [0, 0, 1, 1], [], []>} : vector<2x16xbf16>, vector<16x128xbf16>, vector<2x128xf32> -> vector<2x128xf32>
    %502 = arith.truncf %449 : vector<2x32xf32> to vector<2x32xbf16>
    %cst_143 = arith.constant dense<0.000000e+00> : vector<2x128xf32>
    %503 = tpu.matmul %502, %9, %cst_143 {dimension_numbers = #tpu.dot_dimension_numbers<[1], [0], [0], [1], [0, 0, 1, 1], [], []>} : vector<2x32xbf16>, vector<32x128xbf16>, vector<2x128xf32> -> vector<2x128xf32>
    %504 = arith.addf %501, %503 : vector<2x128xf32>
    %505 = vector.broadcast %11 : vector<1x128xf32> to vector<2x128xf32>
    %506 = arith.addf %504, %505 : vector<2x128xf32>
    %507 = vector.broadcast %26 : vector<1x128xf32> to vector<2x128xf32>
    %508 = arith.mulf %506, %507 : vector<2x128xf32>
    %509 = math.tanh %508 : vector<2x128xf32>
    %510 = vector.extract_strided_slice %509 {offsets = [0, 0], sizes = [2, 32], strides = [1, 1]} : vector<2x128xf32> to vector<2x32xf32>
    %cst_144 = arith.constant 5.000000e-01 : f32
    %511 = vector.broadcast %cst_144 : f32 to vector<2x32xf32>
    %512 = arith.mulf %511, %510 : vector<2x32xf32>
    %cst_145 = arith.constant 5.000000e-01 : f32
    %513 = vector.broadcast %cst_145 : f32 to vector<2x32xf32>
    %514 = arith.addf %512, %513 : vector<2x32xf32>
    %515 = vector.extract_strided_slice %509 {offsets = [0, 64], sizes = [2, 32], strides = [1, 1]} : vector<2x128xf32> to vector<2x32xf32>
    %516 = vector.extract_strided_slice %509 {offsets = [0, 96], sizes = [2, 32], strides = [1, 1]} : vector<2x128xf32> to vector<2x32xf32>
    %cst_146 = arith.constant 5.000000e-01 : f32
    %517 = vector.broadcast %cst_146 : f32 to vector<2x32xf32>
    %518 = arith.mulf %517, %516 : vector<2x32xf32>
    %cst_147 = arith.constant 5.000000e-01 : f32
    %519 = vector.broadcast %cst_147 : f32 to vector<2x32xf32>
    %520 = arith.addf %518, %519 : vector<2x32xf32>
    %521 = vector.extract_strided_slice %509 {offsets = [0, 32], sizes = [2, 32], strides = [1, 1]} : vector<2x128xf32> to vector<2x32xf32>
    %cst_148 = arith.constant 5.000000e-01 : f32
    %522 = vector.broadcast %cst_148 : f32 to vector<2x32xf32>
    %523 = arith.mulf %522, %521 : vector<2x32xf32>
    %cst_149 = arith.constant 5.000000e-01 : f32
    %524 = vector.broadcast %cst_149 : f32 to vector<2x32xf32>
    %525 = arith.addf %523, %524 : vector<2x32xf32>
    %526 = arith.mulf %525, %447 : vector<2x32xf32>
    %527 = arith.mulf %514, %515 : vector<2x32xf32>
    %528 = arith.addf %526, %527 : vector<2x32xf32>
    %529 = math.tanh %528 : vector<2x32xf32>
    %530 = arith.mulf %520, %529 : vector<2x32xf32>
    %531 = arith.truncf %530 : vector<2x32xf32> to vector<2x32xbf16>
    %cst_150 = arith.constant dense<0.000000e+00> : vector<2x16xf32>
    %532 = tpu.matmul %531, %404, %cst_150 {dimension_numbers = #tpu.dot_dimension_numbers<[1], [1], [0], [0], [0, 0, 1, 0], [], []>} : vector<2x32xbf16>, vector<16x32xbf16>, vector<2x16xf32> -> vector<2x16xf32>
    %533 = arith.addf %532, %412 : vector<2x16xf32>
    %534 = math.exp %533 : vector<2x16xf32>
    %cst_151 = arith.constant dense<0.000000e+00> : vector<2xf32>
    %535 = vector.multi_reduction <add>, %534, %cst_151 [1] : vector<2x16xf32> to vector<2xf32>
    %536 = vector.shape_cast %535 : vector<2xf32> to vector<2x1xf32>
    %537 = vector.broadcast %536 : vector<2x1xf32> to vector<2x16xf32>
    %538 = arith.divf %534, %537 : vector<2x16xf32>
    %539 = arith.truncf %538 : vector<2x16xf32> to vector<2x16xbf16>
    %cst_152 = arith.constant dense<0.000000e+00> : vector<2x32xf32>
    %540 = tpu.matmul %539, %404, %cst_152 {dimension_numbers = #tpu.dot_dimension_numbers<[1], [0], [0], [1], [0, 0, 1, 1], [], []>} : vector<2x16xbf16>, vector<16x32xbf16>, vector<2x32xf32> -> vector<2x32xf32>
    %541 = arith.truncf %540 : vector<2x32xf32> to vector<2x32xbf16>
    %cst_153 = arith.constant dense<0.000000e+00> : vector<2x32xf32>
    %542 = tpu.matmul %541, %13, %cst_153 {dimension_numbers = #tpu.dot_dimension_numbers<[1], [0], [0], [1], [0, 0, 1, 1], [], []>} : vector<2x32xbf16>, vector<32x32xbf16>, vector<2x32xf32> -> vector<2x32xf32>
    %cst_154 = arith.constant dense<0.000000e+00> : vector<2x32xf32>
    %543 = tpu.matmul %531, %14, %cst_154 {dimension_numbers = #tpu.dot_dimension_numbers<[1], [0], [0], [1], [0, 0, 1, 1], [], []>} : vector<2x32xbf16>, vector<32x32xbf16>, vector<2x32xf32> -> vector<2x32xf32>
    %544 = arith.addf %542, %543 : vector<2x32xf32>
    %545 = vector.broadcast %15 : vector<1x32xf32> to vector<2x32xf32>
    %546 = arith.addf %544, %545 : vector<2x32xf32>
    %547 = math.tanh %546 : vector<2x32xf32>
    %548 = arith.truncf %547 : vector<2x32xf32> to vector<2x32xbf16>
    %cst_155 = arith.constant dense<0.000000e+00> : vector<2x16xf32>
    %549 = tpu.matmul %548, %16, %cst_155 {dimension_numbers = #tpu.dot_dimension_numbers<[1], [0], [0], [1], [0, 0, 1, 1], [], []>} : vector<2x32xbf16>, vector<32x16xbf16>, vector<2x16xf32> -> vector<2x16xf32>
    %550 = vector.broadcast %17 : vector<1x16xf32> to vector<2x16xf32>
    %551 = arith.addf %549, %550 : vector<2x16xf32>
    %c5_i32 = arith.constant 5 : i32
    %552 = vector.broadcast %c5_i32 : i32 to vector<2x16xi32>
    %553 = arith.cmpi sge, %28, %552 : vector<2x16xi32>
    %c10_i32 = arith.constant 10 : i32
    %554 = vector.broadcast %c10_i32 : i32 to vector<2x16xi32>
    %555 = arith.cmpi slt, %28, %554 : vector<2x16xi32>
    %556 = arith.andi %553, %555 : vector<2x16xi1>
    %cst_156 = arith.constant -1.000000e+30 : f32
    %557 = vector.broadcast %cst_156 : f32 to vector<2x16xf32>
    %558 = arith.select %556, %551, %557 : vector<2x16xi1>, vector<2x16xf32>
    %cst_157 = arith.constant dense<0xFF800000> : vector<2xf32>
    %559 = vector.multi_reduction <maximumf>, %558, %cst_157 [1] : vector<2x16xf32> to vector<2xf32>
    %560 = vector.shape_cast %559 : vector<2xf32> to vector<2x1xf32>
    %561 = vector.broadcast %560 : vector<2x1xf32> to vector<2x16xf32>
    %562 = arith.cmpf oeq, %558, %561 : vector<2x16xf32>
    %c16_i32_158 = arith.constant 16 : i32
    %563 = vector.broadcast %c16_i32_158 : i32 to vector<2x16xi32>
    %564 = arith.select %562, %28, %563 : vector<2x16xi1>, vector<2x16xi32>
    %cst_159 = arith.constant dense<2147483647> : vector<2xi32>
    %565 = vector.multi_reduction <minsi>, %564, %cst_159 [1] : vector<2x16xi32> to vector<2xi32>
    %566 = vector.shape_cast %565 : vector<2xi32> to vector<2x1xi32>
    %cst_160 = arith.constant dense<0xFF800000> : vector<2xf32>
    %567 = vector.multi_reduction <maximumf>, %551, %cst_160 [1] : vector<2x16xf32> to vector<2xf32>
    %568 = vector.shape_cast %567 : vector<2xf32> to vector<2x1xf32>
    %569 = vector.broadcast %568 : vector<2x1xf32> to vector<2x16xf32>
    %570 = arith.subf %551, %569 : vector<2x16xf32>
    %571 = math.exp %570 : vector<2x16xf32>
    %cst_161 = arith.constant dense<0.000000e+00> : vector<2xf32>
    %572 = vector.multi_reduction <add>, %571, %cst_161 [1] : vector<2x16xf32> to vector<2xf32>
    %573 = vector.shape_cast %572 : vector<2xf32> to vector<2x1xf32>
    %574 = math.log %573 : vector<2x1xf32>
    %575 = vector.broadcast %574 : vector<2x1xf32> to vector<2x16xf32>
    %576 = arith.subf %570, %575 : vector<2x16xf32>
    %577 = vector.broadcast %566 : vector<2x1xi32> to vector<2x16xi32>
    %578 = arith.cmpi eq, %28, %577 : vector<2x16xi32>
    %579 = arith.extui %578 : vector<2x16xi1> to vector<2x16xi32>
    %580 = arith.sitofp %579 : vector<2x16xi32> to vector<2x16xf32>
    %581 = arith.truncf %580 : vector<2x16xf32> to vector<2x16xbf16>
    %cst_162 = arith.constant dense<0.000000e+00> : vector<2x128xf32>
    %582 = tpu.matmul %581, %7, %cst_162 {dimension_numbers = #tpu.dot_dimension_numbers<[1], [0], [0], [1], [0, 0, 1, 1], [], []>} : vector<2x16xbf16>, vector<16x128xbf16>, vector<2x128xf32> -> vector<2x128xf32>
    %583 = arith.truncf %530 : vector<2x32xf32> to vector<2x32xbf16>
    %cst_163 = arith.constant dense<0.000000e+00> : vector<2x128xf32>
    %584 = tpu.matmul %583, %9, %cst_163 {dimension_numbers = #tpu.dot_dimension_numbers<[1], [0], [0], [1], [0, 0, 1, 1], [], []>} : vector<2x32xbf16>, vector<32x128xbf16>, vector<2x128xf32> -> vector<2x128xf32>
    %585 = arith.addf %582, %584 : vector<2x128xf32>
    %586 = vector.broadcast %11 : vector<1x128xf32> to vector<2x128xf32>
    %587 = arith.addf %585, %586 : vector<2x128xf32>
    %588 = vector.broadcast %26 : vector<1x128xf32> to vector<2x128xf32>
    %589 = arith.mulf %587, %588 : vector<2x128xf32>
    %590 = math.tanh %589 : vector<2x128xf32>
    %591 = vector.extract_strided_slice %590 {offsets = [0, 0], sizes = [2, 32], strides = [1, 1]} : vector<2x128xf32> to vector<2x32xf32>
    %cst_164 = arith.constant 5.000000e-01 : f32
    %592 = vector.broadcast %cst_164 : f32 to vector<2x32xf32>
    %593 = arith.mulf %592, %591 : vector<2x32xf32>
    %cst_165 = arith.constant 5.000000e-01 : f32
    %594 = vector.broadcast %cst_165 : f32 to vector<2x32xf32>
    %595 = arith.addf %593, %594 : vector<2x32xf32>
    %596 = vector.extract_strided_slice %590 {offsets = [0, 64], sizes = [2, 32], strides = [1, 1]} : vector<2x128xf32> to vector<2x32xf32>
    %597 = vector.extract_strided_slice %590 {offsets = [0, 96], sizes = [2, 32], strides = [1, 1]} : vector<2x128xf32> to vector<2x32xf32>
    %cst_166 = arith.constant 5.000000e-01 : f32
    %598 = vector.broadcast %cst_166 : f32 to vector<2x32xf32>
    %599 = arith.mulf %598, %597 : vector<2x32xf32>
    %cst_167 = arith.constant 5.000000e-01 : f32
    %600 = vector.broadcast %cst_167 : f32 to vector<2x32xf32>
    %601 = arith.addf %599, %600 : vector<2x32xf32>
    %602 = vector.extract_strided_slice %590 {offsets = [0, 32], sizes = [2, 32], strides = [1, 1]} : vector<2x128xf32> to vector<2x32xf32>
    %cst_168 = arith.constant 5.000000e-01 : f32
    %603 = vector.broadcast %cst_168 : f32 to vector<2x32xf32>
    %604 = arith.mulf %603, %602 : vector<2x32xf32>
    %cst_169 = arith.constant 5.000000e-01 : f32
    %605 = vector.broadcast %cst_169 : f32 to vector<2x32xf32>
    %606 = arith.addf %604, %605 : vector<2x32xf32>
    %607 = arith.mulf %606, %528 : vector<2x32xf32>
    %608 = arith.mulf %595, %596 : vector<2x32xf32>
    %609 = arith.addf %607, %608 : vector<2x32xf32>
    %610 = math.tanh %609 : vector<2x32xf32>
    %611 = arith.mulf %601, %610 : vector<2x32xf32>
    %612 = arith.truncf %611 : vector<2x32xf32> to vector<2x32xbf16>
    %cst_170 = arith.constant dense<0.000000e+00> : vector<2x16xf32>
    %613 = tpu.matmul %612, %404, %cst_170 {dimension_numbers = #tpu.dot_dimension_numbers<[1], [1], [0], [0], [0, 0, 1, 0], [], []>} : vector<2x32xbf16>, vector<16x32xbf16>, vector<2x16xf32> -> vector<2x16xf32>
    %614 = arith.addf %613, %412 : vector<2x16xf32>
    %615 = math.exp %614 : vector<2x16xf32>
    %cst_171 = arith.constant dense<0.000000e+00> : vector<2xf32>
    %616 = vector.multi_reduction <add>, %615, %cst_171 [1] : vector<2x16xf32> to vector<2xf32>
    %617 = vector.shape_cast %616 : vector<2xf32> to vector<2x1xf32>
    %618 = vector.broadcast %617 : vector<2x1xf32> to vector<2x16xf32>
    %619 = arith.divf %615, %618 : vector<2x16xf32>
    %620 = arith.truncf %619 : vector<2x16xf32> to vector<2x16xbf16>
    %cst_172 = arith.constant dense<0.000000e+00> : vector<2x32xf32>
    %621 = tpu.matmul %620, %404, %cst_172 {dimension_numbers = #tpu.dot_dimension_numbers<[1], [0], [0], [1], [0, 0, 1, 1], [], []>} : vector<2x16xbf16>, vector<16x32xbf16>, vector<2x32xf32> -> vector<2x32xf32>
    %622 = arith.truncf %621 : vector<2x32xf32> to vector<2x32xbf16>
    %cst_173 = arith.constant dense<0.000000e+00> : vector<2x32xf32>
    %623 = tpu.matmul %622, %13, %cst_173 {dimension_numbers = #tpu.dot_dimension_numbers<[1], [0], [0], [1], [0, 0, 1, 1], [], []>} : vector<2x32xbf16>, vector<32x32xbf16>, vector<2x32xf32> -> vector<2x32xf32>
    %cst_174 = arith.constant dense<0.000000e+00> : vector<2x32xf32>
    %624 = tpu.matmul %612, %14, %cst_174 {dimension_numbers = #tpu.dot_dimension_numbers<[1], [0], [0], [1], [0, 0, 1, 1], [], []>} : vector<2x32xbf16>, vector<32x32xbf16>, vector<2x32xf32> -> vector<2x32xf32>
    %625 = arith.addf %623, %624 : vector<2x32xf32>
    %626 = vector.broadcast %15 : vector<1x32xf32> to vector<2x32xf32>
    %627 = arith.addf %625, %626 : vector<2x32xf32>
    %628 = math.tanh %627 : vector<2x32xf32>
    %629 = arith.truncf %628 : vector<2x32xf32> to vector<2x32xbf16>
    %cst_175 = arith.constant dense<0.000000e+00> : vector<2x16xf32>
    %630 = tpu.matmul %629, %16, %cst_175 {dimension_numbers = #tpu.dot_dimension_numbers<[1], [0], [0], [1], [0, 0, 1, 1], [], []>} : vector<2x32xbf16>, vector<32x16xbf16>, vector<2x16xf32> -> vector<2x16xf32>
    %631 = vector.broadcast %17 : vector<1x16xf32> to vector<2x16xf32>
    %632 = arith.addf %630, %631 : vector<2x16xf32>
    %c1_i32_176 = arith.constant 1 : i32
    %633 = vector.broadcast %c1_i32_176 : i32 to vector<2x16xi32>
    %634 = arith.cmpi sge, %28, %633 : vector<2x16xi32>
    %c3_i32_177 = arith.constant 3 : i32
    %635 = vector.broadcast %c3_i32_177 : i32 to vector<2x16xi32>
    %636 = arith.cmpi slt, %28, %635 : vector<2x16xi32>
    %637 = arith.andi %634, %636 : vector<2x16xi1>
    %cst_178 = arith.constant -1.000000e+30 : f32
    %638 = vector.broadcast %cst_178 : f32 to vector<2x16xf32>
    %639 = arith.select %637, %632, %638 : vector<2x16xi1>, vector<2x16xf32>
    %cst_179 = arith.constant dense<0xFF800000> : vector<2xf32>
    %640 = vector.multi_reduction <maximumf>, %639, %cst_179 [1] : vector<2x16xf32> to vector<2xf32>
    %641 = vector.shape_cast %640 : vector<2xf32> to vector<2x1xf32>
    %642 = vector.broadcast %641 : vector<2x1xf32> to vector<2x16xf32>
    %643 = arith.cmpf oeq, %639, %642 : vector<2x16xf32>
    %c16_i32_180 = arith.constant 16 : i32
    %644 = vector.broadcast %c16_i32_180 : i32 to vector<2x16xi32>
    %645 = arith.select %643, %28, %644 : vector<2x16xi1>, vector<2x16xi32>
    %cst_181 = arith.constant dense<2147483647> : vector<2xi32>
    %646 = vector.multi_reduction <minsi>, %645, %cst_181 [1] : vector<2x16xi32> to vector<2xi32>
    %647 = vector.shape_cast %646 : vector<2xi32> to vector<2x1xi32>
    %cst_182 = arith.constant dense<0xFF800000> : vector<2xf32>
    %648 = vector.multi_reduction <maximumf>, %632, %cst_182 [1] : vector<2x16xf32> to vector<2xf32>
    %649 = vector.shape_cast %648 : vector<2xf32> to vector<2x1xf32>
    %650 = vector.broadcast %649 : vector<2x1xf32> to vector<2x16xf32>
    %651 = arith.subf %632, %650 : vector<2x16xf32>
    %652 = math.exp %651 : vector<2x16xf32>
    %cst_183 = arith.constant dense<0.000000e+00> : vector<2xf32>
    %653 = vector.multi_reduction <add>, %652, %cst_183 [1] : vector<2x16xf32> to vector<2xf32>
    %654 = vector.shape_cast %653 : vector<2xf32> to vector<2x1xf32>
    %655 = math.log %654 : vector<2x1xf32>
    %656 = vector.broadcast %655 : vector<2x1xf32> to vector<2x16xf32>
    %657 = arith.subf %651, %656 : vector<2x16xf32>
    %658 = vector.broadcast %647 : vector<2x1xi32> to vector<2x16xi32>
    %659 = arith.cmpi eq, %28, %658 : vector<2x16xi32>
    %660 = arith.extui %659 : vector<2x16xi1> to vector<2x16xi32>
    %661 = arith.sitofp %660 : vector<2x16xi32> to vector<2x16xf32>
    %662 = arith.truncf %661 : vector<2x16xf32> to vector<2x16xbf16>
    %cst_184 = arith.constant dense<0.000000e+00> : vector<2x128xf32>
    %663 = tpu.matmul %662, %7, %cst_184 {dimension_numbers = #tpu.dot_dimension_numbers<[1], [0], [0], [1], [0, 0, 1, 1], [], []>} : vector<2x16xbf16>, vector<16x128xbf16>, vector<2x128xf32> -> vector<2x128xf32>
    %664 = arith.truncf %611 : vector<2x32xf32> to vector<2x32xbf16>
    %cst_185 = arith.constant dense<0.000000e+00> : vector<2x128xf32>
    %665 = tpu.matmul %664, %9, %cst_185 {dimension_numbers = #tpu.dot_dimension_numbers<[1], [0], [0], [1], [0, 0, 1, 1], [], []>} : vector<2x32xbf16>, vector<32x128xbf16>, vector<2x128xf32> -> vector<2x128xf32>
    %666 = arith.addf %663, %665 : vector<2x128xf32>
    %667 = vector.broadcast %11 : vector<1x128xf32> to vector<2x128xf32>
    %668 = arith.addf %666, %667 : vector<2x128xf32>
    %669 = vector.broadcast %26 : vector<1x128xf32> to vector<2x128xf32>
    %670 = arith.mulf %668, %669 : vector<2x128xf32>
    %671 = math.tanh %670 : vector<2x128xf32>
    %672 = vector.extract_strided_slice %671 {offsets = [0, 0], sizes = [2, 32], strides = [1, 1]} : vector<2x128xf32> to vector<2x32xf32>
    %cst_186 = arith.constant 5.000000e-01 : f32
    %673 = vector.broadcast %cst_186 : f32 to vector<2x32xf32>
    %674 = arith.mulf %673, %672 : vector<2x32xf32>
    %cst_187 = arith.constant 5.000000e-01 : f32
    %675 = vector.broadcast %cst_187 : f32 to vector<2x32xf32>
    %676 = arith.addf %674, %675 : vector<2x32xf32>
    %677 = vector.extract_strided_slice %671 {offsets = [0, 64], sizes = [2, 32], strides = [1, 1]} : vector<2x128xf32> to vector<2x32xf32>
    %678 = vector.extract_strided_slice %671 {offsets = [0, 96], sizes = [2, 32], strides = [1, 1]} : vector<2x128xf32> to vector<2x32xf32>
    %cst_188 = arith.constant 5.000000e-01 : f32
    %679 = vector.broadcast %cst_188 : f32 to vector<2x32xf32>
    %680 = arith.mulf %679, %678 : vector<2x32xf32>
    %cst_189 = arith.constant 5.000000e-01 : f32
    %681 = vector.broadcast %cst_189 : f32 to vector<2x32xf32>
    %682 = arith.addf %680, %681 : vector<2x32xf32>
    %683 = vector.extract_strided_slice %671 {offsets = [0, 32], sizes = [2, 32], strides = [1, 1]} : vector<2x128xf32> to vector<2x32xf32>
    %cst_190 = arith.constant 5.000000e-01 : f32
    %684 = vector.broadcast %cst_190 : f32 to vector<2x32xf32>
    %685 = arith.mulf %684, %683 : vector<2x32xf32>
    %cst_191 = arith.constant 5.000000e-01 : f32
    %686 = vector.broadcast %cst_191 : f32 to vector<2x32xf32>
    %687 = arith.addf %685, %686 : vector<2x32xf32>
    %688 = arith.mulf %687, %609 : vector<2x32xf32>
    %689 = arith.mulf %676, %677 : vector<2x32xf32>
    %690 = arith.addf %688, %689 : vector<2x32xf32>
    %691 = math.tanh %690 : vector<2x32xf32>
    %692 = arith.mulf %682, %691 : vector<2x32xf32>
    %693 = arith.truncf %692 : vector<2x32xf32> to vector<2x32xbf16>
    %cst_192 = arith.constant dense<0.000000e+00> : vector<2x16xf32>
    %694 = tpu.matmul %693, %404, %cst_192 {dimension_numbers = #tpu.dot_dimension_numbers<[1], [1], [0], [0], [0, 0, 1, 0], [], []>} : vector<2x32xbf16>, vector<16x32xbf16>, vector<2x16xf32> -> vector<2x16xf32>
    %695 = arith.addf %694, %412 : vector<2x16xf32>
    %696 = math.exp %695 : vector<2x16xf32>
    %cst_193 = arith.constant dense<0.000000e+00> : vector<2xf32>
    %697 = vector.multi_reduction <add>, %696, %cst_193 [1] : vector<2x16xf32> to vector<2xf32>
    %698 = vector.shape_cast %697 : vector<2xf32> to vector<2x1xf32>
    %699 = vector.broadcast %698 : vector<2x1xf32> to vector<2x16xf32>
    %700 = arith.divf %696, %699 : vector<2x16xf32>
    %701 = arith.truncf %700 : vector<2x16xf32> to vector<2x16xbf16>
    %cst_194 = arith.constant dense<0.000000e+00> : vector<2x32xf32>
    %702 = tpu.matmul %701, %404, %cst_194 {dimension_numbers = #tpu.dot_dimension_numbers<[1], [0], [0], [1], [0, 0, 1, 1], [], []>} : vector<2x16xbf16>, vector<16x32xbf16>, vector<2x32xf32> -> vector<2x32xf32>
    %703 = arith.truncf %702 : vector<2x32xf32> to vector<2x32xbf16>
    %cst_195 = arith.constant dense<0.000000e+00> : vector<2x32xf32>
    %704 = tpu.matmul %703, %13, %cst_195 {dimension_numbers = #tpu.dot_dimension_numbers<[1], [0], [0], [1], [0, 0, 1, 1], [], []>} : vector<2x32xbf16>, vector<32x32xbf16>, vector<2x32xf32> -> vector<2x32xf32>
    %cst_196 = arith.constant dense<0.000000e+00> : vector<2x32xf32>
    %705 = tpu.matmul %693, %14, %cst_196 {dimension_numbers = #tpu.dot_dimension_numbers<[1], [0], [0], [1], [0, 0, 1, 1], [], []>} : vector<2x32xbf16>, vector<32x32xbf16>, vector<2x32xf32> -> vector<2x32xf32>
    %706 = arith.addf %704, %705 : vector<2x32xf32>
    %707 = vector.broadcast %15 : vector<1x32xf32> to vector<2x32xf32>
    %708 = arith.addf %706, %707 : vector<2x32xf32>
    %709 = math.tanh %708 : vector<2x32xf32>
    %710 = arith.truncf %709 : vector<2x32xf32> to vector<2x32xbf16>
    %cst_197 = arith.constant dense<0.000000e+00> : vector<2x16xf32>
    %711 = tpu.matmul %710, %16, %cst_197 {dimension_numbers = #tpu.dot_dimension_numbers<[1], [0], [0], [1], [0, 0, 1, 1], [], []>} : vector<2x32xbf16>, vector<32x16xbf16>, vector<2x16xf32> -> vector<2x16xf32>
    %712 = vector.broadcast %17 : vector<1x16xf32> to vector<2x16xf32>
    %713 = arith.addf %711, %712 : vector<2x16xf32>
    %c5_i32_198 = arith.constant 5 : i32
    %714 = vector.broadcast %c5_i32_198 : i32 to vector<2x16xi32>
    %715 = arith.cmpi sge, %28, %714 : vector<2x16xi32>
    %c10_i32_199 = arith.constant 10 : i32
    %716 = vector.broadcast %c10_i32_199 : i32 to vector<2x16xi32>
    %717 = arith.cmpi slt, %28, %716 : vector<2x16xi32>
    %718 = arith.andi %715, %717 : vector<2x16xi1>
    %cst_200 = arith.constant -1.000000e+30 : f32
    %719 = vector.broadcast %cst_200 : f32 to vector<2x16xf32>
    %720 = arith.select %718, %713, %719 : vector<2x16xi1>, vector<2x16xf32>
    %cst_201 = arith.constant dense<0xFF800000> : vector<2xf32>
    %721 = vector.multi_reduction <maximumf>, %720, %cst_201 [1] : vector<2x16xf32> to vector<2xf32>
    %722 = vector.shape_cast %721 : vector<2xf32> to vector<2x1xf32>
    %723 = vector.broadcast %722 : vector<2x1xf32> to vector<2x16xf32>
    %724 = arith.cmpf oeq, %720, %723 : vector<2x16xf32>
    %c16_i32_202 = arith.constant 16 : i32
    %725 = vector.broadcast %c16_i32_202 : i32 to vector<2x16xi32>
    %726 = arith.select %724, %28, %725 : vector<2x16xi1>, vector<2x16xi32>
    %cst_203 = arith.constant dense<2147483647> : vector<2xi32>
    %727 = vector.multi_reduction <minsi>, %726, %cst_203 [1] : vector<2x16xi32> to vector<2xi32>
    %728 = vector.shape_cast %727 : vector<2xi32> to vector<2x1xi32>
    %cst_204 = arith.constant dense<0xFF800000> : vector<2xf32>
    %729 = vector.multi_reduction <maximumf>, %713, %cst_204 [1] : vector<2x16xf32> to vector<2xf32>
    %730 = vector.shape_cast %729 : vector<2xf32> to vector<2x1xf32>
    %731 = vector.broadcast %730 : vector<2x1xf32> to vector<2x16xf32>
    %732 = arith.subf %713, %731 : vector<2x16xf32>
    %733 = math.exp %732 : vector<2x16xf32>
    %cst_205 = arith.constant dense<0.000000e+00> : vector<2xf32>
    %734 = vector.multi_reduction <add>, %733, %cst_205 [1] : vector<2x16xf32> to vector<2xf32>
    %735 = vector.shape_cast %734 : vector<2xf32> to vector<2x1xf32>
    %736 = math.log %735 : vector<2x1xf32>
    %737 = vector.broadcast %736 : vector<2x1xf32> to vector<2x16xf32>
    %738 = arith.subf %732, %737 : vector<2x16xf32>
    %739 = vector.broadcast %728 : vector<2x1xi32> to vector<2x16xi32>
    %740 = arith.cmpi eq, %28, %739 : vector<2x16xi32>
    %741 = arith.extui %740 : vector<2x16xi1> to vector<2x16xi32>
    %742 = arith.sitofp %741 : vector<2x16xi32> to vector<2x16xf32>
    %743 = arith.truncf %742 : vector<2x16xf32> to vector<2x16xbf16>
    %cst_206 = arith.constant dense<0.000000e+00> : vector<2x128xf32>
    %744 = tpu.matmul %743, %7, %cst_206 {dimension_numbers = #tpu.dot_dimension_numbers<[1], [0], [0], [1], [0, 0, 1, 1], [], []>} : vector<2x16xbf16>, vector<16x128xbf16>, vector<2x128xf32> -> vector<2x128xf32>
    %745 = arith.truncf %692 : vector<2x32xf32> to vector<2x32xbf16>
    %cst_207 = arith.constant dense<0.000000e+00> : vector<2x128xf32>
    %746 = tpu.matmul %745, %9, %cst_207 {dimension_numbers = #tpu.dot_dimension_numbers<[1], [0], [0], [1], [0, 0, 1, 1], [], []>} : vector<2x32xbf16>, vector<32x128xbf16>, vector<2x128xf32> -> vector<2x128xf32>
    %747 = arith.addf %744, %746 : vector<2x128xf32>
    %748 = vector.broadcast %11 : vector<1x128xf32> to vector<2x128xf32>
    %749 = arith.addf %747, %748 : vector<2x128xf32>
    %750 = vector.broadcast %26 : vector<1x128xf32> to vector<2x128xf32>
    %751 = arith.mulf %749, %750 : vector<2x128xf32>
    %752 = math.tanh %751 : vector<2x128xf32>
    %753 = vector.extract_strided_slice %752 {offsets = [0, 0], sizes = [2, 32], strides = [1, 1]} : vector<2x128xf32> to vector<2x32xf32>
    %cst_208 = arith.constant 5.000000e-01 : f32
    %754 = vector.broadcast %cst_208 : f32 to vector<2x32xf32>
    %755 = arith.mulf %754, %753 : vector<2x32xf32>
    %cst_209 = arith.constant 5.000000e-01 : f32
    %756 = vector.broadcast %cst_209 : f32 to vector<2x32xf32>
    %757 = arith.addf %755, %756 : vector<2x32xf32>
    %758 = vector.extract_strided_slice %752 {offsets = [0, 64], sizes = [2, 32], strides = [1, 1]} : vector<2x128xf32> to vector<2x32xf32>
    %759 = vector.extract_strided_slice %752 {offsets = [0, 96], sizes = [2, 32], strides = [1, 1]} : vector<2x128xf32> to vector<2x32xf32>
    %cst_210 = arith.constant 5.000000e-01 : f32
    %760 = vector.broadcast %cst_210 : f32 to vector<2x32xf32>
    %761 = arith.mulf %760, %759 : vector<2x32xf32>
    %cst_211 = arith.constant 5.000000e-01 : f32
    %762 = vector.broadcast %cst_211 : f32 to vector<2x32xf32>
    %763 = arith.addf %761, %762 : vector<2x32xf32>
    %764 = vector.extract_strided_slice %752 {offsets = [0, 32], sizes = [2, 32], strides = [1, 1]} : vector<2x128xf32> to vector<2x32xf32>
    %cst_212 = arith.constant 5.000000e-01 : f32
    %765 = vector.broadcast %cst_212 : f32 to vector<2x32xf32>
    %766 = arith.mulf %765, %764 : vector<2x32xf32>
    %cst_213 = arith.constant 5.000000e-01 : f32
    %767 = vector.broadcast %cst_213 : f32 to vector<2x32xf32>
    %768 = arith.addf %766, %767 : vector<2x32xf32>
    %769 = arith.mulf %768, %690 : vector<2x32xf32>
    %770 = arith.mulf %757, %758 : vector<2x32xf32>
    %771 = arith.addf %769, %770 : vector<2x32xf32>
    %772 = math.tanh %771 : vector<2x32xf32>
    %773 = arith.mulf %763, %772 : vector<2x32xf32>
    %774 = arith.truncf %773 : vector<2x32xf32> to vector<2x32xbf16>
    %cst_214 = arith.constant dense<0.000000e+00> : vector<2x16xf32>
    %775 = tpu.matmul %774, %404, %cst_214 {dimension_numbers = #tpu.dot_dimension_numbers<[1], [1], [0], [0], [0, 0, 1, 0], [], []>} : vector<2x32xbf16>, vector<16x32xbf16>, vector<2x16xf32> -> vector<2x16xf32>
    %776 = arith.addf %775, %412 : vector<2x16xf32>
    %777 = math.exp %776 : vector<2x16xf32>
    %cst_215 = arith.constant dense<0.000000e+00> : vector<2xf32>
    %778 = vector.multi_reduction <add>, %777, %cst_215 [1] : vector<2x16xf32> to vector<2xf32>
    %779 = vector.shape_cast %778 : vector<2xf32> to vector<2x1xf32>
    %780 = vector.broadcast %779 : vector<2x1xf32> to vector<2x16xf32>
    %781 = arith.divf %777, %780 : vector<2x16xf32>
    %782 = arith.truncf %781 : vector<2x16xf32> to vector<2x16xbf16>
    %cst_216 = arith.constant dense<0.000000e+00> : vector<2x32xf32>
    %783 = tpu.matmul %782, %404, %cst_216 {dimension_numbers = #tpu.dot_dimension_numbers<[1], [0], [0], [1], [0, 0, 1, 1], [], []>} : vector<2x16xbf16>, vector<16x32xbf16>, vector<2x32xf32> -> vector<2x32xf32>
    %784 = arith.truncf %783 : vector<2x32xf32> to vector<2x32xbf16>
    %cst_217 = arith.constant dense<0.000000e+00> : vector<2x32xf32>
    %785 = tpu.matmul %784, %13, %cst_217 {dimension_numbers = #tpu.dot_dimension_numbers<[1], [0], [0], [1], [0, 0, 1, 1], [], []>} : vector<2x32xbf16>, vector<32x32xbf16>, vector<2x32xf32> -> vector<2x32xf32>
    %cst_218 = arith.constant dense<0.000000e+00> : vector<2x32xf32>
    %786 = tpu.matmul %774, %14, %cst_218 {dimension_numbers = #tpu.dot_dimension_numbers<[1], [0], [0], [1], [0, 0, 1, 1], [], []>} : vector<2x32xbf16>, vector<32x32xbf16>, vector<2x32xf32> -> vector<2x32xf32>
    %787 = arith.addf %785, %786 : vector<2x32xf32>
    %788 = vector.broadcast %15 : vector<1x32xf32> to vector<2x32xf32>
    %789 = arith.addf %787, %788 : vector<2x32xf32>
    %790 = math.tanh %789 : vector<2x32xf32>
    %791 = arith.truncf %790 : vector<2x32xf32> to vector<2x32xbf16>
    %cst_219 = arith.constant dense<0.000000e+00> : vector<2x16xf32>
    %792 = tpu.matmul %791, %16, %cst_219 {dimension_numbers = #tpu.dot_dimension_numbers<[1], [0], [0], [1], [0, 0, 1, 1], [], []>} : vector<2x32xbf16>, vector<32x16xbf16>, vector<2x16xf32> -> vector<2x16xf32>
    %793 = vector.broadcast %17 : vector<1x16xf32> to vector<2x16xf32>
    %794 = arith.addf %792, %793 : vector<2x16xf32>
    %c1_i32_220 = arith.constant 1 : i32
    %795 = vector.broadcast %c1_i32_220 : i32 to vector<2x16xi32>
    %796 = arith.cmpi sge, %28, %795 : vector<2x16xi32>
    %c3_i32_221 = arith.constant 3 : i32
    %797 = vector.broadcast %c3_i32_221 : i32 to vector<2x16xi32>
    %798 = arith.cmpi slt, %28, %797 : vector<2x16xi32>
    %799 = arith.andi %796, %798 : vector<2x16xi1>
    %cst_222 = arith.constant -1.000000e+30 : f32
    %800 = vector.broadcast %cst_222 : f32 to vector<2x16xf32>
    %801 = arith.select %799, %794, %800 : vector<2x16xi1>, vector<2x16xf32>
    %cst_223 = arith.constant dense<0xFF800000> : vector<2xf32>
    %802 = vector.multi_reduction <maximumf>, %801, %cst_223 [1] : vector<2x16xf32> to vector<2xf32>
    %803 = vector.shape_cast %802 : vector<2xf32> to vector<2x1xf32>
    %804 = vector.broadcast %803 : vector<2x1xf32> to vector<2x16xf32>
    %805 = arith.cmpf oeq, %801, %804 : vector<2x16xf32>
    %c16_i32_224 = arith.constant 16 : i32
    %806 = vector.broadcast %c16_i32_224 : i32 to vector<2x16xi32>
    %807 = arith.select %805, %28, %806 : vector<2x16xi1>, vector<2x16xi32>
    %cst_225 = arith.constant dense<2147483647> : vector<2xi32>
    %808 = vector.multi_reduction <minsi>, %807, %cst_225 [1] : vector<2x16xi32> to vector<2xi32>
    %809 = vector.shape_cast %808 : vector<2xi32> to vector<2x1xi32>
    %cst_226 = arith.constant dense<0xFF800000> : vector<2xf32>
    %810 = vector.multi_reduction <maximumf>, %794, %cst_226 [1] : vector<2x16xf32> to vector<2xf32>
    %811 = vector.shape_cast %810 : vector<2xf32> to vector<2x1xf32>
    %812 = vector.broadcast %811 : vector<2x1xf32> to vector<2x16xf32>
    %813 = arith.subf %794, %812 : vector<2x16xf32>
    %814 = math.exp %813 : vector<2x16xf32>
    %cst_227 = arith.constant dense<0.000000e+00> : vector<2xf32>
    %815 = vector.multi_reduction <add>, %814, %cst_227 [1] : vector<2x16xf32> to vector<2xf32>
    %816 = vector.shape_cast %815 : vector<2xf32> to vector<2x1xf32>
    %817 = math.log %816 : vector<2x1xf32>
    %818 = vector.broadcast %817 : vector<2x1xf32> to vector<2x16xf32>
    %819 = arith.subf %813, %818 : vector<2x16xf32>
    %820 = vector.broadcast %809 : vector<2x1xi32> to vector<2x16xi32>
    %821 = arith.cmpi eq, %28, %820 : vector<2x16xi32>
    %822 = arith.extui %821 : vector<2x16xi1> to vector<2x16xi32>
    %823 = arith.sitofp %822 : vector<2x16xi32> to vector<2x16xf32>
    %824 = arith.truncf %823 : vector<2x16xf32> to vector<2x16xbf16>
    %cst_228 = arith.constant dense<0.000000e+00> : vector<2x128xf32>
    %825 = tpu.matmul %824, %7, %cst_228 {dimension_numbers = #tpu.dot_dimension_numbers<[1], [0], [0], [1], [0, 0, 1, 1], [], []>} : vector<2x16xbf16>, vector<16x128xbf16>, vector<2x128xf32> -> vector<2x128xf32>
    %826 = arith.truncf %773 : vector<2x32xf32> to vector<2x32xbf16>
    %cst_229 = arith.constant dense<0.000000e+00> : vector<2x128xf32>
    %827 = tpu.matmul %826, %9, %cst_229 {dimension_numbers = #tpu.dot_dimension_numbers<[1], [0], [0], [1], [0, 0, 1, 1], [], []>} : vector<2x32xbf16>, vector<32x128xbf16>, vector<2x128xf32> -> vector<2x128xf32>
    %828 = arith.addf %825, %827 : vector<2x128xf32>
    %829 = vector.broadcast %11 : vector<1x128xf32> to vector<2x128xf32>
    %830 = arith.addf %828, %829 : vector<2x128xf32>
    %831 = vector.broadcast %26 : vector<1x128xf32> to vector<2x128xf32>
    %832 = arith.mulf %830, %831 : vector<2x128xf32>
    %833 = math.tanh %832 : vector<2x128xf32>
    %834 = vector.extract_strided_slice %833 {offsets = [0, 0], sizes = [2, 32], strides = [1, 1]} : vector<2x128xf32> to vector<2x32xf32>
    %cst_230 = arith.constant 5.000000e-01 : f32
    %835 = vector.broadcast %cst_230 : f32 to vector<2x32xf32>
    %836 = arith.mulf %835, %834 : vector<2x32xf32>
    %cst_231 = arith.constant 5.000000e-01 : f32
    %837 = vector.broadcast %cst_231 : f32 to vector<2x32xf32>
    %838 = arith.addf %836, %837 : vector<2x32xf32>
    %839 = vector.extract_strided_slice %833 {offsets = [0, 64], sizes = [2, 32], strides = [1, 1]} : vector<2x128xf32> to vector<2x32xf32>
    %840 = vector.extract_strided_slice %833 {offsets = [0, 96], sizes = [2, 32], strides = [1, 1]} : vector<2x128xf32> to vector<2x32xf32>
    %cst_232 = arith.constant 5.000000e-01 : f32
    %841 = vector.broadcast %cst_232 : f32 to vector<2x32xf32>
    %842 = arith.mulf %841, %840 : vector<2x32xf32>
    %cst_233 = arith.constant 5.000000e-01 : f32
    %843 = vector.broadcast %cst_233 : f32 to vector<2x32xf32>
    %844 = arith.addf %842, %843 : vector<2x32xf32>
    %845 = vector.extract_strided_slice %833 {offsets = [0, 32], sizes = [2, 32], strides = [1, 1]} : vector<2x128xf32> to vector<2x32xf32>
    %cst_234 = arith.constant 5.000000e-01 : f32
    %846 = vector.broadcast %cst_234 : f32 to vector<2x32xf32>
    %847 = arith.mulf %846, %845 : vector<2x32xf32>
    %cst_235 = arith.constant 5.000000e-01 : f32
    %848 = vector.broadcast %cst_235 : f32 to vector<2x32xf32>
    %849 = arith.addf %847, %848 : vector<2x32xf32>
    %850 = arith.mulf %849, %771 : vector<2x32xf32>
    %851 = arith.mulf %838, %839 : vector<2x32xf32>
    %852 = arith.addf %850, %851 : vector<2x32xf32>
    %853 = math.tanh %852 : vector<2x32xf32>
    %854 = arith.mulf %844, %853 : vector<2x32xf32>
    %855 = arith.truncf %854 : vector<2x32xf32> to vector<2x32xbf16>
    %cst_236 = arith.constant dense<0.000000e+00> : vector<2x16xf32>
    %856 = tpu.matmul %855, %404, %cst_236 {dimension_numbers = #tpu.dot_dimension_numbers<[1], [1], [0], [0], [0, 0, 1, 0], [], []>} : vector<2x32xbf16>, vector<16x32xbf16>, vector<2x16xf32> -> vector<2x16xf32>
    %857 = arith.addf %856, %412 : vector<2x16xf32>
    %858 = math.exp %857 : vector<2x16xf32>
    %cst_237 = arith.constant dense<0.000000e+00> : vector<2xf32>
    %859 = vector.multi_reduction <add>, %858, %cst_237 [1] : vector<2x16xf32> to vector<2xf32>
    %860 = vector.shape_cast %859 : vector<2xf32> to vector<2x1xf32>
    %861 = vector.broadcast %860 : vector<2x1xf32> to vector<2x16xf32>
    %862 = arith.divf %858, %861 : vector<2x16xf32>
    %863 = arith.truncf %862 : vector<2x16xf32> to vector<2x16xbf16>
    %cst_238 = arith.constant dense<0.000000e+00> : vector<2x32xf32>
    %864 = tpu.matmul %863, %404, %cst_238 {dimension_numbers = #tpu.dot_dimension_numbers<[1], [0], [0], [1], [0, 0, 1, 1], [], []>} : vector<2x16xbf16>, vector<16x32xbf16>, vector<2x32xf32> -> vector<2x32xf32>
    %865 = arith.truncf %864 : vector<2x32xf32> to vector<2x32xbf16>
    %cst_239 = arith.constant dense<0.000000e+00> : vector<2x32xf32>
    %866 = tpu.matmul %865, %13, %cst_239 {dimension_numbers = #tpu.dot_dimension_numbers<[1], [0], [0], [1], [0, 0, 1, 1], [], []>} : vector<2x32xbf16>, vector<32x32xbf16>, vector<2x32xf32> -> vector<2x32xf32>
    %cst_240 = arith.constant dense<0.000000e+00> : vector<2x32xf32>
    %867 = tpu.matmul %855, %14, %cst_240 {dimension_numbers = #tpu.dot_dimension_numbers<[1], [0], [0], [1], [0, 0, 1, 1], [], []>} : vector<2x32xbf16>, vector<32x32xbf16>, vector<2x32xf32> -> vector<2x32xf32>
    %868 = arith.addf %866, %867 : vector<2x32xf32>
    %869 = vector.broadcast %15 : vector<1x32xf32> to vector<2x32xf32>
    %870 = arith.addf %868, %869 : vector<2x32xf32>
    %871 = math.tanh %870 : vector<2x32xf32>
    %872 = arith.truncf %871 : vector<2x32xf32> to vector<2x32xbf16>
    %cst_241 = arith.constant dense<0.000000e+00> : vector<2x16xf32>
    %873 = tpu.matmul %872, %16, %cst_241 {dimension_numbers = #tpu.dot_dimension_numbers<[1], [0], [0], [1], [0, 0, 1, 1], [], []>} : vector<2x32xbf16>, vector<32x16xbf16>, vector<2x16xf32> -> vector<2x16xf32>
    %874 = vector.broadcast %17 : vector<1x16xf32> to vector<2x16xf32>
    %875 = arith.addf %873, %874 : vector<2x16xf32>
    %c10_i32_242 = arith.constant 10 : i32
    %876 = vector.broadcast %c10_i32_242 : i32 to vector<2x16xi32>
    %877 = arith.cmpi sge, %28, %876 : vector<2x16xi32>
    %c15_i32 = arith.constant 15 : i32
    %878 = vector.broadcast %c15_i32 : i32 to vector<2x16xi32>
    %879 = arith.cmpi slt, %28, %878 : vector<2x16xi32>
    %880 = arith.andi %877, %879 : vector<2x16xi1>
    %cst_243 = arith.constant -1.000000e+30 : f32
    %881 = vector.broadcast %cst_243 : f32 to vector<2x16xf32>
    %882 = arith.select %880, %875, %881 : vector<2x16xi1>, vector<2x16xf32>
    %cst_244 = arith.constant dense<0xFF800000> : vector<2xf32>
    %883 = vector.multi_reduction <maximumf>, %882, %cst_244 [1] : vector<2x16xf32> to vector<2xf32>
    %884 = vector.shape_cast %883 : vector<2xf32> to vector<2x1xf32>
    %885 = vector.broadcast %884 : vector<2x1xf32> to vector<2x16xf32>
    %886 = arith.cmpf oeq, %882, %885 : vector<2x16xf32>
    %c16_i32_245 = arith.constant 16 : i32
    %887 = vector.broadcast %c16_i32_245 : i32 to vector<2x16xi32>
    %888 = arith.select %886, %28, %887 : vector<2x16xi1>, vector<2x16xi32>
    %cst_246 = arith.constant dense<2147483647> : vector<2xi32>
    %889 = vector.multi_reduction <minsi>, %888, %cst_246 [1] : vector<2x16xi32> to vector<2xi32>
    %890 = vector.shape_cast %889 : vector<2xi32> to vector<2x1xi32>
    %cst_247 = arith.constant dense<0xFF800000> : vector<2xf32>
    %891 = vector.multi_reduction <maximumf>, %875, %cst_247 [1] : vector<2x16xf32> to vector<2xf32>
    %892 = vector.shape_cast %891 : vector<2xf32> to vector<2x1xf32>
    %893 = vector.broadcast %892 : vector<2x1xf32> to vector<2x16xf32>
    %894 = arith.subf %875, %893 : vector<2x16xf32>
    %895 = math.exp %894 : vector<2x16xf32>
    %cst_248 = arith.constant dense<0.000000e+00> : vector<2xf32>
    %896 = vector.multi_reduction <add>, %895, %cst_248 [1] : vector<2x16xf32> to vector<2xf32>
    %897 = vector.shape_cast %896 : vector<2xf32> to vector<2x1xf32>
    %898 = math.log %897 : vector<2x1xf32>
    %899 = vector.broadcast %898 : vector<2x1xf32> to vector<2x16xf32>
    %900 = arith.subf %894, %899 : vector<2x16xf32>
    %901 = vector.broadcast %890 : vector<2x1xi32> to vector<2x16xi32>
    %902 = arith.cmpi eq, %28, %901 : vector<2x16xi32>
    %903 = arith.extui %902 : vector<2x16xi1> to vector<2x16xi32>
    %904 = arith.sitofp %903 : vector<2x16xi32> to vector<2x16xf32>
    %905 = arith.truncf %904 : vector<2x16xf32> to vector<2x16xbf16>
    %cst_249 = arith.constant dense<0.000000e+00> : vector<2x128xf32>
    %906 = tpu.matmul %905, %7, %cst_249 {dimension_numbers = #tpu.dot_dimension_numbers<[1], [0], [0], [1], [0, 0, 1, 1], [], []>} : vector<2x16xbf16>, vector<16x128xbf16>, vector<2x128xf32> -> vector<2x128xf32>
    %907 = arith.truncf %854 : vector<2x32xf32> to vector<2x32xbf16>
    %cst_250 = arith.constant dense<0.000000e+00> : vector<2x128xf32>
    %908 = tpu.matmul %907, %9, %cst_250 {dimension_numbers = #tpu.dot_dimension_numbers<[1], [0], [0], [1], [0, 0, 1, 1], [], []>} : vector<2x32xbf16>, vector<32x128xbf16>, vector<2x128xf32> -> vector<2x128xf32>
    %909 = arith.addf %906, %908 : vector<2x128xf32>
    %910 = vector.broadcast %11 : vector<1x128xf32> to vector<2x128xf32>
    %911 = arith.addf %909, %910 : vector<2x128xf32>
    %912 = vector.broadcast %26 : vector<1x128xf32> to vector<2x128xf32>
    %913 = arith.mulf %911, %912 : vector<2x128xf32>
    %914 = math.tanh %913 : vector<2x128xf32>
    %915 = vector.extract_strided_slice %914 {offsets = [0, 0], sizes = [2, 32], strides = [1, 1]} : vector<2x128xf32> to vector<2x32xf32>
    %cst_251 = arith.constant 5.000000e-01 : f32
    %916 = vector.broadcast %cst_251 : f32 to vector<2x32xf32>
    %917 = arith.mulf %916, %915 : vector<2x32xf32>
    %cst_252 = arith.constant 5.000000e-01 : f32
    %918 = vector.broadcast %cst_252 : f32 to vector<2x32xf32>
    %919 = arith.addf %917, %918 : vector<2x32xf32>
    %920 = vector.extract_strided_slice %914 {offsets = [0, 64], sizes = [2, 32], strides = [1, 1]} : vector<2x128xf32> to vector<2x32xf32>
    %921 = vector.extract_strided_slice %914 {offsets = [0, 96], sizes = [2, 32], strides = [1, 1]} : vector<2x128xf32> to vector<2x32xf32>
    %cst_253 = arith.constant 5.000000e-01 : f32
    %922 = vector.broadcast %cst_253 : f32 to vector<2x32xf32>
    %923 = arith.mulf %922, %921 : vector<2x32xf32>
    %cst_254 = arith.constant 5.000000e-01 : f32
    %924 = vector.broadcast %cst_254 : f32 to vector<2x32xf32>
    %925 = arith.addf %923, %924 : vector<2x32xf32>
    %926 = vector.extract_strided_slice %914 {offsets = [0, 32], sizes = [2, 32], strides = [1, 1]} : vector<2x128xf32> to vector<2x32xf32>
    %cst_255 = arith.constant 5.000000e-01 : f32
    %927 = vector.broadcast %cst_255 : f32 to vector<2x32xf32>
    %928 = arith.mulf %927, %926 : vector<2x32xf32>
    %cst_256 = arith.constant 5.000000e-01 : f32
    %929 = vector.broadcast %cst_256 : f32 to vector<2x32xf32>
    %930 = arith.addf %928, %929 : vector<2x32xf32>
    %931 = arith.mulf %930, %852 : vector<2x32xf32>
    %932 = arith.mulf %919, %920 : vector<2x32xf32>
    %933 = arith.addf %931, %932 : vector<2x32xf32>
    %934 = math.tanh %933 : vector<2x32xf32>
    %935 = arith.mulf %925, %934 : vector<2x32xf32>
    %936 = arith.truncf %935 : vector<2x32xf32> to vector<2x32xbf16>
    %cst_257 = arith.constant dense<0.000000e+00> : vector<2x16xf32>
    %937 = tpu.matmul %936, %404, %cst_257 {dimension_numbers = #tpu.dot_dimension_numbers<[1], [1], [0], [0], [0, 0, 1, 0], [], []>} : vector<2x32xbf16>, vector<16x32xbf16>, vector<2x16xf32> -> vector<2x16xf32>
    %938 = arith.addf %937, %412 : vector<2x16xf32>
    %939 = math.exp %938 : vector<2x16xf32>
    %cst_258 = arith.constant dense<0.000000e+00> : vector<2xf32>
    %940 = vector.multi_reduction <add>, %939, %cst_258 [1] : vector<2x16xf32> to vector<2xf32>
    %941 = vector.shape_cast %940 : vector<2xf32> to vector<2x1xf32>
    %942 = vector.broadcast %941 : vector<2x1xf32> to vector<2x16xf32>
    %943 = arith.divf %939, %942 : vector<2x16xf32>
    %944 = arith.truncf %943 : vector<2x16xf32> to vector<2x16xbf16>
    %cst_259 = arith.constant dense<0.000000e+00> : vector<2x32xf32>
    %945 = tpu.matmul %944, %404, %cst_259 {dimension_numbers = #tpu.dot_dimension_numbers<[1], [0], [0], [1], [0, 0, 1, 1], [], []>} : vector<2x16xbf16>, vector<16x32xbf16>, vector<2x32xf32> -> vector<2x32xf32>
    %946 = arith.truncf %945 : vector<2x32xf32> to vector<2x32xbf16>
    %cst_260 = arith.constant dense<0.000000e+00> : vector<2x32xf32>
    %947 = tpu.matmul %946, %13, %cst_260 {dimension_numbers = #tpu.dot_dimension_numbers<[1], [0], [0], [1], [0, 0, 1, 1], [], []>} : vector<2x32xbf16>, vector<32x32xbf16>, vector<2x32xf32> -> vector<2x32xf32>
    %cst_261 = arith.constant dense<0.000000e+00> : vector<2x32xf32>
    %948 = tpu.matmul %936, %14, %cst_261 {dimension_numbers = #tpu.dot_dimension_numbers<[1], [0], [0], [1], [0, 0, 1, 1], [], []>} : vector<2x32xbf16>, vector<32x32xbf16>, vector<2x32xf32> -> vector<2x32xf32>
    %949 = arith.addf %947, %948 : vector<2x32xf32>
    %950 = vector.broadcast %15 : vector<1x32xf32> to vector<2x32xf32>
    %951 = arith.addf %949, %950 : vector<2x32xf32>
    %952 = math.tanh %951 : vector<2x32xf32>
    %953 = arith.truncf %952 : vector<2x32xf32> to vector<2x32xbf16>
    %cst_262 = arith.constant dense<0.000000e+00> : vector<2x16xf32>
    %954 = tpu.matmul %953, %16, %cst_262 {dimension_numbers = #tpu.dot_dimension_numbers<[1], [0], [0], [1], [0, 0, 1, 1], [], []>} : vector<2x32xbf16>, vector<32x16xbf16>, vector<2x16xf32> -> vector<2x16xf32>
    %955 = vector.broadcast %17 : vector<1x16xf32> to vector<2x16xf32>
    %956 = arith.addf %954, %955 : vector<2x16xf32>
    %c1_i32_263 = arith.constant 1 : i32
    %957 = vector.broadcast %c1_i32_263 : i32 to vector<2x16xi32>
    %958 = arith.cmpi sge, %28, %957 : vector<2x16xi32>
    %c3_i32_264 = arith.constant 3 : i32
    %959 = vector.broadcast %c3_i32_264 : i32 to vector<2x16xi32>
    %960 = arith.cmpi slt, %28, %959 : vector<2x16xi32>
    %961 = arith.andi %958, %960 : vector<2x16xi1>
    %cst_265 = arith.constant -1.000000e+30 : f32
    %962 = vector.broadcast %cst_265 : f32 to vector<2x16xf32>
    %963 = arith.select %961, %956, %962 : vector<2x16xi1>, vector<2x16xf32>
    %cst_266 = arith.constant dense<0xFF800000> : vector<2xf32>
    %964 = vector.multi_reduction <maximumf>, %963, %cst_266 [1] : vector<2x16xf32> to vector<2xf32>
    %965 = vector.shape_cast %964 : vector<2xf32> to vector<2x1xf32>
    %966 = vector.broadcast %965 : vector<2x1xf32> to vector<2x16xf32>
    %967 = arith.cmpf oeq, %963, %966 : vector<2x16xf32>
    %c16_i32_267 = arith.constant 16 : i32
    %968 = vector.broadcast %c16_i32_267 : i32 to vector<2x16xi32>
    %969 = arith.select %967, %28, %968 : vector<2x16xi1>, vector<2x16xi32>
    %cst_268 = arith.constant dense<2147483647> : vector<2xi32>
    %970 = vector.multi_reduction <minsi>, %969, %cst_268 [1] : vector<2x16xi32> to vector<2xi32>
    %971 = vector.shape_cast %970 : vector<2xi32> to vector<2x1xi32>
    %cst_269 = arith.constant dense<0xFF800000> : vector<2xf32>
    %972 = vector.multi_reduction <maximumf>, %956, %cst_269 [1] : vector<2x16xf32> to vector<2xf32>
    %973 = vector.shape_cast %972 : vector<2xf32> to vector<2x1xf32>
    %974 = vector.broadcast %973 : vector<2x1xf32> to vector<2x16xf32>
    %975 = arith.subf %956, %974 : vector<2x16xf32>
    %976 = math.exp %975 : vector<2x16xf32>
    %cst_270 = arith.constant dense<0.000000e+00> : vector<2xf32>
    %977 = vector.multi_reduction <add>, %976, %cst_270 [1] : vector<2x16xf32> to vector<2xf32>
    %978 = vector.shape_cast %977 : vector<2xf32> to vector<2x1xf32>
    %979 = math.log %978 : vector<2x1xf32>
    %980 = vector.broadcast %979 : vector<2x1xf32> to vector<2x16xf32>
    %981 = arith.subf %975, %980 : vector<2x16xf32>
    %982 = vector.broadcast %971 : vector<2x1xi32> to vector<2x16xi32>
    %983 = arith.cmpi eq, %28, %982 : vector<2x16xi32>
    %984 = arith.extui %983 : vector<2x16xi1> to vector<2x16xi32>
    %985 = arith.sitofp %984 : vector<2x16xi32> to vector<2x16xf32>
    %986 = arith.truncf %985 : vector<2x16xf32> to vector<2x16xbf16>
    %cst_271 = arith.constant dense<0.000000e+00> : vector<2x128xf32>
    %987 = tpu.matmul %986, %7, %cst_271 {dimension_numbers = #tpu.dot_dimension_numbers<[1], [0], [0], [1], [0, 0, 1, 1], [], []>} : vector<2x16xbf16>, vector<16x128xbf16>, vector<2x128xf32> -> vector<2x128xf32>
    %988 = arith.truncf %935 : vector<2x32xf32> to vector<2x32xbf16>
    %cst_272 = arith.constant dense<0.000000e+00> : vector<2x128xf32>
    %989 = tpu.matmul %988, %9, %cst_272 {dimension_numbers = #tpu.dot_dimension_numbers<[1], [0], [0], [1], [0, 0, 1, 1], [], []>} : vector<2x32xbf16>, vector<32x128xbf16>, vector<2x128xf32> -> vector<2x128xf32>
    %990 = arith.addf %987, %989 : vector<2x128xf32>
    %991 = vector.broadcast %11 : vector<1x128xf32> to vector<2x128xf32>
    %992 = arith.addf %990, %991 : vector<2x128xf32>
    %993 = vector.broadcast %26 : vector<1x128xf32> to vector<2x128xf32>
    %994 = arith.mulf %992, %993 : vector<2x128xf32>
    %995 = math.tanh %994 : vector<2x128xf32>
    %996 = vector.extract_strided_slice %995 {offsets = [0, 0], sizes = [2, 32], strides = [1, 1]} : vector<2x128xf32> to vector<2x32xf32>
    %cst_273 = arith.constant 5.000000e-01 : f32
    %997 = vector.broadcast %cst_273 : f32 to vector<2x32xf32>
    %998 = arith.mulf %997, %996 : vector<2x32xf32>
    %cst_274 = arith.constant 5.000000e-01 : f32
    %999 = vector.broadcast %cst_274 : f32 to vector<2x32xf32>
    %1000 = arith.addf %998, %999 : vector<2x32xf32>
    %1001 = vector.extract_strided_slice %995 {offsets = [0, 64], sizes = [2, 32], strides = [1, 1]} : vector<2x128xf32> to vector<2x32xf32>
    %1002 = vector.extract_strided_slice %995 {offsets = [0, 96], sizes = [2, 32], strides = [1, 1]} : vector<2x128xf32> to vector<2x32xf32>
    %cst_275 = arith.constant 5.000000e-01 : f32
    %1003 = vector.broadcast %cst_275 : f32 to vector<2x32xf32>
    %1004 = arith.mulf %1003, %1002 : vector<2x32xf32>
    %cst_276 = arith.constant 5.000000e-01 : f32
    %1005 = vector.broadcast %cst_276 : f32 to vector<2x32xf32>
    %1006 = arith.addf %1004, %1005 : vector<2x32xf32>
    %1007 = vector.extract_strided_slice %995 {offsets = [0, 32], sizes = [2, 32], strides = [1, 1]} : vector<2x128xf32> to vector<2x32xf32>
    %cst_277 = arith.constant 5.000000e-01 : f32
    %1008 = vector.broadcast %cst_277 : f32 to vector<2x32xf32>
    %1009 = arith.mulf %1008, %1007 : vector<2x32xf32>
    %cst_278 = arith.constant 5.000000e-01 : f32
    %1010 = vector.broadcast %cst_278 : f32 to vector<2x32xf32>
    %1011 = arith.addf %1009, %1010 : vector<2x32xf32>
    %1012 = arith.mulf %1011, %933 : vector<2x32xf32>
    %1013 = arith.mulf %1000, %1001 : vector<2x32xf32>
    %1014 = arith.addf %1012, %1013 : vector<2x32xf32>
    %1015 = math.tanh %1014 : vector<2x32xf32>
    %1016 = arith.mulf %1006, %1015 : vector<2x32xf32>
    %1017 = arith.truncf %1016 : vector<2x32xf32> to vector<2x32xbf16>
    %cst_279 = arith.constant dense<0.000000e+00> : vector<2x16xf32>
    %1018 = tpu.matmul %1017, %404, %cst_279 {dimension_numbers = #tpu.dot_dimension_numbers<[1], [1], [0], [0], [0, 0, 1, 0], [], []>} : vector<2x32xbf16>, vector<16x32xbf16>, vector<2x16xf32> -> vector<2x16xf32>
    %1019 = arith.addf %1018, %412 : vector<2x16xf32>
    %1020 = math.exp %1019 : vector<2x16xf32>
    %cst_280 = arith.constant dense<0.000000e+00> : vector<2xf32>
    %1021 = vector.multi_reduction <add>, %1020, %cst_280 [1] : vector<2x16xf32> to vector<2xf32>
    %1022 = vector.shape_cast %1021 : vector<2xf32> to vector<2x1xf32>
    %1023 = vector.broadcast %1022 : vector<2x1xf32> to vector<2x16xf32>
    %1024 = arith.divf %1020, %1023 : vector<2x16xf32>
    %1025 = arith.truncf %1024 : vector<2x16xf32> to vector<2x16xbf16>
    %cst_281 = arith.constant dense<0.000000e+00> : vector<2x32xf32>
    %1026 = tpu.matmul %1025, %404, %cst_281 {dimension_numbers = #tpu.dot_dimension_numbers<[1], [0], [0], [1], [0, 0, 1, 1], [], []>} : vector<2x16xbf16>, vector<16x32xbf16>, vector<2x32xf32> -> vector<2x32xf32>
    %1027 = arith.truncf %1026 : vector<2x32xf32> to vector<2x32xbf16>
    %cst_282 = arith.constant dense<0.000000e+00> : vector<2x32xf32>
    %1028 = tpu.matmul %1027, %13, %cst_282 {dimension_numbers = #tpu.dot_dimension_numbers<[1], [0], [0], [1], [0, 0, 1, 1], [], []>} : vector<2x32xbf16>, vector<32x32xbf16>, vector<2x32xf32> -> vector<2x32xf32>
    %cst_283 = arith.constant dense<0.000000e+00> : vector<2x32xf32>
    %1029 = tpu.matmul %1017, %14, %cst_283 {dimension_numbers = #tpu.dot_dimension_numbers<[1], [0], [0], [1], [0, 0, 1, 1], [], []>} : vector<2x32xbf16>, vector<32x32xbf16>, vector<2x32xf32> -> vector<2x32xf32>
    %1030 = arith.addf %1028, %1029 : vector<2x32xf32>
    %1031 = vector.broadcast %15 : vector<1x32xf32> to vector<2x32xf32>
    %1032 = arith.addf %1030, %1031 : vector<2x32xf32>
    %1033 = math.tanh %1032 : vector<2x32xf32>
    %1034 = arith.truncf %1033 : vector<2x32xf32> to vector<2x32xbf16>
    %cst_284 = arith.constant dense<0.000000e+00> : vector<2x16xf32>
    %1035 = tpu.matmul %1034, %16, %cst_284 {dimension_numbers = #tpu.dot_dimension_numbers<[1], [0], [0], [1], [0, 0, 1, 1], [], []>} : vector<2x32xbf16>, vector<32x16xbf16>, vector<2x16xf32> -> vector<2x16xf32>
    %1036 = vector.broadcast %17 : vector<1x16xf32> to vector<2x16xf32>
    %1037 = arith.addf %1035, %1036 : vector<2x16xf32>
    %c10_i32_285 = arith.constant 10 : i32
    %1038 = vector.broadcast %c10_i32_285 : i32 to vector<2x16xi32>
    %1039 = arith.cmpi sge, %28, %1038 : vector<2x16xi32>
    %c15_i32_286 = arith.constant 15 : i32
    %1040 = vector.broadcast %c15_i32_286 : i32 to vector<2x16xi32>
    %1041 = arith.cmpi slt, %28, %1040 : vector<2x16xi32>
    %1042 = arith.andi %1039, %1041 : vector<2x16xi1>
    %cst_287 = arith.constant -1.000000e+30 : f32
    %1043 = vector.broadcast %cst_287 : f32 to vector<2x16xf32>
    %1044 = arith.select %1042, %1037, %1043 : vector<2x16xi1>, vector<2x16xf32>
    %cst_288 = arith.constant dense<0xFF800000> : vector<2xf32>
    %1045 = vector.multi_reduction <maximumf>, %1044, %cst_288 [1] : vector<2x16xf32> to vector<2xf32>
    %1046 = vector.shape_cast %1045 : vector<2xf32> to vector<2x1xf32>
    %1047 = vector.broadcast %1046 : vector<2x1xf32> to vector<2x16xf32>
    %1048 = arith.cmpf oeq, %1044, %1047 : vector<2x16xf32>
    %c16_i32_289 = arith.constant 16 : i32
    %1049 = vector.broadcast %c16_i32_289 : i32 to vector<2x16xi32>
    %1050 = arith.select %1048, %28, %1049 : vector<2x16xi1>, vector<2x16xi32>
    %cst_290 = arith.constant dense<2147483647> : vector<2xi32>
    %1051 = vector.multi_reduction <minsi>, %1050, %cst_290 [1] : vector<2x16xi32> to vector<2xi32>
    %1052 = vector.shape_cast %1051 : vector<2xi32> to vector<2x1xi32>
    %cst_291 = arith.constant dense<0xFF800000> : vector<2xf32>
    %1053 = vector.multi_reduction <maximumf>, %1037, %cst_291 [1] : vector<2x16xf32> to vector<2xf32>
    %1054 = vector.shape_cast %1053 : vector<2xf32> to vector<2x1xf32>
    %1055 = vector.broadcast %1054 : vector<2x1xf32> to vector<2x16xf32>
    %1056 = arith.subf %1037, %1055 : vector<2x16xf32>
    %1057 = math.exp %1056 : vector<2x16xf32>
    %cst_292 = arith.constant dense<0.000000e+00> : vector<2xf32>
    %1058 = vector.multi_reduction <add>, %1057, %cst_292 [1] : vector<2x16xf32> to vector<2xf32>
    %1059 = vector.shape_cast %1058 : vector<2xf32> to vector<2x1xf32>
    %1060 = math.log %1059 : vector<2x1xf32>
    %1061 = vector.broadcast %1060 : vector<2x1xf32> to vector<2x16xf32>
    %1062 = arith.subf %1056, %1061 : vector<2x16xf32>
    %1063 = tpu.concatenate %495, %576, %657, %738, %819, %900, %981, %1062 in 1 : vector<2x16xf32>, vector<2x16xf32>, vector<2x16xf32>, vector<2x16xf32>, vector<2x16xf32>, vector<2x16xf32>, vector<2x16xf32>, vector<2x16xf32> -> vector<2x128xf32>
    %c0_293 = arith.constant 0 : index
    %c0_294 = arith.constant 0 : index
    %1064 = vector.load %arg17[%c0_293, %c0_294] : memref<2x128xf32, #tpu.memory_space<vmem>>, vector<2x128xf32>
    tpu.vector_store %arg17[%c0_293, %c0_294], %1063 {strides = array<i32>} : memref<2x128xf32, #tpu.memory_space<vmem>>, vector<2x128xf32>,
    %1065 = tpu.concatenate %485, %566, %647, %728, %809, %890, %971, %1052 in 1 : vector<2x1xi32>, vector<2x1xi32>, vector<2x1xi32>, vector<2x1xi32>, vector<2x1xi32>, vector<2x1xi32>, vector<2x1xi32>, vector<2x1xi32> -> vector<2x8xi32>
    %c0_295 = arith.constant 0 : index
    %c0_296 = arith.constant 0 : index
    %1066 = vector.load %arg18[%c0_295, %c0_296] : memref<2x8xi32, #tpu.memory_space<vmem>>, vector<2x8xi32>
    tpu.vector_store %arg18[%c0_295, %c0_296], %1065 {strides = array<i32>} : memref<2x8xi32, #tpu.memory_space<vmem>>, vector<2x8xi32>,
    return
  }
}

</mosaic_0001>

<llo_original>
// kernel: nao_epd_forward.1
$region0: #{nao_epd_forward.1}
  #allocation0 [shape = 'u32[]', space=smem, size = 0x4, offset = 0x4, fixed_abs, tag = 'smem constant byte address 0x4 - core index']
  #allocation1 [shape = 'u32[144,128]{1,0:T(1,128)}', space=vmem, size = 0x12000, scoped, tag = 'internal scratch']
  %s0 = inlined_call_operand.vmem [shape: s32[2,8], index: 0, kind: input, shape index: {}]
  %s1 = inlined_call_operand.vmem [shape: s32[2,8], index: 1, kind: input, shape index: {}]
  %s2 = inlined_call_operand.vmem [shape: bf16[16,32], index: 2, kind: input, shape index: {}]
  %s3 = inlined_call_operand.vmem [shape: bf16[32,128], index: 3, kind: input, shape index: {}]
  %s4 = inlined_call_operand.vmem [shape: bf16[32,128], index: 4, kind: input, shape index: {}]
  %s5 = inlined_call_operand.vmem [shape: f32[1,128], index: 5, kind: input, shape index: {}]
  %s6 = inlined_call_operand.vmem [shape: bf16[32,32], index: 6, kind: input, shape index: {}]
  %s7 = inlined_call_operand.vmem [shape: bf16[32,1], index: 7, kind: input, shape index: {}]
  %s8 = inlined_call_operand.hbm [shape: bf16[16,32], index: 8, kind: input, shape index: {}]
  %s9 = inlined_call_operand.vmem [shape: bf16[32,128], index: 9, kind: input, shape index: {}]
  %s10 = inlined_call_operand.vmem [shape: bf16[32,128], index: 10, kind: input, shape index: {}]
  %s11 = inlined_call_operand.hbm [shape: f32[1,128], index: 11, kind: input, shape index: {}]
  %s12 = inlined_call_operand.vmem [shape: bf16[64,32], index: 12, kind: input, shape index: {}]
  %s13 = inlined_call_operand.hbm [shape: f32[1,32], index: 13, kind: input, shape index: {}]
  %s14 = inlined_call_operand.vmem [shape: bf16[32,16], index: 14, kind: input, shape index: {}]
  %s15 = inlined_call_operand.vmem [shape: f32[1,16], index: 15, kind: input, shape index: {}]
  %s16 = inlined_call_operand.vmem [shape: f32[2,1], index: 16, kind: output, shape index: {0}]
  %s17 = inlined_call_operand.vmem [shape: f32[2,128], index: 17, kind: output, shape index: {1}]
  %s18 = inlined_call_operand.hbm [shape: s32[2,8], index: 18, kind: output, shape index: {2}]
  %19 = xla_tuple %s16, %s17, %s18
  %s20 = sld [smem:[#allocation0]]
  $region102: #{nao_epd_forward.1} parent=0
    _
  %s22 = ssub.s32 1, %s20
  %s23 = scalar_select 0, %s22, %s20
  $region1: #{nao_epd_forward.1} parent=0
    #allocation2 [shape = 'u8[4096]{0}', space=vmem, size = 0x1000, scoped, tag = 'input window, operand 8, single buffered']
    #allocation3 [shape = 's32[1]{0}', space=sflag, size = 0x4, scoped, tag = 'scoped memory for nao_epd_forward.1']
    #allocation4 [shape = 's32[1]{0}', space=sflag, size = 0x4, scoped, tag = 'scoped memory for nao_epd_forward.1']
    #allocation5 [shape = 'u8[512]{0}', space=vmem, size = 0x400, scoped, tag = 'input window, operand 11, single buffered']
    #allocation6 [shape = 's32[1]{0}', space=sflag, size = 0x4, scoped, tag = 'scoped memory for nao_epd_forward.1']
    #allocation7 [shape = 'u8[512]{0}', space=vmem, size = 0x400, scoped, tag = 'input window, operand 13, single buffered']
    #allocation8 [shape = 'u8[1024]{0}', space=vmem, size = 0x400, scoped, tag = 'output window, operand 2, single buffered']
    %24 = vsyncpa [#allocation3], 0
    %25 = vsyncpa [#allocation6], 0
    %26 = vsyncpa [#allocation4], 0
    // Predicated region
    $region2: #{nao_epd_forward.1} parent=1 // pred_check
      _
    $region3: #{nao_epd_forward.1} parent=1 // pred_check_branch
      %28 = sbr.rel (0) target = $region5
    $region4: #{nao_epd_forward.1} parent=1 // pred_region
      _
    $region5: #{nao_epd_forward.1} parent=1 // pred_fallthru
      _
    // Predicated region
    $region6: #{nao_epd_forward.1} parent=1 // pred_check
      _
    $region7: #{nao_epd_forward.1} parent=1 // pred_check_branch
      %30 = sbr.rel (0) target = $region9
    $region8: #{nao_epd_forward.1} parent=1 // pred_region
      _
    $region9: #{nao_epd_forward.1} parent=1 // pred_fallthru
      _
    // Predicated region
    $region10: #{nao_epd_forward.1} parent=1 // pred_check
      _
    $region11: #{nao_epd_forward.1} parent=1 // pred_check_branch
      %32 = sbr.rel (0) target = $region13
    $region12: #{nao_epd_forward.1} parent=1 // pred_region
      _
    $region13: #{nao_epd_forward.1} parent=1 // pred_fallthru
      _
    // Predicated region
    $region14: #{nao_epd_forward.1} parent=1 // pred_check
      _
    $region15: #{nao_epd_forward.1} parent=1 // pred_check_branch
      %34 = sbr.rel (0) target = $region17
    $region16: #{nao_epd_forward.1} parent=1 // pred_region
      _
    $region17: #{nao_epd_forward.1} parent=1 // pred_fallthru
      _
    // Predicated region
    $region18: #{nao_epd_forward.1} parent=1 // pred_check
      _
    $region19: #{nao_epd_forward.1} parent=1 // pred_check_branch
      %36 = sbr.rel (0) target = $region21
    $region20: #{nao_epd_forward.1} parent=1 // pred_region
      _
    $region21: #{nao_epd_forward.1} parent=1 // pred_fallthru
      _
    // Predicated region
    $region22: #{nao_epd_forward.1} parent=1 // pred_check
      _
    $region23: #{nao_epd_forward.1} parent=1 // pred_check_branch
      %38 = sbr.rel (0) target = $region25
    $region24: #{nao_epd_forward.1} parent=1 // pred_region
      _
    $region25: #{nao_epd_forward.1} parent=1 // pred_fallthru
      _
    // Predicated region
    $region26: #{nao_epd_forward.1} parent=1 // pred_check
      _
    $region27: #{nao_epd_forward.1} parent=1 // pred_check_branch
      %40 = sbr.rel (0) target = $region29
    $region28: #{nao_epd_forward.1} parent=1 // pred_region
      _
    $region29: #{nao_epd_forward.1} parent=1 // pred_fallthru
      _
    // Predicated region
    $region30: #{nao_epd_forward.1} parent=1 // pred_check
      _
    $region31: #{nao_epd_forward.1} parent=1 // pred_check_branch
      %42 = sbr.rel (0) target = $region33
    $region32: #{nao_epd_forward.1} parent=1 // pred_region
      _
    $region33: #{nao_epd_forward.1} parent=1 // pred_fallthru
      _
    // Predicated region
    $region34: #{nao_epd_forward.1} parent=1 // pred_check
      _
    $region35: #{nao_epd_forward.1} parent=1 // pred_check_branch
      %44 = sbr.rel (0) target = $region37
    $region36: #{nao_epd_forward.1} parent=1 // pred_region
      %s46 = ssub.s32 128, 128
      %47 = vsyncadd [#allocation3], %s46
      %s48 = sshll.u32 [#allocation2], 4
      %s49 = int_to_ptr.vmem [resolvable:$true] %s48
      %54 = dma.hbm_to_vmem [thread:$0]  %s8, 128, %s49, [#allocation3], 64, 64, 4
    $region37: #{nao_epd_forward.1} parent=1 // pred_fallthru
      _
    // Predicated region
    $region38: #{nao_epd_forward.1} parent=1 // pred_check
      _
    $region39: #{nao_epd_forward.1} parent=1 // pred_check_branch
      %56 = sbr.rel (0) target = $region41
    $region40: #{nao_epd_forward.1} parent=1 // pred_region
      _
    $region41: #{nao_epd_forward.1} parent=1 // pred_fallthru
      _
    // Predicated region
    $region42: #{nao_epd_forward.1} parent=1 // pred_check
      _
    $region43: #{nao_epd_forward.1} parent=1 // pred_check_branch
      %58 = sbr.rel (0) target = $region45
    $region44: #{nao_epd_forward.1} parent=1 // pred_region
      _
    $region45: #{nao_epd_forward.1} parent=1 // pred_fallthru
      _
    // Predicated region
    $region46: #{nao_epd_forward.1} parent=1 // pred_check
      _
    $region47: #{nao_epd_forward.1} parent=1 // pred_check_branch
      %60 = sbr.rel (0) target = $region49
    $region48: #{nao_epd_forward.1} parent=1 // pred_region
      %s62 = ssub.s32 16, 16
      %63 = vsyncadd [#allocation6], %s62
      %s65 = sshll.u32 [#allocation5], 4
      %s66 = int_to_ptr.vmem [resolvable:$true] %s65
      %68 = dma.hbm_to_vmem [thread:$0]  %s11, 16, %s66, [#allocation6]
    $region49: #{nao_epd_forward.1} parent=1 // pred_fallthru
      _
    // Predicated region
    $region50: #{nao_epd_forward.1} parent=1 // pred_check
      _
    $region51: #{nao_epd_forward.1} parent=1 // pred_check_branch
      %70 = sbr.rel (0) target = $region53
    $region52: #{nao_epd_forward.1} parent=1 // pred_region
      _
    $region53: #{nao_epd_forward.1} parent=1 // pred_fallthru
      _
    // Predicated region
    $region54: #{nao_epd_forward.1} parent=1 // pred_check
      _
    $region55: #{nao_epd_forward.1} parent=1 // pred_check_branch
      %72 = sbr.rel (0) target = $region57
    $region56: #{nao_epd_forward.1} parent=1 // pred_region
      %s74 = ssub.s32 16, 16
      %75 = vsyncadd [#allocation6], %s74
      %s77 = sshll.u32 [#allocation7], 4
      %s78 = int_to_ptr.vmem [resolvable:$true] %s77
      %80 = dma.hbm_to_vmem [thread:$0]  %s13, 16, %s78, [#allocation6]
    $region57: #{nao_epd_forward.1} parent=1 // pred_fallthru
      _
    // Predicated region
    $region58: #{nao_epd_forward.1} parent=1 // pred_check
      _
    $region59: #{nao_epd_forward.1} parent=1 // pred_check_branch
      %82 = sbr.rel (0) target = $region61
    $region60: #{nao_epd_forward.1} parent=1 // pred_region
      _
    $region61: #{nao_epd_forward.1} parent=1 // pred_fallthru
      _
    // Predicated region
    $region62: #{nao_epd_forward.1} parent=1 // pred_check
      _
    $region63: #{nao_epd_forward.1} parent=1 // pred_check_branch
      %84 = sbr.rel (0) target = $region65
    $region64: #{nao_epd_forward.1} parent=1 // pred_region
      _
    $region65: #{nao_epd_forward.1} parent=1 // pred_fallthru
      _
    // Predicated region
    $region66: #{nao_epd_forward.1} parent=1 // pred_check
      _
    $region67: #{nao_epd_forward.1} parent=1 // pred_check_branch
      %86 = sbr.rel (0) target = $region69
    $region68: #{nao_epd_forward.1} parent=1 // pred_region
      %87 = dma.done [#allocation3], 128
    $region69: #{nao_epd_forward.1} parent=1 // pred_fallthru
      _
    // Predicated region
    $region70: #{nao_epd_forward.1} parent=1 // pred_check
      _
    $region71: #{nao_epd_forward.1} parent=1 // pred_check_branch
      %89 = sbr.rel (0) target = $region73
    $region72: #{nao_epd_forward.1} parent=1 // pred_region
      %90 = dma.done [#allocation6], 16
    $region73: #{nao_epd_forward.1} parent=1 // pred_fallthru
      _
    // Predicated region
    $region74: #{nao_epd_forward.1} parent=1 // pred_check
      _
    $region75: #{nao_epd_forward.1} parent=1 // pred_check_branch
      %92 = sbr.rel (0) target = $region77
    $region76: #{nao_epd_forward.1} parent=1 // pred_region
      %93 = dma.done [#allocation6], 16
    $region77: #{nao_epd_forward.1} parent=1 // pred_fallthru
      _
    %v95 = vld [vmem:[%s2] sm:$0xf]
    %v96 = vld [vmem:[%s2 + $0x4] sm:$0xf]
    %v97 = vld [vmem:[%s3] sm:$0xf]
    %v98 = vld [vmem:[%s3 + $0x4] sm:$0xf]
    %v99 = vld [vmem:[%s3 + $0x8] sm:$0xf]
    %v100 = vld [vmem:[%s3 + $0xc] sm:$0xf]
    %v103 = vunpack.c.l.b16 %v95
    %v104 = vunpack.c.l.b16 %v96
    %v105 = vpack.c.b16 %v104, %v103
    %v110 = vunpack.c.l.b16 %v97
    %v111 = vunpack.c.l.b16 %v98
    %v112 = vunpack.c.l.b16 %v99
    %v113 = vunpack.c.l.b16 %v100
    %v114 = vpack.c.b16 %v111, %v110
    %v115 = vpack.c.b16 %v113, %v112
    %vm118 = vcmask 261120
    %v120 = vsel %vm118, %v105, 0
    %122 = vmatprep.subr.bf16.mxu0 0
    %123 = vmatpush1.bf16.msra.mxu0 0
    %124 = vmatprep.subr.bf16.mxu0 0
    %125 = vmatpush1.bf16.msra.mxu0 0
    %126 = vmatprep.subr.bf16.mxu0 0
    %127 = vmatpush1.bf16.msra.mxu0 0
    %128 = vmatprep.subr.bf16.mxu0 0
    %129 = vmatpush1.bf16.msra.mxu0 0
    %130 = vmatprep.subr.bf16.mxu0 0
    %131 = vmatpush1.bf16.msra.mxu0 0
    %132 = vmatprep.subr.bf16.mxu0 0
    %133 = vmatpush1.bf16.msra.mxu0 0
    %134 = vmatprep.subr.bf16.mxu0 0
    %135 = vmatpush1.bf16.msra.mxu0 %v115
    %136 = vmatprep.subr.bf16.mxu0 0
    %137 = vmatpush1.bf16.msra.mxu0 %v114
    %138 = vmatprep.subr.bf16.mxu0 0
    %139 = vmatpush2.bf16.msra.mxu0 0
    %140 = vmatprep.subr.bf16.mxu0 0
    %141 = vmatpush2.bf16.msra.mxu0 0
    %142 = vmatprep.subr.bf16.mxu0 0
    %143 = vmatpush2.bf16.msra.mxu0 0
    %144 = vmatprep.subr.bf16.mxu0 0
    %145 = vmatpush2.bf16.msra.mxu0 0
    %146 = vmatprep.subr.bf16.mxu0 0
    %147 = vmatpush2.bf16.msra.mxu0 0
    %148 = vmatprep.subr.bf16.mxu0 0
    %149 = vmatpush2.bf16.msra.mxu0 0
    %150 = vmatprep.subr.bf16.mxu0 0
    %151 = vmatpush2.bf16.msra.mxu0 0
    %152 = vmatprep.subr.bf16.mxu0 0
    %153 = vmatpush2.bf16.msra.mxu0 0
    %154 = vmatprep.mubr.bf16.mxu0 0
    %155 = vmatmul.mubr.bf16.gmra.mxu0 %v120
    %v156 = vpop.f32.mrf.mxu0
    %v157 = vadd.f32 0.0, %v156
    %v158 = vpop.f32.mrf.mxu0
    %v159 = vpop.f32.mrf.mxu0
    %v160 = vadd.f32 0.0, %v159
    %v161 = vpop.f32.mrf.mxu0
    %162 = vdwg.mxu0
    %v163 = vpack.c.bf16 %v160, %v157
    %v164 = vld [vmem:[#allocation2] sm:$0xf]
    %v165 = vld [vmem:[#allocation2 + $0x4] sm:$0xf]
    %v166 = vld [vmem:[%s9] sm:$0xf]
    %v167 = vld [vmem:[%s9 + $0x4] sm:$0xf]
    %v168 = vld [vmem:[%s9 + $0x8] sm:$0xf]
    %v169 = vld [vmem:[%s9 + $0xc] sm:$0xf]
    %v172 = vunpack.c.l.b16 %v164
    %v173 = vunpack.c.l.b16 %v165
    %v174 = vpack.c.b16 %v173, %v172
    %v179 = vunpack.c.l.b16 %v166
    %v180 = vunpack.c.l.b16 %v167
    %v181 = vunpack.c.l.b16 %v168
    %v182 = vunpack.c.l.b16 %v169
    %v183 = vpack.c.b16 %v180, %v179
    %v184 = vpack.c.b16 %v182, %v181
    %v188 = vsel %vm118, %v174, 0
    %190 = vmatprep.subr.bf16.mxu0 0
    %191 = vmatpush1.bf16.msra.mxu0 0
    %192 = vmatprep.subr.bf16.mxu0 0
    %193 = vmatpush1.bf16.msra.mxu0 0
    %194 = vmatprep.subr.bf16.mxu0 0
    %195 = vmatpush1.bf16.msra.mxu0 0
    %196 = vmatprep.subr.bf16.mxu0 0
    %197 = vmatpush1.bf16.msra.mxu0 0
    %198 = vmatprep.subr.bf16.mxu0 0
    %199 = vmatpush1.bf16.msra.mxu0 0
    %200 = vmatprep.subr.bf16.mxu0 0
    %201 = vmatpush1.bf16.msra.mxu0 0
    %202 = vmatprep.subr.bf16.mxu0 0
    %203 = vmatpush1.bf16.msra.mxu0 %v184
    %204 = vmatprep.subr.bf16.mxu0 0
    %205 = vmatpush1.bf16.msra.mxu0 %v183
    %206 = vmatprep.subr.bf16.mxu0 0
    %207 = vmatpush2.bf16.msra.mxu0 0
    %208 = vmatprep.subr.bf16.mxu0 0
    %209 = vmatpush2.bf16.msra.mxu0 0
    %210 = vmatprep.subr.bf16.mxu0 0
    %211 = vmatpush2.bf16.msra.mxu0 0
    %212 = vmatprep.subr.bf16.mxu0 0
    %213 = vmatpush2.bf16.msra.mxu0 0
    %214 = vmatprep.subr.bf16.mxu0 0
    %215 = vmatpush2.bf16.msra.mxu0 0
    %216 = vmatprep.subr.bf16.mxu0 0
    %217 = vmatpush2.bf16.msra.mxu0 0
    %218 = vmatprep.subr.bf16.mxu0 0
    %219 = vmatpush2.bf16.msra.mxu0 0
    %220 = vmatprep.subr.bf16.mxu0 0
    %221 = vmatpush2.bf16.msra.mxu0 0
    %222 = vmatprep.mubr.bf16.mxu0 0
    %223 = vmatmul.mubr.bf16.gmra.mxu0 %v188
    %v224 = vpop.f32.mrf.mxu0
    %v225 = vadd.f32 0.0, %v224
    %v226 = vpop.f32.mrf.mxu0
    %v227 = vpop.f32.mrf.mxu0
    %v228 = vadd.f32 0.0, %v227
    %v229 = vpop.f32.mrf.mxu0
    %230 = vdwg.mxu0
    %v231 = vpack.c.bf16 %v228, %v225
    %v232 = vld [vmem:[%s4] sm:$0xf]
    %v233 = vld [vmem:[%s4 + $0x4] sm:$0xf]
    %v234 = vld [vmem:[%s4 + $0x8] sm:$0xf]
    %v235 = vld [vmem:[%s4 + $0xc] sm:$0xf]
    %v236 = vld [vmem:[%s10] sm:$0xf]
    %v237 = vld [vmem:[%s10 + $0x4] sm:$0xf]
    %v238 = vld [vmem:[%s10 + $0x8] sm:$0xf]
    %v239 = vld [vmem:[%s10 + $0xc] sm:$0xf]
    %v240 = vld [vmem:[%s5] sm:$0x1]
    %v241 = vld [vmem:[#allocation5] sm:$0x1]
    %v242 = vld [vmem:[%s12] sm:$0xf]
    %v243 = vld [vmem:[%s12 + $0x4] sm:$0xf]
    %v244 = vld [vmem:[%s12 + $0x8] sm:$0xf]
    %v245 = vld [vmem:[%s12 + $0xc] sm:$0xf]
    %v246 = vld [vmem:[%s12 + $0x10] sm:$0xf]
    %v247 = vld [vmem:[%s12 + $0x14] sm:$0xf]
    %v248 = vld [vmem:[%s12 + $0x18] sm:$0xf]
    %v249 = vld [vmem:[%s12 + $0x1c] sm:$0xf]
    %v250 = vld [vmem:[#allocation7] sm:$0x1]
    %v251 = vld [vmem:[%s14] sm:$0xf]
    %v252 = vld [vmem:[%s14 + $0x4] sm:$0xf]
    %v253 = vld [vmem:[%s14 + $0x8] sm:$0xf]
    %v254 = vld [vmem:[%s14 + $0xc] sm:$0xf]
    %v255 = vld [vmem:[%s15] sm:$0x1]
    %v256 = vlaneseq
    %v257 = vand.u32 %v256, 127
    %vm258 = vcmp.ge.s32.totalorder %v257, 64
    %vm259 = vcmp.lt.s32.totalorder %v257, 96
    %vm260 = vmand %vm258, %vm259
    %v261 = vsel %vm260, 1.0, 0.5
    %v262 = vld [vmem:[%s0] sm:$0x3]
    %263 = vset.pattern.permute.xlu0 0
    %264 = vperm.xlu0 %263, %v262
    %v265 = vpop.permute.xlu0 %264
    %vm266 = vcmp.eq.s32.totalorder %v257, %v265
    %v267 = vsel %vm266, 1, 0
    %v268 = vcvt.s32.f32 %v267
    %v269 = vpack.c.bf16 %v268, %v268
    %v271 = vlaneseq
    %v272 = vshrl.u32 %v271, 7
    %v273 = vsub.s32 0, %v272
    %v274 = vrot.slane %v240, %v273
    %vm276 = vcmask 130048
    %v278 = vsel %vm276, %v269, 0
    %280 = vmatprep.subr.bf16.mxu0 0
    %281 = vmatpush1.bf16.msra.mxu0 0
    %282 = vmatprep.subr.bf16.mxu0 0
    %283 = vmatpush1.bf16.msra.mxu0 0
    %284 = vmatprep.subr.bf16.mxu0 0
    %285 = vmatpush1.bf16.msra.mxu0 0
    %286 = vmatprep.subr.bf16.mxu0 0
    %287 = vmatpush1.bf16.msra.mxu0 0
    %288 = vmatprep.subr.bf16.mxu0 0
    %289 = vmatpush1.bf16.msra.mxu0 0
    %290 = vmatprep.subr.bf16.mxu0 0
    %291 = vmatpush1.bf16.msra.mxu0 0
    %292 = vmatprep.subr.bf16.mxu0 0
    %293 = vmatpush1.bf16.msra.mxu0 0
    %294 = vmatprep.subr.bf16.mxu0 0
    %295 = vmatpush1.bf16.msra.mxu0 %v163
    %296 = vmatprep.subr.bf16.mxu0 0
    %297 = vmatpush2.bf16.msra.mxu0 0
    %298 = vmatprep.subr.bf16.mxu0 0
    %299 = vmatpush2.bf16.msra.mxu0 0
    %300 = vmatprep.subr.bf16.mxu0 0
    %301 = vmatpush2.bf16.msra.mxu0 0
    %302 = vmatprep.subr.bf16.mxu0 0
    %303 = vmatpush2.bf16.msra.mxu0 0
    %304 = vmatprep.subr.bf16.mxu0 0
    %305 = vmatpush2.bf16.msra.mxu0 0
    %306 = vmatprep.subr.bf16.mxu0 0
    %307 = vmatpush2.bf16.msra.mxu0 0
    %308 = vmatprep.subr.bf16.mxu0 0
    %309 = vmatpush2.bf16.msra.mxu0 0
    %310 = vmatprep.subr.bf16.mxu0 0
    %311 = vmatpush2.bf16.msra.mxu0 0
    %312 = vmatprep.mubr.bf16.mxu0 0
    %313 = vmatmul.mubr.bf16.gmra.mxu0 %v278
    %v314 = vpop.f32.mrf.mxu0
    %v315 = vadd.f32 %v274, %v314
    %v316 = vpop.f32.mrf.mxu0
    %v317 = vpop.f32.mrf.mxu0
    %v318 = vpop.f32.mrf.mxu0
    %319 = vdwg.mxu0
    %320 = vset.pattern.permute.xlu0 1
    %321 = vperm.xlu0 %320, %v262
    %v322 = vpop.permute.xlu0 %321
    %vm323 = vcmp.eq.s32.totalorder %v257, %v322
    %v324 = vsel %vm323, 1, 0
    %v325 = vcvt.s32.f32 %v324
    %v326 = vpack.c.bf16 %v325, %v325
    %v328 = vsel %vm276, %v326, 0
    %330 = vmatprep.subr.bf16.mxu0 0
    %331 = vmatpush1.bf16.msra.mxu0 0
    %332 = vmatprep.subr.bf16.mxu0 0
    %333 = vmatpush1.bf16.msra.mxu0 0
    %334 = vmatprep.subr.bf16.mxu0 0
    %335 = vmatpush1.bf16.msra.mxu0 0
    %336 = vmatprep.subr.bf16.mxu0 0
    %337 = vmatpush1.bf16.msra.mxu0 0
    %338 = vmatprep.subr.bf16.mxu0 0
    %339 = vmatpush1.bf16.msra.mxu0 0
    %340 = vmatprep.subr.bf16.mxu0 0
    %341 = vmatpush1.bf16.msra.mxu0 0
    %342 = vmatprep.subr.bf16.mxu0 0
    %343 = vmatpush1.bf16.msra.mxu0 0
    %344 = vmatprep.subr.bf16.mxu0 0
    %345 = vmatpush1.bf16.msra.mxu0 %v163
    %346 = vmatprep.subr.bf16.mxu0 0
    %347 = vmatpush2.bf16.msra.mxu0 0
    %348 = vmatprep.subr.bf16.mxu0 0
    %349 = vmatpush2.bf16.msra.mxu0 0
    %350 = vmatprep.subr.bf16.mxu0 0
    %351 = vmatpush2.bf16.msra.mxu0 0
    %352 = vmatprep.subr.bf16.mxu0 0
    %353 = vmatpush2.bf16.msra.mxu0 0
    %354 = vmatprep.subr.bf16.mxu0 0
    %355 = vmatpush2.bf16.msra.mxu0 0
    %356 = vmatprep.subr.bf16.mxu0 0
    %357 = vmatpush2.bf16.msra.mxu0 0
    %358 = vmatprep.subr.bf16.mxu0 0
    %359 = vmatpush2.bf16.msra.mxu0 0
    %360 = vmatprep.subr.bf16.mxu0 0
    %361 = vmatpush2.bf16.msra.mxu0 0
    %362 = vmatprep.mubr.bf16.mxu0 0
    %363 = vmatmul.mubr.bf16.gmra.mxu0 %v328
    %v364 = vpop.f32.mrf.mxu0
    %v365 = vadd.f32 %v274, %v364
    %v366 = vpop.f32.mrf.mxu0
    %v367 = vpop.f32.mrf.mxu0
    %v368 = vpop.f32.mrf.mxu0
    %369 = vdwg.mxu0
    %370 = vset.pattern.permute.xlu0 2
    %371 = vperm.xlu0 %370, %v262
    %v372 = vpop.permute.xlu0 %371
    %vm373 = vcmp.eq.s32.totalorder %v257, %v372
    %v374 = vsel %vm373, 1, 0
    %v375 = vcvt.s32.f32 %v374
    %v376 = vpack.c.bf16 %v375, %v375
    %v378 = vsel %vm276, %v376, 0
    %380 = vmatprep.subr.bf16.mxu0 0
    %381 = vmatpush1.bf16.msra.mxu0 0
    %382 = vmatprep.subr.bf16.mxu0 0
    %383 = vmatpush1.bf16.msra.mxu0 0
    %384 = vmatprep.subr.bf16.mxu0 0
    %385 = vmatpush1.bf16.msra.mxu0 0
    %386 = vmatprep.subr.bf16.mxu0 0
    %387 = vmatpush1.bf16.msra.mxu0 0
    %388 = vmatprep.subr.bf16.mxu0 0
    %389 = vmatpush1.bf16.msra.mxu0 0
    %390 = vmatprep.subr.bf16.mxu0 0
    %391 = vmatpush1.bf16.msra.mxu0 0
    %392 = vmatprep.subr.bf16.mxu0 0
    %393 = vmatpush1.bf16.msra.mxu0 0
    %394 = vmatprep.subr.bf16.mxu0 0
    %395 = vmatpush1.bf16.msra.mxu0 %v163
    %396 = vmatprep.subr.bf16.mxu0 0
    %397 = vmatpush2.bf16.msra.mxu0 0
    %398 = vmatprep.subr.bf16.mxu0 0
    %399 = vmatpush2.bf16.msra.mxu0 0
    %400 = vmatprep.subr.bf16.mxu0 0
    %401 = vmatpush2.bf16.msra.mxu0 0
    %402 = vmatprep.subr.bf16.mxu0 0
    %403 = vmatpush2.bf16.msra.mxu0 0
    %404 = vmatprep.subr.bf16.mxu0 0
    %405 = vmatpush2.bf16.msra.mxu0 0
    %406 = vmatprep.subr.bf16.mxu0 0
    %407 = vmatpush2.bf16.msra.mxu0 0
    %408 = vmatprep.subr.bf16.mxu0 0
    %409 = vmatpush2.bf16.msra.mxu0 0
    %410 = vmatprep.subr.bf16.mxu0 0
    %411 = vmatpush2.bf16.msra.mxu0 0
    %412 = vmatprep.mubr.bf16.mxu0 0
    %413 = vmatmul.mubr.bf16.gmra.mxu0 %v378
    %v414 = vpop.f32.mrf.mxu0
    %v415 = vadd.f32 %v274, %v414
    %v416 = vpop.f32.mrf.mxu0
    %v417 = vpop.f32.mrf.mxu0
    %v418 = vpop.f32.mrf.mxu0
    %419 = vdwg.mxu0
    %420 = vset.pattern.permute.xlu0 3
    %421 = vperm.xlu0 %420, %v262
    %v422 = vpop.permute.xlu0 %421
    %vm423 = vcmp.eq.s32.totalorder %v257, %v422
    %v424 = vsel %vm423, 1, 0
    %v425 = vcvt.s32.f32 %v424
    %v426 = vpack.c.bf16 %v425, %v425
    %v428 = vsel %vm276, %v426, 0
    %430 = vmatprep.subr.bf16.mxu0 0
    %431 = vmatpush1.bf16.msra.mxu0 0
    %432 = vmatprep.subr.bf16.mxu0 0
    %433 = vmatpush1.bf16.msra.mxu0 0
    %434 = vmatprep.subr.bf16.mxu0 0
    %435 = vmatpush1.bf16.msra.mxu0 0
    %436 = vmatprep.subr.bf16.mxu0 0
    %437 = vmatpush1.bf16.msra.mxu0 0
    %438 = vmatprep.subr.bf16.mxu0 0
    %439 = vmatpush1.bf16.msra.mxu0 0
    %440 = vmatprep.subr.bf16.mxu0 0
    %441 = vmatpush1.bf16.msra.mxu0 0
    %442 = vmatprep.subr.bf16.mxu0 0
    %443 = vmatpush1.bf16.msra.mxu0 0
    %444 = vmatprep.subr.bf16.mxu0 0
    %445 = vmatpush1.bf16.msra.mxu0 %v163
    %446 = vmatprep.subr.bf16.mxu0 0
    %447 = vmatpush2.bf16.msra.mxu0 0
    %448 = vmatprep.subr.bf16.mxu0 0
    %449 = vmatpush2.bf16.msra.mxu0 0
    %450 = vmatprep.subr.bf16.mxu0 0
    %451 = vmatpush2.bf16.msra.mxu0 0
    %452 = vmatprep.subr.bf16.mxu0 0
    %453 = vmatpush2.bf16.msra.mxu0 0
    %454 = vmatprep.subr.bf16.mxu0 0
    %455 = vmatpush2.bf16.msra.mxu0 0
    %456 = vmatprep.subr.bf16.mxu0 0
    %457 = vmatpush2.bf16.msra.mxu0 0
    %458 = vmatprep.subr.bf16.mxu0 0
    %459 = vmatpush2.bf16.msra.mxu0 0
    %460 = vmatprep.subr.bf16.mxu0 0
    %461 = vmatpush2.bf16.msra.mxu0 0
    %462 = vmatprep.mubr.bf16.mxu0 0
    %463 = vmatmul.mubr.bf16.gmra.mxu0 %v428
    %v464 = vpop.f32.mrf.mxu0
    %v465 = vadd.f32 %v274, %v464
    %v466 = vpop.f32.mrf.mxu0
    %v467 = vpop.f32.mrf.mxu0
    %v468 = vpop.f32.mrf.mxu0
    %469 = vdwg.mxu0
    %470 = vset.pattern.permute.xlu0 4
    %471 = vperm.xlu0 %470, %v262
    %v472 = vpop.permute.xlu0 %471
    %vm473 = vcmp.eq.s32.totalorder %v257, %v472
    %v474 = vsel %vm473, 1, 0
    %v475 = vcvt.s32.f32 %v474
    %v476 = vpack.c.bf16 %v475, %v475
    %v478 = vsel %vm276, %v476, 0
    %480 = vmatprep.subr.bf16.mxu0 0
    %481 = vmatpush1.bf16.msra.mxu0 0
    %482 = vmatprep.subr.bf16.mxu0 0
    %483 = vmatpush1.bf16.msra.mxu0 0
    %484 = vmatprep.subr.bf16.mxu0 0
    %485 = vmatpush1.bf16.msra.mxu0 0
    %486 = vmatprep.subr.bf16.mxu0 0
    %487 = vmatpush1.bf16.msra.mxu0 0
    %488 = vmatprep.subr.bf16.mxu0 0
    %489 = vmatpush1.bf16.msra.mxu0 0
    %490 = vmatprep.subr.bf16.mxu0 0
    %491 = vmatpush1.bf16.msra.mxu0 0
    %492 = vmatprep.subr.bf16.mxu0 0
    %493 = vmatpush1.bf16.msra.mxu0 0
    %494 = vmatprep.subr.bf16.mxu0 0
    %495 = vmatpush1.bf16.msra.mxu0 %v163
    %496 = vmatprep.subr.bf16.mxu0 0
    %497 = vmatpush2.bf16.msra.mxu0 0
    %498 = vmatprep.subr.bf16.mxu0 0
    %499 = vmatpush2.bf16.msra.mxu0 0
    %500 = vmatprep.subr.bf16.mxu0 0
    %501 = vmatpush2.bf16.msra.mxu0 0
    %502 = vmatprep.subr.bf16.mxu0 0
    %503 = vmatpush2.bf16.msra.mxu0 0
    %504 = vmatprep.subr.bf16.mxu0 0
    %505 = vmatpush2.bf16.msra.mxu0 0
    %506 = vmatprep.subr.bf16.mxu0 0
    %507 = vmatpush2.bf16.msra.mxu0 0
    %508 = vmatprep.subr.bf16.mxu0 0
    %509 = vmatpush2.bf16.msra.mxu0 0
    %510 = vmatprep.subr.bf16.mxu0 0
    %511 = vmatpush2.bf16.msra.mxu0 0
    %512 = vmatprep.mubr.bf16.mxu0 0
    %513 = vmatmul.mubr.bf16.gmra.mxu0 %v478
    %v514 = vpop.f32.mrf.mxu0
    %v515 = vadd.f32 %v274, %v514
    %v516 = vpop.f32.mrf.mxu0
    %v517 = vpop.f32.mrf.mxu0
    %v518 = vpop.f32.mrf.mxu0
    %519 = vdwg.mxu0
    %520 = vset.pattern.permute.xlu0 5
    %521 = vperm.xlu0 %520, %v262
    %v522 = vpop.permute.xlu0 %521
    %vm523 = vcmp.eq.s32.totalorder %v257, %v522
    %v524 = vsel %vm523, 1, 0
    %v525 = vcvt.s32.f32 %v524
    %v526 = vpack.c.bf16 %v525, %v525
    %v528 = vsel %vm276, %v526, 0
    %530 = vmatprep.subr.bf16.mxu0 0
    %531 = vmatpush1.bf16.msra.mxu0 0
    %532 = vmatprep.subr.bf16.mxu0 0
    %533 = vmatpush1.bf16.msra.mxu0 0
    %534 = vmatprep.subr.bf16.mxu0 0
    %535 = vmatpush1.bf16.msra.mxu0 0
    %536 = vmatprep.subr.bf16.mxu0 0
    %537 = vmatpush1.bf16.msra.mxu0 0
    %538 = vmatprep.subr.bf16.mxu0 0
    %539 = vmatpush1.bf16.msra.mxu0 0
    %540 = vmatprep.subr.bf16.mxu0 0
    %541 = vmatpush1.bf16.msra.mxu0 0
    %542 = vmatprep.subr.bf16.mxu0 0
    %543 = vmatpush1.bf16.msra.mxu0 0
    %544 = vmatprep.subr.bf16.mxu0 0
    %545 = vmatpush1.bf16.msra.mxu0 %v163
    %546 = vmatprep.subr.bf16.mxu0 0
    %547 = vmatpush2.bf16.msra.mxu0 0
    %548 = vmatprep.subr.bf16.mxu0 0
    %549 = vmatpush2.bf16.msra.mxu0 0
    %550 = vmatprep.subr.bf16.mxu0 0
    %551 = vmatpush2.bf16.msra.mxu0 0
    %552 = vmatprep.subr.bf16.mxu0 0
    %553 = vmatpush2.bf16.msra.mxu0 0
    %554 = vmatprep.subr.bf16.mxu0 0
    %555 = vmatpush2.bf16.msra.mxu0 0
    %556 = vmatprep.subr.bf16.mxu0 0
    %557 = vmatpush2.bf16.msra.mxu0 0
    %558 = vmatprep.subr.bf16.mxu0 0
    %559 = vmatpush2.bf16.msra.mxu0 0
    %560 = vmatprep.subr.bf16.mxu0 0
    %561 = vmatpush2.bf16.msra.mxu0 0
    %562 = vmatprep.mubr.bf16.mxu0 0
    %563 = vmatmul.mubr.bf16.gmra.mxu0 %v528
    %v564 = vpop.f32.mrf.mxu0
    %v565 = vadd.f32 %v274, %v564
    %v566 = vpop.f32.mrf.mxu0
    %v567 = vpop.f32.mrf.mxu0
    %v568 = vpop.f32.mrf.mxu0
    %569 = vdwg.mxu0
    %570 = vset.pattern.permute.xlu0 6
    %571 = vperm.xlu0 %570, %v262
    %v572 = vpop.permute.xlu0 %571
    %vm573 = vcmp.eq.s32.totalorder %v257, %v572
    %v574 = vsel %vm573, 1, 0
    %v575 = vcvt.s32.f32 %v574
    %v576 = vpack.c.bf16 %v575, %v575
    %v578 = vsel %vm276, %v576, 0
    %580 = vmatprep.subr.bf16.mxu0 0
    %581 = vmatpush1.bf16.msra.mxu0 0
    %582 = vmatprep.subr.bf16.mxu0 0
    %583 = vmatpush1.bf16.msra.mxu0 0
    %584 = vmatprep.subr.bf16.mxu0 0
    %585 = vmatpush1.bf16.msra.mxu0 0
    %586 = vmatprep.subr.bf16.mxu0 0
    %587 = vmatpush1.bf16.msra.mxu0 0
    %588 = vmatprep.subr.bf16.mxu0 0
    %589 = vmatpush1.bf16.msra.mxu0 0
    %590 = vmatprep.subr.bf16.mxu0 0
    %591 = vmatpush1.bf16.msra.mxu0 0
    %592 = vmatprep.subr.bf16.mxu0 0
    %593 = vmatpush1.bf16.msra.mxu0 0
    %594 = vmatprep.subr.bf16.mxu0 0
    %595 = vmatpush1.bf16.msra.mxu0 %v163
    %596 = vmatprep.subr.bf16.mxu0 0
    %597 = vmatpush2.bf16.msra.mxu0 0
    %598 = vmatprep.subr.bf16.mxu0 0
    %599 = vmatpush2.bf16.msra.mxu0 0
    %600 = vmatprep.subr.bf16.mxu0 0
    %601 = vmatpush2.bf16.msra.mxu0 0
    %602 = vmatprep.subr.bf16.mxu0 0
    %603 = vmatpush2.bf16.msra.mxu0 0
    %604 = vmatprep.subr.bf16.mxu0 0
    %605 = vmatpush2.bf16.msra.mxu0 0
    %606 = vmatprep.subr.bf16.mxu0 0
    %607 = vmatpush2.bf16.msra.mxu0 0
    %608 = vmatprep.subr.bf16.mxu0 0
    %609 = vmatpush2.bf16.msra.mxu0 0
    %610 = vmatprep.subr.bf16.mxu0 0
    %611 = vmatpush2.bf16.msra.mxu0 0
    %612 = vmatprep.mubr.bf16.mxu0 0
    %613 = vmatmul.mubr.bf16.gmra.mxu0 %v578
    %v614 = vpop.f32.mrf.mxu0
    %v615 = vadd.f32 %v274, %v614
    %v616 = vpop.f32.mrf.mxu0
    %v617 = vpop.f32.mrf.mxu0
    %v618 = vpop.f32.mrf.mxu0
    %619 = vdwg.mxu0
    %620 = vset.pattern.permute.xlu0 7
    %621 = vperm.xlu0 %620, %v262
    %v622 = vpop.permute.xlu0 %621
    %vm623 = vcmp.eq.s32.totalorder %v257, %v622
    %v624 = vsel %vm623, 1, 0
    %v625 = vcvt.s32.f32 %v624
    %v626 = vpack.c.bf16 %v625, %v625
    %v628 = vsel %vm276, %v626, 0
    %630 = vmatprep.subr.bf16.mxu0 0
    %631 = vmatpush1.bf16.msra.mxu0 0
    %632 = vmatprep.subr.bf16.mxu0 0
    %633 = vmatpush1.bf16.msra.mxu0 0
    %634 = vmatprep.subr.bf16.mxu0 0
    %635 = vmatpush1.bf16.msra.mxu0 0
    %636 = vmatprep.subr.bf16.mxu0 0
    %637 = vmatpush1.bf16.msra.mxu0 0
    %638 = vmatprep.subr.bf16.mxu0 0
    %639 = vmatpush1.bf16.msra.mxu0 0
    %640 = vmatprep.subr.bf16.mxu0 0
    %641 = vmatpush1.bf16.msra.mxu0 0
    %642 = vmatprep.subr.bf16.mxu0 0
    %643 = vmatpush1.bf16.msra.mxu0 0
    %644 = vmatprep.subr.bf16.mxu0 0
    %645 = vmatpush1.bf16.msra.mxu0 %v163
    %646 = vmatprep.subr.bf16.mxu0 0
    %647 = vmatpush2.bf16.msra.mxu0 0
    %648 = vmatprep.subr.bf16.mxu0 0
    %649 = vmatpush2.bf16.msra.mxu0 0
    %650 = vmatprep.subr.bf16.mxu0 0
    %651 = vmatpush2.bf16.msra.mxu0 0
    %652 = vmatprep.subr.bf16.mxu0 0
    %653 = vmatpush2.bf16.msra.mxu0 0
    %654 = vmatprep.subr.bf16.mxu0 0
    %655 = vmatpush2.bf16.msra.mxu0 0
    %656 = vmatprep.subr.bf16.mxu0 0
    %657 = vmatpush2.bf16.msra.mxu0 0
    %658 = vmatprep.subr.bf16.mxu0 0
    %659 = vmatpush2.bf16.msra.mxu0 0
    %660 = vmatprep.subr.bf16.mxu0 0
    %661 = vmatpush2.bf16.msra.mxu0 0
    %662 = vmatprep.mubr.bf16.mxu0 0
    %663 = vmatmul.mubr.bf16.gmra.mxu0 %v628
    %v664 = vpop.f32.mrf.mxu0
    %v665 = vadd.f32 %v274, %v664
    %v666 = vpop.f32.mrf.mxu0
    %v667 = vpop.f32.mrf.mxu0
    %v668 = vpop.f32.mrf.mxu0
    %669 = vdwg.mxu0
    %v670 = vmul.f32 %v315, %v261
    %v671 = vtanh.pop %v670
    %v672 = vmul.f32 %v671, 0.5
    %v673 = vadd.f32 %v672, 0.5
    %675 = vrot.lane.b32.xlu0 %v671, 64
    %v676 = vpop.permute.xlu0 %675
    %v678 = vmul.f32 %v673, %v676
    %v679 = vtanh.pop %v678
    %681 = vrot.lane.b32.xlu0 %v679, 96
    %v682 = vpop.permute.xlu0 %681
    %v684 = vmul.f32 %v673, %v682
    %v685 = vmul.f32 %v684, %v684
    %687 = vrot.lane.b32.xlu0 %v685, 32
    %v688 = vpop.permute.xlu0 %687
    %vm690 = vcmask 254976
    %v691 = vsel %vm690, %v688, 0.0
    %692 = vadd.xlane.f32.xlu0 %v691
    %v693 = vpop.xlane.xlu0 %692
    %v694 = vadd.f32 %v693, 1e-24
    %v695 = vrsqrt.pop %v694
    %v696 = vmul.f32 %v684, %v695
    %v697 = vpack.c.bf16 %v684, %v684
    %699 = vrot.lane.b32.xlu0 %v697, 32
    %v700 = vpop.permute.xlu0 %699
    %v705 = vunpack.c.l.b16 %v232
    %v706 = vunpack.c.l.b16 %v233
    %v707 = vunpack.c.l.b16 %v234
    %v708 = vunpack.c.l.b16 %v235
    %v709 = vpack.c.b16 %v706, %v705
    %v710 = vpack.c.b16 %v708, %v707
    %v714 = vsel %vm118, %v700, 0
    %716 = vmatprep.subr.bf16.mxu0 0
    %717 = vmatpush1.bf16.msra.mxu0 0
    %718 = vmatprep.subr.bf16.mxu0 0
    %719 = vmatpush1.bf16.msra.mxu0 0
    %720 = vmatprep.subr.bf16.mxu0 0
    %721 = vmatpush1.bf16.msra.mxu0 0
    %722 = vmatprep.subr.bf16.mxu0 0
    %723 = vmatpush1.bf16.msra.mxu0 0
    %724 = vmatprep.subr.bf16.mxu0 0
    %725 = vmatpush1.bf16.msra.mxu0 0
    %726 = vmatprep.subr.bf16.mxu0 0
    %727 = vmatpush1.bf16.msra.mxu0 0
    %728 = vmatprep.subr.bf16.mxu0 0
    %729 = vmatpush1.bf16.msra.mxu0 %v710
    %730 = vmatprep.subr.bf16.mxu0 0
    %731 = vmatpush1.bf16.msra.mxu0 %v709
    %732 = vmatprep.subr.bf16.mxu0 0
    %733 = vmatpush2.bf16.msra.mxu0 0
    %734 = vmatprep.subr.bf16.mxu0 0
    %735 = vmatpush2.bf16.msra.mxu0 0
    %736 = vmatprep.subr.bf16.mxu0 0
    %737 = vmatpush2.bf16.msra.mxu0 0
    %738 = vmatprep.subr.bf16.mxu0 0
    %739 = vmatpush2.bf16.msra.mxu0 0
    %740 = vmatprep.subr.bf16.mxu0 0
    %741 = vmatpush2.bf16.msra.mxu0 0
    %742 = vmatprep.subr.bf16.mxu0 0
    %743 = vmatpush2.bf16.msra.mxu0 0
    %744 = vmatprep.subr.bf16.mxu0 0
    %745 = vmatpush2.bf16.msra.mxu0 0
    %746 = vmatprep.subr.bf16.mxu0 0
    %747 = vmatpush2.bf16.msra.mxu0 0
    %748 = vmatprep.mubr.bf16.mxu0 0
    %749 = vmatmul.mubr.bf16.gmra.mxu0 %v714
    %v750 = vpop.f32.mrf.mxu0
    %v751 = vadd.f32 0.0, %v750
    %v752 = vpop.f32.mrf.mxu0
    %v753 = vpop.f32.mrf.mxu0
    %v754 = vpop.f32.mrf.mxu0
    %755 = vdwg.mxu0
    %v756 = vadd.f32 %v365, %v751
    %v757 = vmul.f32 %v756, %v261
    %v758 = vtanh.pop %v757
    %v759 = vmul.f32 %v758, 0.5
    %v760 = vadd.f32 %v759, 0.5
    %762 = vrot.lane.b32.xlu0 %v678, 32
    %v763 = vpop.permute.xlu0 %762
    %v765 = vmul.f32 %v760, %v763
    %767 = vrot.lane.b32.xlu0 %v758, 64
    %v768 = vpop.permute.xlu0 %767
    %v770 = vmul.f32 %v760, %v768
    %772 = vrot.lane.b32.xlu0 %v770, 32
    %v773 = vpop.permute.xlu0 %772
    %v775 = vadd.f32 %v765, %v773
    %v776 = vtanh.pop %v775
    %778 = vrot.lane.b32.xlu0 %v776, 64
    %v779 = vpop.permute.xlu0 %778
    %v781 = vmul.f32 %v760, %v779
    %v782 = vmul.f32 %v781, %v781
    %784 = vrot.lane.b32.xlu0 %v782, 32
    %v785 = vpop.permute.xlu0 %784
    %v787 = vsel %vm690, %v785, 0.0
    %788 = vadd.xlane.f32.xlu0 %v787
    %v789 = vpop.xlane.xlu0 %788
    %v790 = vadd.f32 %v789, 1e-24
    %v791 = vrsqrt.pop %v790
    %v792 = vmul.f32 %v781, %v791
    %v793 = vadd.f32 %v696, %v792
    %v794 = vpack.c.bf16 %v781, %v781
    %796 = vrot.lane.b32.xlu0 %v794, 32
    %v797 = vpop.permute.xlu0 %796
    %v799 = vsel %vm118, %v797, 0
    %801 = vmatprep.subr.bf16.mxu0 0
    %802 = vmatpush1.bf16.msra.mxu0 0
    %803 = vmatprep.subr.bf16.mxu0 0
    %804 = vmatpush1.bf16.msra.mxu0 0
    %805 = vmatprep.subr.bf16.mxu0 0
    %806 = vmatpush1.bf16.msra.mxu0 0
    %807 = vmatprep.subr.bf16.mxu0 0
    %808 = vmatpush1.bf16.msra.mxu0 0
    %809 = vmatprep.subr.bf16.mxu0 0
    %810 = vmatpush1.bf16.msra.mxu0 0
    %811 = vmatprep.subr.bf16.mxu0 0
    %812 = vmatpush1.bf16.msra.mxu0 0
    %813 = vmatprep.subr.bf16.mxu0 0
    %814 = vmatpush1.bf16.msra.mxu0 %v710
    %815 = vmatprep.subr.bf16.mxu0 0
    %816 = vmatpush1.bf16.msra.mxu0 %v709
    %817 = vmatprep.subr.bf16.mxu0 0
    %818 = vmatpush2.bf16.msra.mxu0 0
    %819 = vmatprep.subr.bf16.mxu0 0
    %820 = vmatpush2.bf16.msra.mxu0 0
    %821 = vmatprep.subr.bf16.mxu0 0
    %822 = vmatpush2.bf16.msra.mxu0 0
    %823 = vmatprep.subr.bf16.mxu0 0
    %824 = vmatpush2.bf16.msra.mxu0 0
    %825 = vmatprep.subr.bf16.mxu0 0
    %826 = vmatpush2.bf16.msra.mxu0 0
    %827 = vmatprep.subr.bf16.mxu0 0
    %828 = vmatpush2.bf16.msra.mxu0 0
    %829 = vmatprep.subr.bf16.mxu0 0
    %830 = vmatpush2.bf16.msra.mxu0 0
    %831 = vmatprep.subr.bf16.mxu0 0
    %832 = vmatpush2.bf16.msra.mxu0 0
    %833 = vmatprep.mubr.bf16.mxu0 0
    %834 = vmatmul.mubr.bf16.gmra.mxu0 %v799
    %v835 = vpop.f32.mrf.mxu0
    %v836 = vadd.f32 0.0, %v835
    %v837 = vpop.f32.mrf.mxu0
    %v838 = vpop.f32.mrf.mxu0
    %v839 = vpop.f32.mrf.mxu0
    %840 = vdwg.mxu0
    %v841 = vadd.f32 %v415, %v836
    %v842 = vmul.f32 %v841, %v261
    %v843 = vtanh.pop %v842
    %v844 = vmul.f32 %v843, 0.5
    %v845 = vadd.f32 %v844, 0.5
    %v846 = vmul.f32 %v845, %v775
    %848 = vrot.lane.b32.xlu0 %v843, 64
    %v849 = vpop.permute.xlu0 %848
    %v851 = vmul.f32 %v845, %v849
    %853 = vrot.lane.b32.xlu0 %v851, 32
    %v854 = vpop.permute.xlu0 %853
    %v856 = vadd.f32 %v846, %v854
    %v857 = vtanh.pop %v856
    %859 = vrot.lane.b32.xlu0 %v857, 64
    %v860 = vpop.permute.xlu0 %859
    %v862 = vmul.f32 %v845, %v860
    %v863 = vmul.f32 %v862, %v862
    %865 = vrot.lane.b32.xlu0 %v863, 32
    %v866 = vpop.permute.xlu0 %865
    %v868 = vsel %vm690, %v866, 0.0
    %869 = vadd.xlane.f32.xlu0 %v868
    %v870 = vpop.xlane.xlu0 %869
    %v871 = vadd.f32 %v870, 1e-24
    %v872 = vrsqrt.pop %v871
    %v873 = vmul.f32 %v862, %v872
    %v874 = vadd.f32 %v793, %v873
    %v875 = vpack.c.bf16 %v862, %v862
    %877 = vrot.lane.b32.xlu0 %v875, 32
    %v878 = vpop.permute.xlu0 %877
    %v880 = vsel %vm118, %v878, 0
    %882 = vmatprep.subr.bf16.mxu0 0
    %883 = vmatpush1.bf16.msra.mxu0 0
    %884 = vmatprep.subr.bf16.mxu0 0
    %885 = vmatpush1.bf16.msra.mxu0 0
    %886 = vmatprep.subr.bf16.mxu0 0
    %887 = vmatpush1.bf16.msra.mxu0 0
    %888 = vmatprep.subr.bf16.mxu0 0
    %889 = vmatpush1.bf16.msra.mxu0 0
    %890 = vmatprep.subr.bf16.mxu0 0
    %891 = vmatpush1.bf16.msra.mxu0 0
    %892 = vmatprep.subr.bf16.mxu0 0
    %893 = vmatpush1.bf16.msra.mxu0 0
    %894 = vmatprep.subr.bf16.mxu0 0
    %895 = vmatpush1.bf16.msra.mxu0 %v710
    %896 = vmatprep.subr.bf16.mxu0 0
    %897 = vmatpush1.bf16.msra.mxu0 %v709
    %898 = vmatprep.subr.bf16.mxu0 0
    %899 = vmatpush2.bf16.msra.mxu0 0
    %900 = vmatprep.subr.bf16.mxu0 0
    %901 = vmatpush2.bf16.msra.mxu0 0
    %902 = vmatprep.subr.bf16.mxu0 0
    %903 = vmatpush2.bf16.msra.mxu0 0
    %904 = vmatprep.subr.bf16.mxu0 0
    %905 = vmatpush2.bf16.msra.mxu0 0
    %906 = vmatprep.subr.bf16.mxu0 0
    %907 = vmatpush2.bf16.msra.mxu0 0
    %908 = vmatprep.subr.bf16.mxu0 0
    %909 = vmatpush2.bf16.msra.mxu0 0
    %910 = vmatprep.subr.bf16.mxu0 0
    %911 = vmatpush2.bf16.msra.mxu0 0
    %912 = vmatprep.subr.bf16.mxu0 0
    %913 = vmatpush2.bf16.msra.mxu0 0
    %914 = vmatprep.mubr.bf16.mxu0 0
    %915 = vmatmul.mubr.bf16.gmra.mxu0 %v880
    %v916 = vpop.f32.mrf.mxu0
    %v917 = vadd.f32 0.0, %v916
    %v918 = vpop.f32.mrf.mxu0
    %v919 = vpop.f32.mrf.mxu0
    %v920 = vpop.f32.mrf.mxu0
    %921 = vdwg.mxu0
    %v922 = vadd.f32 %v465, %v917
    %v923 = vmul.f32 %v922, %v261
    %v924 = vtanh.pop %v923
    %v925 = vmul.f32 %v924, 0.5
    %v926 = vadd.f32 %v925, 0.5
    %v927 = vmul.f32 %v926, %v856
    %929 = vrot.lane.b32.xlu0 %v924, 64
    %v930 = vpop.permute.xlu0 %929
    %v932 = vmul.f32 %v926, %v930
    %934 = vrot.lane.b32.xlu0 %v932, 32
    %v935 = vpop.permute.xlu0 %934
    %v937 = vadd.f32 %v927, %v935
    %v938 = vtanh.pop %v937
    %940 = vrot.lane.b32.xlu0 %v938, 64
    %v941 = vpop.permute.xlu0 %940
    %v943 = vmul.f32 %v926, %v941
    %v944 = vmul.f32 %v943, %v943
    %946 = vrot.lane.b32.xlu0 %v944, 32
    %v947 = vpop.permute.xlu0 %946
    %v949 = vsel %vm690, %v947, 0.0
    %950 = vadd.xlane.f32.xlu0 %v949
    %v951 = vpop.xlane.xlu0 %950
    %v952 = vadd.f32 %v951, 1e-24
    %v953 = vrsqrt.pop %v952
    %v954 = vmul.f32 %v943, %v953
    %v955 = vadd.f32 %v874, %v954
    %v956 = vpack.c.bf16 %v943, %v943
    %958 = vrot.lane.b32.xlu0 %v956, 32
    %v959 = vpop.permute.xlu0 %958
    %v961 = vsel %vm118, %v959, 0
    %963 = vmatprep.subr.bf16.mxu0 0
    %964 = vmatpush1.bf16.msra.mxu0 0
    %965 = vmatprep.subr.bf16.mxu0 0
    %966 = vmatpush1.bf16.msra.mxu0 0
    %967 = vmatprep.subr.bf16.mxu0 0
    %968 = vmatpush1.bf16.msra.mxu0 0
    %969 = vmatprep.subr.bf16.mxu0 0
    %970 = vmatpush1.bf16.msra.mxu0 0
    %971 = vmatprep.subr.bf16.mxu0 0
    %972 = vmatpush1.bf16.msra.mxu0 0
    %973 = vmatprep.subr.bf16.mxu0 0
    %974 = vmatpush1.bf16.msra.mxu0 0
    %975 = vmatprep.subr.bf16.mxu0 0
    %976 = vmatpush1.bf16.msra.mxu0 %v710
    %977 = vmatprep.subr.bf16.mxu0 0
    %978 = vmatpush1.bf16.msra.mxu0 %v709
    %979 = vmatprep.subr.bf16.mxu0 0
    %980 = vmatpush2.bf16.msra.mxu0 0
    %981 = vmatprep.subr.bf16.mxu0 0
    %982 = vmatpush2.bf16.msra.mxu0 0
    %983 = vmatprep.subr.bf16.mxu0 0
    %984 = vmatpush2.bf16.msra.mxu0 0
    %985 = vmatprep.subr.bf16.mxu0 0
    %986 = vmatpush2.bf16.msra.mxu0 0
    %987 = vmatprep.subr.bf16.mxu0 0
    %988 = vmatpush2.bf16.msra.mxu0 0
    %989 = vmatprep.subr.bf16.mxu0 0
    %990 = vmatpush2.bf16.msra.mxu0 0
    %991 = vmatprep.subr.bf16.mxu0 0
    %992 = vmatpush2.bf16.msra.mxu0 0
    %993 = vmatprep.subr.bf16.mxu0 0
    %994 = vmatpush2.bf16.msra.mxu0 0
    %995 = vmatprep.mubr.bf16.mxu0 0
    %996 = vmatmul.mubr.bf16.gmra.mxu0 %v961
    %v997 = vpop.f32.mrf.mxu0
    %v998 = vadd.f32 0.0, %v997
    %v999 = vpop.f32.mrf.mxu0
    %v1000 = vpop.f32.mrf.mxu0
    %v1001 = vpop.f32.mrf.mxu0
    %1002 = vdwg.mxu0
    %v1003 = vadd.f32 %v515, %v998
    %v1004 = vmul.f32 %v1003, %v261
    %v1005 = vtanh.pop %v1004
    %v1006 = vmul.f32 %v1005, 0.5
    %v1007 = vadd.f32 %v1006, 0.5
    %v1008 = vmul.f32 %v1007, %v937
    %1010 = vrot.lane.b32.xlu0 %v1005, 64
    %v1011 = vpop.permute.xlu0 %1010
    %v1013 = vmul.f32 %v1007, %v1011
    %1015 = vrot.lane.b32.xlu0 %v1013, 32
    %v1016 = vpop.permute.xlu0 %1015
    %v1018 = vadd.f32 %v1008, %v1016
    %v1019 = vtanh.pop %v1018
    %1021 = vrot.lane.b32.xlu0 %v1019, 64
    %v1022 = vpop.permute.xlu0 %1021
    %v1024 = vmul.f32 %v1007, %v1022
    %v1025 = vmul.f32 %v1024, %v1024
    %1027 = vrot.lane.b32.xlu0 %v1025, 32
    %v1028 = vpop.permute.xlu0 %1027
    %v1030 = vsel %vm690, %v1028, 0.0
    %1031 = vadd.xlane.f32.xlu0 %v1030
    %v1032 = vpop.xlane.xlu0 %1031
    %v1033 = vadd.f32 %v1032, 1e-24
    %v1034 = vrsqrt.pop %v1033
    %v1035 = vmul.f32 %v1024, %v1034
    %v1036 = vadd.f32 %v955, %v1035
    %v1037 = vpack.c.bf16 %v1024, %v1024
    %1039 = vrot.lane.b32.xlu0 %v1037, 32
    %v1040 = vpop.permute.xlu0 %1039
    %v1042 = vsel %vm118, %v1040, 0
    %1044 = vmatprep.subr.bf16.mxu0 0
    %1045 = vmatpush1.bf16.msra.mxu0 0
    %1046 = vmatprep.subr.bf16.mxu0 0
    %1047 = vmatpush1.bf16.msra.mxu0 0
    %1048 = vmatprep.subr.bf16.mxu0 0
    %1049 = vmatpush1.bf16.msra.mxu0 0
    %1050 = vmatprep.subr.bf16.mxu0 0
    %1051 = vmatpush1.bf16.msra.mxu0 0
    %1052 = vmatprep.subr.bf16.mxu0 0
    %1053 = vmatpush1.bf16.msra.mxu0 0
    %1054 = vmatprep.subr.bf16.mxu0 0
    %1055 = vmatpush1.bf16.msra.mxu0 0
    %1056 = vmatprep.subr.bf16.mxu0 0
    %1057 = vmatpush1.bf16.msra.mxu0 %v710
    %1058 = vmatprep.subr.bf16.mxu0 0
    %1059 = vmatpush1.bf16.msra.mxu0 %v709
    %1060 = vmatprep.subr.bf16.mxu0 0
    %1061 = vmatpush2.bf16.msra.mxu0 0
    %1062 = vmatprep.subr.bf16.mxu0 0
    %1063 = vmatpush2.bf16.msra.mxu0 0
    %1064 = vmatprep.subr.bf16.mxu0 0
    %1065 = vmatpush2.bf16.msra.mxu0 0
    %1066 = vmatprep.subr.bf16.mxu0 0
    %1067 = vmatpush2.bf16.msra.mxu0 0
    %1068 = vmatprep.subr.bf16.mxu0 0
    %1069 = vmatpush2.bf16.msra.mxu0 0
    %1070 = vmatprep.subr.bf16.mxu0 0
    %1071 = vmatpush2.bf16.msra.mxu0 0
    %1072 = vmatprep.subr.bf16.mxu0 0
    %1073 = vmatpush2.bf16.msra.mxu0 0
    %1074 = vmatprep.subr.bf16.mxu0 0
    %1075 = vmatpush2.bf16.msra.mxu0 0
    %1076 = vmatprep.mubr.bf16.mxu0 0
    %1077 = vmatmul.mubr.bf16.gmra.mxu0 %v1042
    %v1078 = vpop.f32.mrf.mxu0
    %v1079 = vadd.f32 0.0, %v1078
    %v1080 = vpop.f32.mrf.mxu0
    %v1081 = vpop.f32.mrf.mxu0
    %v1082 = vpop.f32.mrf.mxu0
    %1083 = vdwg.mxu0
    %v1084 = vadd.f32 %v565, %v1079
    %v1085 = vmul.f32 %v1084, %v261
    %v1086 = vtanh.pop %v1085
    %v1087 = vmul.f32 %v1086, 0.5
    %v1088 = vadd.f32 %v1087, 0.5
    %v1089 = vmul.f32 %v1088, %v1018
    %1091 = vrot.lane.b32.xlu0 %v1086, 64
    %v1092 = vpop.permute.xlu0 %1091
    %v1094 = vmul.f32 %v1088, %v1092
    %1096 = vrot.lane.b32.xlu0 %v1094, 32
    %v1097 = vpop.permute.xlu0 %1096
    %v1099 = vadd.f32 %v1089, %v1097
    %v1100 = vtanh.pop %v1099
    %1102 = vrot.lane.b32.xlu0 %v1100, 64
    %v1103 = vpop.permute.xlu0 %1102
    %v1105 = vmul.f32 %v1088, %v1103
    %v1106 = vmul.f32 %v1105, %v1105
    %1108 = vrot.lane.b32.xlu0 %v1106, 32
    %v1109 = vpop.permute.xlu0 %1108
    %v1111 = vsel %vm690, %v1109, 0.0
    %1112 = vadd.xlane.f32.xlu0 %v1111
    %v1113 = vpop.xlane.xlu0 %1112
    %v1114 = vadd.f32 %v1113, 1e-24
    %v1115 = vrsqrt.pop %v1114
    %v1116 = vmul.f32 %v1105, %v1115
    %v1117 = vadd.f32 %v1036, %v1116
    %v1118 = vpack.c.bf16 %v1105, %v1105
    %1120 = vrot.lane.b32.xlu0 %v1118, 32
    %v1121 = vpop.permute.xlu0 %1120
    %v1123 = vsel %vm118, %v1121, 0
    %1125 = vmatprep.subr.bf16.mxu0 0
    %1126 = vmatpush1.bf16.msra.mxu0 0
    %1127 = vmatprep.subr.bf16.mxu0 0
    %1128 = vmatpush1.bf16.msra.mxu0 0
    %1129 = vmatprep.subr.bf16.mxu0 0
    %1130 = vmatpush1.bf16.msra.mxu0 0
    %1131 = vmatprep.subr.bf16.mxu0 0
    %1132 = vmatpush1.bf16.msra.mxu0 0
    %1133 = vmatprep.subr.bf16.mxu0 0
    %1134 = vmatpush1.bf16.msra.mxu0 0
    %1135 = vmatprep.subr.bf16.mxu0 0
    %1136 = vmatpush1.bf16.msra.mxu0 0
    %1137 = vmatprep.subr.bf16.mxu0 0
    %1138 = vmatpush1.bf16.msra.mxu0 %v710
    %1139 = vmatprep.subr.bf16.mxu0 0
    %1140 = vmatpush1.bf16.msra.mxu0 %v709
    %1141 = vmatprep.subr.bf16.mxu0 0
    %1142 = vmatpush2.bf16.msra.mxu0 0
    %1143 = vmatprep.subr.bf16.mxu0 0
    %1144 = vmatpush2.bf16.msra.mxu0 0
    %1145 = vmatprep.subr.bf16.mxu0 0
    %1146 = vmatpush2.bf16.msra.mxu0 0
    %1147 = vmatprep.subr.bf16.mxu0 0
    %1148 = vmatpush2.bf16.msra.mxu0 0
    %1149 = vmatprep.subr.bf16.mxu0 0
    %1150 = vmatpush2.bf16.msra.mxu0 0
    %1151 = vmatprep.subr.bf16.mxu0 0
    %1152 = vmatpush2.bf16.msra.mxu0 0
    %1153 = vmatprep.subr.bf16.mxu0 0
    %1154 = vmatpush2.bf16.msra.mxu0 0
    %1155 = vmatprep.subr.bf16.mxu0 0
    %1156 = vmatpush2.bf16.msra.mxu0 0
    %1157 = vmatprep.mubr.bf16.mxu0 0
    %1158 = vmatmul.mubr.bf16.gmra.mxu0 %v1123
    %v1159 = vpop.f32.mrf.mxu0
    %v1160 = vadd.f32 0.0, %v1159
    %v1161 = vpop.f32.mrf.mxu0
    %v1162 = vpop.f32.mrf.mxu0
    %v1163 = vpop.f32.mrf.mxu0
    %1164 = vdwg.mxu0
    %v1165 = vadd.f32 %v615, %v1160
    %v1166 = vmul.f32 %v1165, %v261
    %v1167 = vtanh.pop %v1166
    %v1168 = vmul.f32 %v1167, 0.5
    %v1169 = vadd.f32 %v1168, 0.5
    %v1170 = vmul.f32 %v1169, %v1099
    %1172 = vrot.lane.b32.xlu0 %v1167, 64
    %v1173 = vpop.permute.xlu0 %1172
    %v1175 = vmul.f32 %v1169, %v1173
    %1177 = vrot.lane.b32.xlu0 %v1175, 32
    %v1178 = vpop.permute.xlu0 %1177
    %v1180 = vadd.f32 %v1170, %v1178
    %v1181 = vtanh.pop %v1180
    %1183 = vrot.lane.b32.xlu0 %v1181, 64
    %v1184 = vpop.permute.xlu0 %1183
    %v1186 = vmul.f32 %v1169, %v1184
    %v1187 = vmul.f32 %v1186, %v1186
    %1189 = vrot.lane.b32.xlu0 %v1187, 32
    %v1190 = vpop.permute.xlu0 %1189
    %v1192 = vsel %vm690, %v1190, 0.0
    %1193 = vadd.xlane.f32.xlu0 %v1192
    %v1194 = vpop.xlane.xlu0 %1193
    %v1195 = vadd.f32 %v1194, 1e-24
    %v1196 = vrsqrt.pop %v1195
    %v1197 = vmul.f32 %v1186, %v1196
    %v1198 = vadd.f32 %v1117, %v1197
    %v1199 = vpack.c.bf16 %v1186, %v1186
    %1201 = vrot.lane.b32.xlu0 %v1199, 32
    %v1202 = vpop.permute.xlu0 %1201
    %v1204 = vsel %vm118, %v1202, 0
    %1206 = vmatprep.subr.bf16.mxu0 0
    %1207 = vmatpush1.bf16.msra.mxu0 0
    %1208 = vmatprep.subr.bf16.mxu0 0
    %1209 = vmatpush1.bf16.msra.mxu0 0
    %1210 = vmatprep.subr.bf16.mxu0 0
    %1211 = vmatpush1.bf16.msra.mxu0 0
    %1212 = vmatprep.subr.bf16.mxu0 0
    %1213 = vmatpush1.bf16.msra.mxu0 0
    %1214 = vmatprep.subr.bf16.mxu0 0
    %1215 = vmatpush1.bf16.msra.mxu0 0
    %1216 = vmatprep.subr.bf16.mxu0 0
    %1217 = vmatpush1.bf16.msra.mxu0 0
    %1218 = vmatprep.subr.bf16.mxu0 0
    %1219 = vmatpush1.bf16.msra.mxu0 %v710
    %1220 = vmatprep.subr.bf16.mxu0 0
    %1221 = vmatpush1.bf16.msra.mxu0 %v709
    %1222 = vmatprep.subr.bf16.mxu0 0
    %1223 = vmatpush2.bf16.msra.mxu0 0
    %1224 = vmatprep.subr.bf16.mxu0 0
    %1225 = vmatpush2.bf16.msra.mxu0 0
    %1226 = vmatprep.subr.bf16.mxu0 0
    %1227 = vmatpush2.bf16.msra.mxu0 0
    %1228 = vmatprep.subr.bf16.mxu0 0
    %1229 = vmatpush2.bf16.msra.mxu0 0
    %1230 = vmatprep.subr.bf16.mxu0 0
    %1231 = vmatpush2.bf16.msra.mxu0 0
    %1232 = vmatprep.subr.bf16.mxu0 0
    %1233 = vmatpush2.bf16.msra.mxu0 0
    %1234 = vmatprep.subr.bf16.mxu0 0
    %1235 = vmatpush2.bf16.msra.mxu0 0
    %1236 = vmatprep.subr.bf16.mxu0 0
    %1237 = vmatpush2.bf16.msra.mxu0 0
    %1238 = vmatprep.mubr.bf16.mxu0 0
    %1239 = vmatmul.mubr.bf16.gmra.mxu0 %v1204
    %v1240 = vpop.f32.mrf.mxu0
    %v1241 = vadd.f32 0.0, %v1240
    %v1242 = vpop.f32.mrf.mxu0
    %v1243 = vpop.f32.mrf.mxu0
    %v1244 = vpop.f32.mrf.mxu0
    %1245 = vdwg.mxu0
    %v1246 = vadd.f32 %v665, %v1241
    %v1247 = vmul.f32 %v1246, %v261
    %v1248 = vtanh.pop %v1247
    %v1249 = vmul.f32 %v1248, 0.5
    %v1250 = vadd.f32 %v1249, 0.5
    %v1251 = vmul.f32 %v1250, %v1180
    %1253 = vrot.lane.b32.xlu0 %v1248, 64
    %v1254 = vpop.permute.xlu0 %1253
    %v1256 = vmul.f32 %v1250, %v1254
    %1258 = vrot.lane.b32.xlu0 %v1256, 32
    %v1259 = vpop.permute.xlu0 %1258
    %v1261 = vadd.f32 %v1251, %v1259
    %v1262 = vtanh.pop %v1261
    %1264 = vrot.lane.b32.xlu0 %v1262, 64
    %v1265 = vpop.permute.xlu0 %1264
    %v1267 = vmul.f32 %v1250, %v1265
    %v1268 = vmul.f32 %v1267, %v1267
    %1270 = vrot.lane.b32.xlu0 %v1268, 32
    %v1271 = vpop.permute.xlu0 %1270
    %v1273 = vsel %vm690, %v1271, 0.0
    %1274 = vadd.xlane.f32.xlu0 %v1273
    %v1275 = vpop.xlane.xlu0 %1274
    %v1276 = vadd.f32 %v1275, 1e-24
    %v1277 = vrsqrt.pop %v1276
    %v1278 = vmul.f32 %v1267, %v1277
    %v1279 = vadd.f32 %v1198, %v1278
    %v1280 = vmul.f32 %v1279, 0.125
    %v1281 = vmul.f32 %v1280, %v1280
    %1283 = vrot.lane.b32.xlu0 %v1281, 32
    %v1284 = vpop.permute.xlu0 %1283
    %v1286 = vsel %vm690, %v1284, 0.0
    %1287 = vadd.xlane.f32.xlu0 %v1286
    %v1288 = vpop.xlane.xlu0 %1287
    %v1289 = vadd.f32 %v1288, 1e-24
    %v1290 = vrsqrt.pop %v1289
    %v1291 = vmul.f32 %v1280, %v1290
    %v1292 = vpack.c.bf16 %v1291, %v1291
    %v1293 = vld [vmem:[%s6] sm:$0xf]
    %v1294 = vld [vmem:[%s6 + $0x4] sm:$0xf]
    %v1295 = vld [vmem:[%s6 + $0x8] sm:$0xf]
    %v1296 = vld [vmem:[%s6 + $0xc] sm:$0xf]
    %1298 = vrot.lane.b32.xlu0 %v1292, 32
    %v1299 = vpop.permute.xlu0 %1298
    %v1304 = vunpack.c.l.b16 %v1293
    %v1305 = vunpack.c.l.b16 %v1294
    %v1306 = vunpack.c.l.b16 %v1295
    %v1307 = vunpack.c.l.b16 %v1296
    %v1308 = vpack.c.b16 %v1305, %v1304
    %v1309 = vpack.c.b16 %v1307, %v1306
    %v1313 = vsel %vm118, %v1299, 0
    %1315 = vmatprep.subr.bf16.mxu0 0
    %1316 = vmatpush1.bf16.msra.mxu0 0
    %1317 = vmatprep.subr.bf16.mxu0 0
    %1318 = vmatpush1.bf16.msra.mxu0 0
    %1319 = vmatprep.subr.bf16.mxu0 0
    %1320 = vmatpush1.bf16.msra.mxu0 0
    %1321 = vmatprep.subr.bf16.mxu0 0
    %1322 = vmatpush1.bf16.msra.mxu0 0
    %1323 = vmatprep.subr.bf16.mxu0 0
    %1324 = vmatpush1.bf16.msra.mxu0 0
    %1325 = vmatprep.subr.bf16.mxu0 0
    %1326 = vmatpush1.bf16.msra.mxu0 0
    %1327 = vmatprep.subr.bf16.mxu0 0
    %1328 = vmatpush1.bf16.msra.mxu0 %v1309
    %1329 = vmatprep.subr.bf16.mxu0 0
    %1330 = vmatpush1.bf16.msra.mxu0 %v1308
    %1331 = vmatprep.subr.bf16.mxu0 0
    %1332 = vmatpush2.bf16.msra.mxu0 0
    %1333 = vmatprep.subr.bf16.mxu0 0
    %1334 = vmatpush2.bf16.msra.mxu0 0
    %1335 = vmatprep.subr.bf16.mxu0 0
    %1336 = vmatpush2.bf16.msra.mxu0 0
    %1337 = vmatprep.subr.bf16.mxu0 0
    %1338 = vmatpush2.bf16.msra.mxu0 0
    %1339 = vmatprep.subr.bf16.mxu0 0
    %1340 = vmatpush2.bf16.msra.mxu0 0
    %1341 = vmatprep.subr.bf16.mxu0 0
    %1342 = vmatpush2.bf16.msra.mxu0 0
    %1343 = vmatprep.subr.bf16.mxu0 0
    %1344 = vmatpush2.bf16.msra.mxu0 0
    %1345 = vmatprep.subr.bf16.mxu0 0
    %1346 = vmatpush2.bf16.msra.mxu0 0
    %1347 = vmatprep.mubr.bf16.mxu0 0
    %1348 = vmatmul.mubr.bf16.gmra.mxu0 %v1313
    %v1349 = vpop.f32.mrf.mxu0
    %v1350 = vadd.f32 0.0, %v1349
    %v1351 = vpop.f32.mrf.mxu0
    %v1352 = vpop.f32.mrf.mxu0
    %v1353 = vpop.f32.mrf.mxu0
    %1354 = vdwg.mxu0
    %v1355 = vmax.f32 %v1350, 0.0
    %v1356 = vpack.c.bf16 %v1355, %v1355
    %v1357 = vld [vmem:[%s7] sm:$0xf]
    %v1358 = vld [vmem:[%s7 + $0x4] sm:$0xf]
    %v1359 = vld [vmem:[%s7 + $0x8] sm:$0xf]
    %v1360 = vld [vmem:[%s7 + $0xc] sm:$0xf]
    %v1365 = vunpack.c.l.b16 %v1357
    %v1366 = vunpack.c.l.b16 %v1358
    %v1367 = vunpack.c.l.b16 %v1359
    %v1368 = vunpack.c.l.b16 %v1360
    %v1369 = vpack.c.b16 %v1366, %v1365
    %v1370 = vpack.c.b16 %v1368, %v1367
    %v1374 = vsel %vm118, %v1356, 0
    %1376 = vmatprep.subr.bf16.mxu0 0
    %1377 = vmatpush1.bf16.msra.mxu0 0
    %1378 = vmatprep.subr.bf16.mxu0 0
    %1379 = vmatpush1.bf16.msra.mxu0 0
    %1380 = vmatprep.subr.bf16.mxu0 0
    %1381 = vmatpush1.bf16.msra.mxu0 0
    %1382 = vmatprep.subr.bf16.mxu0 0
    %1383 = vmatpush1.bf16.msra.mxu0 0
    %1384 = vmatprep.subr.bf16.mxu0 0
    %1385 = vmatpush1.bf16.msra.mxu0 0
    %1386 = vmatprep.subr.bf16.mxu0 0
    %1387 = vmatpush1.bf16.msra.mxu0 0
    %1388 = vmatprep.subr.bf16.mxu0 0
    %1389 = vmatpush1.bf16.msra.mxu0 %v1370
    %1390 = vmatprep.subr.bf16.mxu0 0
    %1391 = vmatpush1.bf16.msra.mxu0 %v1369
    %1392 = vmatprep.subr.bf16.mxu0 0
    %1393 = vmatpush2.bf16.msra.mxu0 0
    %1394 = vmatprep.subr.bf16.mxu0 0
    %1395 = vmatpush2.bf16.msra.mxu0 0
    %1396 = vmatprep.subr.bf16.mxu0 0
    %1397 = vmatpush2.bf16.msra.mxu0 0
    %1398 = vmatprep.subr.bf16.mxu0 0
    %1399 = vmatpush2.bf16.msra.mxu0 0
    %1400 = vmatprep.subr.bf16.mxu0 0
    %1401 = vmatpush2.bf16.msra.mxu0 0
    %1402 = vmatprep.subr.bf16.mxu0 0
    %1403 = vmatpush2.bf16.msra.mxu0 0
    %1404 = vmatprep.subr.bf16.mxu0 0
    %1405 = vmatpush2.bf16.msra.mxu0 0
    %1406 = vmatprep.subr.bf16.mxu0 0
    %1407 = vmatpush2.bf16.msra.mxu0 0
    %1408 = vmatprep.mubr.bf16.mxu0 0
    %1409 = vmatmul.mubr.bf16.gmra.mxu0 %v1374
    %v1410 = vpop.f32.mrf.mxu0
    %v1411 = vadd.f32 0.0, %v1410
    %v1412 = vpop.f32.mrf.mxu0
    %v1413 = vpop.f32.mrf.mxu0
    %v1414 = vpop.f32.mrf.mxu0
    %1415 = vdwg.mxu0
    %v1416 = vxor.u32 %v1411, 2147483648
    %v1417 = vmul.f32 %v1416, 1.442695
    %v1418 = vpow.pop %v1417
    %v1419 = vadd.f32 %v1418, 1.0
    %v1420 = vrcp.pop %v1419
    %v1421 = vmul.f32 1.0, %v1420
    %vm1422 = vcmask 1024
    %1423 = vst.msk [vmem:[%s16] sm:$0x3] %vm1422, %v1421
    %v1425 = vrot.slane %v792, 6
    %v1428 = vrot.slane %v873, 4
    %v1431 = vrot.slane %v954, 2
    %v1434 = vrot.slane %v1116, 6
    %v1437 = vrot.slane %v1197, 4
    %v1440 = vrot.slane %v1278, 2
    %vm1442 = vcmask 1041408
    %v1443 = vsel %vm1442, %v696, %v1425
    %vm1444 = vcmask 1043456
    %v1445 = vsel %vm1444, %v1443, %v1428
    %vm1446 = vcmask 1045504
    %v1447 = vsel %vm1446, %v1445, %v1431
    %v1448 = vsel %vm1442, %v1035, %v1434
    %v1449 = vsel %vm1444, %v1448, %v1437
    %v1450 = vsel %vm1446, %v1449, %v1440
    %v1451 = vpack.c.bf16 %v1450, %v1447
    %v1452 = vlaneseq
    %v1453 = vshrl.u32 %v1452, 7
    %v1454 = vand.u32 %v257, 1
    %vm1455 = vcmp.eq.s32.totalorder %v1454, %v1453
    %v1456 = vsel %vm1455, 0.0, -1e+30
    %v1457 = vld [vmem:[%s1] sm:$0x3]
    %1458 = vset.pattern.permute.xlu0 0
    %1459 = vperm.xlu0 %1458, %v1457
    %v1460 = vpop.permute.xlu0 %1459
    %vm1461 = vcmp.eq.s32.totalorder %v257, %v1460
    %v1462 = vsel %vm1461, 1, 0
    %v1463 = vcvt.s32.f32 %v1462
    %v1464 = vpack.c.bf16 %v1463, %v1463
    %v1469 = vunpack.c.l.b16 %v236
    %v1470 = vunpack.c.l.b16 %v237
    %v1471 = vunpack.c.l.b16 %v238
    %v1472 = vunpack.c.l.b16 %v239
    %v1473 = vpack.c.b16 %v1470, %v1469
    %v1474 = vpack.c.b16 %v1472, %v1471
    %1477 = vmatprep.subr.bf16.mxu0 0
    %1478 = vmatpush1.bf16.msra.mxu0 0
    %1479 = vmatprep.subr.bf16.mxu0 0
    %1480 = vmatpush1.bf16.msra.mxu0 0
    %1481 = vmatprep.subr.bf16.mxu0 0
    %1482 = vmatpush1.bf16.msra.mxu0 0
    %1483 = vmatprep.subr.bf16.mxu0 0
    %1484 = vmatpush1.bf16.msra.mxu0 0
    %1485 = vmatprep.subr.bf16.mxu0 0
    %1486 = vmatpush1.bf16.msra.mxu0 0
    %1487 = vmatprep.subr.bf16.mxu0 0
    %1488 = vmatpush1.bf16.msra.mxu0 0
    %1489 = vmatprep.subr.bf16.mxu0 0
    %1490 = vmatpush1.bf16.msra.mxu0 %v1474
    %1491 = vmatprep.subr.bf16.mxu0 0
    %1492 = vmatpush1.bf16.msra.mxu0 %v1473
    %1493 = vmatprep.subr.bf16.mxu0 0
    %1494 = vmatpush2.bf16.msra.mxu0 0
    %1495 = vmatprep.subr.bf16.mxu0 0
    %1496 = vmatpush2.bf16.msra.mxu0 0
    %1497 = vmatprep.subr.bf16.mxu0 0
    %1498 = vmatpush2.bf16.msra.mxu0 0
    %1499 = vmatprep.subr.bf16.mxu0 0
    %1500 = vmatpush2.bf16.msra.mxu0 0
    %1501 = vmatprep.subr.bf16.mxu0 0
    %1502 = vmatpush2.bf16.msra.mxu0 0
    %1503 = vmatprep.subr.bf16.mxu0 0
    %1504 = vmatpush2.bf16.msra.mxu0 0
    %1505 = vmatprep.subr.bf16.mxu0 0
    %1506 = vmatpush2.bf16.msra.mxu0 0
    %1507 = vmatprep.subr.bf16.mxu0 0
    %1508 = vmatpush2.bf16.msra.mxu0 0
    %1509 = vmatprep.mubr.bf16.mxu0 0
    %1510 = vmatmul.mubr.bf16.gmra.mxu0 %v1313
    %v1511 = vpop.f32.mrf.mxu0
    %v1512 = vadd.f32 0.0, %v1511
    %v1513 = vpop.f32.mrf.mxu0
    %v1514 = vpop.f32.mrf.mxu0
    %v1515 = vpop.f32.mrf.mxu0
    %1516 = vdwg.mxu0
    %v1518 = vsel %vm276, %v1464, 0
    %1520 = vmatprep.subr.bf16.mxu0 0
    %1521 = vmatpush1.bf16.msra.mxu0 0
    %1522 = vmatprep.subr.bf16.mxu0 0
    %1523 = vmatpush1.bf16.msra.mxu0 0
    %1524 = vmatprep.subr.bf16.mxu0 0
    %1525 = vmatpush1.bf16.msra.mxu0 0
    %1526 = vmatprep.subr.bf16.mxu0 0
    %1527 = vmatpush1.bf16.msra.mxu0 0
    %1528 = vmatprep.subr.bf16.mxu0 0
    %1529 = vmatpush1.bf16.msra.mxu0 0
    %1530 = vmatprep.subr.bf16.mxu0 0
    %1531 = vmatpush1.bf16.msra.mxu0 0
    %1532 = vmatprep.subr.bf16.mxu0 0
    %1533 = vmatpush1.bf16.msra.mxu0 0
    %1534 = vmatprep.subr.bf16.mxu0 0
    %1535 = vmatpush1.bf16.msra.mxu0 %v231
    %1536 = vmatprep.subr.bf16.mxu0 0
    %1537 = vmatpush2.bf16.msra.mxu0 0
    %1538 = vmatprep.subr.bf16.mxu0 0
    %1539 = vmatpush2.bf16.msra.mxu0 0
    %1540 = vmatprep.subr.bf16.mxu0 0
    %1541 = vmatpush2.bf16.msra.mxu0 0
    %1542 = vmatprep.subr.bf16.mxu0 0
    %1543 = vmatpush2.bf16.msra.mxu0 0
    %1544 = vmatprep.subr.bf16.mxu0 0
    %1545 = vmatpush2.bf16.msra.mxu0 0
    %1546 = vmatprep.subr.bf16.mxu0 0
    %1547 = vmatpush2.bf16.msra.mxu0 0
    %1548 = vmatprep.subr.bf16.mxu0 0
    %1549 = vmatpush2.bf16.msra.mxu0 0
    %1550 = vmatprep.subr.bf16.mxu0 0
    %1551 = vmatpush2.bf16.msra.mxu0 0
    %1552 = vmatprep.mubr.bf16.mxu0 0
    %1553 = vmatmul.mubr.bf16.gmra.mxu0 %v1518
    %v1554 = vpop.f32.mrf.mxu0
    %v1555 = vadd.f32 %v1512, %v1554
    %v1556 = vpop.f32.mrf.mxu0
    %v1557 = vpop.f32.mrf.mxu0
    %v1558 = vpop.f32.mrf.mxu0
    %1559 = vdwg.mxu0
    %v1561 = vlaneseq
    %v1562 = vshrl.u32 %v1561, 7
    %v1563 = vsub.s32 0, %v1562
    %v1564 = vrot.slane %v241, %v1563
    %v1566 = vadd.f32 %v1555, %v1564
    %v1567 = vmul.f32 %v1566, %v261
    %v1568 = vtanh.pop %v1567
    %v1569 = vmul.f32 %v1568, 0.5
    %v1570 = vadd.f32 %v1569, 0.5
    %1572 = vrot.lane.b32.xlu0 %v1291, 64
    %v1573 = vpop.permute.xlu0 %1572
    %v1575 = vmul.f32 %v1570, %v1573
    %1577 = vrot.lane.b32.xlu0 %v1568, 64
    %v1578 = vpop.permute.xlu0 %1577
    %v1580 = vmul.f32 %v1570, %v1578
    %1582 = vrot.lane.b32.xlu0 %v1580, 32
    %v1583 = vpop.permute.xlu0 %1582
    %v1585 = vadd.f32 %v1575, %v1583
    %v1586 = vtanh.pop %v1585
    %1588 = vrot.lane.b32.xlu0 %v1586, 64
    %v1589 = vpop.permute.xlu0 %1588
    %v1591 = vmul.f32 %v1570, %v1589
    %v1592 = vpack.c.bf16 %v1591, %v1591
    %1594 = vrot.lane.b32.xlu0 %v1592, 32
    %v1595 = vpop.permute.xlu0 %1594
    %1597 = vrot.lane.b32.xlu0 %v1451, 32
    %v1598 = vpop.permute.xlu0 %1597
    %v1600 = vsel %vm118, %v1595, 0
    %v1603 = vsel %vm118, %v1598, 0
    %1605 = vmatprep.subr.bf16.mxu0 0
    %1606 = vmatpush1.bf16.xpose.msra.mxu0 0
    %1607 = vmatprep.subr.bf16.mxu0 0
    %1608 = vmatpush1.bf16.xpose.msra.mxu0 0
    %1609 = vmatprep.subr.bf16.mxu0 0
    %1610 = vmatpush1.bf16.xpose.msra.mxu0 0
    %1611 = vmatprep.subr.bf16.mxu0 0
    %1612 = vmatpush1.bf16.xpose.msra.mxu0 0
    %1613 = vmatprep.subr.bf16.mxu0 0
    %1614 = vmatpush1.bf16.xpose.msra.mxu0 0
    %1615 = vmatprep.subr.bf16.mxu0 0
    %1616 = vmatpush1.bf16.xpose.msra.mxu0 0
    %1617 = vmatprep.subr.bf16.mxu0 0
    %1618 = vmatpush1.bf16.xpose.msra.mxu0 0
    %1619 = vmatprep.subr.bf16.mxu0 0
    %1620 = vmatpush1.bf16.xpose.msra.mxu0 %v1603
    %1621 = vmatprep.subr.bf16.mxu0 0
    %1622 = vmatpush2.bf16.xpose.msra.mxu0 0
    %1623 = vmatprep.subr.bf16.mxu0 0
    %1624 = vmatpush2.bf16.xpose.msra.mxu0 0
    %1625 = vmatprep.subr.bf16.mxu0 0
    %1626 = vmatpush2.bf16.xpose.msra.mxu0 0
    %1627 = vmatprep.subr.bf16.mxu0 0
    %1628 = vmatpush2.bf16.xpose.msra.mxu0 0
    %1629 = vmatprep.subr.bf16.mxu0 0
    %1630 = vmatpush2.bf16.xpose.msra.mxu0 0
    %1631 = vmatprep.subr.bf16.mxu0 0
    %1632 = vmatpush2.bf16.xpose.msra.mxu0 0
    %1633 = vmatprep.subr.bf16.mxu0 0
    %1634 = vmatpush2.bf16.xpose.msra.mxu0 0
    %1635 = vmatprep.subr.bf16.mxu0 0
    %1636 = vmatpush2.bf16.xpose.msra.mxu0 0
    %1637 = vmatprep.mubr.bf16.mxu0 0
    %1638 = vmatmul.mubr.bf16.gmra.mxu0 %v1600
    %v1639 = vpop.f32.mrf.mxu0
    %v1640 = vadd.f32 %v1456, %v1639
    %v1641 = vpop.f32.mrf.mxu0
    %v1642 = vpop.f32.mrf.mxu0
    %v1643 = vpop.f32.mrf.mxu0
    %1644 = vdwg.mxu0
    %v1645 = vmul.f32 %v1640, 1.442695
    %v1646 = vpow.pop %v1645
    %vm1647 = vcmask 123904
    %v1648 = vsel %vm1647, %v1646, 0.0
    %1649 = vadd.xlane.f32.xlu0 %v1648
    %v1650 = vpop.xlane.xlu0 %1649
    %v1651 = vrcp.pop %v1650
    %v1652 = vmul.f32 %v1646, %v1651
    %v1653 = vpack.c.bf16 %v1652, %v1652
    %v1656 = vsel %vm276, %v1653, 0
    %1658 = vmatprep.subr.bf16.mxu0 0
    %1659 = vmatpush1.bf16.msra.mxu0 0
    %1660 = vmatprep.subr.bf16.mxu0 0
    %1661 = vmatpush1.bf16.msra.mxu0 0
    %1662 = vmatprep.subr.bf16.mxu0 0
    %1663 = vmatpush1.bf16.msra.mxu0 0
    %1664 = vmatprep.subr.bf16.mxu0 0
    %1665 = vmatpush1.bf16.msra.mxu0 0
    %1666 = vmatprep.subr.bf16.mxu0 0
    %1667 = vmatpush1.bf16.msra.mxu0 0
    %1668 = vmatprep.subr.bf16.mxu0 0
    %1669 = vmatpush1.bf16.msra.mxu0 0
    %1670 = vmatprep.subr.bf16.mxu0 0
    %1671 = vmatpush1.bf16.msra.mxu0 0
    %1672 = vmatprep.subr.bf16.mxu0 0
    %1673 = vmatpush1.bf16.msra.mxu0 %v1598
    %1674 = vmatprep.subr.bf16.mxu0 0
    %1675 = vmatpush2.bf16.msra.mxu0 0
    %1676 = vmatprep.subr.bf16.mxu0 0
    %1677 = vmatpush2.bf16.msra.mxu0 0
    %1678 = vmatprep.subr.bf16.mxu0 0
    %1679 = vmatpush2.bf16.msra.mxu0 0
    %1680 = vmatprep.subr.bf16.mxu0 0
    %1681 = vmatpush2.bf16.msra.mxu0 0
    %1682 = vmatprep.subr.bf16.mxu0 0
    %1683 = vmatpush2.bf16.msra.mxu0 0
    %1684 = vmatprep.subr.bf16.mxu0 0
    %1685 = vmatpush2.bf16.msra.mxu0 0
    %1686 = vmatprep.subr.bf16.mxu0 0
    %1687 = vmatpush2.bf16.msra.mxu0 0
    %1688 = vmatprep.subr.bf16.mxu0 0
    %1689 = vmatpush2.bf16.msra.mxu0 0
    %1690 = vmatprep.mubr.bf16.mxu0 0
    %1691 = vmatmul.mubr.bf16.gmra.mxu0 %v1656
    %v1692 = vpop.f32.mrf.mxu0
    %v1693 = vadd.f32 0.0, %v1692
    %v1694 = vpop.f32.mrf.mxu0
    %v1695 = vpop.f32.mrf.mxu0
    %v1696 = vpop.f32.mrf.mxu0
    %1697 = vdwg.mxu0
    %v1698 = vpack.c.bf16 %v1693, %v1693
    %v1703 = vunpack.c.l.b16 %v246
    %v1704 = vunpack.c.l.b16 %v247
    %v1705 = vunpack.c.l.b16 %v248
    %v1706 = vunpack.c.l.b16 %v249
    %v1707 = vpack.c.b16 %v1704, %v1703
    %v1708 = vpack.c.b16 %v1706, %v1705
    %1711 = vmatprep.subr.bf16.mxu0 0
    %1712 = vmatpush1.bf16.msra.mxu0 0
    %1713 = vmatprep.subr.bf16.mxu0 0
    %1714 = vmatpush1.bf16.msra.mxu0 0
    %1715 = vmatprep.subr.bf16.mxu0 0
    %1716 = vmatpush1.bf16.msra.mxu0 0
    %1717 = vmatprep.subr.bf16.mxu0 0
    %1718 = vmatpush1.bf16.msra.mxu0 0
    %1719 = vmatprep.subr.bf16.mxu0 0
    %1720 = vmatpush1.bf16.msra.mxu0 0
    %1721 = vmatprep.subr.bf16.mxu0 0
    %1722 = vmatpush1.bf16.msra.mxu0 0
    %1723 = vmatprep.subr.bf16.mxu0 0
    %1724 = vmatpush1.bf16.msra.mxu0 %v1708
    %1725 = vmatprep.subr.bf16.mxu0 0
    %1726 = vmatpush1.bf16.msra.mxu0 %v1707
    %1727 = vmatprep.subr.bf16.mxu0 0
    %1728 = vmatpush2.bf16.msra.mxu0 0
    %1729 = vmatprep.subr.bf16.mxu0 0
    %1730 = vmatpush2.bf16.msra.mxu0 0
    %1731 = vmatprep.subr.bf16.mxu0 0
    %1732 = vmatpush2.bf16.msra.mxu0 0
    %1733 = vmatprep.subr.bf16.mxu0 0
    %1734 = vmatpush2.bf16.msra.mxu0 0
    %1735 = vmatprep.subr.bf16.mxu0 0
    %1736 = vmatpush2.bf16.msra.mxu0 0
    %1737 = vmatprep.subr.bf16.mxu0 0
    %1738 = vmatpush2.bf16.msra.mxu0 0
    %1739 = vmatprep.subr.bf16.mxu0 0
    %1740 = vmatpush2.bf16.msra.mxu0 0
    %1741 = vmatprep.subr.bf16.mxu0 0
    %1742 = vmatpush2.bf16.msra.mxu0 0
    %1743 = vmatprep.mubr.bf16.mxu0 0
    %1744 = vmatmul.mubr.bf16.gmra.mxu0 %v1600
    %v1745 = vpop.f32.mrf.mxu0
    %v1746 = vadd.f32 0.0, %v1745
    %v1747 = vpop.f32.mrf.mxu0
    %v1748 = vpop.f32.mrf.mxu0
    %v1749 = vpop.f32.mrf.mxu0
    %1750 = vdwg.mxu0
    %v1755 = vunpack.c.l.b16 %v242
    %v1756 = vunpack.c.l.b16 %v243
    %v1757 = vunpack.c.l.b16 %v244
    %v1758 = vunpack.c.l.b16 %v245
    %v1759 = vpack.c.b16 %v1756, %v1755
    %v1760 = vpack.c.b16 %v1758, %v1757
    %v1764 = vsel %vm118, %v1698, 0
    %1766 = vmatprep.subr.bf16.mxu0 0
    %1767 = vmatpush1.bf16.msra.mxu0 0
    %1768 = vmatprep.subr.bf16.mxu0 0
    %1769 = vmatpush1.bf16.msra.mxu0 0
    %1770 = vmatprep.subr.bf16.mxu0 0
    %1771 = vmatpush1.bf16.msra.mxu0 0
    %1772 = vmatprep.subr.bf16.mxu0 0
    %1773 = vmatpush1.bf16.msra.mxu0 0
    %1774 = vmatprep.subr.bf16.mxu0 0
    %1775 = vmatpush1.bf16.msra.mxu0 0
    %1776 = vmatprep.subr.bf16.mxu0 0
    %1777 = vmatpush1.bf16.msra.mxu0 0
    %1778 = vmatprep.subr.bf16.mxu0 0
    %1779 = vmatpush1.bf16.msra.mxu0 %v1760
    %1780 = vmatprep.subr.bf16.mxu0 0
    %1781 = vmatpush1.bf16.msra.mxu0 %v1759
    %1782 = vmatprep.subr.bf16.mxu0 0
    %1783 = vmatpush2.bf16.msra.mxu0 0
    %1784 = vmatprep.subr.bf16.mxu0 0
    %1785 = vmatpush2.bf16.msra.mxu0 0
    %1786 = vmatprep.subr.bf16.mxu0 0
    %1787 = vmatpush2.bf16.msra.mxu0 0
    %1788 = vmatprep.subr.bf16.mxu0 0
    %1789 = vmatpush2.bf16.msra.mxu0 0
    %1790 = vmatprep.subr.bf16.mxu0 0
    %1791 = vmatpush2.bf16.msra.mxu0 0
    %1792 = vmatprep.subr.bf16.mxu0 0
    %1793 = vmatpush2.bf16.msra.mxu0 0
    %1794 = vmatprep.subr.bf16.mxu0 0
    %1795 = vmatpush2.bf16.msra.mxu0 0
    %1796 = vmatprep.subr.bf16.mxu0 0
    %1797 = vmatpush2.bf16.msra.mxu0 0
    %1798 = vmatprep.mubr.bf16.mxu0 0
    %1799 = vmatmul.mubr.bf16.gmra.mxu0 %v1764
    %v1800 = vpop.f32.mrf.mxu0
    %v1801 = vadd.f32 %v1746, %v1800
    %v1802 = vpop.f32.mrf.mxu0
    %v1803 = vpop.f32.mrf.mxu0
    %v1804 = vpop.f32.mrf.mxu0
    %1805 = vdwg.mxu0
    %v1807 = vlaneseq
    %v1808 = vshrl.u32 %v1807, 7
    %v1809 = vsub.s32 0, %v1808
    %v1810 = vrot.slane %v250, %v1809
    %v1812 = vadd.f32 %v1801, %v1810
    %v1813 = vtanh.pop %v1812
    %v1814 = vpack.c.bf16 %v1813, %v1813
    %v1816 = vlaneseq
    %v1817 = vshrl.u32 %v1816, 7
    %v1818 = vsub.s32 0, %v1817
    %v1819 = vrot.slane %v255, %v1818
    %v1825 = vunpack.c.l.b16 %v251
    %v1826 = vunpack.c.l.b16 %v252
    %v1827 = vunpack.c.l.b16 %v253
    %v1828 = vunpack.c.l.b16 %v254
    %v1829 = vpack.c.b16 %v1826, %v1825
    %v1830 = vpack.c.b16 %v1828, %v1827
    %v1834 = vsel %vm118, %v1814, 0
    %1836 = vmatprep.subr.bf16.mxu0 0
    %1837 = vmatpush1.bf16.msra.mxu0 0
    %1838 = vmatprep.subr.bf16.mxu0 0
    %1839 = vmatpush1.bf16.msra.mxu0 0
    %1840 = vmatprep.subr.bf16.mxu0 0
    %1841 = vmatpush1.bf16.msra.mxu0 0
    %1842 = vmatprep.subr.bf16.mxu0 0
    %1843 = vmatpush1.bf16.msra.mxu0 0
    %1844 = vmatprep.subr.bf16.mxu0 0
    %1845 = vmatpush1.bf16.msra.mxu0 0
    %1846 = vmatprep.subr.bf16.mxu0 0
    %1847 = vmatpush1.bf16.msra.mxu0 0
    %1848 = vmatprep.subr.bf16.mxu0 0
    %1849 = vmatpush1.bf16.msra.mxu0 %v1830
    %1850 = vmatprep.subr.bf16.mxu0 0
    %1851 = vmatpush1.bf16.msra.mxu0 %v1829
    %1852 = vmatprep.subr.bf16.mxu0 0
    %1853 = vmatpush2.bf16.msra.mxu0 0
    %1854 = vmatprep.subr.bf16.mxu0 0
    %1855 = vmatpush2.bf16.msra.mxu0 0
    %1856 = vmatprep.subr.bf16.mxu0 0
    %1857 = vmatpush2.bf16.msra.mxu0 0
    %1858 = vmatprep.subr.bf16.mxu0 0
    %1859 = vmatpush2.bf16.msra.mxu0 0
    %1860 = vmatprep.subr.bf16.mxu0 0
    %1861 = vmatpush2.bf16.msra.mxu0 0
    %1862 = vmatprep.subr.bf16.mxu0 0
    %1863 = vmatpush2.bf16.msra.mxu0 0
    %1864 = vmatprep.subr.bf16.mxu0 0
    %1865 = vmatpush2.bf16.msra.mxu0 0
    %1866 = vmatprep.subr.bf16.mxu0 0
    %1867 = vmatpush2.bf16.msra.mxu0 0
    %1868 = vmatprep.mubr.bf16.mxu0 0
    %1869 = vmatmul.mubr.bf16.gmra.mxu0 %v1834
    %v1870 = vpop.f32.mrf.mxu0
    %v1871 = vadd.f32 %v1819, %v1870
    %v1872 = vpop.f32.mrf.mxu0
    %v1873 = vpop.f32.mrf.mxu0
    %v1874 = vpop.f32.mrf.mxu0
    %1875 = vdwg.mxu0
    %vm1876 = vcmp.ge.s32.totalorder %v257, 1
    %vm1877 = vcmp.lt.s32.totalorder %v257, 3
    %vm1878 = vmand %vm1876, %vm1877
    %v1879 = vsel %vm1878, %v1871, -1e+30
    %v1880 = vsel %vm1647, %v1879, -inf
    %1881 = vmax.xlane.f32.xlu0 %v1880
    %v1882 = vpop.xlane.xlu0 %1881
    %vm1883 = vcmp.eq.f32.partialorder %v1879, %v1882
    %v1884 = vsel %vm1883, %v257, 16
    %v1885 = vsel %vm1647, %v1884, 2147483647
    %v1886 = vand.u32 %v1885, 65535
    %v1887 = vshra.s32 %v1885, 16
    %v1888 = vcvt.s32.f32 %v1886
    %v1889 = vcvt.s32.f32 %v1887
    %1890 = vmin.xlane.f32.xlu0 %v1889
    %v1891 = vpop.xlane.xlu0 %1890
    %vm1892 = vcmp.eq.f32.partialorder %v1889, %v1891
    %v1893 = vsel %vm1892, %v1888, inf
    %1894 = vmin.xlane.f32.xlu0 %v1893
    %v1895 = vpop.xlane.xlu0 %1894
    %v1896 = vcvt.f32.s32 %v1895
    %v1897 = vcvt.f32.s32 %v1891
    %v1898 = vshll.u32 %v1897, 16
    %v1899 = vadd.s32 %v1898, %v1896
    %v1900 = vsel %vm1647, %v1871, -inf
    %1901 = vmax.xlane.f32.xlu0 %v1900
    %v1902 = vpop.xlane.xlu0 %1901
    %v1903 = vsub.f32 %v1871, %v1902
    %v1904 = vmul.f32 %v1903, 1.442695
    %v1905 = vpow.pop %v1904
    %v1906 = vsel %vm1647, %v1905, 0.0
    %1907 = vadd.xlane.f32.xlu0 %v1906
    %v1908 = vpop.xlane.xlu0 %1907
    %v1909 = vlog2.pop %v1908
    %v1910 = vmul.f32 %v1909, 0.6931472
    %v1911 = vsub.f32 %v1903, %v1910
    %vm1912 = vcmp.eq.s32.totalorder %v257, %v1899
    %v1913 = vsel %vm1912, 1, 0
    %v1914 = vcvt.s32.f32 %v1913
    %v1915 = vpack.c.bf16 %v1914, %v1914
    %1916 = vmatprep.subr.bf16.mxu0 0
    %1917 = vmatpush1.bf16.msra.mxu0 0
    %1918 = vmatprep.subr.bf16.mxu0 0
    %1919 = vmatpush1.bf16.msra.mxu0 0
    %1920 = vmatprep.subr.bf16.mxu0 0
    %1921 = vmatpush1.bf16.msra.mxu0 0
    %1922 = vmatprep.subr.bf16.mxu0 0
    %1923 = vmatpush1.bf16.msra.mxu0 0
    %1924 = vmatprep.subr.bf16.mxu0 0
    %1925 = vmatpush1.bf16.msra.mxu0 0
    %1926 = vmatprep.subr.bf16.mxu0 0
    %1927 = vmatpush1.bf16.msra.mxu0 0
    %1928 = vmatprep.subr.bf16.mxu0 0
    %1929 = vmatpush1.bf16.msra.mxu0 %v1474
    %1930 = vmatprep.subr.bf16.mxu0 0
    %1931 = vmatpush1.bf16.msra.mxu0 %v1473
    %1932 = vmatprep.subr.bf16.mxu0 0
    %1933 = vmatpush2.bf16.msra.mxu0 0
    %1934 = vmatprep.subr.bf16.mxu0 0
    %1935 = vmatpush2.bf16.msra.mxu0 0
    %1936 = vmatprep.subr.bf16.mxu0 0
    %1937 = vmatpush2.bf16.msra.mxu0 0
    %1938 = vmatprep.subr.bf16.mxu0 0
    %1939 = vmatpush2.bf16.msra.mxu0 0
    %1940 = vmatprep.subr.bf16.mxu0 0
    %1941 = vmatpush2.bf16.msra.mxu0 0
    %1942 = vmatprep.subr.bf16.mxu0 0
    %1943 = vmatpush2.bf16.msra.mxu0 0
    %1944 = vmatprep.subr.bf16.mxu0 0
    %1945 = vmatpush2.bf16.msra.mxu0 0
    %1946 = vmatprep.subr.bf16.mxu0 0
    %1947 = vmatpush2.bf16.msra.mxu0 0
    %1948 = vmatprep.mubr.bf16.mxu0 0
    %1949 = vmatmul.mubr.bf16.gmra.mxu0 %v1600
    %v1950 = vpop.f32.mrf.mxu0
    %v1951 = vadd.f32 0.0, %v1950
    %v1952 = vpop.f32.mrf.mxu0
    %v1953 = vpop.f32.mrf.mxu0
    %v1954 = vpop.f32.mrf.mxu0
    %1955 = vdwg.mxu0
    %v1957 = vsel %vm276, %v1915, 0
    %1959 = vmatprep.subr.bf16.mxu0 0
    %1960 = vmatpush1.bf16.msra.mxu0 0
    %1961 = vmatprep.subr.bf16.mxu0 0
    %1962 = vmatpush1.bf16.msra.mxu0 0
    %1963 = vmatprep.subr.bf16.mxu0 0
    %1964 = vmatpush1.bf16.msra.mxu0 0
    %1965 = vmatprep.subr.bf16.mxu0 0
    %1966 = vmatpush1.bf16.msra.mxu0 0
    %1967 = vmatprep.subr.bf16.mxu0 0
    %1968 = vmatpush1.bf16.msra.mxu0 0
    %1969 = vmatprep.subr.bf16.mxu0 0
    %1970 = vmatpush1.bf16.msra.mxu0 0
    %1971 = vmatprep.subr.bf16.mxu0 0
    %1972 = vmatpush1.bf16.msra.mxu0 0
    %1973 = vmatprep.subr.bf16.mxu0 0
    %1974 = vmatpush1.bf16.msra.mxu0 %v231
    %1975 = vmatprep.subr.bf16.mxu0 0
    %1976 = vmatpush2.bf16.msra.mxu0 0
    %1977 = vmatprep.subr.bf16.mxu0 0
    %1978 = vmatpush2.bf16.msra.mxu0 0
    %1979 = vmatprep.subr.bf16.mxu0 0
    %1980 = vmatpush2.bf16.msra.mxu0 0
    %1981 = vmatprep.subr.bf16.mxu0 0
    %1982 = vmatpush2.bf16.msra.mxu0 0
    %1983 = vmatprep.subr.bf16.mxu0 0
    %1984 = vmatpush2.bf16.msra.mxu0 0
    %1985 = vmatprep.subr.bf16.mxu0 0
    %1986 = vmatpush2.bf16.msra.mxu0 0
    %1987 = vmatprep.subr.bf16.mxu0 0
    %1988 = vmatpush2.bf16.msra.mxu0 0
    %1989 = vmatprep.subr.bf16.mxu0 0
    %1990 = vmatpush2.bf16.msra.mxu0 0
    %1991 = vmatprep.mubr.bf16.mxu0 0
    %1992 = vmatmul.mubr.bf16.gmra.mxu0 %v1957
    %v1993 = vpop.f32.mrf.mxu0
    %v1994 = vadd.f32 %v1951, %v1993
    %v1995 = vpop.f32.mrf.mxu0
    %v1996 = vpop.f32.mrf.mxu0
    %v1997 = vpop.f32.mrf.mxu0
    %1998 = vdwg.mxu0
    %v1999 = vadd.f32 %v1994, %v1564
    %v2000 = vmul.f32 %v1999, %v261
    %v2001 = vtanh.pop %v2000
    %v2002 = vmul.f32 %v2001, 0.5
    %v2003 = vadd.f32 %v2002, 0.5
    %v2004 = vmul.f32 %v2003, %v1585
    %2006 = vrot.lane.b32.xlu0 %v2001, 64
    %v2007 = vpop.permute.xlu0 %2006
    %v2009 = vmul.f32 %v2003, %v2007
    %2011 = vrot.lane.b32.xlu0 %v2009, 32
    %v2012 = vpop.permute.xlu0 %2011
    %v2014 = vadd.f32 %v2004, %v2012
    %v2015 = vtanh.pop %v2014
    %2017 = vrot.lane.b32.xlu0 %v2015, 64
    %v2018 = vpop.permute.xlu0 %2017
    %v2020 = vmul.f32 %v2003, %v2018
    %v2021 = vpack.c.bf16 %v2020, %v2020
    %2023 = vrot.lane.b32.xlu0 %v2021, 32
    %v2024 = vpop.permute.xlu0 %2023
    %v2026 = vsel %vm118, %v2024, 0
    %2028 = vmatprep.subr.bf16.mxu0 0
    %2029 = vmatpush1.bf16.xpose.msra.mxu0 0
    %2030 = vmatprep.subr.bf16.mxu0 0
    %2031 = vmatpush1.bf16.xpose.msra.mxu0 0
    %2032 = vmatprep.subr.bf16.mxu0 0
    %2033 = vmatpush1.bf16.xpose.msra.mxu0 0
    %2034 = vmatprep.subr.bf16.mxu0 0
    %2035 = vmatpush1.bf16.xpose.msra.mxu0 0
    %2036 = vmatprep.subr.bf16.mxu0 0
    %2037 = vmatpush1.bf16.xpose.msra.mxu0 0
    %2038 = vmatprep.subr.bf16.mxu0 0
    %2039 = vmatpush1.bf16.xpose.msra.mxu0 0
    %2040 = vmatprep.subr.bf16.mxu0 0
    %2041 = vmatpush1.bf16.xpose.msra.mxu0 0
    %2042 = vmatprep.subr.bf16.mxu0 0
    %2043 = vmatpush1.bf16.xpose.msra.mxu0 %v1603
    %2044 = vmatprep.subr.bf16.mxu0 0
    %2045 = vmatpush2.bf16.xpose.msra.mxu0 0
    %2046 = vmatprep.subr.bf16.mxu0 0
    %2047 = vmatpush2.bf16.xpose.msra.mxu0 0
    %2048 = vmatprep.subr.bf16.mxu0 0
    %2049 = vmatpush2.bf16.xpose.msra.mxu0 0
    %2050 = vmatprep.subr.bf16.mxu0 0
    %2051 = vmatpush2.bf16.xpose.msra.mxu0 0
    %2052 = vmatprep.subr.bf16.mxu0 0
    %2053 = vmatpush2.bf16.xpose.msra.mxu0 0
    %2054 = vmatprep.subr.bf16.mxu0 0
    %2055 = vmatpush2.bf16.xpose.msra.mxu0 0
    %2056 = vmatprep.subr.bf16.mxu0 0
    %2057 = vmatpush2.bf16.xpose.msra.mxu0 0
    %2058 = vmatprep.subr.bf16.mxu0 0
    %2059 = vmatpush2.bf16.xpose.msra.mxu0 0
    %2060 = vmatprep.mubr.bf16.mxu0 0
    %2061 = vmatmul.mubr.bf16.gmra.mxu0 %v2026
    %v2062 = vpop.f32.mrf.mxu0
    %v2063 = vadd.f32 %v1456, %v2062
    %v2064 = vpop.f32.mrf.mxu0
    %v2065 = vpop.f32.mrf.mxu0
    %v2066 = vpop.f32.mrf.mxu0
    %2067 = vdwg.mxu0
    %v2068 = vmul.f32 %v2063, 1.442695
    %v2069 = vpow.pop %v2068
    %v2070 = vsel %vm1647, %v2069, 0.0
    %2071 = vadd.xlane.f32.xlu0 %v2070
    %v2072 = vpop.xlane.xlu0 %2071
    %v2073 = vrcp.pop %v2072
    %v2074 = vmul.f32 %v2069, %v2073
    %v2075 = vpack.c.bf16 %v2074, %v2074
    %v2077 = vsel %vm276, %v2075, 0
    %2079 = vmatprep.subr.bf16.mxu0 0
    %2080 = vmatpush1.bf16.msra.mxu0 0
    %2081 = vmatprep.subr.bf16.mxu0 0
    %2082 = vmatpush1.bf16.msra.mxu0 0
    %2083 = vmatprep.subr.bf16.mxu0 0
    %2084 = vmatpush1.bf16.msra.mxu0 0
    %2085 = vmatprep.subr.bf16.mxu0 0
    %2086 = vmatpush1.bf16.msra.mxu0 0
    %2087 = vmatprep.subr.bf16.mxu0 0
    %2088 = vmatpush1.bf16.msra.mxu0 0
    %2089 = vmatprep.subr.bf16.mxu0 0
    %2090 = vmatpush1.bf16.msra.mxu0 0
    %2091 = vmatprep.subr.bf16.mxu0 0
    %2092 = vmatpush1.bf16.msra.mxu0 0
    %2093 = vmatprep.subr.bf16.mxu0 0
    %2094 = vmatpush1.bf16.msra.mxu0 %v1598
    %2095 = vmatprep.subr.bf16.mxu0 0
    %2096 = vmatpush2.bf16.msra.mxu0 0
    %2097 = vmatprep.subr.bf16.mxu0 0
    %2098 = vmatpush2.bf16.msra.mxu0 0
    %2099 = vmatprep.subr.bf16.mxu0 0
    %2100 = vmatpush2.bf16.msra.mxu0 0
    %2101 = vmatprep.subr.bf16.mxu0 0
    %2102 = vmatpush2.bf16.msra.mxu0 0
    %2103 = vmatprep.subr.bf16.mxu0 0
    %2104 = vmatpush2.bf16.msra.mxu0 0
    %2105 = vmatprep.subr.bf16.mxu0 0
    %2106 = vmatpush2.bf16.msra.mxu0 0
    %2107 = vmatprep.subr.bf16.mxu0 0
    %2108 = vmatpush2.bf16.msra.mxu0 0
    %2109 = vmatprep.subr.bf16.mxu0 0
    %2110 = vmatpush2.bf16.msra.mxu0 0
    %2111 = vmatprep.mubr.bf16.mxu0 0
    %2112 = vmatmul.mubr.bf16.gmra.mxu0 %v2077
    %v2113 = vpop.f32.mrf.mxu0
    %v2114 = vadd.f32 0.0, %v2113
    %v2115 = vpop.f32.mrf.mxu0
    %v2116 = vpop.f32.mrf.mxu0
    %v2117 = vpop.f32.mrf.mxu0
    %2118 = vdwg.mxu0
    %v2119 = vpack.c.bf16 %v2114, %v2114
    %2120 = vmatprep.subr.bf16.mxu0 0
    %2121 = vmatpush1.bf16.msra.mxu0 0
    %2122 = vmatprep.subr.bf16.mxu0 0
    %2123 = vmatpush1.bf16.msra.mxu0 0
    %2124 = vmatprep.subr.bf16.mxu0 0
    %2125 = vmatpush1.bf16.msra.mxu0 0
    %2126 = vmatprep.subr.bf16.mxu0 0
    %2127 = vmatpush1.bf16.msra.mxu0 0
    %2128 = vmatprep.subr.bf16.mxu0 0
    %2129 = vmatpush1.bf16.msra.mxu0 0
    %2130 = vmatprep.subr.bf16.mxu0 0
    %2131 = vmatpush1.bf16.msra.mxu0 0
    %2132 = vmatprep.subr.bf16.mxu0 0
    %2133 = vmatpush1.bf16.msra.mxu0 %v1708
    %2134 = vmatprep.subr.bf16.mxu0 0
    %2135 = vmatpush1.bf16.msra.mxu0 %v1707
    %2136 = vmatprep.subr.bf16.mxu0 0
    %2137 = vmatpush2.bf16.msra.mxu0 0
    %2138 = vmatprep.subr.bf16.mxu0 0
    %2139 = vmatpush2.bf16.msra.mxu0 0
    %2140 = vmatprep.subr.bf16.mxu0 0
    %2141 = vmatpush2.bf16.msra.mxu0 0
    %2142 = vmatprep.subr.bf16.mxu0 0
    %2143 = vmatpush2.bf16.msra.mxu0 0
    %2144 = vmatprep.subr.bf16.mxu0 0
    %2145 = vmatpush2.bf16.msra.mxu0 0
    %2146 = vmatprep.subr.bf16.mxu0 0
    %2147 = vmatpush2.bf16.msra.mxu0 0
    %2148 = vmatprep.subr.bf16.mxu0 0
    %2149 = vmatpush2.bf16.msra.mxu0 0
    %2150 = vmatprep.subr.bf16.mxu0 0
    %2151 = vmatpush2.bf16.msra.mxu0 0
    %2152 = vmatprep.mubr.bf16.mxu0 0
    %2153 = vmatmul.mubr.bf16.gmra.mxu0 %v2026
    %v2154 = vpop.f32.mrf.mxu0
    %v2155 = vadd.f32 0.0, %v2154
    %v2156 = vpop.f32.mrf.mxu0
    %v2157 = vpop.f32.mrf.mxu0
    %v2158 = vpop.f32.mrf.mxu0
    %2159 = vdwg.mxu0
    %v2161 = vsel %vm118, %v2119, 0
    %2163 = vmatprep.subr.bf16.mxu0 0
    %2164 = vmatpush1.bf16.msra.mxu0 0
    %2165 = vmatprep.subr.bf16.mxu0 0
    %2166 = vmatpush1.bf16.msra.mxu0 0
    %2167 = vmatprep.subr.bf16.mxu0 0
    %2168 = vmatpush1.bf16.msra.mxu0 0
    %2169 = vmatprep.subr.bf16.mxu0 0
    %2170 = vmatpush1.bf16.msra.mxu0 0
    %2171 = vmatprep.subr.bf16.mxu0 0
    %2172 = vmatpush1.bf16.msra.mxu0 0
    %2173 = vmatprep.subr.bf16.mxu0 0
    %2174 = vmatpush1.bf16.msra.mxu0 0
    %2175 = vmatprep.subr.bf16.mxu0 0
    %2176 = vmatpush1.bf16.msra.mxu0 %v1760
    %2177 = vmatprep.subr.bf16.mxu0 0
    %2178 = vmatpush1.bf16.msra.mxu0 %v1759
    %2179 = vmatprep.subr.bf16.mxu0 0
    %2180 = vmatpush2.bf16.msra.mxu0 0
    %2181 = vmatprep.subr.bf16.mxu0 0
    %2182 = vmatpush2.bf16.msra.mxu0 0
    %2183 = vmatprep.subr.bf16.mxu0 0
    %2184 = vmatpush2.bf16.msra.mxu0 0
    %2185 = vmatprep.subr.bf16.mxu0 0
    %2186 = vmatpush2.bf16.msra.mxu0 0
    %2187 = vmatprep.subr.bf16.mxu0 0
    %2188 = vmatpush2.bf16.msra.mxu0 0
    %2189 = vmatprep.subr.bf16.mxu0 0
    %2190 = vmatpush2.bf16.msra.mxu0 0
    %2191 = vmatprep.subr.bf16.mxu0 0
    %2192 = vmatpush2.bf16.msra.mxu0 0
    %2193 = vmatprep.subr.bf16.mxu0 0
    %2194 = vmatpush2.bf16.msra.mxu0 0
    %2195 = vmatprep.mubr.bf16.mxu0 0
    %2196 = vmatmul.mubr.bf16.gmra.mxu0 %v2161
    %v2197 = vpop.f32.mrf.mxu0
    %v2198 = vadd.f32 %v2155, %v2197
    %v2199 = vpop.f32.mrf.mxu0
    %v2200 = vpop.f32.mrf.mxu0
    %v2201 = vpop.f32.mrf.mxu0
    %2202 = vdwg.mxu0
    %v2203 = vadd.f32 %v2198, %v1810
    %v2204 = vtanh.pop %v2203
    %v2205 = vpack.c.bf16 %v2204, %v2204
    %v2207 = vsel %vm118, %v2205, 0
    %2209 = vmatprep.subr.bf16.mxu0 0
    %2210 = vmatpush1.bf16.msra.mxu0 0
    %2211 = vmatprep.subr.bf16.mxu0 0
    %2212 = vmatpush1.bf16.msra.mxu0 0
    %2213 = vmatprep.subr.bf16.mxu0 0
    %2214 = vmatpush1.bf16.msra.mxu0 0
    %2215 = vmatprep.subr.bf16.mxu0 0
    %2216 = vmatpush1.bf16.msra.mxu0 0
    %2217 = vmatprep.subr.bf16.mxu0 0
    %2218 = vmatpush1.bf16.msra.mxu0 0
    %2219 = vmatprep.subr.bf16.mxu0 0
    %2220 = vmatpush1.bf16.msra.mxu0 0
    %2221 = vmatprep.subr.bf16.mxu0 0
    %2222 = vmatpush1.bf16.msra.mxu0 %v1830
    %2223 = vmatprep.subr.bf16.mxu0 0
    %2224 = vmatpush1.bf16.msra.mxu0 %v1829
    %2225 = vmatprep.subr.bf16.mxu0 0
    %2226 = vmatpush2.bf16.msra.mxu0 0
    %2227 = vmatprep.subr.bf16.mxu0 0
    %2228 = vmatpush2.bf16.msra.mxu0 0
    %2229 = vmatprep.subr.bf16.mxu0 0
    %2230 = vmatpush2.bf16.msra.mxu0 0
    %2231 = vmatprep.subr.bf16.mxu0 0
    %2232 = vmatpush2.bf16.msra.mxu0 0
    %2233 = vmatprep.subr.bf16.mxu0 0
    %2234 = vmatpush2.bf16.msra.mxu0 0
    %2235 = vmatprep.subr.bf16.mxu0 0
    %2236 = vmatpush2.bf16.msra.mxu0 0
    %2237 = vmatprep.subr.bf16.mxu0 0
    %2238 = vmatpush2.bf16.msra.mxu0 0
    %2239 = vmatprep.subr.bf16.mxu0 0
    %2240 = vmatpush2.bf16.msra.mxu0 0
    %2241 = vmatprep.mubr.bf16.mxu0 0
    %2242 = vmatmul.mubr.bf16.gmra.mxu0 %v2207
    %v2243 = vpop.f32.mrf.mxu0
    %v2244 = vadd.f32 %v1819, %v2243
    %v2245 = vpop.f32.mrf.mxu0
    %v2246 = vpop.f32.mrf.mxu0
    %v2247 = vpop.f32.mrf.mxu0
    %2248 = vdwg.mxu0
    %vm2249 = vcmp.ge.s32.totalorder %v257, 5
    %vm2250 = vcmp.lt.s32.totalorder %v257, 10
    %vm2251 = vmand %vm2249, %vm2250
    %v2252 = vsel %vm2251, %v2244, -1e+30
    %v2253 = vsel %vm1647, %v2252, -inf
    %2254 = vmax.xlane.f32.xlu0 %v2253
    %v2255 = vpop.xlane.xlu0 %2254
    %vm2256 = vcmp.eq.f32.partialorder %v2252, %v2255
    %v2257 = vsel %vm2256, %v257, 16
    %v2258 = vsel %vm1647, %v2257, 2147483647
    %v2259 = vand.u32 %v2258, 65535
    %v2260 = vshra.s32 %v2258, 16
    %v2261 = vcvt.s32.f32 %v2259
    %v2262 = vcvt.s32.f32 %v2260
    %2263 = vmin.xlane.f32.xlu0 %v2262
    %v2264 = vpop.xlane.xlu0 %2263
    %vm2265 = vcmp.eq.f32.partialorder %v2262, %v2264
    %v2266 = vsel %vm2265, %v2261, inf
    %2267 = vmin.xlane.f32.xlu0 %v2266
    %v2268 = vpop.xlane.xlu0 %2267
    %v2269 = vcvt.f32.s32 %v2268
    %v2270 = vcvt.f32.s32 %v2264
    %v2271 = vshll.u32 %v2270, 16
    %v2272 = vadd.s32 %v2271, %v2269
    %v2273 = vsel %vm1647, %v2244, -inf
    %2274 = vmax.xlane.f32.xlu0 %v2273
    %v2275 = vpop.xlane.xlu0 %2274
    %v2276 = vsub.f32 %v2244, %v2275
    %v2277 = vmul.f32 %v2276, 1.442695
    %v2278 = vpow.pop %v2277
    %v2279 = vsel %vm1647, %v2278, 0.0
    %2280 = vadd.xlane.f32.xlu0 %v2279
    %v2281 = vpop.xlane.xlu0 %2280
    %v2282 = vlog2.pop %v2281
    %v2283 = vmul.f32 %v2282, 0.6931472
    %v2284 = vsub.f32 %v2276, %v2283
    %vm2285 = vcmp.eq.s32.totalorder %v257, %v2272
    %v2286 = vsel %vm2285, 1, 0
    %v2287 = vcvt.s32.f32 %v2286
    %v2288 = vpack.c.bf16 %v2287, %v2287
    %2289 = vmatprep.subr.bf16.mxu0 0
    %2290 = vmatpush1.bf16.msra.mxu0 0
    %2291 = vmatprep.subr.bf16.mxu0 0
    %2292 = vmatpush1.bf16.msra.mxu0 0
    %2293 = vmatprep.subr.bf16.mxu0 0
    %2294 = vmatpush1.bf16.msra.mxu0 0
    %2295 = vmatprep.subr.bf16.mxu0 0
    %2296 = vmatpush1.bf16.msra.mxu0 0
    %2297 = vmatprep.subr.bf16.mxu0 0
    %2298 = vmatpush1.bf16.msra.mxu0 0
    %2299 = vmatprep.subr.bf16.mxu0 0
    %2300 = vmatpush1.bf16.msra.mxu0 0
    %2301 = vmatprep.subr.bf16.mxu0 0
    %2302 = vmatpush1.bf16.msra.mxu0 %v1474
    %2303 = vmatprep.subr.bf16.mxu0 0
    %2304 = vmatpush1.bf16.msra.mxu0 %v1473
    %2305 = vmatprep.subr.bf16.mxu0 0
    %2306 = vmatpush2.bf16.msra.mxu0 0
    %2307 = vmatprep.subr.bf16.mxu0 0
    %2308 = vmatpush2.bf16.msra.mxu0 0
    %2309 = vmatprep.subr.bf16.mxu0 0
    %2310 = vmatpush2.bf16.msra.mxu0 0
    %2311 = vmatprep.subr.bf16.mxu0 0
    %2312 = vmatpush2.bf16.msra.mxu0 0
    %2313 = vmatprep.subr.bf16.mxu0 0
    %2314 = vmatpush2.bf16.msra.mxu0 0
    %2315 = vmatprep.subr.bf16.mxu0 0
    %2316 = vmatpush2.bf16.msra.mxu0 0
    %2317 = vmatprep.subr.bf16.mxu0 0
    %2318 = vmatpush2.bf16.msra.mxu0 0
    %2319 = vmatprep.subr.bf16.mxu0 0
    %2320 = vmatpush2.bf16.msra.mxu0 0
    %2321 = vmatprep.mubr.bf16.mxu0 0
    %2322 = vmatmul.mubr.bf16.gmra.mxu0 %v2026
    %v2323 = vpop.f32.mrf.mxu0
    %v2324 = vadd.f32 0.0, %v2323
    %v2325 = vpop.f32.mrf.mxu0
    %v2326 = vpop.f32.mrf.mxu0
    %v2327 = vpop.f32.mrf.mxu0
    %2328 = vdwg.mxu0
    %v2330 = vsel %vm276, %v2288, 0
    %2332 = vmatprep.subr.bf16.mxu0 0
    %2333 = vmatpush1.bf16.msra.mxu0 0
    %2334 = vmatprep.subr.bf16.mxu0 0
    %2335 = vmatpush1.bf16.msra.mxu0 0
    %2336 = vmatprep.subr.bf16.mxu0 0
    %2337 = vmatpush1.bf16.msra.mxu0 0
    %2338 = vmatprep.subr.bf16.mxu0 0
    %2339 = vmatpush1.bf16.msra.mxu0 0
    %2340 = vmatprep.subr.bf16.mxu0 0
    %2341 = vmatpush1.bf16.msra.mxu0 0
    %2342 = vmatprep.subr.bf16.mxu0 0
    %2343 = vmatpush1.bf16.msra.mxu0 0
    %2344 = vmatprep.subr.bf16.mxu0 0
    %2345 = vmatpush1.bf16.msra.mxu0 0
    %2346 = vmatprep.subr.bf16.mxu0 0
    %2347 = vmatpush1.bf16.msra.mxu0 %v231
    %2348 = vmatprep.subr.bf16.mxu0 0
    %2349 = vmatpush2.bf16.msra.mxu0 0
    %2350 = vmatprep.subr.bf16.mxu0 0
    %2351 = vmatpush2.bf16.msra.mxu0 0
    %2352 = vmatprep.subr.bf16.mxu0 0
    %2353 = vmatpush2.bf16.msra.mxu0 0
    %2354 = vmatprep.subr.bf16.mxu0 0
    %2355 = vmatpush2.bf16.msra.mxu0 0
    %2356 = vmatprep.subr.bf16.mxu0 0
    %2357 = vmatpush2.bf16.msra.mxu0 0
    %2358 = vmatprep.subr.bf16.mxu0 0
    %2359 = vmatpush2.bf16.msra.mxu0 0
    %2360 = vmatprep.subr.bf16.mxu0 0
    %2361 = vmatpush2.bf16.msra.mxu0 0
    %2362 = vmatprep.subr.bf16.mxu0 0
    %2363 = vmatpush2.bf16.msra.mxu0 0
    %2364 = vmatprep.mubr.bf16.mxu0 0
    %2365 = vmatmul.mubr.bf16.gmra.mxu0 %v2330
    %v2366 = vpop.f32.mrf.mxu0
    %v2367 = vadd.f32 %v2324, %v2366
    %v2368 = vpop.f32.mrf.mxu0
    %v2369 = vpop.f32.mrf.mxu0
    %v2370 = vpop.f32.mrf.mxu0
    %2371 = vdwg.mxu0
    %v2372 = vadd.f32 %v2367, %v1564
    %v2373 = vmul.f32 %v2372, %v261
    %v2374 = vtanh.pop %v2373
    %v2375 = vmul.f32 %v2374, 0.5
    %v2376 = vadd.f32 %v2375, 0.5
    %v2377 = vmul.f32 %v2376, %v2014
    %2379 = vrot.lane.b32.xlu0 %v2374, 64
    %v2380 = vpop.permute.xlu0 %2379
    %v2382 = vmul.f32 %v2376, %v2380
    %2384 = vrot.lane.b32.xlu0 %v2382, 32
    %v2385 = vpop.permute.xlu0 %2384
    %v2387 = vadd.f32 %v2377, %v2385
    %v2388 = vtanh.pop %v2387
    %2390 = vrot.lane.b32.xlu0 %v2388, 64
    %v2391 = vpop.permute.xlu0 %2390
    %v2393 = vmul.f32 %v2376, %v2391
    %v2394 = vpack.c.bf16 %v2393, %v2393
    %2396 = vrot.lane.b32.xlu0 %v2394, 32
    %v2397 = vpop.permute.xlu0 %2396
    %v2399 = vsel %vm118, %v2397, 0
    %2401 = vmatprep.subr.bf16.mxu0 0
    %2402 = vmatpush1.bf16.xpose.msra.mxu0 0
    %2403 = vmatprep.subr.bf16.mxu0 0
    %2404 = vmatpush1.bf16.xpose.msra.mxu0 0
    %2405 = vmatprep.subr.bf16.mxu0 0
    %2406 = vmatpush1.bf16.xpose.msra.mxu0 0
    %2407 = vmatprep.subr.bf16.mxu0 0
    %2408 = vmatpush1.bf16.xpose.msra.mxu0 0
    %2409 = vmatprep.subr.bf16.mxu0 0
    %2410 = vmatpush1.bf16.xpose.msra.mxu0 0
    %2411 = vmatprep.subr.bf16.mxu0 0
    %2412 = vmatpush1.bf16.xpose.msra.mxu0 0
    %2413 = vmatprep.subr.bf16.mxu0 0
    %2414 = vmatpush1.bf16.xpose.msra.mxu0 0
    %2415 = vmatprep.subr.bf16.mxu0 0
    %2416 = vmatpush1.bf16.xpose.msra.mxu0 %v1603
    %2417 = vmatprep.subr.bf16.mxu0 0
    %2418 = vmatpush2.bf16.xpose.msra.mxu0 0
    %2419 = vmatprep.subr.bf16.mxu0 0
    %2420 = vmatpush2.bf16.xpose.msra.mxu0 0
    %2421 = vmatprep.subr.bf16.mxu0 0
    %2422 = vmatpush2.bf16.xpose.msra.mxu0 0
    %2423 = vmatprep.subr.bf16.mxu0 0
    %2424 = vmatpush2.bf16.xpose.msra.mxu0 0
    %2425 = vmatprep.subr.bf16.mxu0 0
    %2426 = vmatpush2.bf16.xpose.msra.mxu0 0
    %2427 = vmatprep.subr.bf16.mxu0 0
    %2428 = vmatpush2.bf16.xpose.msra.mxu0 0
    %2429 = vmatprep.subr.bf16.mxu0 0
    %2430 = vmatpush2.bf16.xpose.msra.mxu0 0
    %2431 = vmatprep.subr.bf16.mxu0 0
    %2432 = vmatpush2.bf16.xpose.msra.mxu0 0
    %2433 = vmatprep.mubr.bf16.mxu0 0
    %2434 = vmatmul.mubr.bf16.gmra.mxu0 %v2399
    %v2435 = vpop.f32.mrf.mxu0
    %v2436 = vadd.f32 %v1456, %v2435
    %v2437 = vpop.f32.mrf.mxu0
    %v2438 = vpop.f32.mrf.mxu0
    %v2439 = vpop.f32.mrf.mxu0
    %2440 = vdwg.mxu0
    %v2441 = vmul.f32 %v2436, 1.442695
    %v2442 = vpow.pop %v2441
    %v2443 = vsel %vm1647, %v2442, 0.0
    %2444 = vadd.xlane.f32.xlu0 %v2443
    %v2445 = vpop.xlane.xlu0 %2444
    %v2446 = vrcp.pop %v2445
    %v2447 = vmul.f32 %v2442, %v2446
    %v2448 = vpack.c.bf16 %v2447, %v2447
    %v2450 = vsel %vm276, %v2448, 0
    %2452 = vmatprep.subr.bf16.mxu0 0
    %2453 = vmatpush1.bf16.msra.mxu0 0
    %2454 = vmatprep.subr.bf16.mxu0 0
    %2455 = vmatpush1.bf16.msra.mxu0 0
    %2456 = vmatprep.subr.bf16.mxu0 0
    %2457 = vmatpush1.bf16.msra.mxu0 0
    %2458 = vmatprep.subr.bf16.mxu0 0
    %2459 = vmatpush1.bf16.msra.mxu0 0
    %2460 = vmatprep.subr.bf16.mxu0 0
    %2461 = vmatpush1.bf16.msra.mxu0 0
    %2462 = vmatprep.subr.bf16.mxu0 0
    %2463 = vmatpush1.bf16.msra.mxu0 0
    %2464 = vmatprep.subr.bf16.mxu0 0
    %2465 = vmatpush1.bf16.msra.mxu0 0
    %2466 = vmatprep.subr.bf16.mxu0 0
    %2467 = vmatpush1.bf16.msra.mxu0 %v1598
    %2468 = vmatprep.subr.bf16.mxu0 0
    %2469 = vmatpush2.bf16.msra.mxu0 0
    %2470 = vmatprep.subr.bf16.mxu0 0
    %2471 = vmatpush2.bf16.msra.mxu0 0
    %2472 = vmatprep.subr.bf16.mxu0 0
    %2473 = vmatpush2.bf16.msra.mxu0 0
    %2474 = vmatprep.subr.bf16.mxu0 0
    %2475 = vmatpush2.bf16.msra.mxu0 0
    %2476 = vmatprep.subr.bf16.mxu0 0
    %2477 = vmatpush2.bf16.msra.mxu0 0
    %2478 = vmatprep.subr.bf16.mxu0 0
    %2479 = vmatpush2.bf16.msra.mxu0 0
    %2480 = vmatprep.subr.bf16.mxu0 0
    %2481 = vmatpush2.bf16.msra.mxu0 0
    %2482 = vmatprep.subr.bf16.mxu0 0
    %2483 = vmatpush2.bf16.msra.mxu0 0
    %2484 = vmatprep.mubr.bf16.mxu0 0
    %2485 = vmatmul.mubr.bf16.gmra.mxu0 %v2450
    %v2486 = vpop.f32.mrf.mxu0
    %v2487 = vadd.f32 0.0, %v2486
    %v2488 = vpop.f32.mrf.mxu0
    %v2489 = vpop.f32.mrf.mxu0
    %v2490 = vpop.f32.mrf.mxu0
    %2491 = vdwg.mxu0
    %v2492 = vpack.c.bf16 %v2487, %v2487
    %2493 = vmatprep.subr.bf16.mxu0 0
    %2494 = vmatpush1.bf16.msra.mxu0 0
    %2495 = vmatprep.subr.bf16.mxu0 0
    %2496 = vmatpush1.bf16.msra.mxu0 0
    %2497 = vmatprep.subr.bf16.mxu0 0
    %2498 = vmatpush1.bf16.msra.mxu0 0
    %2499 = vmatprep.subr.bf16.mxu0 0
    %2500 = vmatpush1.bf16.msra.mxu0 0
    %2501 = vmatprep.subr.bf16.mxu0 0
    %2502 = vmatpush1.bf16.msra.mxu0 0
    %2503 = vmatprep.subr.bf16.mxu0 0
    %2504 = vmatpush1.bf16.msra.mxu0 0
    %2505 = vmatprep.subr.bf16.mxu0 0
    %2506 = vmatpush1.bf16.msra.mxu0 %v1708
    %2507 = vmatprep.subr.bf16.mxu0 0
    %2508 = vmatpush1.bf16.msra.mxu0 %v1707
    %2509 = vmatprep.subr.bf16.mxu0 0
    %2510 = vmatpush2.bf16.msra.mxu0 0
    %2511 = vmatprep.subr.bf16.mxu0 0
    %2512 = vmatpush2.bf16.msra.mxu0 0
    %2513 = vmatprep.subr.bf16.mxu0 0
    %2514 = vmatpush2.bf16.msra.mxu0 0
    %2515 = vmatprep.subr.bf16.mxu0 0
    %2516 = vmatpush2.bf16.msra.mxu0 0
    %2517 = vmatprep.subr.bf16.mxu0 0
    %2518 = vmatpush2.bf16.msra.mxu0 0
    %2519 = vmatprep.subr.bf16.mxu0 0
    %2520 = vmatpush2.bf16.msra.mxu0 0
    %2521 = vmatprep.subr.bf16.mxu0 0
    %2522 = vmatpush2.bf16.msra.mxu0 0
    %2523 = vmatprep.subr.bf16.mxu0 0
    %2524 = vmatpush2.bf16.msra.mxu0 0
    %2525 = vmatprep.mubr.bf16.mxu0 0
    %2526 = vmatmul.mubr.bf16.gmra.mxu0 %v2399
    %v2527 = vpop.f32.mrf.mxu0
    %v2528 = vadd.f32 0.0, %v2527
    %v2529 = vpop.f32.mrf.mxu0
    %v2530 = vpop.f32.mrf.mxu0
    %v2531 = vpop.f32.mrf.mxu0
    %2532 = vdwg.mxu0
    %v2534 = vsel %vm118, %v2492, 0
    %2536 = vmatprep.subr.bf16.mxu0 0
    %2537 = vmatpush1.bf16.msra.mxu0 0
    %2538 = vmatprep.subr.bf16.mxu0 0
    %2539 = vmatpush1.bf16.msra.mxu0 0
    %2540 = vmatprep.subr.bf16.mxu0 0
    %2541 = vmatpush1.bf16.msra.mxu0 0
    %2542 = vmatprep.subr.bf16.mxu0 0
    %2543 = vmatpush1.bf16.msra.mxu0 0
    %2544 = vmatprep.subr.bf16.mxu0 0
    %2545 = vmatpush1.bf16.msra.mxu0 0
    %2546 = vmatprep.subr.bf16.mxu0 0
    %2547 = vmatpush1.bf16.msra.mxu0 0
    %2548 = vmatprep.subr.bf16.mxu0 0
    %2549 = vmatpush1.bf16.msra.mxu0 %v1760
    %2550 = vmatprep.subr.bf16.mxu0 0
    %2551 = vmatpush1.bf16.msra.mxu0 %v1759
    %2552 = vmatprep.subr.bf16.mxu0 0
    %2553 = vmatpush2.bf16.msra.mxu0 0
    %2554 = vmatprep.subr.bf16.mxu0 0
    %2555 = vmatpush2.bf16.msra.mxu0 0
    %2556 = vmatprep.subr.bf16.mxu0 0
    %2557 = vmatpush2.bf16.msra.mxu0 0
    %2558 = vmatprep.subr.bf16.mxu0 0
    %2559 = vmatpush2.bf16.msra.mxu0 0
    %2560 = vmatprep.subr.bf16.mxu0 0
    %2561 = vmatpush2.bf16.msra.mxu0 0
    %2562 = vmatprep.subr.bf16.mxu0 0
    %2563 = vmatpush2.bf16.msra.mxu0 0
    %2564 = vmatprep.subr.bf16.mxu0 0
    %2565 = vmatpush2.bf16.msra.mxu0 0
    %2566 = vmatprep.subr.bf16.mxu0 0
    %2567 = vmatpush2.bf16.msra.mxu0 0
    %2568 = vmatprep.mubr.bf16.mxu0 0
    %2569 = vmatmul.mubr.bf16.gmra.mxu0 %v2534
    %v2570 = vpop.f32.mrf.mxu0
    %v2571 = vadd.f32 %v2528, %v2570
    %v2572 = vpop.f32.mrf.mxu0
    %v2573 = vpop.f32.mrf.mxu0
    %v2574 = vpop.f32.mrf.mxu0
    %2575 = vdwg.mxu0
    %v2576 = vadd.f32 %v2571, %v1810
    %v2577 = vtanh.pop %v2576
    %v2578 = vpack.c.bf16 %v2577, %v2577
    %v2580 = vsel %vm118, %v2578, 0
    %2582 = vmatprep.subr.bf16.mxu0 0
    %2583 = vmatpush1.bf16.msra.mxu0 0
    %2584 = vmatprep.subr.bf16.mxu0 0
    %2585 = vmatpush1.bf16.msra.mxu0 0
    %2586 = vmatprep.subr.bf16.mxu0 0
    %2587 = vmatpush1.bf16.msra.mxu0 0
    %2588 = vmatprep.subr.bf16.mxu0 0
    %2589 = vmatpush1.bf16.msra.mxu0 0
    %2590 = vmatprep.subr.bf16.mxu0 0
    %2591 = vmatpush1.bf16.msra.mxu0 0
    %2592 = vmatprep.subr.bf16.mxu0 0
    %2593 = vmatpush1.bf16.msra.mxu0 0
    %2594 = vmatprep.subr.bf16.mxu0 0
    %2595 = vmatpush1.bf16.msra.mxu0 %v1830
    %2596 = vmatprep.subr.bf16.mxu0 0
    %2597 = vmatpush1.bf16.msra.mxu0 %v1829
    %2598 = vmatprep.subr.bf16.mxu0 0
    %2599 = vmatpush2.bf16.msra.mxu0 0
    %2600 = vmatprep.subr.bf16.mxu0 0
    %2601 = vmatpush2.bf16.msra.mxu0 0
    %2602 = vmatprep.subr.bf16.mxu0 0
    %2603 = vmatpush2.bf16.msra.mxu0 0
    %2604 = vmatprep.subr.bf16.mxu0 0
    %2605 = vmatpush2.bf16.msra.mxu0 0
    %2606 = vmatprep.subr.bf16.mxu0 0
    %2607 = vmatpush2.bf16.msra.mxu0 0
    %2608 = vmatprep.subr.bf16.mxu0 0
    %2609 = vmatpush2.bf16.msra.mxu0 0
    %2610 = vmatprep.subr.bf16.mxu0 0
    %2611 = vmatpush2.bf16.msra.mxu0 0
    %2612 = vmatprep.subr.bf16.mxu0 0
    %2613 = vmatpush2.bf16.msra.mxu0 0
    %2614 = vmatprep.mubr.bf16.mxu0 0
    %2615 = vmatmul.mubr.bf16.gmra.mxu0 %v2580
    %v2616 = vpop.f32.mrf.mxu0
    %v2617 = vadd.f32 %v1819, %v2616
    %v2618 = vpop.f32.mrf.mxu0
    %v2619 = vpop.f32.mrf.mxu0
    %v2620 = vpop.f32.mrf.mxu0
    %2621 = vdwg.mxu0
    %v2622 = vsel %vm1878, %v2617, -1e+30
    %v2623 = vsel %vm1647, %v2622, -inf
    %2624 = vmax.xlane.f32.xlu0 %v2623
    %v2625 = vpop.xlane.xlu0 %2624
    %vm2626 = vcmp.eq.f32.partialorder %v2622, %v2625
    %v2627 = vsel %vm2626, %v257, 16
    %v2628 = vsel %vm1647, %v2627, 2147483647
    %v2629 = vand.u32 %v2628, 65535
    %v2630 = vshra.s32 %v2628, 16
    %v2631 = vcvt.s32.f32 %v2629
    %v2632 = vcvt.s32.f32 %v2630
    %2633 = vmin.xlane.f32.xlu0 %v2632
    %v2634 = vpop.xlane.xlu0 %2633
    %vm2635 = vcmp.eq.f32.partialorder %v2632, %v2634
    %v2636 = vsel %vm2635, %v2631, inf
    %2637 = vmin.xlane.f32.xlu0 %v2636
    %v2638 = vpop.xlane.xlu0 %2637
    %v2639 = vcvt.f32.s32 %v2638
    %v2640 = vcvt.f32.s32 %v2634
    %v2641 = vshll.u32 %v2640, 16
    %v2642 = vadd.s32 %v2641, %v2639
    %v2643 = vsel %vm1647, %v2617, -inf
    %2644 = vmax.xlane.f32.xlu0 %v2643
    %v2645 = vpop.xlane.xlu0 %2644
    %v2646 = vsub.f32 %v2617, %v2645
    %v2647 = vmul.f32 %v2646, 1.442695
    %v2648 = vpow.pop %v2647
    %v2649 = vsel %vm1647, %v2648, 0.0
    %2650 = vadd.xlane.f32.xlu0 %v2649
    %v2651 = vpop.xlane.xlu0 %2650
    %v2652 = vlog2.pop %v2651
    %v2653 = vmul.f32 %v2652, 0.6931472
    %v2654 = vsub.f32 %v2646, %v2653
    %vm2655 = vcmp.eq.s32.totalorder %v257, %v2642
    %v2656 = vsel %vm2655, 1, 0
    %v2657 = vcvt.s32.f32 %v2656
    %v2658 = vpack.c.bf16 %v2657, %v2657
    %2659 = vmatprep.subr.bf16.mxu0 0
    %2660 = vmatpush1.bf16.msra.mxu0 0
    %2661 = vmatprep.subr.bf16.mxu0 0
    %2662 = vmatpush1.bf16.msra.mxu0 0
    %2663 = vmatprep.subr.bf16.mxu0 0
    %2664 = vmatpush1.bf16.msra.mxu0 0
    %2665 = vmatprep.subr.bf16.mxu0 0
    %2666 = vmatpush1.bf16.msra.mxu0 0
    %2667 = vmatprep.subr.bf16.mxu0 0
    %2668 = vmatpush1.bf16.msra.mxu0 0
    %2669 = vmatprep.subr.bf16.mxu0 0
    %2670 = vmatpush1.bf16.msra.mxu0 0
    %2671 = vmatprep.subr.bf16.mxu0 0
    %2672 = vmatpush1.bf16.msra.mxu0 %v1474
    %2673 = vmatprep.subr.bf16.mxu0 0
    %2674 = vmatpush1.bf16.msra.mxu0 %v1473
    %2675 = vmatprep.subr.bf16.mxu0 0
    %2676 = vmatpush2.bf16.msra.mxu0 0
    %2677 = vmatprep.subr.bf16.mxu0 0
    %2678 = vmatpush2.bf16.msra.mxu0 0
    %2679 = vmatprep.subr.bf16.mxu0 0
    %2680 = vmatpush2.bf16.msra.mxu0 0
    %2681 = vmatprep.subr.bf16.mxu0 0
    %2682 = vmatpush2.bf16.msra.mxu0 0
    %2683 = vmatprep.subr.bf16.mxu0 0
    %2684 = vmatpush2.bf16.msra.mxu0 0
    %2685 = vmatprep.subr.bf16.mxu0 0
    %2686 = vmatpush2.bf16.msra.mxu0 0
    %2687 = vmatprep.subr.bf16.mxu0 0
    %2688 = vmatpush2.bf16.msra.mxu0 0
    %2689 = vmatprep.subr.bf16.mxu0 0
    %2690 = vmatpush2.bf16.msra.mxu0 0
    %2691 = vmatprep.mubr.bf16.mxu0 0
    %2692 = vmatmul.mubr.bf16.gmra.mxu0 %v2399
    %v2693 = vpop.f32.mrf.mxu0
    %v2694 = vadd.f32 0.0, %v2693
    %v2695 = vpop.f32.mrf.mxu0
    %v2696 = vpop.f32.mrf.mxu0
    %v2697 = vpop.f32.mrf.mxu0
    %2698 = vdwg.mxu0
    %v2700 = vsel %vm276, %v2658, 0
    %2702 = vmatprep.subr.bf16.mxu0 0
    %2703 = vmatpush1.bf16.msra.mxu0 0
    %2704 = vmatprep.subr.bf16.mxu0 0
    %2705 = vmatpush1.bf16.msra.mxu0 0
    %2706 = vmatprep.subr.bf16.mxu0 0
    %2707 = vmatpush1.bf16.msra.mxu0 0
    %2708 = vmatprep.subr.bf16.mxu0 0
    %2709 = vmatpush1.bf16.msra.mxu0 0
    %2710 = vmatprep.subr.bf16.mxu0 0
    %2711 = vmatpush1.bf16.msra.mxu0 0
    %2712 = vmatprep.subr.bf16.mxu0 0
    %2713 = vmatpush1.bf16.msra.mxu0 0
    %2714 = vmatprep.subr.bf16.mxu0 0
    %2715 = vmatpush1.bf16.msra.mxu0 0
    %2716 = vmatprep.subr.bf16.mxu0 0
    %2717 = vmatpush1.bf16.msra.mxu0 %v231
    %2718 = vmatprep.subr.bf16.mxu0 0
    %2719 = vmatpush2.bf16.msra.mxu0 0
    %2720 = vmatprep.subr.bf16.mxu0 0
    %2721 = vmatpush2.bf16.msra.mxu0 0
    %2722 = vmatprep.subr.bf16.mxu0 0
    %2723 = vmatpush2.bf16.msra.mxu0 0
    %2724 = vmatprep.subr.bf16.mxu0 0
    %2725 = vmatpush2.bf16.msra.mxu0 0
    %2726 = vmatprep.subr.bf16.mxu0 0
    %2727 = vmatpush2.bf16.msra.mxu0 0
    %2728 = vmatprep.subr.bf16.mxu0 0
    %2729 = vmatpush2.bf16.msra.mxu0 0
    %2730 = vmatprep.subr.bf16.mxu0 0
    %2731 = vmatpush2.bf16.msra.mxu0 0
    %2732 = vmatprep.subr.bf16.mxu0 0
    %2733 = vmatpush2.bf16.msra.mxu0 0
    %2734 = vmatprep.mubr.bf16.mxu0 0
    %2735 = vmatmul.mubr.bf16.gmra.mxu0 %v2700
    %v2736 = vpop.f32.mrf.mxu0
    %v2737 = vadd.f32 %v2694, %v2736
    %v2738 = vpop.f32.mrf.mxu0
    %v2739 = vpop.f32.mrf.mxu0
    %v2740 = vpop.f32.mrf.mxu0
    %2741 = vdwg.mxu0
    %v2742 = vadd.f32 %v2737, %v1564
    %v2743 = vmul.f32 %v2742, %v261
    %v2744 = vtanh.pop %v2743
    %v2745 = vmul.f32 %v2744, 0.5
    %v2746 = vadd.f32 %v2745, 0.5
    %v2747 = vmul.f32 %v2746, %v2387
    %2749 = vrot.lane.b32.xlu0 %v2744, 64
    %v2750 = vpop.permute.xlu0 %2749
    %v2752 = vmul.f32 %v2746, %v2750
    %2754 = vrot.lane.b32.xlu0 %v2752, 32
    %v2755 = vpop.permute.xlu0 %2754
    %v2757 = vadd.f32 %v2747, %v2755
    %v2758 = vtanh.pop %v2757
    %2760 = vrot.lane.b32.xlu0 %v2758, 64
    %v2761 = vpop.permute.xlu0 %2760
    %v2763 = vmul.f32 %v2746, %v2761
    %v2764 = vpack.c.bf16 %v2763, %v2763
    %2766 = vrot.lane.b32.xlu0 %v2764, 32
    %v2767 = vpop.permute.xlu0 %2766
    %v2769 = vsel %vm118, %v2767, 0
    %2771 = vmatprep.subr.bf16.mxu0 0
    %2772 = vmatpush1.bf16.xpose.msra.mxu0 0
    %2773 = vmatprep.subr.bf16.mxu0 0
    %2774 = vmatpush1.bf16.xpose.msra.mxu0 0
    %2775 = vmatprep.subr.bf16.mxu0 0
    %2776 = vmatpush1.bf16.xpose.msra.mxu0 0
    %2777 = vmatprep.subr.bf16.mxu0 0
    %2778 = vmatpush1.bf16.xpose.msra.mxu0 0
    %2779 = vmatprep.subr.bf16.mxu0 0
    %2780 = vmatpush1.bf16.xpose.msra.mxu0 0
    %2781 = vmatprep.subr.bf16.mxu0 0
    %2782 = vmatpush1.bf16.xpose.msra.mxu0 0
    %2783 = vmatprep.subr.bf16.mxu0 0
    %2784 = vmatpush1.bf16.xpose.msra.mxu0 0
    %2785 = vmatprep.subr.bf16.mxu0 0
    %2786 = vmatpush1.bf16.xpose.msra.mxu0 %v1603
    %2787 = vmatprep.subr.bf16.mxu0 0
    %2788 = vmatpush2.bf16.xpose.msra.mxu0 0
    %2789 = vmatprep.subr.bf16.mxu0 0
    %2790 = vmatpush2.bf16.xpose.msra.mxu0 0
    %2791 = vmatprep.subr.bf16.mxu0 0
    %2792 = vmatpush2.bf16.xpose.msra.mxu0 0
    %2793 = vmatprep.subr.bf16.mxu0 0
    %2794 = vmatpush2.bf16.xpose.msra.mxu0 0
    %2795 = vmatprep.subr.bf16.mxu0 0
    %2796 = vmatpush2.bf16.xpose.msra.mxu0 0
    %2797 = vmatprep.subr.bf16.mxu0 0
    %2798 = vmatpush2.bf16.xpose.msra.mxu0 0
    %2799 = vmatprep.subr.bf16.mxu0 0
    %2800 = vmatpush2.bf16.xpose.msra.mxu0 0
    %2801 = vmatprep.subr.bf16.mxu0 0
    %2802 = vmatpush2.bf16.xpose.msra.mxu0 0
    %2803 = vmatprep.mubr.bf16.mxu0 0
    %2804 = vmatmul.mubr.bf16.gmra.mxu0 %v2769
    %v2805 = vpop.f32.mrf.mxu0
    %v2806 = vadd.f32 %v1456, %v2805
    %v2807 = vpop.f32.mrf.mxu0
    %v2808 = vpop.f32.mrf.mxu0
    %v2809 = vpop.f32.mrf.mxu0
    %2810 = vdwg.mxu0
    %v2811 = vmul.f32 %v2806, 1.442695
    %v2812 = vpow.pop %v2811
    %v2813 = vsel %vm1647, %v2812, 0.0
    %2814 = vadd.xlane.f32.xlu0 %v2813
    %v2815 = vpop.xlane.xlu0 %2814
    %v2816 = vrcp.pop %v2815
    %v2817 = vmul.f32 %v2812, %v2816
    %v2818 = vpack.c.bf16 %v2817, %v2817
    %v2820 = vsel %vm276, %v2818, 0
    %2822 = vmatprep.subr.bf16.mxu0 0
    %2823 = vmatpush1.bf16.msra.mxu0 0
    %2824 = vmatprep.subr.bf16.mxu0 0
    %2825 = vmatpush1.bf16.msra.mxu0 0
    %2826 = vmatprep.subr.bf16.mxu0 0
    %2827 = vmatpush1.bf16.msra.mxu0 0
    %2828 = vmatprep.subr.bf16.mxu0 0
    %2829 = vmatpush1.bf16.msra.mxu0 0
    %2830 = vmatprep.subr.bf16.mxu0 0
    %2831 = vmatpush1.bf16.msra.mxu0 0
    %2832 = vmatprep.subr.bf16.mxu0 0
    %2833 = vmatpush1.bf16.msra.mxu0 0
    %2834 = vmatprep.subr.bf16.mxu0 0
    %2835 = vmatpush1.bf16.msra.mxu0 0
    %2836 = vmatprep.subr.bf16.mxu0 0
    %2837 = vmatpush1.bf16.msra.mxu0 %v1598
    %2838 = vmatprep.subr.bf16.mxu0 0
    %2839 = vmatpush2.bf16.msra.mxu0 0
    %2840 = vmatprep.subr.bf16.mxu0 0
    %2841 = vmatpush2.bf16.msra.mxu0 0
    %2842 = vmatprep.subr.bf16.mxu0 0
    %2843 = vmatpush2.bf16.msra.mxu0 0
    %2844 = vmatprep.subr.bf16.mxu0 0
    %2845 = vmatpush2.bf16.msra.mxu0 0
    %2846 = vmatprep.subr.bf16.mxu0 0
    %2847 = vmatpush2.bf16.msra.mxu0 0
    %2848 = vmatprep.subr.bf16.mxu0 0
    %2849 = vmatpush2.bf16.msra.mxu0 0
    %2850 = vmatprep.subr.bf16.mxu0 0
    %2851 = vmatpush2.bf16.msra.mxu0 0
    %2852 = vmatprep.subr.bf16.mxu0 0
    %2853 = vmatpush2.bf16.msra.mxu0 0
    %2854 = vmatprep.mubr.bf16.mxu0 0
    %2855 = vmatmul.mubr.bf16.gmra.mxu0 %v2820
    %v2856 = vpop.f32.mrf.mxu0
    %v2857 = vadd.f32 0.0, %v2856
    %v2858 = vpop.f32.mrf.mxu0
    %v2859 = vpop.f32.mrf.mxu0
    %v2860 = vpop.f32.mrf.mxu0
    %2861 = vdwg.mxu0
    %v2862 = vpack.c.bf16 %v2857, %v2857
    %2863 = vmatprep.subr.bf16.mxu0 0
    %2864 = vmatpush1.bf16.msra.mxu0 0
    %2865 = vmatprep.subr.bf16.mxu0 0
    %2866 = vmatpush1.bf16.msra.mxu0 0
    %2867 = vmatprep.subr.bf16.mxu0 0
    %2868 = vmatpush1.bf16.msra.mxu0 0
    %2869 = vmatprep.subr.bf16.mxu0 0
    %2870 = vmatpush1.bf16.msra.mxu0 0
    %2871 = vmatprep.subr.bf16.mxu0 0
    %2872 = vmatpush1.bf16.msra.mxu0 0
    %2873 = vmatprep.subr.bf16.mxu0 0
    %2874 = vmatpush1.bf16.msra.mxu0 0
    %2875 = vmatprep.subr.bf16.mxu0 0
    %2876 = vmatpush1.bf16.msra.mxu0 %v1708
    %2877 = vmatprep.subr.bf16.mxu0 0
    %2878 = vmatpush1.bf16.msra.mxu0 %v1707
    %2879 = vmatprep.subr.bf16.mxu0 0
    %2880 = vmatpush2.bf16.msra.mxu0 0
    %2881 = vmatprep.subr.bf16.mxu0 0
    %2882 = vmatpush2.bf16.msra.mxu0 0
    %2883 = vmatprep.subr.bf16.mxu0 0
    %2884 = vmatpush2.bf16.msra.mxu0 0
    %2885 = vmatprep.subr.bf16.mxu0 0
    %2886 = vmatpush2.bf16.msra.mxu0 0
    %2887 = vmatprep.subr.bf16.mxu0 0
    %2888 = vmatpush2.bf16.msra.mxu0 0
    %2889 = vmatprep.subr.bf16.mxu0 0
    %2890 = vmatpush2.bf16.msra.mxu0 0
    %2891 = vmatprep.subr.bf16.mxu0 0
    %2892 = vmatpush2.bf16.msra.mxu0 0
    %2893 = vmatprep.subr.bf16.mxu0 0
    %2894 = vmatpush2.bf16.msra.mxu0 0
    %2895 = vmatprep.mubr.bf16.mxu0 0
    %2896 = vmatmul.mubr.bf16.gmra.mxu0 %v2769
    %v2897 = vpop.f32.mrf.mxu0
    %v2898 = vadd.f32 0.0, %v2897
    %v2899 = vpop.f32.mrf.mxu0
    %v2900 = vpop.f32.mrf.mxu0
    %v2901 = vpop.f32.mrf.mxu0
    %2902 = vdwg.mxu0
    %v2904 = vsel %vm118, %v2862, 0
    %2906 = vmatprep.subr.bf16.mxu0 0
    %2907 = vmatpush1.bf16.msra.mxu0 0
    %2908 = vmatprep.subr.bf16.mxu0 0
    %2909 = vmatpush1.bf16.msra.mxu0 0
    %2910 = vmatprep.subr.bf16.mxu0 0
    %2911 = vmatpush1.bf16.msra.mxu0 0
    %2912 = vmatprep.subr.bf16.mxu0 0
    %2913 = vmatpush1.bf16.msra.mxu0 0
    %2914 = vmatprep.subr.bf16.mxu0 0
    %2915 = vmatpush1.bf16.msra.mxu0 0
    %2916 = vmatprep.subr.bf16.mxu0 0
    %2917 = vmatpush1.bf16.msra.mxu0 0
    %2918 = vmatprep.subr.bf16.mxu0 0
    %2919 = vmatpush1.bf16.msra.mxu0 %v1760
    %2920 = vmatprep.subr.bf16.mxu0 0
    %2921 = vmatpush1.bf16.msra.mxu0 %v1759
    %2922 = vmatprep.subr.bf16.mxu0 0
    %2923 = vmatpush2.bf16.msra.mxu0 0
    %2924 = vmatprep.subr.bf16.mxu0 0
    %2925 = vmatpush2.bf16.msra.mxu0 0
    %2926 = vmatprep.subr.bf16.mxu0 0
    %2927 = vmatpush2.bf16.msra.mxu0 0
    %2928 = vmatprep.subr.bf16.mxu0 0
    %2929 = vmatpush2.bf16.msra.mxu0 0
    %2930 = vmatprep.subr.bf16.mxu0 0
    %2931 = vmatpush2.bf16.msra.mxu0 0
    %2932 = vmatprep.subr.bf16.mxu0 0
    %2933 = vmatpush2.bf16.msra.mxu0 0
    %2934 = vmatprep.subr.bf16.mxu0 0
    %2935 = vmatpush2.bf16.msra.mxu0 0
    %2936 = vmatprep.subr.bf16.mxu0 0
    %2937 = vmatpush2.bf16.msra.mxu0 0
    %2938 = vmatprep.mubr.bf16.mxu0 0
    %2939 = vmatmul.mubr.bf16.gmra.mxu0 %v2904
    %v2940 = vpop.f32.mrf.mxu0
    %v2941 = vadd.f32 %v2898, %v2940
    %v2942 = vpop.f32.mrf.mxu0
    %v2943 = vpop.f32.mrf.mxu0
    %v2944 = vpop.f32.mrf.mxu0
    %2945 = vdwg.mxu0
    %v2946 = vadd.f32 %v2941, %v1810
    %v2947 = vtanh.pop %v2946
    %v2948 = vpack.c.bf16 %v2947, %v2947
    %v2950 = vsel %vm118, %v2948, 0
    %2952 = vmatprep.subr.bf16.mxu0 0
    %2953 = vmatpush1.bf16.msra.mxu0 0
    %2954 = vmatprep.subr.bf16.mxu0 0
    %2955 = vmatpush1.bf16.msra.mxu0 0
    %2956 = vmatprep.subr.bf16.mxu0 0
    %2957 = vmatpush1.bf16.msra.mxu0 0
    %2958 = vmatprep.subr.bf16.mxu0 0
    %2959 = vmatpush1.bf16.msra.mxu0 0
    %2960 = vmatprep.subr.bf16.mxu0 0
    %2961 = vmatpush1.bf16.msra.mxu0 0
    %2962 = vmatprep.subr.bf16.mxu0 0
    %2963 = vmatpush1.bf16.msra.mxu0 0
    %2964 = vmatprep.subr.bf16.mxu0 0
    %2965 = vmatpush1.bf16.msra.mxu0 %v1830
    %2966 = vmatprep.subr.bf16.mxu0 0
    %2967 = vmatpush1.bf16.msra.mxu0 %v1829
    %2968 = vmatprep.subr.bf16.mxu0 0
    %2969 = vmatpush2.bf16.msra.mxu0 0
    %2970 = vmatprep.subr.bf16.mxu0 0
    %2971 = vmatpush2.bf16.msra.mxu0 0
    %2972 = vmatprep.subr.bf16.mxu0 0
    %2973 = vmatpush2.bf16.msra.mxu0 0
    %2974 = vmatprep.subr.bf16.mxu0 0
    %2975 = vmatpush2.bf16.msra.mxu0 0
    %2976 = vmatprep.subr.bf16.mxu0 0
    %2977 = vmatpush2.bf16.msra.mxu0 0
    %2978 = vmatprep.subr.bf16.mxu0 0
    %2979 = vmatpush2.bf16.msra.mxu0 0
    %2980 = vmatprep.subr.bf16.mxu0 0
    %2981 = vmatpush2.bf16.msra.mxu0 0
    %2982 = vmatprep.subr.bf16.mxu0 0
    %2983 = vmatpush2.bf16.msra.mxu0 0
    %2984 = vmatprep.mubr.bf16.mxu0 0
    %2985 = vmatmul.mubr.bf16.gmra.mxu0 %v2950
    %v2986 = vpop.f32.mrf.mxu0
    %v2987 = vadd.f32 %v1819, %v2986
    %v2988 = vpop.f32.mrf.mxu0
    %v2989 = vpop.f32.mrf.mxu0
    %v2990 = vpop.f32.mrf.mxu0
    %2991 = vdwg.mxu0
    %v2992 = vsel %vm2251, %v2987, -1e+30
    %v2993 = vsel %vm1647, %v2992, -inf
    %2994 = vmax.xlane.f32.xlu0 %v2993
    %v2995 = vpop.xlane.xlu0 %2994
    %vm2996 = vcmp.eq.f32.partialorder %v2992, %v2995
    %v2997 = vsel %vm2996, %v257, 16
    %v2998 = vsel %vm1647, %v2997, 2147483647
    %v2999 = vand.u32 %v2998, 65535
    %v3000 = vshra.s32 %v2998, 16
    %v3001 = vcvt.s32.f32 %v2999
    %v3002 = vcvt.s32.f32 %v3000
    %3003 = vmin.xlane.f32.xlu0 %v3002
    %v3004 = vpop.xlane.xlu0 %3003
    %vm3005 = vcmp.eq.f32.partialorder %v3002, %v3004
    %v3006 = vsel %vm3005, %v3001, inf
    %3007 = vmin.xlane.f32.xlu0 %v3006
    %v3008 = vpop.xlane.xlu0 %3007
    %v3009 = vcvt.f32.s32 %v3008
    %v3010 = vcvt.f32.s32 %v3004
    %v3011 = vshll.u32 %v3010, 16
    %v3012 = vadd.s32 %v3011, %v3009
    %v3013 = vsel %vm1647, %v2987, -inf
    %3014 = vmax.xlane.f32.xlu0 %v3013
    %v3015 = vpop.xlane.xlu0 %3014
    %v3016 = vsub.f32 %v2987, %v3015
    %v3017 = vmul.f32 %v3016, 1.442695
    %v3018 = vpow.pop %v3017
    %v3019 = vsel %vm1647, %v3018, 0.0
    %3020 = vadd.xlane.f32.xlu0 %v3019
    %v3021 = vpop.xlane.xlu0 %3020
    %v3022 = vlog2.pop %v3021
    %v3023 = vmul.f32 %v3022, 0.6931472
    %v3024 = vsub.f32 %v3016, %v3023
    %vm3025 = vcmp.eq.s32.totalorder %v257, %v3012
    %v3026 = vsel %vm3025, 1, 0
    %v3027 = vcvt.s32.f32 %v3026
    %v3028 = vpack.c.bf16 %v3027, %v3027
    %3029 = vmatprep.subr.bf16.mxu0 0
    %3030 = vmatpush1.bf16.msra.mxu0 0
    %3031 = vmatprep.subr.bf16.mxu0 0
    %3032 = vmatpush1.bf16.msra.mxu0 0
    %3033 = vmatprep.subr.bf16.mxu0 0
    %3034 = vmatpush1.bf16.msra.mxu0 0
    %3035 = vmatprep.subr.bf16.mxu0 0
    %3036 = vmatpush1.bf16.msra.mxu0 0
    %3037 = vmatprep.subr.bf16.mxu0 0
    %3038 = vmatpush1.bf16.msra.mxu0 0
    %3039 = vmatprep.subr.bf16.mxu0 0
    %3040 = vmatpush1.bf16.msra.mxu0 0
    %3041 = vmatprep.subr.bf16.mxu0 0
    %3042 = vmatpush1.bf16.msra.mxu0 %v1474
    %3043 = vmatprep.subr.bf16.mxu0 0
    %3044 = vmatpush1.bf16.msra.mxu0 %v1473
    %3045 = vmatprep.subr.bf16.mxu0 0
    %3046 = vmatpush2.bf16.msra.mxu0 0
    %3047 = vmatprep.subr.bf16.mxu0 0
    %3048 = vmatpush2.bf16.msra.mxu0 0
    %3049 = vmatprep.subr.bf16.mxu0 0
    %3050 = vmatpush2.bf16.msra.mxu0 0
    %3051 = vmatprep.subr.bf16.mxu0 0
    %3052 = vmatpush2.bf16.msra.mxu0 0
    %3053 = vmatprep.subr.bf16.mxu0 0
    %3054 = vmatpush2.bf16.msra.mxu0 0
    %3055 = vmatprep.subr.bf16.mxu0 0
    %3056 = vmatpush2.bf16.msra.mxu0 0
    %3057 = vmatprep.subr.bf16.mxu0 0
    %3058 = vmatpush2.bf16.msra.mxu0 0
    %3059 = vmatprep.subr.bf16.mxu0 0
    %3060 = vmatpush2.bf16.msra.mxu0 0
    %3061 = vmatprep.mubr.bf16.mxu0 0
    %3062 = vmatmul.mubr.bf16.gmra.mxu0 %v2769
    %v3063 = vpop.f32.mrf.mxu0
    %v3064 = vadd.f32 0.0, %v3063
    %v3065 = vpop.f32.mrf.mxu0
    %v3066 = vpop.f32.mrf.mxu0
    %v3067 = vpop.f32.mrf.mxu0
    %3068 = vdwg.mxu0
    %v3070 = vsel %vm276, %v3028, 0
    %3072 = vmatprep.subr.bf16.mxu0 0
    %3073 = vmatpush1.bf16.msra.mxu0 0
    %3074 = vmatprep.subr.bf16.mxu0 0
    %3075 = vmatpush1.bf16.msra.mxu0 0
    %3076 = vmatprep.subr.bf16.mxu0 0
    %3077 = vmatpush1.bf16.msra.mxu0 0
    %3078 = vmatprep.subr.bf16.mxu0 0
    %3079 = vmatpush1.bf16.msra.mxu0 0
    %3080 = vmatprep.subr.bf16.mxu0 0
    %3081 = vmatpush1.bf16.msra.mxu0 0
    %3082 = vmatprep.subr.bf16.mxu0 0
    %3083 = vmatpush1.bf16.msra.mxu0 0
    %3084 = vmatprep.subr.bf16.mxu0 0
    %3085 = vmatpush1.bf16.msra.mxu0 0
    %3086 = vmatprep.subr.bf16.mxu0 0
    %3087 = vmatpush1.bf16.msra.mxu0 %v231
    %3088 = vmatprep.subr.bf16.mxu0 0
    %3089 = vmatpush2.bf16.msra.mxu0 0
    %3090 = vmatprep.subr.bf16.mxu0 0
    %3091 = vmatpush2.bf16.msra.mxu0 0
    %3092 = vmatprep.subr.bf16.mxu0 0
    %3093 = vmatpush2.bf16.msra.mxu0 0
    %3094 = vmatprep.subr.bf16.mxu0 0
    %3095 = vmatpush2.bf16.msra.mxu0 0
    %3096 = vmatprep.subr.bf16.mxu0 0
    %3097 = vmatpush2.bf16.msra.mxu0 0
    %3098 = vmatprep.subr.bf16.mxu0 0
    %3099 = vmatpush2.bf16.msra.mxu0 0
    %3100 = vmatprep.subr.bf16.mxu0 0
    %3101 = vmatpush2.bf16.msra.mxu0 0
    %3102 = vmatprep.subr.bf16.mxu0 0
    %3103 = vmatpush2.bf16.msra.mxu0 0
    %3104 = vmatprep.mubr.bf16.mxu0 0
    %3105 = vmatmul.mubr.bf16.gmra.mxu0 %v3070
    %v3106 = vpop.f32.mrf.mxu0
    %v3107 = vadd.f32 %v3064, %v3106
    %v3108 = vpop.f32.mrf.mxu0
    %v3109 = vpop.f32.mrf.mxu0
    %v3110 = vpop.f32.mrf.mxu0
    %3111 = vdwg.mxu0
    %v3112 = vadd.f32 %v3107, %v1564
    %v3113 = vmul.f32 %v3112, %v261
    %v3114 = vtanh.pop %v3113
    %v3115 = vmul.f32 %v3114, 0.5
    %v3116 = vadd.f32 %v3115, 0.5
    %v3117 = vmul.f32 %v3116, %v2757
    %3119 = vrot.lane.b32.xlu0 %v3114, 64
    %v3120 = vpop.permute.xlu0 %3119
    %v3122 = vmul.f32 %v3116, %v3120
    %3124 = vrot.lane.b32.xlu0 %v3122, 32
    %v3125 = vpop.permute.xlu0 %3124
    %v3127 = vadd.f32 %v3117, %v3125
    %v3128 = vtanh.pop %v3127
    %3130 = vrot.lane.b32.xlu0 %v3128, 64
    %v3131 = vpop.permute.xlu0 %3130
    %v3133 = vmul.f32 %v3116, %v3131
    %v3134 = vpack.c.bf16 %v3133, %v3133
    %3136 = vrot.lane.b32.xlu0 %v3134, 32
    %v3137 = vpop.permute.xlu0 %3136
    %v3139 = vsel %vm118, %v3137, 0
    %3141 = vmatprep.subr.bf16.mxu0 0
    %3142 = vmatpush1.bf16.xpose.msra.mxu0 0
    %3143 = vmatprep.subr.bf16.mxu0 0
    %3144 = vmatpush1.bf16.xpose.msra.mxu0 0
    %3145 = vmatprep.subr.bf16.mxu0 0
    %3146 = vmatpush1.bf16.xpose.msra.mxu0 0
    %3147 = vmatprep.subr.bf16.mxu0 0
    %3148 = vmatpush1.bf16.xpose.msra.mxu0 0
    %3149 = vmatprep.subr.bf16.mxu0 0
    %3150 = vmatpush1.bf16.xpose.msra.mxu0 0
    %3151 = vmatprep.subr.bf16.mxu0 0
    %3152 = vmatpush1.bf16.xpose.msra.mxu0 0
    %3153 = vmatprep.subr.bf16.mxu0 0
    %3154 = vmatpush1.bf16.xpose.msra.mxu0 0
    %3155 = vmatprep.subr.bf16.mxu0 0
    %3156 = vmatpush1.bf16.xpose.msra.mxu0 %v1603
    %3157 = vmatprep.subr.bf16.mxu0 0
    %3158 = vmatpush2.bf16.xpose.msra.mxu0 0
    %3159 = vmatprep.subr.bf16.mxu0 0
    %3160 = vmatpush2.bf16.xpose.msra.mxu0 0
    %3161 = vmatprep.subr.bf16.mxu0 0
    %3162 = vmatpush2.bf16.xpose.msra.mxu0 0
    %3163 = vmatprep.subr.bf16.mxu0 0
    %3164 = vmatpush2.bf16.xpose.msra.mxu0 0
    %3165 = vmatprep.subr.bf16.mxu0 0
    %3166 = vmatpush2.bf16.xpose.msra.mxu0 0
    %3167 = vmatprep.subr.bf16.mxu0 0
    %3168 = vmatpush2.bf16.xpose.msra.mxu0 0
    %3169 = vmatprep.subr.bf16.mxu0 0
    %3170 = vmatpush2.bf16.xpose.msra.mxu0 0
    %3171 = vmatprep.subr.bf16.mxu0 0
    %3172 = vmatpush2.bf16.xpose.msra.mxu0 0
    %3173 = vmatprep.mubr.bf16.mxu0 0
    %3174 = vmatmul.mubr.bf16.gmra.mxu0 %v3139
    %v3175 = vpop.f32.mrf.mxu0
    %v3176 = vadd.f32 %v1456, %v3175
    %v3177 = vpop.f32.mrf.mxu0
    %v3178 = vpop.f32.mrf.mxu0
    %v3179 = vpop.f32.mrf.mxu0
    %3180 = vdwg.mxu0
    %v3181 = vmul.f32 %v3176, 1.442695
    %v3182 = vpow.pop %v3181
    %v3183 = vsel %vm1647, %v3182, 0.0
    %3184 = vadd.xlane.f32.xlu0 %v3183
    %v3185 = vpop.xlane.xlu0 %3184
    %v3186 = vrcp.pop %v3185
    %v3187 = vmul.f32 %v3182, %v3186
    %v3188 = vpack.c.bf16 %v3187, %v3187
    %v3190 = vsel %vm276, %v3188, 0
    %3192 = vmatprep.subr.bf16.mxu0 0
    %3193 = vmatpush1.bf16.msra.mxu0 0
    %3194 = vmatprep.subr.bf16.mxu0 0
    %3195 = vmatpush1.bf16.msra.mxu0 0
    %3196 = vmatprep.subr.bf16.mxu0 0
    %3197 = vmatpush1.bf16.msra.mxu0 0
    %3198 = vmatprep.subr.bf16.mxu0 0
    %3199 = vmatpush1.bf16.msra.mxu0 0
    %3200 = vmatprep.subr.bf16.mxu0 0
    %3201 = vmatpush1.bf16.msra.mxu0 0
    %3202 = vmatprep.subr.bf16.mxu0 0
    %3203 = vmatpush1.bf16.msra.mxu0 0
    %3204 = vmatprep.subr.bf16.mxu0 0
    %3205 = vmatpush1.bf16.msra.mxu0 0
    %3206 = vmatprep.subr.bf16.mxu0 0
    %3207 = vmatpush1.bf16.msra.mxu0 %v1598
    %3208 = vmatprep.subr.bf16.mxu0 0
    %3209 = vmatpush2.bf16.msra.mxu0 0
    %3210 = vmatprep.subr.bf16.mxu0 0
    %3211 = vmatpush2.bf16.msra.mxu0 0
    %3212 = vmatprep.subr.bf16.mxu0 0
    %3213 = vmatpush2.bf16.msra.mxu0 0
    %3214 = vmatprep.subr.bf16.mxu0 0
    %3215 = vmatpush2.bf16.msra.mxu0 0
    %3216 = vmatprep.subr.bf16.mxu0 0
    %3217 = vmatpush2.bf16.msra.mxu0 0
    %3218 = vmatprep.subr.bf16.mxu0 0
    %3219 = vmatpush2.bf16.msra.mxu0 0
    %3220 = vmatprep.subr.bf16.mxu0 0
    %3221 = vmatpush2.bf16.msra.mxu0 0
    %3222 = vmatprep.subr.bf16.mxu0 0
    %3223 = vmatpush2.bf16.msra.mxu0 0
    %3224 = vmatprep.mubr.bf16.mxu0 0
    %3225 = vmatmul.mubr.bf16.gmra.mxu0 %v3190
    %v3226 = vpop.f32.mrf.mxu0
    %v3227 = vadd.f32 0.0, %v3226
    %v3228 = vpop.f32.mrf.mxu0
    %v3229 = vpop.f32.mrf.mxu0
    %v3230 = vpop.f32.mrf.mxu0
    %3231 = vdwg.mxu0
    %v3232 = vpack.c.bf16 %v3227, %v3227
    %3233 = vmatprep.subr.bf16.mxu0 0
    %3234 = vmatpush1.bf16.msra.mxu0 0
    %3235 = vmatprep.subr.bf16.mxu0 0
    %3236 = vmatpush1.bf16.msra.mxu0 0
    %3237 = vmatprep.subr.bf16.mxu0 0
    %3238 = vmatpush1.bf16.msra.mxu0 0
    %3239 = vmatprep.subr.bf16.mxu0 0
    %3240 = vmatpush1.bf16.msra.mxu0 0
    %3241 = vmatprep.subr.bf16.mxu0 0
    %3242 = vmatpush1.bf16.msra.mxu0 0
    %3243 = vmatprep.subr.bf16.mxu0 0
    %3244 = vmatpush1.bf16.msra.mxu0 0
    %3245 = vmatprep.subr.bf16.mxu0 0
    %3246 = vmatpush1.bf16.msra.mxu0 %v1708
    %3247 = vmatprep.subr.bf16.mxu0 0
    %3248 = vmatpush1.bf16.msra.mxu0 %v1707
    %3249 = vmatprep.subr.bf16.mxu0 0
    %3250 = vmatpush2.bf16.msra.mxu0 0
    %3251 = vmatprep.subr.bf16.mxu0 0
    %3252 = vmatpush2.bf16.msra.mxu0 0
    %3253 = vmatprep.subr.bf16.mxu0 0
    %3254 = vmatpush2.bf16.msra.mxu0 0
    %3255 = vmatprep.subr.bf16.mxu0 0
    %3256 = vmatpush2.bf16.msra.mxu0 0
    %3257 = vmatprep.subr.bf16.mxu0 0
    %3258 = vmatpush2.bf16.msra.mxu0 0
    %3259 = vmatprep.subr.bf16.mxu0 0
    %3260 = vmatpush2.bf16.msra.mxu0 0
    %3261 = vmatprep.subr.bf16.mxu0 0
    %3262 = vmatpush2.bf16.msra.mxu0 0
    %3263 = vmatprep.subr.bf16.mxu0 0
    %3264 = vmatpush2.bf16.msra.mxu0 0
    %3265 = vmatprep.mubr.bf16.mxu0 0
    %3266 = vmatmul.mubr.bf16.gmra.mxu0 %v3139
    %v3267 = vpop.f32.mrf.mxu0
    %v3268 = vadd.f32 0.0, %v3267
    %v3269 = vpop.f32.mrf.mxu0
    %v3270 = vpop.f32.mrf.mxu0
    %v3271 = vpop.f32.mrf.mxu0
    %3272 = vdwg.mxu0
    %v3274 = vsel %vm118, %v3232, 0
    %3276 = vmatprep.subr.bf16.mxu0 0
    %3277 = vmatpush1.bf16.msra.mxu0 0
    %3278 = vmatprep.subr.bf16.mxu0 0
    %3279 = vmatpush1.bf16.msra.mxu0 0
    %3280 = vmatprep.subr.bf16.mxu0 0
    %3281 = vmatpush1.bf16.msra.mxu0 0
    %3282 = vmatprep.subr.bf16.mxu0 0
    %3283 = vmatpush1.bf16.msra.mxu0 0
    %3284 = vmatprep.subr.bf16.mxu0 0
    %3285 = vmatpush1.bf16.msra.mxu0 0
    %3286 = vmatprep.subr.bf16.mxu0 0
    %3287 = vmatpush1.bf16.msra.mxu0 0
    %3288 = vmatprep.subr.bf16.mxu0 0
    %3289 = vmatpush1.bf16.msra.mxu0 %v1760
    %3290 = vmatprep.subr.bf16.mxu0 0
    %3291 = vmatpush1.bf16.msra.mxu0 %v1759
    %3292 = vmatprep.subr.bf16.mxu0 0
    %3293 = vmatpush2.bf16.msra.mxu0 0
    %3294 = vmatprep.subr.bf16.mxu0 0
    %3295 = vmatpush2.bf16.msra.mxu0 0
    %3296 = vmatprep.subr.bf16.mxu0 0
    %3297 = vmatpush2.bf16.msra.mxu0 0
    %3298 = vmatprep.subr.bf16.mxu0 0
    %3299 = vmatpush2.bf16.msra.mxu0 0
    %3300 = vmatprep.subr.bf16.mxu0 0
    %3301 = vmatpush2.bf16.msra.mxu0 0
    %3302 = vmatprep.subr.bf16.mxu0 0
    %3303 = vmatpush2.bf16.msra.mxu0 0
    %3304 = vmatprep.subr.bf16.mxu0 0
    %3305 = vmatpush2.bf16.msra.mxu0 0
    %3306 = vmatprep.subr.bf16.mxu0 0
    %3307 = vmatpush2.bf16.msra.mxu0 0
    %3308 = vmatprep.mubr.bf16.mxu0 0
    %3309 = vmatmul.mubr.bf16.gmra.mxu0 %v3274
    %v3310 = vpop.f32.mrf.mxu0
    %v3311 = vadd.f32 %v3268, %v3310
    %v3312 = vpop.f32.mrf.mxu0
    %v3313 = vpop.f32.mrf.mxu0
    %v3314 = vpop.f32.mrf.mxu0
    %3315 = vdwg.mxu0
    %v3316 = vadd.f32 %v3311, %v1810
    %v3317 = vtanh.pop %v3316
    %v3318 = vpack.c.bf16 %v3317, %v3317
    %v3320 = vsel %vm118, %v3318, 0
    %3322 = vmatprep.subr.bf16.mxu0 0
    %3323 = vmatpush1.bf16.msra.mxu0 0
    %3324 = vmatprep.subr.bf16.mxu0 0
    %3325 = vmatpush1.bf16.msra.mxu0 0
    %3326 = vmatprep.subr.bf16.mxu0 0
    %3327 = vmatpush1.bf16.msra.mxu0 0
    %3328 = vmatprep.subr.bf16.mxu0 0
    %3329 = vmatpush1.bf16.msra.mxu0 0
    %3330 = vmatprep.subr.bf16.mxu0 0
    %3331 = vmatpush1.bf16.msra.mxu0 0
    %3332 = vmatprep.subr.bf16.mxu0 0
    %3333 = vmatpush1.bf16.msra.mxu0 0
    %3334 = vmatprep.subr.bf16.mxu0 0
    %3335 = vmatpush1.bf16.msra.mxu0 %v1830
    %3336 = vmatprep.subr.bf16.mxu0 0
    %3337 = vmatpush1.bf16.msra.mxu0 %v1829
    %3338 = vmatprep.subr.bf16.mxu0 0
    %3339 = vmatpush2.bf16.msra.mxu0 0
    %3340 = vmatprep.subr.bf16.mxu0 0
    %3341 = vmatpush2.bf16.msra.mxu0 0
    %3342 = vmatprep.subr.bf16.mxu0 0
    %3343 = vmatpush2.bf16.msra.mxu0 0
    %3344 = vmatprep.subr.bf16.mxu0 0
    %3345 = vmatpush2.bf16.msra.mxu0 0
    %3346 = vmatprep.subr.bf16.mxu0 0
    %3347 = vmatpush2.bf16.msra.mxu0 0
    %3348 = vmatprep.subr.bf16.mxu0 0
    %3349 = vmatpush2.bf16.msra.mxu0 0
    %3350 = vmatprep.subr.bf16.mxu0 0
    %3351 = vmatpush2.bf16.msra.mxu0 0
    %3352 = vmatprep.subr.bf16.mxu0 0
    %3353 = vmatpush2.bf16.msra.mxu0 0
    %3354 = vmatprep.mubr.bf16.mxu0 0
    %3355 = vmatmul.mubr.bf16.gmra.mxu0 %v3320
    %v3356 = vpop.f32.mrf.mxu0
    %v3357 = vadd.f32 %v1819, %v3356
    %v3358 = vpop.f32.mrf.mxu0
    %v3359 = vpop.f32.mrf.mxu0
    %v3360 = vpop.f32.mrf.mxu0
    %3361 = vdwg.mxu0
    %v3362 = vsel %vm1878, %v3357, -1e+30
    %v3363 = vsel %vm1647, %v3362, -inf
    %3364 = vmax.xlane.f32.xlu0 %v3363
    %v3365 = vpop.xlane.xlu0 %3364
    %vm3366 = vcmp.eq.f32.partialorder %v3362, %v3365
    %v3367 = vsel %vm3366, %v257, 16
    %v3368 = vsel %vm1647, %v3367, 2147483647
    %v3369 = vand.u32 %v3368, 65535
    %v3370 = vshra.s32 %v3368, 16
    %v3371 = vcvt.s32.f32 %v3369
    %v3372 = vcvt.s32.f32 %v3370
    %3373 = vmin.xlane.f32.xlu0 %v3372
    %v3374 = vpop.xlane.xlu0 %3373
    %vm3375 = vcmp.eq.f32.partialorder %v3372, %v3374
    %v3376 = vsel %vm3375, %v3371, inf
    %3377 = vmin.xlane.f32.xlu0 %v3376
    %v3378 = vpop.xlane.xlu0 %3377
    %v3379 = vcvt.f32.s32 %v3378
    %v3380 = vcvt.f32.s32 %v3374
    %v3381 = vshll.u32 %v3380, 16
    %v3382 = vadd.s32 %v3381, %v3379
    %v3383 = vsel %vm1647, %v3357, -inf
    %3384 = vmax.xlane.f32.xlu0 %v3383
    %v3385 = vpop.xlane.xlu0 %3384
    %v3386 = vsub.f32 %v3357, %v3385
    %v3387 = vmul.f32 %v3386, 1.442695
    %v3388 = vpow.pop %v3387
    %v3389 = vsel %vm1647, %v3388, 0.0
    %3390 = vadd.xlane.f32.xlu0 %v3389
    %v3391 = vpop.xlane.xlu0 %3390
    %v3392 = vlog2.pop %v3391
    %v3393 = vmul.f32 %v3392, 0.6931472
    %v3394 = vsub.f32 %v3386, %v3393
    %vm3395 = vcmp.eq.s32.totalorder %v257, %v3382
    %v3396 = vsel %vm3395, 1, 0
    %v3397 = vcvt.s32.f32 %v3396
    %v3398 = vpack.c.bf16 %v3397, %v3397
    %3399 = vmatprep.subr.bf16.mxu0 0
    %3400 = vmatpush1.bf16.msra.mxu0 0
    %3401 = vmatprep.subr.bf16.mxu0 0
    %3402 = vmatpush1.bf16.msra.mxu0 0
    %3403 = vmatprep.subr.bf16.mxu0 0
    %3404 = vmatpush1.bf16.msra.mxu0 0
    %3405 = vmatprep.subr.bf16.mxu0 0
    %3406 = vmatpush1.bf16.msra.mxu0 0
    %3407 = vmatprep.subr.bf16.mxu0 0
    %3408 = vmatpush1.bf16.msra.mxu0 0
    %3409 = vmatprep.subr.bf16.mxu0 0
    %3410 = vmatpush1.bf16.msra.mxu0 0
    %3411 = vmatprep.subr.bf16.mxu0 0
    %3412 = vmatpush1.bf16.msra.mxu0 %v1474
    %3413 = vmatprep.subr.bf16.mxu0 0
    %3414 = vmatpush1.bf16.msra.mxu0 %v1473
    %3415 = vmatprep.subr.bf16.mxu0 0
    %3416 = vmatpush2.bf16.msra.mxu0 0
    %3417 = vmatprep.subr.bf16.mxu0 0
    %3418 = vmatpush2.bf16.msra.mxu0 0
    %3419 = vmatprep.subr.bf16.mxu0 0
    %3420 = vmatpush2.bf16.msra.mxu0 0
    %3421 = vmatprep.subr.bf16.mxu0 0
    %3422 = vmatpush2.bf16.msra.mxu0 0
    %3423 = vmatprep.subr.bf16.mxu0 0
    %3424 = vmatpush2.bf16.msra.mxu0 0
    %3425 = vmatprep.subr.bf16.mxu0 0
    %3426 = vmatpush2.bf16.msra.mxu0 0
    %3427 = vmatprep.subr.bf16.mxu0 0
    %3428 = vmatpush2.bf16.msra.mxu0 0
    %3429 = vmatprep.subr.bf16.mxu0 0
    %3430 = vmatpush2.bf16.msra.mxu0 0
    %3431 = vmatprep.mubr.bf16.mxu0 0
    %3432 = vmatmul.mubr.bf16.gmra.mxu0 %v3139
    %v3433 = vpop.f32.mrf.mxu0
    %v3434 = vadd.f32 0.0, %v3433
    %v3435 = vpop.f32.mrf.mxu0
    %v3436 = vpop.f32.mrf.mxu0
    %v3437 = vpop.f32.mrf.mxu0
    %3438 = vdwg.mxu0
    %v3440 = vsel %vm276, %v3398, 0
    %3442 = vmatprep.subr.bf16.mxu0 0
    %3443 = vmatpush1.bf16.msra.mxu0 0
    %3444 = vmatprep.subr.bf16.mxu0 0
    %3445 = vmatpush1.bf16.msra.mxu0 0
    %3446 = vmatprep.subr.bf16.mxu0 0
    %3447 = vmatpush1.bf16.msra.mxu0 0
    %3448 = vmatprep.subr.bf16.mxu0 0
    %3449 = vmatpush1.bf16.msra.mxu0 0
    %3450 = vmatprep.subr.bf16.mxu0 0
    %3451 = vmatpush1.bf16.msra.mxu0 0
    %3452 = vmatprep.subr.bf16.mxu0 0
    %3453 = vmatpush1.bf16.msra.mxu0 0
    %3454 = vmatprep.subr.bf16.mxu0 0
    %3455 = vmatpush1.bf16.msra.mxu0 0
    %3456 = vmatprep.subr.bf16.mxu0 0
    %3457 = vmatpush1.bf16.msra.mxu0 %v231
    %3458 = vmatprep.subr.bf16.mxu0 0
    %3459 = vmatpush2.bf16.msra.mxu0 0
    %3460 = vmatprep.subr.bf16.mxu0 0
    %3461 = vmatpush2.bf16.msra.mxu0 0
    %3462 = vmatprep.subr.bf16.mxu0 0
    %3463 = vmatpush2.bf16.msra.mxu0 0
    %3464 = vmatprep.subr.bf16.mxu0 0
    %3465 = vmatpush2.bf16.msra.mxu0 0
    %3466 = vmatprep.subr.bf16.mxu0 0
    %3467 = vmatpush2.bf16.msra.mxu0 0
    %3468 = vmatprep.subr.bf16.mxu0 0
    %3469 = vmatpush2.bf16.msra.mxu0 0
    %3470 = vmatprep.subr.bf16.mxu0 0
    %3471 = vmatpush2.bf16.msra.mxu0 0
    %3472 = vmatprep.subr.bf16.mxu0 0
    %3473 = vmatpush2.bf16.msra.mxu0 0
    %3474 = vmatprep.mubr.bf16.mxu0 0
    %3475 = vmatmul.mubr.bf16.gmra.mxu0 %v3440
    %v3476 = vpop.f32.mrf.mxu0
    %v3477 = vadd.f32 %v3434, %v3476
    %v3478 = vpop.f32.mrf.mxu0
    %v3479 = vpop.f32.mrf.mxu0
    %v3480 = vpop.f32.mrf.mxu0
    %3481 = vdwg.mxu0
    %v3482 = vadd.f32 %v3477, %v1564
    %v3483 = vmul.f32 %v3482, %v261
    %v3484 = vtanh.pop %v3483
    %v3485 = vmul.f32 %v3484, 0.5
    %v3486 = vadd.f32 %v3485, 0.5
    %v3487 = vmul.f32 %v3486, %v3127
    %3489 = vrot.lane.b32.xlu0 %v3484, 64
    %v3490 = vpop.permute.xlu0 %3489
    %v3492 = vmul.f32 %v3486, %v3490
    %3494 = vrot.lane.b32.xlu0 %v3492, 32
    %v3495 = vpop.permute.xlu0 %3494
    %v3497 = vadd.f32 %v3487, %v3495
    %v3498 = vtanh.pop %v3497
    %3500 = vrot.lane.b32.xlu0 %v3498, 64
    %v3501 = vpop.permute.xlu0 %3500
    %v3503 = vmul.f32 %v3486, %v3501
    %v3504 = vpack.c.bf16 %v3503, %v3503
    %3506 = vrot.lane.b32.xlu0 %v3504, 32
    %v3507 = vpop.permute.xlu0 %3506
    %v3509 = vsel %vm118, %v3507, 0
    %3511 = vmatprep.subr.bf16.mxu0 0
    %3512 = vmatpush1.bf16.xpose.msra.mxu0 0
    %3513 = vmatprep.subr.bf16.mxu0 0
    %3514 = vmatpush1.bf16.xpose.msra.mxu0 0
    %3515 = vmatprep.subr.bf16.mxu0 0
    %3516 = vmatpush1.bf16.xpose.msra.mxu0 0
    %3517 = vmatprep.subr.bf16.mxu0 0
    %3518 = vmatpush1.bf16.xpose.msra.mxu0 0
    %3519 = vmatprep.subr.bf16.mxu0 0
    %3520 = vmatpush1.bf16.xpose.msra.mxu0 0
    %3521 = vmatprep.subr.bf16.mxu0 0
    %3522 = vmatpush1.bf16.xpose.msra.mxu0 0
    %3523 = vmatprep.subr.bf16.mxu0 0
    %3524 = vmatpush1.bf16.xpose.msra.mxu0 0
    %3525 = vmatprep.subr.bf16.mxu0 0
    %3526 = vmatpush1.bf16.xpose.msra.mxu0 %v1603
    %3527 = vmatprep.subr.bf16.mxu0 0
    %3528 = vmatpush2.bf16.xpose.msra.mxu0 0
    %3529 = vmatprep.subr.bf16.mxu0 0
    %3530 = vmatpush2.bf16.xpose.msra.mxu0 0
    %3531 = vmatprep.subr.bf16.mxu0 0
    %3532 = vmatpush2.bf16.xpose.msra.mxu0 0
    %3533 = vmatprep.subr.bf16.mxu0 0
    %3534 = vmatpush2.bf16.xpose.msra.mxu0 0
    %3535 = vmatprep.subr.bf16.mxu0 0
    %3536 = vmatpush2.bf16.xpose.msra.mxu0 0
    %3537 = vmatprep.subr.bf16.mxu0 0
    %3538 = vmatpush2.bf16.xpose.msra.mxu0 0
    %3539 = vmatprep.subr.bf16.mxu0 0
    %3540 = vmatpush2.bf16.xpose.msra.mxu0 0
    %3541 = vmatprep.subr.bf16.mxu0 0
    %3542 = vmatpush2.bf16.xpose.msra.mxu0 0
    %3543 = vmatprep.mubr.bf16.mxu0 0
    %3544 = vmatmul.mubr.bf16.gmra.mxu0 %v3509
    %v3545 = vpop.f32.mrf.mxu0
    %v3546 = vadd.f32 %v1456, %v3545
    %v3547 = vpop.f32.mrf.mxu0
    %v3548 = vpop.f32.mrf.mxu0
    %v3549 = vpop.f32.mrf.mxu0
    %3550 = vdwg.mxu0
    %v3551 = vmul.f32 %v3546, 1.442695
    %v3552 = vpow.pop %v3551
    %v3553 = vsel %vm1647, %v3552, 0.0
    %3554 = vadd.xlane.f32.xlu0 %v3553
    %v3555 = vpop.xlane.xlu0 %3554
    %v3556 = vrcp.pop %v3555
    %v3557 = vmul.f32 %v3552, %v3556
    %v3558 = vpack.c.bf16 %v3557, %v3557
    %v3560 = vsel %vm276, %v3558, 0
    %3562 = vmatprep.subr.bf16.mxu0 0
    %3563 = vmatpush1.bf16.msra.mxu0 0
    %3564 = vmatprep.subr.bf16.mxu0 0
    %3565 = vmatpush1.bf16.msra.mxu0 0
    %3566 = vmatprep.subr.bf16.mxu0 0
    %3567 = vmatpush1.bf16.msra.mxu0 0
    %3568 = vmatprep.subr.bf16.mxu0 0
    %3569 = vmatpush1.bf16.msra.mxu0 0
    %3570 = vmatprep.subr.bf16.mxu0 0
    %3571 = vmatpush1.bf16.msra.mxu0 0
    %3572 = vmatprep.subr.bf16.mxu0 0
    %3573 = vmatpush1.bf16.msra.mxu0 0
    %3574 = vmatprep.subr.bf16.mxu0 0
    %3575 = vmatpush1.bf16.msra.mxu0 0
    %3576 = vmatprep.subr.bf16.mxu0 0
    %3577 = vmatpush1.bf16.msra.mxu0 %v1598
    %3578 = vmatprep.subr.bf16.mxu0 0
    %3579 = vmatpush2.bf16.msra.mxu0 0
    %3580 = vmatprep.subr.bf16.mxu0 0
    %3581 = vmatpush2.bf16.msra.mxu0 0
    %3582 = vmatprep.subr.bf16.mxu0 0
    %3583 = vmatpush2.bf16.msra.mxu0 0
    %3584 = vmatprep.subr.bf16.mxu0 0
    %3585 = vmatpush2.bf16.msra.mxu0 0
    %3586 = vmatprep.subr.bf16.mxu0 0
    %3587 = vmatpush2.bf16.msra.mxu0 0
    %3588 = vmatprep.subr.bf16.mxu0 0
    %3589 = vmatpush2.bf16.msra.mxu0 0
    %3590 = vmatprep.subr.bf16.mxu0 0
    %3591 = vmatpush2.bf16.msra.mxu0 0
    %3592 = vmatprep.subr.bf16.mxu0 0
    %3593 = vmatpush2.bf16.msra.mxu0 0
    %3594 = vmatprep.mubr.bf16.mxu0 0
    %3595 = vmatmul.mubr.bf16.gmra.mxu0 %v3560
    %v3596 = vpop.f32.mrf.mxu0
    %v3597 = vadd.f32 0.0, %v3596
    %v3598 = vpop.f32.mrf.mxu0
    %v3599 = vpop.f32.mrf.mxu0
    %v3600 = vpop.f32.mrf.mxu0
    %3601 = vdwg.mxu0
    %v3602 = vpack.c.bf16 %v3597, %v3597
    %3603 = vmatprep.subr.bf16.mxu0 0
    %3604 = vmatpush1.bf16.msra.mxu0 0
    %3605 = vmatprep.subr.bf16.mxu0 0
    %3606 = vmatpush1.bf16.msra.mxu0 0
    %3607 = vmatprep.subr.bf16.mxu0 0
    %3608 = vmatpush1.bf16.msra.mxu0 0
    %3609 = vmatprep.subr.bf16.mxu0 0
    %3610 = vmatpush1.bf16.msra.mxu0 0
    %3611 = vmatprep.subr.bf16.mxu0 0
    %3612 = vmatpush1.bf16.msra.mxu0 0
    %3613 = vmatprep.subr.bf16.mxu0 0
    %3614 = vmatpush1.bf16.msra.mxu0 0
    %3615 = vmatprep.subr.bf16.mxu0 0
    %3616 = vmatpush1.bf16.msra.mxu0 %v1708
    %3617 = vmatprep.subr.bf16.mxu0 0
    %3618 = vmatpush1.bf16.msra.mxu0 %v1707
    %3619 = vmatprep.subr.bf16.mxu0 0
    %3620 = vmatpush2.bf16.msra.mxu0 0
    %3621 = vmatprep.subr.bf16.mxu0 0
    %3622 = vmatpush2.bf16.msra.mxu0 0
    %3623 = vmatprep.subr.bf16.mxu0 0
    %3624 = vmatpush2.bf16.msra.mxu0 0
    %3625 = vmatprep.subr.bf16.mxu0 0
    %3626 = vmatpush2.bf16.msra.mxu0 0
    %3627 = vmatprep.subr.bf16.mxu0 0
    %3628 = vmatpush2.bf16.msra.mxu0 0
    %3629 = vmatprep.subr.bf16.mxu0 0
    %3630 = vmatpush2.bf16.msra.mxu0 0
    %3631 = vmatprep.subr.bf16.mxu0 0
    %3632 = vmatpush2.bf16.msra.mxu0 0
    %3633 = vmatprep.subr.bf16.mxu0 0
    %3634 = vmatpush2.bf16.msra.mxu0 0
    %3635 = vmatprep.mubr.bf16.mxu0 0
    %3636 = vmatmul.mubr.bf16.gmra.mxu0 %v3509
    %v3637 = vpop.f32.mrf.mxu0
    %v3638 = vadd.f32 0.0, %v3637
    %v3639 = vpop.f32.mrf.mxu0
    %v3640 = vpop.f32.mrf.mxu0
    %v3641 = vpop.f32.mrf.mxu0
    %3642 = vdwg.mxu0
    %v3644 = vsel %vm118, %v3602, 0
    %3646 = vmatprep.subr.bf16.mxu0 0
    %3647 = vmatpush1.bf16.msra.mxu0 0
    %3648 = vmatprep.subr.bf16.mxu0 0
    %3649 = vmatpush1.bf16.msra.mxu0 0
    %3650 = vmatprep.subr.bf16.mxu0 0
    %3651 = vmatpush1.bf16.msra.mxu0 0
    %3652 = vmatprep.subr.bf16.mxu0 0
    %3653 = vmatpush1.bf16.msra.mxu0 0
    %3654 = vmatprep.subr.bf16.mxu0 0
    %3655 = vmatpush1.bf16.msra.mxu0 0
    %3656 = vmatprep.subr.bf16.mxu0 0
    %3657 = vmatpush1.bf16.msra.mxu0 0
    %3658 = vmatprep.subr.bf16.mxu0 0
    %3659 = vmatpush1.bf16.msra.mxu0 %v1760
    %3660 = vmatprep.subr.bf16.mxu0 0
    %3661 = vmatpush1.bf16.msra.mxu0 %v1759
    %3662 = vmatprep.subr.bf16.mxu0 0
    %3663 = vmatpush2.bf16.msra.mxu0 0
    %3664 = vmatprep.subr.bf16.mxu0 0
    %3665 = vmatpush2.bf16.msra.mxu0 0
    %3666 = vmatprep.subr.bf16.mxu0 0
    %3667 = vmatpush2.bf16.msra.mxu0 0
    %3668 = vmatprep.subr.bf16.mxu0 0
    %3669 = vmatpush2.bf16.msra.mxu0 0
    %3670 = vmatprep.subr.bf16.mxu0 0
    %3671 = vmatpush2.bf16.msra.mxu0 0
    %3672 = vmatprep.subr.bf16.mxu0 0
    %3673 = vmatpush2.bf16.msra.mxu0 0
    %3674 = vmatprep.subr.bf16.mxu0 0
    %3675 = vmatpush2.bf16.msra.mxu0 0
    %3676 = vmatprep.subr.bf16.mxu0 0
    %3677 = vmatpush2.bf16.msra.mxu0 0
    %3678 = vmatprep.mubr.bf16.mxu0 0
    %3679 = vmatmul.mubr.bf16.gmra.mxu0 %v3644
    %v3680 = vpop.f32.mrf.mxu0
    %v3681 = vadd.f32 %v3638, %v3680
    %v3682 = vpop.f32.mrf.mxu0
    %v3683 = vpop.f32.mrf.mxu0
    %v3684 = vpop.f32.mrf.mxu0
    %3685 = vdwg.mxu0
    %v3686 = vadd.f32 %v3681, %v1810
    %v3687 = vtanh.pop %v3686
    %v3688 = vpack.c.bf16 %v3687, %v3687
    %v3690 = vsel %vm118, %v3688, 0
    %3692 = vmatprep.subr.bf16.mxu0 0
    %3693 = vmatpush1.bf16.msra.mxu0 0
    %3694 = vmatprep.subr.bf16.mxu0 0
    %3695 = vmatpush1.bf16.msra.mxu0 0
    %3696 = vmatprep.subr.bf16.mxu0 0
    %3697 = vmatpush1.bf16.msra.mxu0 0
    %3698 = vmatprep.subr.bf16.mxu0 0
    %3699 = vmatpush1.bf16.msra.mxu0 0
    %3700 = vmatprep.subr.bf16.mxu0 0
    %3701 = vmatpush1.bf16.msra.mxu0 0
    %3702 = vmatprep.subr.bf16.mxu0 0
    %3703 = vmatpush1.bf16.msra.mxu0 0
    %3704 = vmatprep.subr.bf16.mxu0 0
    %3705 = vmatpush1.bf16.msra.mxu0 %v1830
    %3706 = vmatprep.subr.bf16.mxu0 0
    %3707 = vmatpush1.bf16.msra.mxu0 %v1829
    %3708 = vmatprep.subr.bf16.mxu0 0
    %3709 = vmatpush2.bf16.msra.mxu0 0
    %3710 = vmatprep.subr.bf16.mxu0 0
    %3711 = vmatpush2.bf16.msra.mxu0 0
    %3712 = vmatprep.subr.bf16.mxu0 0
    %3713 = vmatpush2.bf16.msra.mxu0 0
    %3714 = vmatprep.subr.bf16.mxu0 0
    %3715 = vmatpush2.bf16.msra.mxu0 0
    %3716 = vmatprep.subr.bf16.mxu0 0
    %3717 = vmatpush2.bf16.msra.mxu0 0
    %3718 = vmatprep.subr.bf16.mxu0 0
    %3719 = vmatpush2.bf16.msra.mxu0 0
    %3720 = vmatprep.subr.bf16.mxu0 0
    %3721 = vmatpush2.bf16.msra.mxu0 0
    %3722 = vmatprep.subr.bf16.mxu0 0
    %3723 = vmatpush2.bf16.msra.mxu0 0
    %3724 = vmatprep.mubr.bf16.mxu0 0
    %3725 = vmatmul.mubr.bf16.gmra.mxu0 %v3690
    %v3726 = vpop.f32.mrf.mxu0
    %v3727 = vadd.f32 %v1819, %v3726
    %v3728 = vpop.f32.mrf.mxu0
    %v3729 = vpop.f32.mrf.mxu0
    %v3730 = vpop.f32.mrf.mxu0
    %3731 = vdwg.mxu0
    %vm3732 = vcmp.ge.s32.totalorder %v257, 10
    %vm3733 = vcmp.lt.s32.totalorder %v257, 15
    %vm3734 = vmand %vm3732, %vm3733
    %v3735 = vsel %vm3734, %v3727, -1e+30
    %v3736 = vsel %vm1647, %v3735, -inf
    %3737 = vmax.xlane.f32.xlu0 %v3736
    %v3738 = vpop.xlane.xlu0 %3737
    %vm3739 = vcmp.eq.f32.partialorder %v3735, %v3738
    %v3740 = vsel %vm3739, %v257, 16
    %v3741 = vsel %vm1647, %v3740, 2147483647
    %v3742 = vand.u32 %v3741, 65535
    %v3743 = vshra.s32 %v3741, 16
    %v3744 = vcvt.s32.f32 %v3742
    %v3745 = vcvt.s32.f32 %v3743
    %3746 = vmin.xlane.f32.xlu0 %v3745
    %v3747 = vpop.xlane.xlu0 %3746
    %vm3748 = vcmp.eq.f32.partialorder %v3745, %v3747
    %v3749 = vsel %vm3748, %v3744, inf
    %3750 = vmin.xlane.f32.xlu0 %v3749
    %v3751 = vpop.xlane.xlu0 %3750
    %v3752 = vcvt.f32.s32 %v3751
    %v3753 = vcvt.f32.s32 %v3747
    %v3754 = vshll.u32 %v3753, 16
    %v3755 = vadd.s32 %v3754, %v3752
    %v3756 = vsel %vm1647, %v3727, -inf
    %3757 = vmax.xlane.f32.xlu0 %v3756
    %v3758 = vpop.xlane.xlu0 %3757
    %v3759 = vsub.f32 %v3727, %v3758
    %v3760 = vmul.f32 %v3759, 1.442695
    %v3761 = vpow.pop %v3760
    %v3762 = vsel %vm1647, %v3761, 0.0
    %3763 = vadd.xlane.f32.xlu0 %v3762
    %v3764 = vpop.xlane.xlu0 %3763
    %v3765 = vlog2.pop %v3764
    %v3766 = vmul.f32 %v3765, 0.6931472
    %v3767 = vsub.f32 %v3759, %v3766
    %vm3768 = vcmp.eq.s32.totalorder %v257, %v3755
    %v3769 = vsel %vm3768, 1, 0
    %v3770 = vcvt.s32.f32 %v3769
    %v3771 = vpack.c.bf16 %v3770, %v3770
    %3772 = vmatprep.subr.bf16.mxu0 0
    %3773 = vmatpush1.bf16.msra.mxu0 0
    %3774 = vmatprep.subr.bf16.mxu0 0
    %3775 = vmatpush1.bf16.msra.mxu0 0
    %3776 = vmatprep.subr.bf16.mxu0 0
    %3777 = vmatpush1.bf16.msra.mxu0 0
    %3778 = vmatprep.subr.bf16.mxu0 0
    %3779 = vmatpush1.bf16.msra.mxu0 0
    %3780 = vmatprep.subr.bf16.mxu0 0
    %3781 = vmatpush1.bf16.msra.mxu0 0
    %3782 = vmatprep.subr.bf16.mxu0 0
    %3783 = vmatpush1.bf16.msra.mxu0 0
    %3784 = vmatprep.subr.bf16.mxu0 0
    %3785 = vmatpush1.bf16.msra.mxu0 %v1474
    %3786 = vmatprep.subr.bf16.mxu0 0
    %3787 = vmatpush1.bf16.msra.mxu0 %v1473
    %3788 = vmatprep.subr.bf16.mxu0 0
    %3789 = vmatpush2.bf16.msra.mxu0 0
    %3790 = vmatprep.subr.bf16.mxu0 0
    %3791 = vmatpush2.bf16.msra.mxu0 0
    %3792 = vmatprep.subr.bf16.mxu0 0
    %3793 = vmatpush2.bf16.msra.mxu0 0
    %3794 = vmatprep.subr.bf16.mxu0 0
    %3795 = vmatpush2.bf16.msra.mxu0 0
    %3796 = vmatprep.subr.bf16.mxu0 0
    %3797 = vmatpush2.bf16.msra.mxu0 0
    %3798 = vmatprep.subr.bf16.mxu0 0
    %3799 = vmatpush2.bf16.msra.mxu0 0
    %3800 = vmatprep.subr.bf16.mxu0 0
    %3801 = vmatpush2.bf16.msra.mxu0 0
    %3802 = vmatprep.subr.bf16.mxu0 0
    %3803 = vmatpush2.bf16.msra.mxu0 0
    %3804 = vmatprep.mubr.bf16.mxu0 0
    %3805 = vmatmul.mubr.bf16.gmra.mxu0 %v3509
    %v3806 = vpop.f32.mrf.mxu0
    %v3807 = vadd.f32 0.0, %v3806
    %v3808 = vpop.f32.mrf.mxu0
    %v3809 = vpop.f32.mrf.mxu0
    %v3810 = vpop.f32.mrf.mxu0
    %3811 = vdwg.mxu0
    %v3813 = vsel %vm276, %v3771, 0
    %3815 = vmatprep.subr.bf16.mxu0 0
    %3816 = vmatpush1.bf16.msra.mxu0 0
    %3817 = vmatprep.subr.bf16.mxu0 0
    %3818 = vmatpush1.bf16.msra.mxu0 0
    %3819 = vmatprep.subr.bf16.mxu0 0
    %3820 = vmatpush1.bf16.msra.mxu0 0
    %3821 = vmatprep.subr.bf16.mxu0 0
    %3822 = vmatpush1.bf16.msra.mxu0 0
    %3823 = vmatprep.subr.bf16.mxu0 0
    %3824 = vmatpush1.bf16.msra.mxu0 0
    %3825 = vmatprep.subr.bf16.mxu0 0
    %3826 = vmatpush1.bf16.msra.mxu0 0
    %3827 = vmatprep.subr.bf16.mxu0 0
    %3828 = vmatpush1.bf16.msra.mxu0 0
    %3829 = vmatprep.subr.bf16.mxu0 0
    %3830 = vmatpush1.bf16.msra.mxu0 %v231
    %3831 = vmatprep.subr.bf16.mxu0 0
    %3832 = vmatpush2.bf16.msra.mxu0 0
    %3833 = vmatprep.subr.bf16.mxu0 0
    %3834 = vmatpush2.bf16.msra.mxu0 0
    %3835 = vmatprep.subr.bf16.mxu0 0
    %3836 = vmatpush2.bf16.msra.mxu0 0
    %3837 = vmatprep.subr.bf16.mxu0 0
    %3838 = vmatpush2.bf16.msra.mxu0 0
    %3839 = vmatprep.subr.bf16.mxu0 0
    %3840 = vmatpush2.bf16.msra.mxu0 0
    %3841 = vmatprep.subr.bf16.mxu0 0
    %3842 = vmatpush2.bf16.msra.mxu0 0
    %3843 = vmatprep.subr.bf16.mxu0 0
    %3844 = vmatpush2.bf16.msra.mxu0 0
    %3845 = vmatprep.subr.bf16.mxu0 0
    %3846 = vmatpush2.bf16.msra.mxu0 0
    %3847 = vmatprep.mubr.bf16.mxu0 0
    %3848 = vmatmul.mubr.bf16.gmra.mxu0 %v3813
    %v3849 = vpop.f32.mrf.mxu0
    %v3850 = vadd.f32 %v3807, %v3849
    %v3851 = vpop.f32.mrf.mxu0
    %v3852 = vpop.f32.mrf.mxu0
    %v3853 = vpop.f32.mrf.mxu0
    %3854 = vdwg.mxu0
    %v3855 = vadd.f32 %v3850, %v1564
    %v3856 = vmul.f32 %v3855, %v261
    %v3857 = vtanh.pop %v3856
    %v3858 = vmul.f32 %v3857, 0.5
    %v3859 = vadd.f32 %v3858, 0.5
    %v3860 = vmul.f32 %v3859, %v3497
    %3862 = vrot.lane.b32.xlu0 %v3857, 64
    %v3863 = vpop.permute.xlu0 %3862
    %v3865 = vmul.f32 %v3859, %v3863
    %3867 = vrot.lane.b32.xlu0 %v3865, 32
    %v3868 = vpop.permute.xlu0 %3867
    %v3870 = vadd.f32 %v3860, %v3868
    %v3871 = vtanh.pop %v3870
    %3873 = vrot.lane.b32.xlu0 %v3871, 64
    %v3874 = vpop.permute.xlu0 %3873
    %v3876 = vmul.f32 %v3859, %v3874
    %v3877 = vpack.c.bf16 %v3876, %v3876
    %3879 = vrot.lane.b32.xlu0 %v3877, 32
    %v3880 = vpop.permute.xlu0 %3879
    %v3882 = vsel %vm118, %v3880, 0
    %3884 = vmatprep.subr.bf16.mxu0 0
    %3885 = vmatpush1.bf16.xpose.msra.mxu0 0
    %3886 = vmatprep.subr.bf16.mxu0 0
    %3887 = vmatpush1.bf16.xpose.msra.mxu0 0
    %3888 = vmatprep.subr.bf16.mxu0 0
    %3889 = vmatpush1.bf16.xpose.msra.mxu0 0
    %3890 = vmatprep.subr.bf16.mxu0 0
    %3891 = vmatpush1.bf16.xpose.msra.mxu0 0
    %3892 = vmatprep.subr.bf16.mxu0 0
    %3893 = vmatpush1.bf16.xpose.msra.mxu0 0
    %3894 = vmatprep.subr.bf16.mxu0 0
    %3895 = vmatpush1.bf16.xpose.msra.mxu0 0
    %3896 = vmatprep.subr.bf16.mxu0 0
    %3897 = vmatpush1.bf16.xpose.msra.mxu0 0
    %3898 = vmatprep.subr.bf16.mxu0 0
    %3899 = vmatpush1.bf16.xpose.msra.mxu0 %v1603
    %3900 = vmatprep.subr.bf16.mxu0 0
    %3901 = vmatpush2.bf16.xpose.msra.mxu0 0
    %3902 = vmatprep.subr.bf16.mxu0 0
    %3903 = vmatpush2.bf16.xpose.msra.mxu0 0
    %3904 = vmatprep.subr.bf16.mxu0 0
    %3905 = vmatpush2.bf16.xpose.msra.mxu0 0
    %3906 = vmatprep.subr.bf16.mxu0 0
    %3907 = vmatpush2.bf16.xpose.msra.mxu0 0
    %3908 = vmatprep.subr.bf16.mxu0 0
    %3909 = vmatpush2.bf16.xpose.msra.mxu0 0
    %3910 = vmatprep.subr.bf16.mxu0 0
    %3911 = vmatpush2.bf16.xpose.msra.mxu0 0
    %3912 = vmatprep.subr.bf16.mxu0 0
    %3913 = vmatpush2.bf16.xpose.msra.mxu0 0
    %3914 = vmatprep.subr.bf16.mxu0 0
    %3915 = vmatpush2.bf16.xpose.msra.mxu0 0
    %3916 = vmatprep.mubr.bf16.mxu0 0
    %3917 = vmatmul.mubr.bf16.gmra.mxu0 %v3882
    %v3918 = vpop.f32.mrf.mxu0
    %v3919 = vadd.f32 %v1456, %v3918
    %v3920 = vpop.f32.mrf.mxu0
    %v3921 = vpop.f32.mrf.mxu0
    %v3922 = vpop.f32.mrf.mxu0
    %3923 = vdwg.mxu0
    %v3924 = vmul.f32 %v3919, 1.442695
    %v3925 = vpow.pop %v3924
    %v3926 = vsel %vm1647, %v3925, 0.0
    %3927 = vadd.xlane.f32.xlu0 %v3926
    %v3928 = vpop.xlane.xlu0 %3927
    %v3929 = vrcp.pop %v3928
    %v3930 = vmul.f32 %v3925, %v3929
    %v3931 = vpack.c.bf16 %v3930, %v3930
    %v3933 = vsel %vm276, %v3931, 0
    %3935 = vmatprep.subr.bf16.mxu0 0
    %3936 = vmatpush1.bf16.msra.mxu0 0
    %3937 = vmatprep.subr.bf16.mxu0 0
    %3938 = vmatpush1.bf16.msra.mxu0 0
    %3939 = vmatprep.subr.bf16.mxu0 0
    %3940 = vmatpush1.bf16.msra.mxu0 0
    %3941 = vmatprep.subr.bf16.mxu0 0
    %3942 = vmatpush1.bf16.msra.mxu0 0
    %3943 = vmatprep.subr.bf16.mxu0 0
    %3944 = vmatpush1.bf16.msra.mxu0 0
    %3945 = vmatprep.subr.bf16.mxu0 0
    %3946 = vmatpush1.bf16.msra.mxu0 0
    %3947 = vmatprep.subr.bf16.mxu0 0
    %3948 = vmatpush1.bf16.msra.mxu0 0
    %3949 = vmatprep.subr.bf16.mxu0 0
    %3950 = vmatpush1.bf16.msra.mxu0 %v1598
    %3951 = vmatprep.subr.bf16.mxu0 0
    %3952 = vmatpush2.bf16.msra.mxu0 0
    %3953 = vmatprep.subr.bf16.mxu0 0
    %3954 = vmatpush2.bf16.msra.mxu0 0
    %3955 = vmatprep.subr.bf16.mxu0 0
    %3956 = vmatpush2.bf16.msra.mxu0 0
    %3957 = vmatprep.subr.bf16.mxu0 0
    %3958 = vmatpush2.bf16.msra.mxu0 0
    %3959 = vmatprep.subr.bf16.mxu0 0
    %3960 = vmatpush2.bf16.msra.mxu0 0
    %3961 = vmatprep.subr.bf16.mxu0 0
    %3962 = vmatpush2.bf16.msra.mxu0 0
    %3963 = vmatprep.subr.bf16.mxu0 0
    %3964 = vmatpush2.bf16.msra.mxu0 0
    %3965 = vmatprep.subr.bf16.mxu0 0
    %3966 = vmatpush2.bf16.msra.mxu0 0
    %3967 = vmatprep.mubr.bf16.mxu0 0
    %3968 = vmatmul.mubr.bf16.gmra.mxu0 %v3933
    %v3969 = vpop.f32.mrf.mxu0
    %v3970 = vadd.f32 0.0, %v3969
    %v3971 = vpop.f32.mrf.mxu0
    %v3972 = vpop.f32.mrf.mxu0
    %v3973 = vpop.f32.mrf.mxu0
    %3974 = vdwg.mxu0
    %v3975 = vpack.c.bf16 %v3970, %v3970
    %3976 = vmatprep.subr.bf16.mxu0 0
    %3977 = vmatpush1.bf16.msra.mxu0 0
    %3978 = vmatprep.subr.bf16.mxu0 0
    %3979 = vmatpush1.bf16.msra.mxu0 0
    %3980 = vmatprep.subr.bf16.mxu0 0
    %3981 = vmatpush1.bf16.msra.mxu0 0
    %3982 = vmatprep.subr.bf16.mxu0 0
    %3983 = vmatpush1.bf16.msra.mxu0 0
    %3984 = vmatprep.subr.bf16.mxu0 0
    %3985 = vmatpush1.bf16.msra.mxu0 0
    %3986 = vmatprep.subr.bf16.mxu0 0
    %3987 = vmatpush1.bf16.msra.mxu0 0
    %3988 = vmatprep.subr.bf16.mxu0 0
    %3989 = vmatpush1.bf16.msra.mxu0 %v1708
    %3990 = vmatprep.subr.bf16.mxu0 0
    %3991 = vmatpush1.bf16.msra.mxu0 %v1707
    %3992 = vmatprep.subr.bf16.mxu0 0
    %3993 = vmatpush2.bf16.msra.mxu0 0
    %3994 = vmatprep.subr.bf16.mxu0 0
    %3995 = vmatpush2.bf16.msra.mxu0 0
    %3996 = vmatprep.subr.bf16.mxu0 0
    %3997 = vmatpush2.bf16.msra.mxu0 0
    %3998 = vmatprep.subr.bf16.mxu0 0
    %3999 = vmatpush2.bf16.msra.mxu0 0
    %4000 = vmatprep.subr.bf16.mxu0 0
    %4001 = vmatpush2.bf16.msra.mxu0 0
    %4002 = vmatprep.subr.bf16.mxu0 0
    %4003 = vmatpush2.bf16.msra.mxu0 0
    %4004 = vmatprep.subr.bf16.mxu0 0
    %4005 = vmatpush2.bf16.msra.mxu0 0
    %4006 = vmatprep.subr.bf16.mxu0 0
    %4007 = vmatpush2.bf16.msra.mxu0 0
    %4008 = vmatprep.mubr.bf16.mxu0 0
    %4009 = vmatmul.mubr.bf16.gmra.mxu0 %v3882
    %v4010 = vpop.f32.mrf.mxu0
    %v4011 = vadd.f32 0.0, %v4010
    %v4012 = vpop.f32.mrf.mxu0
    %v4013 = vpop.f32.mrf.mxu0
    %v4014 = vpop.f32.mrf.mxu0
    %4015 = vdwg.mxu0
    %v4017 = vsel %vm118, %v3975, 0
    %4019 = vmatprep.subr.bf16.mxu0 0
    %4020 = vmatpush1.bf16.msra.mxu0 0
    %4021 = vmatprep.subr.bf16.mxu0 0
    %4022 = vmatpush1.bf16.msra.mxu0 0
    %4023 = vmatprep.subr.bf16.mxu0 0
    %4024 = vmatpush1.bf16.msra.mxu0 0
    %4025 = vmatprep.subr.bf16.mxu0 0
    %4026 = vmatpush1.bf16.msra.mxu0 0
    %4027 = vmatprep.subr.bf16.mxu0 0
    %4028 = vmatpush1.bf16.msra.mxu0 0
    %4029 = vmatprep.subr.bf16.mxu0 0
    %4030 = vmatpush1.bf16.msra.mxu0 0
    %4031 = vmatprep.subr.bf16.mxu0 0
    %4032 = vmatpush1.bf16.msra.mxu0 %v1760
    %4033 = vmatprep.subr.bf16.mxu0 0
    %4034 = vmatpush1.bf16.msra.mxu0 %v1759
    %4035 = vmatprep.subr.bf16.mxu0 0
    %4036 = vmatpush2.bf16.msra.mxu0 0
    %4037 = vmatprep.subr.bf16.mxu0 0
    %4038 = vmatpush2.bf16.msra.mxu0 0
    %4039 = vmatprep.subr.bf16.mxu0 0
    %4040 = vmatpush2.bf16.msra.mxu0 0
    %4041 = vmatprep.subr.bf16.mxu0 0
    %4042 = vmatpush2.bf16.msra.mxu0 0
    %4043 = vmatprep.subr.bf16.mxu0 0
    %4044 = vmatpush2.bf16.msra.mxu0 0
    %4045 = vmatprep.subr.bf16.mxu0 0
    %4046 = vmatpush2.bf16.msra.mxu0 0
    %4047 = vmatprep.subr.bf16.mxu0 0
    %4048 = vmatpush2.bf16.msra.mxu0 0
    %4049 = vmatprep.subr.bf16.mxu0 0
    %4050 = vmatpush2.bf16.msra.mxu0 0
    %4051 = vmatprep.mubr.bf16.mxu0 0
    %4052 = vmatmul.mubr.bf16.gmra.mxu0 %v4017
    %v4053 = vpop.f32.mrf.mxu0
    %v4054 = vadd.f32 %v4011, %v4053
    %v4055 = vpop.f32.mrf.mxu0
    %v4056 = vpop.f32.mrf.mxu0
    %v4057 = vpop.f32.mrf.mxu0
    %4058 = vdwg.mxu0
    %v4059 = vadd.f32 %v4054, %v1810
    %v4060 = vtanh.pop %v4059
    %v4061 = vpack.c.bf16 %v4060, %v4060
    %v4063 = vsel %vm118, %v4061, 0
    %4065 = vmatprep.subr.bf16.mxu0 0
    %4066 = vmatpush1.bf16.msra.mxu0 0
    %4067 = vmatprep.subr.bf16.mxu0 0
    %4068 = vmatpush1.bf16.msra.mxu0 0
    %4069 = vmatprep.subr.bf16.mxu0 0
    %4070 = vmatpush1.bf16.msra.mxu0 0
    %4071 = vmatprep.subr.bf16.mxu0 0
    %4072 = vmatpush1.bf16.msra.mxu0 0
    %4073 = vmatprep.subr.bf16.mxu0 0
    %4074 = vmatpush1.bf16.msra.mxu0 0
    %4075 = vmatprep.subr.bf16.mxu0 0
    %4076 = vmatpush1.bf16.msra.mxu0 0
    %4077 = vmatprep.subr.bf16.mxu0 0
    %4078 = vmatpush1.bf16.msra.mxu0 %v1830
    %4079 = vmatprep.subr.bf16.mxu0 0
    %4080 = vmatpush1.bf16.msra.mxu0 %v1829
    %4081 = vmatprep.subr.bf16.mxu0 0
    %4082 = vmatpush2.bf16.msra.mxu0 0
    %4083 = vmatprep.subr.bf16.mxu0 0
    %4084 = vmatpush2.bf16.msra.mxu0 0
    %4085 = vmatprep.subr.bf16.mxu0 0
    %4086 = vmatpush2.bf16.msra.mxu0 0
    %4087 = vmatprep.subr.bf16.mxu0 0
    %4088 = vmatpush2.bf16.msra.mxu0 0
    %4089 = vmatprep.subr.bf16.mxu0 0
    %4090 = vmatpush2.bf16.msra.mxu0 0
    %4091 = vmatprep.subr.bf16.mxu0 0
    %4092 = vmatpush2.bf16.msra.mxu0 0
    %4093 = vmatprep.subr.bf16.mxu0 0
    %4094 = vmatpush2.bf16.msra.mxu0 0
    %4095 = vmatprep.subr.bf16.mxu0 0
    %4096 = vmatpush2.bf16.msra.mxu0 0
    %4097 = vmatprep.mubr.bf16.mxu0 0
    %4098 = vmatmul.mubr.bf16.gmra.mxu0 %v4063
    %v4099 = vpop.f32.mrf.mxu0
    %v4100 = vadd.f32 %v1819, %v4099
    %v4101 = vpop.f32.mrf.mxu0
    %v4102 = vpop.f32.mrf.mxu0
    %v4103 = vpop.f32.mrf.mxu0
    %4104 = vdwg.mxu0
    %v4105 = vsel %vm1878, %v4100, -1e+30
    %v4106 = vsel %vm1647, %v4105, -inf
    %4107 = vmax.xlane.f32.xlu0 %v4106
    %v4108 = vpop.xlane.xlu0 %4107
    %vm4109 = vcmp.eq.f32.partialorder %v4105, %v4108
    %v4110 = vsel %vm4109, %v257, 16
    %v4111 = vsel %vm1647, %v4110, 2147483647
    %v4112 = vand.u32 %v4111, 65535
    %v4113 = vshra.s32 %v4111, 16
    %v4114 = vcvt.s32.f32 %v4112
    %v4115 = vcvt.s32.f32 %v4113
    %4116 = vmin.xlane.f32.xlu0 %v4115
    %v4117 = vpop.xlane.xlu0 %4116
    %vm4118 = vcmp.eq.f32.partialorder %v4115, %v4117
    %v4119 = vsel %vm4118, %v4114, inf
    %4120 = vmin.xlane.f32.xlu0 %v4119
    %v4121 = vpop.xlane.xlu0 %4120
    %v4122 = vcvt.f32.s32 %v4121
    %v4123 = vcvt.f32.s32 %v4117
    %v4124 = vshll.u32 %v4123, 16
    %v4125 = vadd.s32 %v4124, %v4122
    %v4126 = vsel %vm1647, %v4100, -inf
    %4127 = vmax.xlane.f32.xlu0 %v4126
    %v4128 = vpop.xlane.xlu0 %4127
    %v4129 = vsub.f32 %v4100, %v4128
    %v4130 = vmul.f32 %v4129, 1.442695
    %v4131 = vpow.pop %v4130
    %v4132 = vsel %vm1647, %v4131, 0.0
    %4133 = vadd.xlane.f32.xlu0 %v4132
    %v4134 = vpop.xlane.xlu0 %4133
    %v4135 = vlog2.pop %v4134
    %v4136 = vmul.f32 %v4135, 0.6931472
    %v4137 = vsub.f32 %v4129, %v4136
    %vm4138 = vcmp.eq.s32.totalorder %v257, %v4125
    %v4139 = vsel %vm4138, 1, 0
    %v4140 = vcvt.s32.f32 %v4139
    %v4141 = vpack.c.bf16 %v4140, %v4140
    %4142 = vmatprep.subr.bf16.mxu0 0
    %4143 = vmatpush1.bf16.msra.mxu0 0
    %4144 = vmatprep.subr.bf16.mxu0 0
    %4145 = vmatpush1.bf16.msra.mxu0 0
    %4146 = vmatprep.subr.bf16.mxu0 0
    %4147 = vmatpush1.bf16.msra.mxu0 0
    %4148 = vmatprep.subr.bf16.mxu0 0
    %4149 = vmatpush1.bf16.msra.mxu0 0
    %4150 = vmatprep.subr.bf16.mxu0 0
    %4151 = vmatpush1.bf16.msra.mxu0 0
    %4152 = vmatprep.subr.bf16.mxu0 0
    %4153 = vmatpush1.bf16.msra.mxu0 0
    %4154 = vmatprep.subr.bf16.mxu0 0
    %4155 = vmatpush1.bf16.msra.mxu0 %v1474
    %4156 = vmatprep.subr.bf16.mxu0 0
    %4157 = vmatpush1.bf16.msra.mxu0 %v1473
    %4158 = vmatprep.subr.bf16.mxu0 0
    %4159 = vmatpush2.bf16.msra.mxu0 0
    %4160 = vmatprep.subr.bf16.mxu0 0
    %4161 = vmatpush2.bf16.msra.mxu0 0
    %4162 = vmatprep.subr.bf16.mxu0 0
    %4163 = vmatpush2.bf16.msra.mxu0 0
    %4164 = vmatprep.subr.bf16.mxu0 0
    %4165 = vmatpush2.bf16.msra.mxu0 0
    %4166 = vmatprep.subr.bf16.mxu0 0
    %4167 = vmatpush2.bf16.msra.mxu0 0
    %4168 = vmatprep.subr.bf16.mxu0 0
    %4169 = vmatpush2.bf16.msra.mxu0 0
    %4170 = vmatprep.subr.bf16.mxu0 0
    %4171 = vmatpush2.bf16.msra.mxu0 0
    %4172 = vmatprep.subr.bf16.mxu0 0
    %4173 = vmatpush2.bf16.msra.mxu0 0
    %4174 = vmatprep.mubr.bf16.mxu0 0
    %4175 = vmatmul.mubr.bf16.gmra.mxu0 %v3882
    %v4176 = vpop.f32.mrf.mxu0
    %v4177 = vadd.f32 0.0, %v4176
    %v4178 = vpop.f32.mrf.mxu0
    %v4179 = vpop.f32.mrf.mxu0
    %v4180 = vpop.f32.mrf.mxu0
    %4181 = vdwg.mxu0
    %v4183 = vsel %vm276, %v4141, 0
    %4185 = vmatprep.subr.bf16.mxu0 0
    %4186 = vmatpush1.bf16.msra.mxu0 0
    %4187 = vmatprep.subr.bf16.mxu0 0
    %4188 = vmatpush1.bf16.msra.mxu0 0
    %4189 = vmatprep.subr.bf16.mxu0 0
    %4190 = vmatpush1.bf16.msra.mxu0 0
    %4191 = vmatprep.subr.bf16.mxu0 0
    %4192 = vmatpush1.bf16.msra.mxu0 0
    %4193 = vmatprep.subr.bf16.mxu0 0
    %4194 = vmatpush1.bf16.msra.mxu0 0
    %4195 = vmatprep.subr.bf16.mxu0 0
    %4196 = vmatpush1.bf16.msra.mxu0 0
    %4197 = vmatprep.subr.bf16.mxu0 0
    %4198 = vmatpush1.bf16.msra.mxu0 0
    %4199 = vmatprep.subr.bf16.mxu0 0
    %4200 = vmatpush1.bf16.msra.mxu0 %v231
    %4201 = vmatprep.subr.bf16.mxu0 0
    %4202 = vmatpush2.bf16.msra.mxu0 0
    %4203 = vmatprep.subr.bf16.mxu0 0
    %4204 = vmatpush2.bf16.msra.mxu0 0
    %4205 = vmatprep.subr.bf16.mxu0 0
    %4206 = vmatpush2.bf16.msra.mxu0 0
    %4207 = vmatprep.subr.bf16.mxu0 0
    %4208 = vmatpush2.bf16.msra.mxu0 0
    %4209 = vmatprep.subr.bf16.mxu0 0
    %4210 = vmatpush2.bf16.msra.mxu0 0
    %4211 = vmatprep.subr.bf16.mxu0 0
    %4212 = vmatpush2.bf16.msra.mxu0 0
    %4213 = vmatprep.subr.bf16.mxu0 0
    %4214 = vmatpush2.bf16.msra.mxu0 0
    %4215 = vmatprep.subr.bf16.mxu0 0
    %4216 = vmatpush2.bf16.msra.mxu0 0
    %4217 = vmatprep.mubr.bf16.mxu0 0
    %4218 = vmatmul.mubr.bf16.gmra.mxu0 %v4183
    %v4219 = vpop.f32.mrf.mxu0
    %v4220 = vadd.f32 %v4177, %v4219
    %v4221 = vpop.f32.mrf.mxu0
    %v4222 = vpop.f32.mrf.mxu0
    %v4223 = vpop.f32.mrf.mxu0
    %4224 = vdwg.mxu0
    %v4225 = vadd.f32 %v4220, %v1564
    %v4226 = vmul.f32 %v4225, %v261
    %v4227 = vtanh.pop %v4226
    %v4228 = vmul.f32 %v4227, 0.5
    %v4229 = vadd.f32 %v4228, 0.5
    %v4230 = vmul.f32 %v4229, %v3870
    %4232 = vrot.lane.b32.xlu0 %v4227, 64
    %v4233 = vpop.permute.xlu0 %4232
    %v4235 = vmul.f32 %v4229, %v4233
    %4237 = vrot.lane.b32.xlu0 %v4235, 32
    %v4238 = vpop.permute.xlu0 %4237
    %v4240 = vadd.f32 %v4230, %v4238
    %v4241 = vtanh.pop %v4240
    %4243 = vrot.lane.b32.xlu0 %v4241, 64
    %v4244 = vpop.permute.xlu0 %4243
    %v4246 = vmul.f32 %v4229, %v4244
    %v4247 = vpack.c.bf16 %v4246, %v4246
    %4249 = vrot.lane.b32.xlu0 %v4247, 32
    %v4250 = vpop.permute.xlu0 %4249
    %v4252 = vsel %vm118, %v4250, 0
    %4254 = vmatprep.subr.bf16.mxu0 0
    %4255 = vmatpush1.bf16.xpose.msra.mxu0 0
    %4256 = vmatprep.subr.bf16.mxu0 0
    %4257 = vmatpush1.bf16.xpose.msra.mxu0 0
    %4258 = vmatprep.subr.bf16.mxu0 0
    %4259 = vmatpush1.bf16.xpose.msra.mxu0 0
    %4260 = vmatprep.subr.bf16.mxu0 0
    %4261 = vmatpush1.bf16.xpose.msra.mxu0 0
    %4262 = vmatprep.subr.bf16.mxu0 0
    %4263 = vmatpush1.bf16.xpose.msra.mxu0 0
    %4264 = vmatprep.subr.bf16.mxu0 0
    %4265 = vmatpush1.bf16.xpose.msra.mxu0 0
    %4266 = vmatprep.subr.bf16.mxu0 0
    %4267 = vmatpush1.bf16.xpose.msra.mxu0 0
    %4268 = vmatprep.subr.bf16.mxu0 0
    %4269 = vmatpush1.bf16.xpose.msra.mxu0 %v1603
    %4270 = vmatprep.subr.bf16.mxu0 0
    %4271 = vmatpush2.bf16.xpose.msra.mxu0 0
    %4272 = vmatprep.subr.bf16.mxu0 0
    %4273 = vmatpush2.bf16.xpose.msra.mxu0 0
    %4274 = vmatprep.subr.bf16.mxu0 0
    %4275 = vmatpush2.bf16.xpose.msra.mxu0 0
    %4276 = vmatprep.subr.bf16.mxu0 0
    %4277 = vmatpush2.bf16.xpose.msra.mxu0 0
    %4278 = vmatprep.subr.bf16.mxu0 0
    %4279 = vmatpush2.bf16.xpose.msra.mxu0 0
    %4280 = vmatprep.subr.bf16.mxu0 0
    %4281 = vmatpush2.bf16.xpose.msra.mxu0 0
    %4282 = vmatprep.subr.bf16.mxu0 0
    %4283 = vmatpush2.bf16.xpose.msra.mxu0 0
    %4284 = vmatprep.subr.bf16.mxu0 0
    %4285 = vmatpush2.bf16.xpose.msra.mxu0 0
    %4286 = vmatprep.mubr.bf16.mxu0 0
    %4287 = vmatmul.mubr.bf16.gmra.mxu0 %v4252
    %v4288 = vpop.f32.mrf.mxu0
    %v4289 = vadd.f32 %v1456, %v4288
    %v4290 = vpop.f32.mrf.mxu0
    %v4291 = vpop.f32.mrf.mxu0
    %v4292 = vpop.f32.mrf.mxu0
    %4293 = vdwg.mxu0
    %v4294 = vmul.f32 %v4289, 1.442695
    %v4295 = vpow.pop %v4294
    %v4296 = vsel %vm1647, %v4295, 0.0
    %4297 = vadd.xlane.f32.xlu0 %v4296
    %v4298 = vpop.xlane.xlu0 %4297
    %v4299 = vrcp.pop %v4298
    %v4300 = vmul.f32 %v4295, %v4299
    %v4301 = vpack.c.bf16 %v4300, %v4300
    %v4303 = vsel %vm276, %v4301, 0
    %4305 = vmatprep.subr.bf16.mxu0 0
    %4306 = vmatpush1.bf16.msra.mxu0 0
    %4307 = vmatprep.subr.bf16.mxu0 0
    %4308 = vmatpush1.bf16.msra.mxu0 0
    %4309 = vmatprep.subr.bf16.mxu0 0
    %4310 = vmatpush1.bf16.msra.mxu0 0
    %4311 = vmatprep.subr.bf16.mxu0 0
    %4312 = vmatpush1.bf16.msra.mxu0 0
    %4313 = vmatprep.subr.bf16.mxu0 0
    %4314 = vmatpush1.bf16.msra.mxu0 0
    %4315 = vmatprep.subr.bf16.mxu0 0
    %4316 = vmatpush1.bf16.msra.mxu0 0
    %4317 = vmatprep.subr.bf16.mxu0 0
    %4318 = vmatpush1.bf16.msra.mxu0 0
    %4319 = vmatprep.subr.bf16.mxu0 0
    %4320 = vmatpush1.bf16.msra.mxu0 %v1598
    %4321 = vmatprep.subr.bf16.mxu0 0
    %4322 = vmatpush2.bf16.msra.mxu0 0
    %4323 = vmatprep.subr.bf16.mxu0 0
    %4324 = vmatpush2.bf16.msra.mxu0 0
    %4325 = vmatprep.subr.bf16.mxu0 0
    %4326 = vmatpush2.bf16.msra.mxu0 0
    %4327 = vmatprep.subr.bf16.mxu0 0
    %4328 = vmatpush2.bf16.msra.mxu0 0
    %4329 = vmatprep.subr.bf16.mxu0 0
    %4330 = vmatpush2.bf16.msra.mxu0 0
    %4331 = vmatprep.subr.bf16.mxu0 0
    %4332 = vmatpush2.bf16.msra.mxu0 0
    %4333 = vmatprep.subr.bf16.mxu0 0
    %4334 = vmatpush2.bf16.msra.mxu0 0
    %4335 = vmatprep.subr.bf16.mxu0 0
    %4336 = vmatpush2.bf16.msra.mxu0 0
    %4337 = vmatprep.mubr.bf16.mxu0 0
    %4338 = vmatmul.mubr.bf16.gmra.mxu0 %v4303
    %v4339 = vpop.f32.mrf.mxu0
    %v4340 = vadd.f32 0.0, %v4339
    %v4341 = vpop.f32.mrf.mxu0
    %v4342 = vpop.f32.mrf.mxu0
    %v4343 = vpop.f32.mrf.mxu0
    %4344 = vdwg.mxu0
    %v4345 = vpack.c.bf16 %v4340, %v4340
    %4346 = vmatprep.subr.bf16.mxu0 0
    %4347 = vmatpush1.bf16.msra.mxu0 0
    %4348 = vmatprep.subr.bf16.mxu0 0
    %4349 = vmatpush1.bf16.msra.mxu0 0
    %4350 = vmatprep.subr.bf16.mxu0 0
    %4351 = vmatpush1.bf16.msra.mxu0 0
    %4352 = vmatprep.subr.bf16.mxu0 0
    %4353 = vmatpush1.bf16.msra.mxu0 0
    %4354 = vmatprep.subr.bf16.mxu0 0
    %4355 = vmatpush1.bf16.msra.mxu0 0
    %4356 = vmatprep.subr.bf16.mxu0 0
    %4357 = vmatpush1.bf16.msra.mxu0 0
    %4358 = vmatprep.subr.bf16.mxu0 0
    %4359 = vmatpush1.bf16.msra.mxu0 %v1708
    %4360 = vmatprep.subr.bf16.mxu0 0
    %4361 = vmatpush1.bf16.msra.mxu0 %v1707
    %4362 = vmatprep.subr.bf16.mxu0 0
    %4363 = vmatpush2.bf16.msra.mxu0 0
    %4364 = vmatprep.subr.bf16.mxu0 0
    %4365 = vmatpush2.bf16.msra.mxu0 0
    %4366 = vmatprep.subr.bf16.mxu0 0
    %4367 = vmatpush2.bf16.msra.mxu0 0
    %4368 = vmatprep.subr.bf16.mxu0 0
    %4369 = vmatpush2.bf16.msra.mxu0 0
    %4370 = vmatprep.subr.bf16.mxu0 0
    %4371 = vmatpush2.bf16.msra.mxu0 0
    %4372 = vmatprep.subr.bf16.mxu0 0
    %4373 = vmatpush2.bf16.msra.mxu0 0
    %4374 = vmatprep.subr.bf16.mxu0 0
    %4375 = vmatpush2.bf16.msra.mxu0 0
    %4376 = vmatprep.subr.bf16.mxu0 0
    %4377 = vmatpush2.bf16.msra.mxu0 0
    %4378 = vmatprep.mubr.bf16.mxu0 0
    %4379 = vmatmul.mubr.bf16.gmra.mxu0 %v4252
    %v4380 = vpop.f32.mrf.mxu0
    %v4381 = vadd.f32 0.0, %v4380
    %v4382 = vpop.f32.mrf.mxu0
    %v4383 = vpop.f32.mrf.mxu0
    %v4384 = vpop.f32.mrf.mxu0
    %4385 = vdwg.mxu0
    %v4387 = vsel %vm118, %v4345, 0
    %4389 = vmatprep.subr.bf16.mxu0 0
    %4390 = vmatpush1.bf16.msra.mxu0 0
    %4391 = vmatprep.subr.bf16.mxu0 0
    %4392 = vmatpush1.bf16.msra.mxu0 0
    %4393 = vmatprep.subr.bf16.mxu0 0
    %4394 = vmatpush1.bf16.msra.mxu0 0
    %4395 = vmatprep.subr.bf16.mxu0 0
    %4396 = vmatpush1.bf16.msra.mxu0 0
    %4397 = vmatprep.subr.bf16.mxu0 0
    %4398 = vmatpush1.bf16.msra.mxu0 0
    %4399 = vmatprep.subr.bf16.mxu0 0
    %4400 = vmatpush1.bf16.msra.mxu0 0
    %4401 = vmatprep.subr.bf16.mxu0 0
    %4402 = vmatpush1.bf16.msra.mxu0 %v1760
    %4403 = vmatprep.subr.bf16.mxu0 0
    %4404 = vmatpush1.bf16.msra.mxu0 %v1759
    %4405 = vmatprep.subr.bf16.mxu0 0
    %4406 = vmatpush2.bf16.msra.mxu0 0
    %4407 = vmatprep.subr.bf16.mxu0 0
    %4408 = vmatpush2.bf16.msra.mxu0 0
    %4409 = vmatprep.subr.bf16.mxu0 0
    %4410 = vmatpush2.bf16.msra.mxu0 0
    %4411 = vmatprep.subr.bf16.mxu0 0
    %4412 = vmatpush2.bf16.msra.mxu0 0
    %4413 = vmatprep.subr.bf16.mxu0 0
    %4414 = vmatpush2.bf16.msra.mxu0 0
    %4415 = vmatprep.subr.bf16.mxu0 0
    %4416 = vmatpush2.bf16.msra.mxu0 0
    %4417 = vmatprep.subr.bf16.mxu0 0
    %4418 = vmatpush2.bf16.msra.mxu0 0
    %4419 = vmatprep.subr.bf16.mxu0 0
    %4420 = vmatpush2.bf16.msra.mxu0 0
    %4421 = vmatprep.mubr.bf16.mxu0 0
    %4422 = vmatmul.mubr.bf16.gmra.mxu0 %v4387
    %v4423 = vpop.f32.mrf.mxu0
    %v4424 = vadd.f32 %v4381, %v4423
    %v4425 = vpop.f32.mrf.mxu0
    %v4426 = vpop.f32.mrf.mxu0
    %v4427 = vpop.f32.mrf.mxu0
    %4428 = vdwg.mxu0
    %v4429 = vadd.f32 %v4424, %v1810
    %v4430 = vtanh.pop %v4429
    %v4431 = vpack.c.bf16 %v4430, %v4430
    %v4433 = vsel %vm118, %v4431, 0
    %4435 = vmatprep.subr.bf16.mxu0 0
    %4436 = vmatpush1.bf16.msra.mxu0 0
    %4437 = vmatprep.subr.bf16.mxu0 0
    %4438 = vmatpush1.bf16.msra.mxu0 0
    %4439 = vmatprep.subr.bf16.mxu0 0
    %4440 = vmatpush1.bf16.msra.mxu0 0
    %4441 = vmatprep.subr.bf16.mxu0 0
    %4442 = vmatpush1.bf16.msra.mxu0 0
    %4443 = vmatprep.subr.bf16.mxu0 0
    %4444 = vmatpush1.bf16.msra.mxu0 0
    %4445 = vmatprep.subr.bf16.mxu0 0
    %4446 = vmatpush1.bf16.msra.mxu0 0
    %4447 = vmatprep.subr.bf16.mxu0 0
    %4448 = vmatpush1.bf16.msra.mxu0 %v1830
    %4449 = vmatprep.subr.bf16.mxu0 0
    %4450 = vmatpush1.bf16.msra.mxu0 %v1829
    %4451 = vmatprep.subr.bf16.mxu0 0
    %4452 = vmatpush2.bf16.msra.mxu0 0
    %4453 = vmatprep.subr.bf16.mxu0 0
    %4454 = vmatpush2.bf16.msra.mxu0 0
    %4455 = vmatprep.subr.bf16.mxu0 0
    %4456 = vmatpush2.bf16.msra.mxu0 0
    %4457 = vmatprep.subr.bf16.mxu0 0
    %4458 = vmatpush2.bf16.msra.mxu0 0
    %4459 = vmatprep.subr.bf16.mxu0 0
    %4460 = vmatpush2.bf16.msra.mxu0 0
    %4461 = vmatprep.subr.bf16.mxu0 0
    %4462 = vmatpush2.bf16.msra.mxu0 0
    %4463 = vmatprep.subr.bf16.mxu0 0
    %4464 = vmatpush2.bf16.msra.mxu0 0
    %4465 = vmatprep.subr.bf16.mxu0 0
    %4466 = vmatpush2.bf16.msra.mxu0 0
    %4467 = vmatprep.mubr.bf16.mxu0 0
    %4468 = vmatmul.mubr.bf16.gmra.mxu0 %v4433
    %v4469 = vpop.f32.mrf.mxu0
    %v4470 = vadd.f32 %v1819, %v4469
    %v4471 = vpop.f32.mrf.mxu0
    %v4472 = vpop.f32.mrf.mxu0
    %v4473 = vpop.f32.mrf.mxu0
    %4474 = vdwg.mxu0
    %v4475 = vsel %vm3734, %v4470, -1e+30
    %v4476 = vsel %vm1647, %v4475, -inf
    %4477 = vmax.xlane.f32.xlu0 %v4476
    %v4478 = vpop.xlane.xlu0 %4477
    %vm4479 = vcmp.eq.f32.partialorder %v4475, %v4478
    %v4480 = vsel %vm4479, %v257, 16
    %v4481 = vsel %vm1647, %v4480, 2147483647
    %v4482 = vand.u32 %v4481, 65535
    %v4483 = vshra.s32 %v4481, 16
    %v4484 = vcvt.s32.f32 %v4482
    %v4485 = vcvt.s32.f32 %v4483
    %4486 = vmin.xlane.f32.xlu0 %v4485
    %v4487 = vpop.xlane.xlu0 %4486
    %vm4488 = vcmp.eq.f32.partialorder %v4485, %v4487
    %v4489 = vsel %vm4488, %v4484, inf
    %4490 = vmin.xlane.f32.xlu0 %v4489
    %v4491 = vpop.xlane.xlu0 %4490
    %v4492 = vcvt.f32.s32 %v4491
    %v4493 = vcvt.f32.s32 %v4487
    %v4494 = vshll.u32 %v4493, 16
    %v4495 = vadd.s32 %v4494, %v4492
    %v4496 = vsel %vm1647, %v4470, -inf
    %4497 = vmax.xlane.f32.xlu0 %v4496
    %v4498 = vpop.xlane.xlu0 %4497
    %v4499 = vsub.f32 %v4470, %v4498
    %v4500 = vmul.f32 %v4499, 1.442695
    %v4501 = vpow.pop %v4500
    %v4502 = vsel %vm1647, %v4501, 0.0
    %4503 = vadd.xlane.f32.xlu0 %v4502
    %v4504 = vpop.xlane.xlu0 %4503
    %v4505 = vlog2.pop %v4504
    %v4506 = vmul.f32 %v4505, 0.6931472
    %v4507 = vsub.f32 %v4499, %v4506
    %4509 = vrot.lane.b32.xlu0 %v2284, 16
    %v4510 = vpop.permute.xlu0 %4509
    %4513 = vrot.lane.b32.xlu0 %v2654, 32
    %v4514 = vpop.permute.xlu0 %4513
    %4517 = vrot.lane.b32.xlu0 %v3024, 48
    %v4518 = vpop.permute.xlu0 %4517
    %4521 = vrot.lane.b32.xlu0 %v3394, 64
    %v4522 = vpop.permute.xlu0 %4521
    %4525 = vrot.lane.b32.xlu0 %v3767, 80
    %v4526 = vpop.permute.xlu0 %4525
    %4529 = vrot.lane.b32.xlu0 %v4137, 96
    %v4530 = vpop.permute.xlu0 %4529
    %4533 = vrot.lane.b32.xlu0 %v4507, 112
    %v4534 = vpop.permute.xlu0 %4533
    %v4536 = vsel %vm276, %v1911, %v4510
    %v4537 = vsel %vm118, %v4536, %v4514
    %vm4538 = vcmask 392192
    %v4539 = vsel %vm4538, %v4537, %v4518
    %vm4540 = vcmask 523264
    %v4541 = vsel %vm4540, %v4539, %v4522
    %vm4542 = vcmask 654336
    %v4543 = vsel %vm4542, %v4541, %v4526
    %vm4544 = vcmask 785408
    %v4545 = vsel %vm4544, %v4543, %v4530
    %vm4546 = vcmask 916480
    %v4547 = vsel %vm4546, %v4545, %v4534
    %4548 = vst [vmem:[%s17] sm:$0x3] %v4547
    %vm4549 = vcmask 7168
    %v4550 = vsel %vm4549, %v1899, %v2272
    %vm4551 = vcmask 15360
    %v4552 = vsel %vm4551, %v4550, %v2642
    %vm4553 = vcmask 23552
    %v4554 = vsel %vm4553, %v4552, %v3012
    %vm4555 = vcmask 31744
    %v4556 = vsel %vm4555, %v4554, %v3382
    %vm4557 = vcmask 39936
    %v4558 = vsel %vm4557, %v4556, %v3755
    %vm4559 = vcmask 48128
    %v4560 = vsel %vm4559, %v4558, %v4125
    %vm4561 = vcmask 56320
    %v4562 = vsel %vm4561, %v4560, %v4495
    %vm4563 = vcmask 58368
    %4564 = vst.msk [vmem:[#allocation8] sm:$0x3] %vm4563, %v4562
    // Predicated region
    $region78: #{nao_epd_forward.1} parent=1 // pred_check
      _
    $region79: #{nao_epd_forward.1} parent=1 // pred_check_branch
      %4566 = sbr.rel (0) target = $region81
    $region80: #{nao_epd_forward.1} parent=1 // pred_region
      _
    $region81: #{nao_epd_forward.1} parent=1 // pred_fallthru
      _
    // Predicated region
    $region82: #{nao_epd_forward.1} parent=1 // pred_check
      _
    $region83: #{nao_epd_forward.1} parent=1 // pred_check_branch
      %4568 = sbr.rel (0) target = $region85
    $region84: #{nao_epd_forward.1} parent=1 // pred_region
      _
    $region85: #{nao_epd_forward.1} parent=1 // pred_fallthru
      _
    // Predicated region
    $region86: #{nao_epd_forward.1} parent=1 // pred_check
      _
    $region87: #{nao_epd_forward.1} parent=1 // pred_check_branch
      %4570 = sbr.rel (0) target = $region89
    $region88: #{nao_epd_forward.1} parent=1 // pred_region
      %s4572 = ssub.s32 32, 32
      %4573 = vsyncadd [#allocation4], %s4572
      %s4575 = sshll.u32 [#allocation8], 4
      %s4576 = int_to_ptr.vmem [resolvable:$true] %s4575
      %4578 = dma.vmem_to_hbm [thread:$0]  %s4576, 32, %s18, [#allocation4]
    $region89: #{nao_epd_forward.1} parent=1 // pred_fallthru
      _
    // Predicated region
    $region90: #{nao_epd_forward.1} parent=1 // pred_check
      _
    $region91: #{nao_epd_forward.1} parent=1 // pred_check_branch
      %4580 = sbr.rel (0) target = $region93
    $region92: #{nao_epd_forward.1} parent=1 // pred_region
      _
    $region93: #{nao_epd_forward.1} parent=1 // pred_fallthru
      _
    // Predicated region
    $region94: #{nao_epd_forward.1} parent=1 // pred_check
      _
    $region95: #{nao_epd_forward.1} parent=1 // pred_check_branch
      %4582 = sbr.rel (0) target = $region97
    $region96: #{nao_epd_forward.1} parent=1 // pred_region
      _
    $region97: #{nao_epd_forward.1} parent=1 // pred_fallthru
      _
    // Predicated region
    $region98: #{nao_epd_forward.1} parent=1 // pred_check
      _
    $region99: #{nao_epd_forward.1} parent=1 // pred_check_branch
      %4584 = sbr.rel (0) target = $region101
    $region100: #{nao_epd_forward.1} parent=1 // pred_region
      %4585 = dma.done [#allocation4], 32
    $region101: #{nao_epd_forward.1} parent=1 // pred_fallthru
      _
    %4586 = vsyncpa [#allocation3], 1
    %4587 = vsyncpa [#allocation6], 1
    %4588 = vsyncpa [#allocation4], 1

</llo_original>
